<compile_context>
chip_gen: v6e
topology: v6e:2x2x1
jax: 0.10.0
libtpu: 0.0.40
codegen_flags: <defaults>
</compile_context>

<pallas_src>
import functools
import math

import jax
import jax.numpy as jnp
from jax.experimental import pallas as pl
from jax.experimental.pallas import tpu as pltpu


# ------------------------- in-kernel helper functions -------------------------

def _addnorm(x, y, gamma, beta):
    """LayerNorm(x + y), eps=1e-5, biased variance (torch default)."""
    z = x + y
    mean = jnp.mean(z, axis=-1, keepdims=True)
    var = jnp.mean(jnp.square(z - mean), axis=-1, keepdims=True)
    return (z - mean) * jax.lax.rsqrt(var + 1e-5) * gamma + beta


def _first_channel(v):
    """v[:, :1] computed as an iota-select + reduce (avoids a lane-dim slice)."""
    sel = (jax.lax.broadcasted_iota(jnp.int32, (1, v.shape[-1]), 1) == 0)
    return jnp.sum(v * sel.astype(v.dtype), axis=-1, keepdims=True)


def _mha_block(x_q, x_k, x_v, qw, qb, kw, kb, vw, vb, ow, ob, *,
               base, heads, key_bias):
    """Multi-head attention for one decoder block.

    x_q:[T,Cq]  x_k/x_v:[S,Ck]; qw/kw/vw/qb/kb/vb/ow are per-(block,head) stacked
    refs indexed with base+h; ob is the [1,C] output bias value.  The softmax
    scale is pre-folded into qw/qb.  key_bias is an additive finite mask
    ([1,S] or [T,S]) or None.  Output projection is fused per head (sum of
    [T,d]@[d,C]), so the result is written lane-dense as [T,C].
    """
    out = None
    for h in range(heads):
        i = base + h
        q = jnp.dot(x_q, qw[i], preferred_element_type=jnp.float32) + qb[i]   # [T,d]
        k = jnp.dot(x_k, kw[i], preferred_element_type=jnp.float32) + kb[i]   # [S,d]
        v = jnp.dot(x_v, vw[i], preferred_element_type=jnp.float32) + vb[i]   # [S,d]
        # contract the last dims directly (no explicit transpose of k)
        sc = jax.lax.dot_general(q, k, (((1,), (1,)), ((), ())),
                                 preferred_element_type=jnp.float32)          # [T,S]
        if key_bias is not None:
            sc = sc + key_bias
        p = jnp.exp(sc - jnp.max(sc, axis=-1, keepdims=True))
        p = p * pl.reciprocal(jnp.sum(p, axis=-1, keepdims=True), approx=True)
        oh = jnp.dot(p, v, preferred_element_type=jnp.float32)                # [T,d]
        part = jnp.dot(oh, ow[i], preferred_element_type=jnp.float32)         # [T,C]
        out = part if out is None else out + part
    return out + ob


# ------------------------------- fused kernel --------------------------------

def _decoder_kernel(
    steps_ref,                                             # scalar prefetch (used only by index_maps)
    # per-batch activations (8)
    x_ref, contents_ref, style_ref, embed_ref,
    mask_ref, msrow_ref, mscol_ref, m00_ref,
    # shared constants (2)
    pe_ref, linkkey_ref,
    # stacked block weights (36)
    embw, embb,
    sqw, sqb, skw, skb, svw, svb, sow, sob,
    lsqw, lsqb, lskw, lskb, lsvw, lsvb, lsow, lsob,
    lcqw, lcqb, lckw, lckb, lcvw, lcvb, lcow, lcob,
    slng, slnb, mlng, mlnb, flng, flnb,
    f1w, f1b, f2w, f2b,
    # step-selected final projection (2)
    wsel_ref, bsel_ref,
    # output
    out_ref,
    *, heads, blocks, causal, has_mask):
    del steps_ref  # consumed by the BlockSpec index_maps
    neg = jnp.float32(1e30)

    x = x_ref[0] + pe_ref[...]               # [T, C]   (PE add fused in)
    t = x.shape[0]
    contents = contents_ref[0]               # [S, contexts]
    style = style_ref[0]                     # [P, styles]
    linkkey = linkkey_ref[...]               # [P, styles] (shared across batch)
    embed = embed_ref[0]                     # [1, embeds]
    ms_col = mscol_ref[0]                    # [T, 1]  = mask[..., :1]
    m00 = m00_ref[0]                         # [1, 1]  = mask[0, 0]

    # Additive finite key-side masks (single FMA, no NaN for fully-masked rows).
    self_bias = None
    if has_mask:
        self_bias = (msrow_ref[0] - 1.0) * neg            # [1, T]
    if causal:
        rows = jax.lax.broadcasted_iota(jnp.int32, (t, t), 0)
        cols = jax.lax.broadcasted_iota(jnp.int32, (t, t), 1)
        cbias = jnp.where(cols <= rows, 0.0, -neg).astype(jnp.float32)
        self_bias = cbias if self_bias is None else self_bias + cbias
    link_bias = (mask_ref[0] - 1.0) * neg if has_mask else None

    for blk in range(blocks):
        base = blk * heads
        # time-embedding chunk for this block: mapper(embed).chunk(blocks)[blk]
        x = x + (jnp.dot(embed, embw[blk], preferred_element_type=jnp.float32)
                 + embb[blk])

        # --- AddNorm(self MultiheadAttention) ---
        att = _mha_block(x, x, x, sqw, sqb, skw, skb, svw, svb, sow, sob[blk],
                         base=base, heads=heads, key_bias=self_bias)
        if has_mask:
            att = att * (ms_col * m00)       # out * mask_s[..., :1]
        x = _addnorm(x, att, slng[blk], slnb[blk])

        # --- AddNorm(MultiLink) ---
        x_a = _mha_block(x, linkkey, style, lsqw, lsqb, lskw, lskb, lsvw, lsvb,
                         lsow, lsob[blk], base=base, heads=heads, key_bias=None)
        x_b = _mha_block(x, contents, contents, lcqw, lcqb, lckw, lckb, lcvw,
                         lcvb, lcow, lcob[blk], base=base, heads=heads,
                         key_bias=link_bias)
        if has_mask:
            x_b = x_b * ms_col               # out * mask[..., :1]
        ml = x_a + x_b
        if has_mask:
            ml = _first_channel(ml)          # MultiLink: x = x[..., :1]
        x = _addnorm(x, ml, mlng[blk], mlnb[blk])

        # --- AddNorm(FeedForward) ---  (nn.Dropout(p=0.0): eval-mode no-op)
        h = jnp.maximum(jnp.dot(x, f1w[blk], preferred_element_type=jnp.float32)
                        + f1b[blk], 0.0)
        ff = jnp.dot(h, f2w[blk], preferred_element_type=jnp.float32) + f2b[blk]
        x = _addnorm(x, ff, flng[blk], flnb[blk])

    # Final projection with scalar-prefetch-selected weight[steps[b]] / bias[steps[b]].
    out = jnp.dot(x, wsel_ref[0], preferred_element_type=jnp.float32) + bsel_ref[0]
    if has_mask:
        out = out * ms_col                   # out * mask[..., :1]
    out_ref[0] = out


# --------------------------- host-side param packing --------------------------

_PACKED_ORDER = (
    "embw", "embb",
    "sqw", "sqb", "skw", "skb", "svw", "svb", "sow", "sob",
    "lsqw", "lsqb", "lskw", "lskb", "lsvw", "lsvb", "lsow", "lsob",
    "lcqw", "lcqb", "lckw", "lckb", "lcvw", "lcvb", "lcow", "lcob",
    "slng", "slnb", "mlng", "mlnb", "flng", "flnb",
    "f1w", "f1b", "f2w", "f2b",
)


def _pack_params(params, *, channels, heads):
    """Stack per-block / per-(block,head) weights so the fused kernel can index
    them with static leading indices (no in-kernel lane slicing).  The softmax
    scale is folded into the q projections."""
    blocks_p = params["blocks"]
    nblk = len(blocks_p)
    d = channels // heads
    scale = float(d) ** -0.5

    def split_in(w):    # [fin, C] -> [heads, fin, d]
        fin = w.shape[0]
        return jnp.transpose(w.reshape(fin, heads, d), (1, 0, 2))

    def split_b(b):     # [C] -> [heads, 1, d]
        return b.reshape(heads, 1, d)

    def split_out(w):   # [C, C] -> [heads, d, C]
        return w.reshape(heads, d, channels)

    def stack(fn):      # -> [blocks, ...]
        return jnp.stack([fn(bp) for bp in blocks_p], axis=0)

    def stack_h(fn):    # -> [blocks*heads, ...]
        arr = jnp.stack([fn(bp) for bp in blocks_p], axis=0)
        return arr.reshape((nblk * heads,) + arr.shape[2:])

    def mha_pack(path, prefix, out):
        def g(bp):
            node = bp
            for k in path:
                node = node[k]
            return node
        out[prefix + "qw"] = stack_h(lambda bp: split_in(g(bp)["q"]["w"]) * scale)
        out[prefix + "qb"] = stack_h(lambda bp: split_b(g(bp)["q"]["b"]) * scale)
        out[prefix + "kw"] = stack_h(lambda bp: split_in(g(bp)["k"]["w"]))
        out[prefix + "kb"] = stack_h(lambda bp: split_b(g(bp)["k"]["b"]))
        out[prefix + "vw"] = stack_h(lambda bp: split_in(g(bp)["v"]["w"]))
        out[prefix + "vb"] = stack_h(lambda bp: split_b(g(bp)["v"]["b"]))
        out[prefix + "ow"] = stack_h(lambda bp: split_out(g(bp)["o"]["w"]))
        out[prefix + "ob"] = stack(lambda bp: g(bp)["o"]["b"][None])

    packed = {}
    packed["embw"] = jnp.transpose(
        params["mapper"]["w"].reshape(-1, nblk, channels), (1, 0, 2))   # [blocks, embeds, C]
    packed["embb"] = params["mapper"]["b"].reshape(nblk, 1, channels)
    mha_pack(("self_mha",), "s", packed)
    mha_pack(("ml", "link_style"), "ls", packed)
    mha_pack(("ml", "link_context"), "lc", packed)
    packed["slng"] = stack(lambda bp: bp["self_ln"]["g"][None])
    packed["slnb"] = stack(lambda bp: bp["self_ln"]["b"][None])
    packed["mlng"] = stack(lambda bp: bp["ml_ln"]["g"][None])
    packed["mlnb"] = stack(lambda bp: bp["ml_ln"]["b"][None])
    packed["flng"] = stack(lambda bp: bp["ffn_ln"]["g"][None])
    packed["flnb"] = stack(lambda bp: bp["ffn_ln"]["b"][None])
    packed["f1w"] = stack(lambda bp: bp["ffn"]["lin1"]["w"])
    packed["f1b"] = stack(lambda bp: bp["ffn"]["lin1"]["b"][None])
    packed["f2w"] = stack(lambda bp: bp["ffn"]["lin2"]["w"])
    packed["f2b"] = stack(lambda bp: bp["ffn"]["lin2"]["b"][None])
    return packed


def sinusoidal_pe(size, channels):
    pos = jnp.arange(size, dtype=jnp.float32)
    i = jnp.arange(0, channels, 2, dtype=jnp.float32)
    ctx = pos[:, None] * jnp.exp(-jnp.log(10000.0) * i / channels)[None]
    return jnp.stack([jnp.sin(ctx), jnp.cos(ctx)], axis=-1).reshape(size, channels)


# ------------------------------- forward wrapper -------------------------------

def decoder_forward(params, x, contents, style, steps, embed, mask=None, *,
                    heads, channels, blocks, causal=False):
    b, t, c = x.shape
    s = contents.shape[1]
    tokens = params["weight"].shape[-1]
    has_mask = mask is not None
    mask_arr = jnp.ones((b, t, s), jnp.float32) if mask is None else mask

    ms_row = mask_arr[:, :, 0][:, None, :]          # [B, 1, T]
    ms_col = mask_arr[:, :, :1]                     # [B, T, 1]
    m00 = mask_arr[:, :1, :1]                       # [B, 1, 1]
    embed3 = embed[:, None, :]                      # [B, 1, embeds]
    pe = sinusoidal_pe(t, c)                        # [T, C]
    linkkey = params["linkkey"][0]                  # [P, styles]
    w_final = params["weight"]                      # [steps_n, C, tokens]
    b_final = params["bias"][:, None, :]            # [steps_n, 1, tokens]

    packed = _pack_params(params, channels=channels, heads=heads)

    def batch_spec(a):
        z = (0,) * (a.ndim - 1)
        return pl.BlockSpec((1,) + a.shape[1:], lambda i, st, _z=z: (i,) + _z)

    def full_spec(a):
        z = (0,) * a.ndim
        return pl.BlockSpec(a.shape, lambda i, st, _z=z: _z)

    def step_spec(a):
        z = (0,) * (a.ndim - 1)
        return pl.BlockSpec((1,) + a.shape[1:], lambda i, st, _z=z: (st[i],) + _z)

    act_arrays = [x, contents, style, embed3, mask_arr, ms_row, ms_col, m00]
    shared_arrays = [pe, linkkey]
    packed_arrays = [packed[k] for k in _PACKED_ORDER]
    final_arrays = [w_final, b_final]

    in_specs = ([batch_spec(a) for a in act_arrays]
                + [full_spec(a) for a in shared_arrays + packed_arrays]
                + [step_spec(a) for a in final_arrays])

    kern = functools.partial(_decoder_kernel, heads=heads, blocks=blocks,
                             causal=causal, has_mask=has_mask)
    return pl.pallas_call(
        kern,
        out_shape=jax.ShapeDtypeStruct((b, t, tokens), jnp.float32),
        grid_spec=pltpu.PrefetchScalarGridSpec(
            num_scalar_prefetch=1,
            grid=(b,),
            in_specs=in_specs,
            out_specs=pl.BlockSpec((1, t, tokens), lambda i, st: (i, 0, 0)),
        ),
        compiler_params=pltpu.CompilerParams(
            dimension_semantics=("parallel",)),   # v7x: one batch per TensorCore
    )(steps.astype(jnp.int32), *act_arrays, *shared_arrays, *packed_arrays,
      *final_arrays)


# ------------------------------- parameter init --------------------------------

def init_decoder_params(key, *, channels, contexts, styles, embeds, heads, ffn,
                        prototypes, blocks, steps, tokens):
    def linear_p(k, fin, fout):
        kw, kb = jax.random.split(k)
        lim = 1.0 / math.sqrt(fin)
        return {"w": jax.random.uniform(kw, (fin, fout), jnp.float32, -lim, lim),
                "b": jax.random.uniform(kb, (fout,), jnp.float32, -lim, lim)}

    def mha_p(k, keys_dim, queries_dim):
        kq, kk, kv, ko = jax.random.split(k, 4)
        return {"q": linear_p(kq, queries_dim, channels),
                "k": linear_p(kk, keys_dim, channels),
                "v": linear_p(kv, keys_dim, channels),
                "o": linear_p(ko, channels, channels)}

    def ln_p():
        return {"g": jnp.ones((channels,), jnp.float32),
                "b": jnp.zeros((channels,), jnp.float32)}

    keys = jax.random.split(key, 4 + blocks)
    params = {
        "mapper": linear_p(keys[0], embeds, channels * blocks),
        "linkkey": jax.random.normal(keys[1], (1, prototypes, styles), jnp.float32),
        "weight": jax.random.normal(keys[2], (steps, channels, tokens), jnp.float32),
        "bias": jax.random.normal(keys[3], (steps, tokens), jnp.float32),
        "blocks": [],
    }
    for i in range(blocks):
        k_self, k_ls, k_lc, k_proj, k_f1, k_f2 = jax.random.split(keys[4 + i], 6)
        params["blocks"].append({
            "self_ln": ln_p(),
            "self_mha": mha_p(k_self, channels, channels),
            "ml_ln": ln_p(),
            "ml": {
                "proj": linear_p(k_proj, channels, channels * 2),  # declared but unused by forward
                "link_style": mha_p(k_ls, styles, channels),
                "link_context": mha_p(k_lc, contexts, channels),
            },
            "ffn_ln": ln_p(),
            "ffn": {"lin1": linear_p(k_f1, channels, ffn),
                    "lin2": linear_p(k_f2, ffn, channels)},
        })
    return params


# ------------------------------------ main --------------------------------------

if __name__ == "__main__":
    B, T, S = 2, 8, 10
    channels, contexts, styles, embeds = 32, 24, 16, 20
    heads, ffn, prototypes, blocks_n = 2, 48, 4, 2
    steps_n, tokens = 4, 12

    root = jax.random.PRNGKey(0)
    kp, kx, kc, ks, ke = jax.random.split(root, 5)
    params = init_decoder_params(
        kp, channels=channels, contexts=contexts, styles=styles, embeds=embeds,
        heads=heads, ffn=ffn, prototypes=prototypes, blocks=blocks_n,
        steps=steps_n, tokens=tokens)

    x = jax.random.normal(kx, (B, T, channels), jnp.float32)
    contents = jax.random.normal(kc, (B, S, contexts), jnp.float32)
    style = jax.random.normal(ks, (B, prototypes, styles), jnp.float32)
    embed = jax.random.normal(ke, (B, embeds), jnp.float32)
    steps = jnp.array([1, 3], dtype=jnp.int32)
    mask = jnp.ones((B, T, S), jnp.float32)

    fwd = jax.jit(functools.partial(decoder_forward, heads=heads, channels=channels,
                                    blocks=blocks_n, causal=False))
    out = fwd(params, x, contents, style, steps, embed, mask)
    out = jax.block_until_ready(out)
    assert out.shape == (B, T, tokens), out.shape
    assert bool(jnp.all(jnp.isfinite(out))), "non-finite output"
    print("KERNEL_OK")
</pallas_src>

<mosaic_0001>
module attributes {stable_mosaic.version = 11 : i64} {
  func.func @_decoder_kernel(%arg0: i32, %arg1: memref<2xi32, #tpu.memory_space<smem>>, %arg2: memref<1x8x32xf32, #tpu.memory_space<vmem>>, %arg3: memref<1x10x24xf32, #tpu.memory_space<vmem>>, %arg4: memref<1x4x16xf32, #tpu.memory_space<vmem>>, %arg5: memref<1x1x20xf32, #tpu.memory_space<vmem>>, %arg6: memref<1x8x10xf32, #tpu.memory_space<vmem>>, %arg7: memref<1x1x8xf32, #tpu.memory_space<vmem>>, %arg8: memref<1x8x1xf32, #tpu.memory_space<vmem>>, %arg9: memref<1x1x1xf32, #tpu.memory_space<vmem>>, %arg10: memref<8x32xf32, #tpu.memory_space<vmem>>, %arg11: memref<4x16xf32, #tpu.memory_space<vmem>>, %arg12: memref<2x20x32xf32, #tpu.memory_space<vmem>>, %arg13: memref<2x1x32xf32, #tpu.memory_space<vmem>>, %arg14: memref<4x32x16xf32, #tpu.memory_space<vmem>>, %arg15: memref<4x1x16xf32, #tpu.memory_space<vmem>>, %arg16: memref<4x32x16xf32, #tpu.memory_space<vmem>>, %arg17: memref<4x1x16xf32, #tpu.memory_space<vmem>>, %arg18: memref<4x32x16xf32, #tpu.memory_space<vmem>>, %arg19: memref<4x1x16xf32, #tpu.memory_space<vmem>>, %arg20: memref<4x16x32xf32, #tpu.memory_space<vmem>>, %arg21: memref<2x1x32xf32, #tpu.memory_space<vmem>>, %arg22: memref<4x32x16xf32, #tpu.memory_space<vmem>>, %arg23: memref<4x1x16xf32, #tpu.memory_space<vmem>>, %arg24: memref<4x16x16xf32, #tpu.memory_space<vmem>>, %arg25: memref<4x1x16xf32, #tpu.memory_space<vmem>>, %arg26: memref<4x16x16xf32, #tpu.memory_space<vmem>>, %arg27: memref<4x1x16xf32, #tpu.memory_space<vmem>>, %arg28: memref<4x16x32xf32, #tpu.memory_space<vmem>>, %arg29: memref<2x1x32xf32, #tpu.memory_space<vmem>>, %arg30: memref<4x32x16xf32, #tpu.memory_space<vmem>>, %arg31: memref<4x1x16xf32, #tpu.memory_space<vmem>>, %arg32: memref<4x24x16xf32, #tpu.memory_space<vmem>>, %arg33: memref<4x1x16xf32, #tpu.memory_space<vmem>>, %arg34: memref<4x24x16xf32, #tpu.memory_space<vmem>>, %arg35: memref<4x1x16xf32, #tpu.memory_space<vmem>>, %arg36: memref<4x16x32xf32, #tpu.memory_space<vmem>>, %arg37: memref<2x1x32xf32, #tpu.memory_space<vmem>>, %arg38: memref<2x1x32xf32, #tpu.memory_space<vmem>>, %arg39: memref<2x1x32xf32, #tpu.memory_space<vmem>>, %arg40: memref<2x1x32xf32, #tpu.memory_space<vmem>>, %arg41: memref<2x1x32xf32, #tpu.memory_space<vmem>>, %arg42: memref<2x1x32xf32, #tpu.memory_space<vmem>>, %arg43: memref<2x1x32xf32, #tpu.memory_space<vmem>>, %arg44: memref<2x32x48xf32, #tpu.memory_space<vmem>>, %arg45: memref<2x1x48xf32, #tpu.memory_space<vmem>>, %arg46: memref<2x48x32xf32, #tpu.memory_space<vmem>>, %arg47: memref<2x1x32xf32, #tpu.memory_space<vmem>>, %arg48: memref<1x32x12xf32, #tpu.memory_space<vmem>>, %arg49: memref<1x1x12xf32, #tpu.memory_space<vmem>>, %arg50: memref<1x8x12xf32, #tpu.memory_space<vmem>>) attributes {dimension_semantics = [#tpu.dimension_semantics<parallel>], iteration_bounds = array<i64: 2>, scalar_prefetch = 1 : i64, scratch_operands = 0 : i64, tpu.core_type = #tpu.core_type<tc>, window_params = [{transform_indices = @transform_0, window_bounds = array<i64: 1, 8, 32>}, {transform_indices = @transform_1, window_bounds = array<i64: 1, 10, 24>}, {transform_indices = @transform_2, window_bounds = array<i64: 1, 4, 16>}, {transform_indices = @transform_3, window_bounds = array<i64: 1, 1, 20>}, {transform_indices = @transform_4, window_bounds = array<i64: 1, 8, 10>}, {transform_indices = @transform_5, window_bounds = array<i64: 1, 1, 8>}, {transform_indices = @transform_6, window_bounds = array<i64: 1, 8, 1>}, {transform_indices = @transform_7, window_bounds = array<i64: 1, 1, 1>}, {pipeline_mode = #tpu.pipeline_mode<synchronous>, transform_indices = @transform_8, window_bounds = array<i64: 8, 32>}, {pipeline_mode = #tpu.pipeline_mode<synchronous>, transform_indices = @transform_9, window_bounds = array<i64: 4, 16>}, {pipeline_mode = #tpu.pipeline_mode<synchronous>, transform_indices = @transform_10, window_bounds = array<i64: 2, 20, 32>}, {pipeline_mode = #tpu.pipeline_mode<synchronous>, transform_indices = @transform_11, window_bounds = array<i64: 2, 1, 32>}, {pipeline_mode = #tpu.pipeline_mode<synchronous>, transform_indices = @transform_12, window_bounds = array<i64: 4, 32, 16>}, {pipeline_mode = #tpu.pipeline_mode<synchronous>, transform_indices = @transform_13, window_bounds = array<i64: 4, 1, 16>}, {pipeline_mode = #tpu.pipeline_mode<synchronous>, transform_indices = @transform_14, window_bounds = array<i64: 4, 32, 16>}, {pipeline_mode = #tpu.pipeline_mode<synchronous>, transform_indices = @transform_15, window_bounds = array<i64: 4, 1, 16>}, {pipeline_mode = #tpu.pipeline_mode<synchronous>, transform_indices = @transform_16, window_bounds = array<i64: 4, 32, 16>}, {pipeline_mode = #tpu.pipeline_mode<synchronous>, transform_indices = @transform_17, window_bounds = array<i64: 4, 1, 16>}, {pipeline_mode = #tpu.pipeline_mode<synchronous>, transform_indices = @transform_18, window_bounds = array<i64: 4, 16, 32>}, {pipeline_mode = #tpu.pipeline_mode<synchronous>, transform_indices = @transform_19, window_bounds = array<i64: 2, 1, 32>}, {pipeline_mode = #tpu.pipeline_mode<synchronous>, transform_indices = @transform_20, window_bounds = array<i64: 4, 32, 16>}, {pipeline_mode = #tpu.pipeline_mode<synchronous>, transform_indices = @transform_21, window_bounds = array<i64: 4, 1, 16>}, {pipeline_mode = #tpu.pipeline_mode<synchronous>, transform_indices = @transform_22, window_bounds = array<i64: 4, 16, 16>}, {pipeline_mode = #tpu.pipeline_mode<synchronous>, transform_indices = @transform_23, window_bounds = array<i64: 4, 1, 16>}, {pipeline_mode = #tpu.pipeline_mode<synchronous>, transform_indices = @transform_24, window_bounds = array<i64: 4, 16, 16>}, {pipeline_mode = #tpu.pipeline_mode<synchronous>, transform_indices = @transform_25, window_bounds = array<i64: 4, 1, 16>}, {pipeline_mode = #tpu.pipeline_mode<synchronous>, transform_indices = @transform_26, window_bounds = array<i64: 4, 16, 32>}, {pipeline_mode = #tpu.pipeline_mode<synchronous>, transform_indices = @transform_27, window_bounds = array<i64: 2, 1, 32>}, {pipeline_mode = #tpu.pipeline_mode<synchronous>, transform_indices = @transform_28, window_bounds = array<i64: 4, 32, 16>}, {pipeline_mode = #tpu.pipeline_mode<synchronous>, transform_indices = @transform_29, window_bounds = array<i64: 4, 1, 16>}, {pipeline_mode = #tpu.pipeline_mode<synchronous>, transform_indices = @transform_30, window_bounds = array<i64: 4, 24, 16>}, {pipeline_mode = #tpu.pipeline_mode<synchronous>, transform_indices = @transform_31, window_bounds = array<i64: 4, 1, 16>}, {pipeline_mode = #tpu.pipeline_mode<synchronous>, transform_indices = @transform_32, window_bounds = array<i64: 4, 24, 16>}, {pipeline_mode = #tpu.pipeline_mode<synchronous>, transform_indices = @transform_33, window_bounds = array<i64: 4, 1, 16>}, {pipeline_mode = #tpu.pipeline_mode<synchronous>, transform_indices = @transform_34, window_bounds = array<i64: 4, 16, 32>}, {pipeline_mode = #tpu.pipeline_mode<synchronous>, transform_indices = @transform_35, window_bounds = array<i64: 2, 1, 32>}, {pipeline_mode = #tpu.pipeline_mode<synchronous>, transform_indices = @transform_36, window_bounds = array<i64: 2, 1, 32>}, {pipeline_mode = #tpu.pipeline_mode<synchronous>, transform_indices = @transform_37, window_bounds = array<i64: 2, 1, 32>}, {pipeline_mode = #tpu.pipeline_mode<synchronous>, transform_indices = @transform_38, window_bounds = array<i64: 2, 1, 32>}, {pipeline_mode = #tpu.pipeline_mode<synchronous>, transform_indices = @transform_39, window_bounds = array<i64: 2, 1, 32>}, {pipeline_mode = #tpu.pipeline_mode<synchronous>, transform_indices = @transform_40, window_bounds = array<i64: 2, 1, 32>}, {pipeline_mode = #tpu.pipeline_mode<synchronous>, transform_indices = @transform_41, window_bounds = array<i64: 2, 1, 32>}, {pipeline_mode = #tpu.pipeline_mode<synchronous>, transform_indices = @transform_42, window_bounds = array<i64: 2, 32, 48>}, {pipeline_mode = #tpu.pipeline_mode<synchronous>, transform_indices = @transform_43, window_bounds = array<i64: 2, 1, 48>}, {pipeline_mode = #tpu.pipeline_mode<synchronous>, transform_indices = @transform_44, window_bounds = array<i64: 2, 48, 32>}, {pipeline_mode = #tpu.pipeline_mode<synchronous>, transform_indices = @transform_45, window_bounds = array<i64: 2, 1, 32>}, {transform_indices = @transform_46, window_bounds = array<i64: 1, 32, 12>}, {transform_indices = @transform_47, window_bounds = array<i64: 1, 1, 12>}, {transform_indices = @transform_48, window_bounds = array<i64: 1, 8, 12>}]} {
    %c0 = arith.constant 0 : index
    %c0_0 = arith.constant 0 : index
    %c0_1 = arith.constant 0 : index
    %0 = vector.load %arg2[%c0, %c0_0, %c0_1] : memref<1x8x32xf32, #tpu.memory_space<vmem>>, vector<1x8x32xf32>
    %1 = vector.shape_cast %0 : vector<1x8x32xf32> to vector<8x32xf32>
    %c0_2 = arith.constant 0 : index
    %c0_3 = arith.constant 0 : index
    %2 = vector.load %arg10[%c0_2, %c0_3] : memref<8x32xf32, #tpu.memory_space<vmem>>, vector<8x32xf32>
    %3 = arith.addf %1, %2 : vector<8x32xf32>
    %c0_4 = arith.constant 0 : index
    %c0_5 = arith.constant 0 : index
    %c0_6 = arith.constant 0 : index
    %4 = vector.load %arg3[%c0_4, %c0_5, %c0_6] : memref<1x10x24xf32, #tpu.memory_space<vmem>>, vector<1x10x24xf32>
    %5 = vector.shape_cast %4 : vector<1x10x24xf32> to vector<10x24xf32>
    %c0_7 = arith.constant 0 : index
    %c0_8 = arith.constant 0 : index
    %c0_9 = arith.constant 0 : index
    %6 = vector.load %arg4[%c0_7, %c0_8, %c0_9] : memref<1x4x16xf32, #tpu.memory_space<vmem>>, vector<1x4x16xf32>
    %7 = vector.shape_cast %6 : vector<1x4x16xf32> to vector<4x16xf32>
    %c0_10 = arith.constant 0 : index
    %c0_11 = arith.constant 0 : index
    %8 = vector.load %arg11[%c0_10, %c0_11] : memref<4x16xf32, #tpu.memory_space<vmem>>, vector<4x16xf32>
    %c0_12 = arith.constant 0 : index
    %c0_13 = arith.constant 0 : index
    %c0_14 = arith.constant 0 : index
    %9 = vector.load %arg5[%c0_12, %c0_13, %c0_14] : memref<1x1x20xf32, #tpu.memory_space<vmem>>, vector<1x1x20xf32>
    %10 = vector.shape_cast %9 : vector<1x1x20xf32> to vector<1x20xf32>
    %c0_15 = arith.constant 0 : index
    %c0_16 = arith.constant 0 : index
    %c0_17 = arith.constant 0 : index
    %11 = vector.load %arg8[%c0_15, %c0_16, %c0_17] : memref<1x8x1xf32, #tpu.memory_space<vmem>>, vector<1x8x1xf32>
    %12 = vector.shape_cast %11 : vector<1x8x1xf32> to vector<8x1xf32>
    %c0_18 = arith.constant 0 : index
    %c0_19 = arith.constant 0 : index
    %c0_20 = arith.constant 0 : index
    %13 = vector.load %arg9[%c0_18, %c0_19, %c0_20] : memref<1x1x1xf32, #tpu.memory_space<vmem>>, vector<1x1x1xf32>
    %14 = vector.shape_cast %13 : vector<1x1x1xf32> to vector<1x1xf32>
    %c0_21 = arith.constant 0 : index
    %c0_22 = arith.constant 0 : index
    %c0_23 = arith.constant 0 : index
    %15 = vector.load %arg7[%c0_21, %c0_22, %c0_23] : memref<1x1x8xf32, #tpu.memory_space<vmem>>, vector<1x1x8xf32>
    %16 = vector.shape_cast %15 : vector<1x1x8xf32> to vector<1x8xf32>
    %cst = arith.constant 1.000000e+00 : f32
    %17 = vector.broadcast %cst : f32 to vector<1x8xf32>
    %18 = arith.subf %16, %17 : vector<1x8xf32>
    %cst_24 = arith.constant 1.000000e+30 : f32
    %19 = vector.broadcast %cst_24 : f32 to vector<1x8xf32>
    %20 = arith.mulf %18, %19 : vector<1x8xf32>
    %c0_25 = arith.constant 0 : index
    %c0_26 = arith.constant 0 : index
    %c0_27 = arith.constant 0 : index
    %21 = vector.load %arg6[%c0_25, %c0_26, %c0_27] : memref<1x8x10xf32, #tpu.memory_space<vmem>>, vector<1x8x10xf32>
    %22 = vector.shape_cast %21 : vector<1x8x10xf32> to vector<8x10xf32>
    %cst_28 = arith.constant 1.000000e+00 : f32
    %23 = vector.broadcast %cst_28 : f32 to vector<8x10xf32>
    %24 = arith.subf %22, %23 : vector<8x10xf32>
    %cst_29 = arith.constant 1.000000e+30 : f32
    %25 = vector.broadcast %cst_29 : f32 to vector<8x10xf32>
    %26 = arith.mulf %24, %25 : vector<8x10xf32>
    %c0_30 = arith.constant 0 : index
    %c0_31 = arith.constant 0 : index
    %c0_32 = arith.constant 0 : index
    %27 = vector.load %arg12[%c0_30, %c0_31, %c0_32] : memref<2x20x32xf32, #tpu.memory_space<vmem>>, vector<1x20x32xf32>
    %28 = vector.shape_cast %27 : vector<1x20x32xf32> to vector<20x32xf32>
    %cst_33 = arith.constant dense<0.000000e+00> : vector<1x32xf32>
    %29 = tpu.matmul %10, %28, %cst_33 {dimension_numbers = #tpu.dot_dimension_numbers<[1], [0], [0], [1], [0, 0, 1, 1], [], []>} : vector<1x20xf32>, vector<20x32xf32>, vector<1x32xf32> -> vector<1x32xf32>
    %c0_34 = arith.constant 0 : index
    %c0_35 = arith.constant 0 : index
    %c0_36 = arith.constant 0 : index
    %30 = vector.load %arg13[%c0_34, %c0_35, %c0_36] : memref<2x1x32xf32, #tpu.memory_space<vmem>>, vector<1x1x32xf32>
    %31 = vector.shape_cast %30 : vector<1x1x32xf32> to vector<1x32xf32>
    %32 = arith.addf %29, %31 : vector<1x32xf32>
    %33 = vector.broadcast %32 : vector<1x32xf32> to vector<8x32xf32>
    %34 = arith.addf %3, %33 : vector<8x32xf32>
    %c0_37 = arith.constant 0 : index
    %c0_38 = arith.constant 0 : index
    %c0_39 = arith.constant 0 : index
    %35 = vector.load %arg21[%c0_37, %c0_38, %c0_39] : memref<2x1x32xf32, #tpu.memory_space<vmem>>, vector<1x1x32xf32>
    %36 = vector.shape_cast %35 : vector<1x1x32xf32> to vector<1x32xf32>
    %c0_40 = arith.constant 0 : index
    %c0_41 = arith.constant 0 : index
    %c0_42 = arith.constant 0 : index
    %37 = vector.load %arg14[%c0_40, %c0_41, %c0_42] : memref<4x32x16xf32, #tpu.memory_space<vmem>>, vector<1x32x16xf32>
    %38 = vector.shape_cast %37 : vector<1x32x16xf32> to vector<32x16xf32>
    %cst_43 = arith.constant dense<0.000000e+00> : vector<8x16xf32>
    %39 = tpu.matmul %34, %38, %cst_43 {dimension_numbers = #tpu.dot_dimension_numbers<[1], [0], [0], [1], [0, 0, 1, 1], [], []>} : vector<8x32xf32>, vector<32x16xf32>, vector<8x16xf32> -> vector<8x16xf32>
    %c0_44 = arith.constant 0 : index
    %c0_45 = arith.constant 0 : index
    %c0_46 = arith.constant 0 : index
    %40 = vector.load %arg15[%c0_44, %c0_45, %c0_46] : memref<4x1x16xf32, #tpu.memory_space<vmem>>, vector<1x1x16xf32>
    %41 = vector.shape_cast %40 : vector<1x1x16xf32> to vector<1x16xf32>
    %42 = vector.broadcast %41 : vector<1x16xf32> to vector<8x16xf32>
    %43 = arith.addf %39, %42 : vector<8x16xf32>
    %c0_47 = arith.constant 0 : index
    %c0_48 = arith.constant 0 : index
    %c0_49 = arith.constant 0 : index
    %44 = vector.load %arg16[%c0_47, %c0_48, %c0_49] : memref<4x32x16xf32, #tpu.memory_space<vmem>>, vector<1x32x16xf32>
    %45 = vector.shape_cast %44 : vector<1x32x16xf32> to vector<32x16xf32>
    %cst_50 = arith.constant dense<0.000000e+00> : vector<8x16xf32>
    %46 = tpu.matmul %34, %45, %cst_50 {dimension_numbers = #tpu.dot_dimension_numbers<[1], [0], [0], [1], [0, 0, 1, 1], [], []>} : vector<8x32xf32>, vector<32x16xf32>, vector<8x16xf32> -> vector<8x16xf32>
    %c0_51 = arith.constant 0 : index
    %c0_52 = arith.constant 0 : index
    %c0_53 = arith.constant 0 : index
    %47 = vector.load %arg17[%c0_51, %c0_52, %c0_53] : memref<4x1x16xf32, #tpu.memory_space<vmem>>, vector<1x1x16xf32>
    %48 = vector.shape_cast %47 : vector<1x1x16xf32> to vector<1x16xf32>
    %49 = vector.broadcast %48 : vector<1x16xf32> to vector<8x16xf32>
    %50 = arith.addf %46, %49 : vector<8x16xf32>
    %c0_54 = arith.constant 0 : index
    %c0_55 = arith.constant 0 : index
    %c0_56 = arith.constant 0 : index
    %51 = vector.load %arg18[%c0_54, %c0_55, %c0_56] : memref<4x32x16xf32, #tpu.memory_space<vmem>>, vector<1x32x16xf32>
    %52 = vector.shape_cast %51 : vector<1x32x16xf32> to vector<32x16xf32>
    %cst_57 = arith.constant dense<0.000000e+00> : vector<8x16xf32>
    %53 = tpu.matmul %34, %52, %cst_57 {dimension_numbers = #tpu.dot_dimension_numbers<[1], [0], [0], [1], [0, 0, 1, 1], [], []>} : vector<8x32xf32>, vector<32x16xf32>, vector<8x16xf32> -> vector<8x16xf32>
    %c0_58 = arith.constant 0 : index
    %c0_59 = arith.constant 0 : index
    %c0_60 = arith.constant 0 : index
    %54 = vector.load %arg19[%c0_58, %c0_59, %c0_60] : memref<4x1x16xf32, #tpu.memory_space<vmem>>, vector<1x1x16xf32>
    %55 = vector.shape_cast %54 : vector<1x1x16xf32> to vector<1x16xf32>
    %56 = vector.broadcast %55 : vector<1x16xf32> to vector<8x16xf32>
    %57 = arith.addf %53, %56 : vector<8x16xf32>
    %cst_61 = arith.constant dense<0.000000e+00> : vector<8x8xf32>
    %58 = tpu.matmul %43, %50, %cst_61 {dimension_numbers = #tpu.dot_dimension_numbers<[1], [1], [0], [0], [0, 0, 1, 0], [], []>} : vector<8x16xf32>, vector<8x16xf32>, vector<8x8xf32> -> vector<8x8xf32>
    %59 = vector.broadcast %20 : vector<1x8xf32> to vector<8x8xf32>
    %60 = arith.addf %58, %59 : vector<8x8xf32>
    %cst_62 = arith.constant dense<0xFF800000> : vector<8xf32>
    %61 = vector.multi_reduction <maximumf>, %60, %cst_62 [1] : vector<8x8xf32> to vector<8xf32>
    %62 = vector.shape_cast %61 : vector<8xf32> to vector<8x1xf32>
    %63 = vector.broadcast %62 : vector<8x1xf32> to vector<8x8xf32>
    %64 = arith.subf %60, %63 : vector<8x8xf32>
    %65 = math.exp %64 : vector<8x8xf32>
    %cst_63 = arith.constant dense<0.000000e+00> : vector<8xf32>
    %66 = vector.multi_reduction <add>, %65, %cst_63 [1] : vector<8x8xf32> to vector<8xf32>
    %67 = vector.shape_cast %66 : vector<8xf32> to vector<8x1xf32>
    %68 = tpu.reciprocal %67 {approx = true} : vector<8x1xf32> -> vector<8x1xf32>
    %69 = vector.broadcast %68 : vector<8x1xf32> to vector<8x8xf32>
    %70 = arith.mulf %65, %69 : vector<8x8xf32>
    %cst_64 = arith.constant dense<0.000000e+00> : vector<8x16xf32>
    %71 = tpu.matmul %70, %57, %cst_64 {dimension_numbers = #tpu.dot_dimension_numbers<[1], [0], [0], [1], [0, 0, 1, 1], [], []>} : vector<8x8xf32>, vector<8x16xf32>, vector<8x16xf32> -> vector<8x16xf32>
    %c0_65 = arith.constant 0 : index
    %c0_66 = arith.constant 0 : index
    %c0_67 = arith.constant 0 : index
    %72 = vector.load %arg20[%c0_65, %c0_66, %c0_67] : memref<4x16x32xf32, #tpu.memory_space<vmem>>, vector<1x16x32xf32>
    %73 = vector.shape_cast %72 : vector<1x16x32xf32> to vector<16x32xf32>
    %cst_68 = arith.constant dense<0.000000e+00> : vector<8x32xf32>
    %74 = tpu.matmul %71, %73, %cst_68 {dimension_numbers = #tpu.dot_dimension_numbers<[1], [0], [0], [1], [0, 0, 1, 1], [], []>} : vector<8x16xf32>, vector<16x32xf32>, vector<8x32xf32> -> vector<8x32xf32>
    %c1 = arith.constant 1 : index
    %c0_69 = arith.constant 0 : index
    %c0_70 = arith.constant 0 : index
    %75 = vector.load %arg14[%c1, %c0_69, %c0_70] : memref<4x32x16xf32, #tpu.memory_space<vmem>>, vector<1x32x16xf32>
    %76 = vector.shape_cast %75 : vector<1x32x16xf32> to vector<32x16xf32>
    %cst_71 = arith.constant dense<0.000000e+00> : vector<8x16xf32>
    %77 = tpu.matmul %34, %76, %cst_71 {dimension_numbers = #tpu.dot_dimension_numbers<[1], [0], [0], [1], [0, 0, 1, 1], [], []>} : vector<8x32xf32>, vector<32x16xf32>, vector<8x16xf32> -> vector<8x16xf32>
    %c1_72 = arith.constant 1 : index
    %c0_73 = arith.constant 0 : index
    %c0_74 = arith.constant 0 : index
    %78 = vector.load %arg15[%c1_72, %c0_73, %c0_74] : memref<4x1x16xf32, #tpu.memory_space<vmem>>, vector<1x1x16xf32>
    %79 = vector.shape_cast %78 : vector<1x1x16xf32> to vector<1x16xf32>
    %80 = vector.broadcast %79 : vector<1x16xf32> to vector<8x16xf32>
    %81 = arith.addf %77, %80 : vector<8x16xf32>
    %c1_75 = arith.constant 1 : index
    %c0_76 = arith.constant 0 : index
    %c0_77 = arith.constant 0 : index
    %82 = vector.load %arg16[%c1_75, %c0_76, %c0_77] : memref<4x32x16xf32, #tpu.memory_space<vmem>>, vector<1x32x16xf32>
    %83 = vector.shape_cast %82 : vector<1x32x16xf32> to vector<32x16xf32>
    %cst_78 = arith.constant dense<0.000000e+00> : vector<8x16xf32>
    %84 = tpu.matmul %34, %83, %cst_78 {dimension_numbers = #tpu.dot_dimension_numbers<[1], [0], [0], [1], [0, 0, 1, 1], [], []>} : vector<8x32xf32>, vector<32x16xf32>, vector<8x16xf32> -> vector<8x16xf32>
    %c1_79 = arith.constant 1 : index
    %c0_80 = arith.constant 0 : index
    %c0_81 = arith.constant 0 : index
    %85 = vector.load %arg17[%c1_79, %c0_80, %c0_81] : memref<4x1x16xf32, #tpu.memory_space<vmem>>, vector<1x1x16xf32>
    %86 = vector.shape_cast %85 : vector<1x1x16xf32> to vector<1x16xf32>
    %87 = vector.broadcast %86 : vector<1x16xf32> to vector<8x16xf32>
    %88 = arith.addf %84, %87 : vector<8x16xf32>
    %c1_82 = arith.constant 1 : index
    %c0_83 = arith.constant 0 : index
    %c0_84 = arith.constant 0 : index
    %89 = vector.load %arg18[%c1_82, %c0_83, %c0_84] : memref<4x32x16xf32, #tpu.memory_space<vmem>>, vector<1x32x16xf32>
    %90 = vector.shape_cast %89 : vector<1x32x16xf32> to vector<32x16xf32>
    %cst_85 = arith.constant dense<0.000000e+00> : vector<8x16xf32>
    %91 = tpu.matmul %34, %90, %cst_85 {dimension_numbers = #tpu.dot_dimension_numbers<[1], [0], [0], [1], [0, 0, 1, 1], [], []>} : vector<8x32xf32>, vector<32x16xf32>, vector<8x16xf32> -> vector<8x16xf32>
    %c1_86 = arith.constant 1 : index
    %c0_87 = arith.constant 0 : index
    %c0_88 = arith.constant 0 : index
    %92 = vector.load %arg19[%c1_86, %c0_87, %c0_88] : memref<4x1x16xf32, #tpu.memory_space<vmem>>, vector<1x1x16xf32>
    %93 = vector.shape_cast %92 : vector<1x1x16xf32> to vector<1x16xf32>
    %94 = vector.broadcast %93 : vector<1x16xf32> to vector<8x16xf32>
    %95 = arith.addf %91, %94 : vector<8x16xf32>
    %cst_89 = arith.constant dense<0.000000e+00> : vector<8x8xf32>
    %96 = tpu.matmul %81, %88, %cst_89 {dimension_numbers = #tpu.dot_dimension_numbers<[1], [1], [0], [0], [0, 0, 1, 0], [], []>} : vector<8x16xf32>, vector<8x16xf32>, vector<8x8xf32> -> vector<8x8xf32>
    %97 = vector.broadcast %20 : vector<1x8xf32> to vector<8x8xf32>
    %98 = arith.addf %96, %97 : vector<8x8xf32>
    %cst_90 = arith.constant dense<0xFF800000> : vector<8xf32>
    %99 = vector.multi_reduction <maximumf>, %98, %cst_90 [1] : vector<8x8xf32> to vector<8xf32>
    %100 = vector.shape_cast %99 : vector<8xf32> to vector<8x1xf32>
    %101 = vector.broadcast %100 : vector<8x1xf32> to vector<8x8xf32>
    %102 = arith.subf %98, %101 : vector<8x8xf32>
    %103 = math.exp %102 : vector<8x8xf32>
    %cst_91 = arith.constant dense<0.000000e+00> : vector<8xf32>
    %104 = vector.multi_reduction <add>, %103, %cst_91 [1] : vector<8x8xf32> to vector<8xf32>
    %105 = vector.shape_cast %104 : vector<8xf32> to vector<8x1xf32>
    %106 = tpu.reciprocal %105 {approx = true} : vector<8x1xf32> -> vector<8x1xf32>
    %107 = vector.broadcast %106 : vector<8x1xf32> to vector<8x8xf32>
    %108 = arith.mulf %103, %107 : vector<8x8xf32>
    %cst_92 = arith.constant dense<0.000000e+00> : vector<8x16xf32>
    %109 = tpu.matmul %108, %95, %cst_92 {dimension_numbers = #tpu.dot_dimension_numbers<[1], [0], [0], [1], [0, 0, 1, 1], [], []>} : vector<8x8xf32>, vector<8x16xf32>, vector<8x16xf32> -> vector<8x16xf32>
    %c1_93 = arith.constant 1 : index
    %c0_94 = arith.constant 0 : index
    %c0_95 = arith.constant 0 : index
    %110 = vector.load %arg20[%c1_93, %c0_94, %c0_95] : memref<4x16x32xf32, #tpu.memory_space<vmem>>, vector<1x16x32xf32>
    %111 = vector.shape_cast %110 : vector<1x16x32xf32> to vector<16x32xf32>
    %cst_96 = arith.constant dense<0.000000e+00> : vector<8x32xf32>
    %112 = tpu.matmul %109, %111, %cst_96 {dimension_numbers = #tpu.dot_dimension_numbers<[1], [0], [0], [1], [0, 0, 1, 1], [], []>} : vector<8x16xf32>, vector<16x32xf32>, vector<8x32xf32> -> vector<8x32xf32>
    %113 = arith.addf %74, %112 : vector<8x32xf32>
    %114 = vector.broadcast %36 : vector<1x32xf32> to vector<8x32xf32>
    %115 = arith.addf %113, %114 : vector<8x32xf32>
    %116 = vector.broadcast %14 : vector<1x1xf32> to vector<8x1xf32>
    %117 = arith.mulf %12, %116 : vector<8x1xf32>
    %118 = vector.broadcast %117 : vector<8x1xf32> to vector<8x32xf32>
    %119 = arith.mulf %115, %118 : vector<8x32xf32>
    %c0_97 = arith.constant 0 : index
    %c0_98 = arith.constant 0 : index
    %c0_99 = arith.constant 0 : index
    %120 = vector.load %arg38[%c0_97, %c0_98, %c0_99] : memref<2x1x32xf32, #tpu.memory_space<vmem>>, vector<1x1x32xf32>
    %121 = vector.shape_cast %120 : vector<1x1x32xf32> to vector<1x32xf32>
    %c0_100 = arith.constant 0 : index
    %c0_101 = arith.constant 0 : index
    %c0_102 = arith.constant 0 : index
    %122 = vector.load %arg39[%c0_100, %c0_101, %c0_102] : memref<2x1x32xf32, #tpu.memory_space<vmem>>, vector<1x1x32xf32>
    %123 = vector.shape_cast %122 : vector<1x1x32xf32> to vector<1x32xf32>
    %124 = arith.addf %34, %119 : vector<8x32xf32>
    %cst_103 = arith.constant dense<0.000000e+00> : vector<8xf32>
    %125 = vector.multi_reduction <add>, %124, %cst_103 [1] : vector<8x32xf32> to vector<8xf32>
    %126 = vector.shape_cast %125 : vector<8xf32> to vector<8x1xf32>
    %cst_104 = arith.constant 3.200000e+01 : f32
    %127 = vector.broadcast %cst_104 : f32 to vector<8x1xf32>
    %128 = arith.divf %126, %127 : vector<8x1xf32>
    %129 = vector.broadcast %128 : vector<8x1xf32> to vector<8x32xf32>
    %130 = arith.subf %124, %129 : vector<8x32xf32>
    %131 = arith.mulf %130, %130 : vector<8x32xf32>
    %cst_105 = arith.constant dense<0.000000e+00> : vector<8xf32>
    %132 = vector.multi_reduction <add>, %131, %cst_105 [1] : vector<8x32xf32> to vector<8xf32>
    %133 = vector.shape_cast %132 : vector<8xf32> to vector<8x1xf32>
    %cst_106 = arith.constant 3.200000e+01 : f32
    %134 = vector.broadcast %cst_106 : f32 to vector<8x1xf32>
    %135 = arith.divf %133, %134 : vector<8x1xf32>
    %136 = vector.broadcast %128 : vector<8x1xf32> to vector<8x32xf32>
    %137 = arith.subf %124, %136 : vector<8x32xf32>
    %cst_107 = arith.constant 9.99999974E-6 : f32
    %138 = vector.broadcast %cst_107 : f32 to vector<8x1xf32>
    %139 = arith.addf %135, %138 : vector<8x1xf32>
    %140 = math.rsqrt %139 : vector<8x1xf32>
    %141 = vector.broadcast %140 : vector<8x1xf32> to vector<8x32xf32>
    %142 = arith.mulf %137, %141 : vector<8x32xf32>
    %143 = vector.broadcast %121 : vector<1x32xf32> to vector<8x32xf32>
    %144 = arith.mulf %142, %143 : vector<8x32xf32>
    %145 = vector.broadcast %123 : vector<1x32xf32> to vector<8x32xf32>
    %146 = arith.addf %144, %145 : vector<8x32xf32>
    %c0_108 = arith.constant 0 : index
    %c0_109 = arith.constant 0 : index
    %c0_110 = arith.constant 0 : index
    %147 = vector.load %arg29[%c0_108, %c0_109, %c0_110] : memref<2x1x32xf32, #tpu.memory_space<vmem>>, vector<1x1x32xf32>
    %148 = vector.shape_cast %147 : vector<1x1x32xf32> to vector<1x32xf32>
    %c0_111 = arith.constant 0 : index
    %c0_112 = arith.constant 0 : index
    %c0_113 = arith.constant 0 : index
    %149 = vector.load %arg22[%c0_111, %c0_112, %c0_113] : memref<4x32x16xf32, #tpu.memory_space<vmem>>, vector<1x32x16xf32>
    %150 = vector.shape_cast %149 : vector<1x32x16xf32> to vector<32x16xf32>
    %cst_114 = arith.constant dense<0.000000e+00> : vector<8x16xf32>
    %151 = tpu.matmul %146, %150, %cst_114 {dimension_numbers = #tpu.dot_dimension_numbers<[1], [0], [0], [1], [0, 0, 1, 1], [], []>} : vector<8x32xf32>, vector<32x16xf32>, vector<8x16xf32> -> vector<8x16xf32>
    %c0_115 = arith.constant 0 : index
    %c0_116 = arith.constant 0 : index
    %c0_117 = arith.constant 0 : index
    %152 = vector.load %arg23[%c0_115, %c0_116, %c0_117] : memref<4x1x16xf32, #tpu.memory_space<vmem>>, vector<1x1x16xf32>
    %153 = vector.shape_cast %152 : vector<1x1x16xf32> to vector<1x16xf32>
    %154 = vector.broadcast %153 : vector<1x16xf32> to vector<8x16xf32>
    %155 = arith.addf %151, %154 : vector<8x16xf32>
    %c0_118 = arith.constant 0 : index
    %c0_119 = arith.constant 0 : index
    %c0_120 = arith.constant 0 : index
    %156 = vector.load %arg24[%c0_118, %c0_119, %c0_120] : memref<4x16x16xf32, #tpu.memory_space<vmem>>, vector<1x16x16xf32>
    %157 = vector.shape_cast %156 : vector<1x16x16xf32> to vector<16x16xf32>
    %cst_121 = arith.constant dense<0.000000e+00> : vector<4x16xf32>
    %158 = tpu.matmul %8, %157, %cst_121 {dimension_numbers = #tpu.dot_dimension_numbers<[1], [0], [0], [1], [0, 0, 1, 1], [], []>} : vector<4x16xf32>, vector<16x16xf32>, vector<4x16xf32> -> vector<4x16xf32>
    %c0_122 = arith.constant 0 : index
    %c0_123 = arith.constant 0 : index
    %c0_124 = arith.constant 0 : index
    %159 = vector.load %arg25[%c0_122, %c0_123, %c0_124] : memref<4x1x16xf32, #tpu.memory_space<vmem>>, vector<1x1x16xf32>
    %160 = vector.shape_cast %159 : vector<1x1x16xf32> to vector<1x16xf32>
    %161 = vector.broadcast %160 : vector<1x16xf32> to vector<4x16xf32>
    %162 = arith.addf %158, %161 : vector<4x16xf32>
    %c0_125 = arith.constant 0 : index
    %c0_126 = arith.constant 0 : index
    %c0_127 = arith.constant 0 : index
    %163 = vector.load %arg26[%c0_125, %c0_126, %c0_127] : memref<4x16x16xf32, #tpu.memory_space<vmem>>, vector<1x16x16xf32>
    %164 = vector.shape_cast %163 : vector<1x16x16xf32> to vector<16x16xf32>
    %cst_128 = arith.constant dense<0.000000e+00> : vector<4x16xf32>
    %165 = tpu.matmul %7, %164, %cst_128 {dimension_numbers = #tpu.dot_dimension_numbers<[1], [0], [0], [1], [0, 0, 1, 1], [], []>} : vector<4x16xf32>, vector<16x16xf32>, vector<4x16xf32> -> vector<4x16xf32>
    %c0_129 = arith.constant 0 : index
    %c0_130 = arith.constant 0 : index
    %c0_131 = arith.constant 0 : index
    %166 = vector.load %arg27[%c0_129, %c0_130, %c0_131] : memref<4x1x16xf32, #tpu.memory_space<vmem>>, vector<1x1x16xf32>
    %167 = vector.shape_cast %166 : vector<1x1x16xf32> to vector<1x16xf32>
    %168 = vector.broadcast %167 : vector<1x16xf32> to vector<4x16xf32>
    %169 = arith.addf %165, %168 : vector<4x16xf32>
    %cst_132 = arith.constant dense<0.000000e+00> : vector<8x4xf32>
    %170 = tpu.matmul %155, %162, %cst_132 {dimension_numbers = #tpu.dot_dimension_numbers<[1], [1], [0], [0], [0, 0, 1, 0], [], []>} : vector<8x16xf32>, vector<4x16xf32>, vector<8x4xf32> -> vector<8x4xf32>
    %cst_133 = arith.constant dense<0xFF800000> : vector<8xf32>
    %171 = vector.multi_reduction <maximumf>, %170, %cst_133 [1] : vector<8x4xf32> to vector<8xf32>
    %172 = vector.shape_cast %171 : vector<8xf32> to vector<8x1xf32>
    %173 = vector.broadcast %172 : vector<8x1xf32> to vector<8x4xf32>
    %174 = arith.subf %170, %173 : vector<8x4xf32>
    %175 = math.exp %174 : vector<8x4xf32>
    %cst_134 = arith.constant dense<0.000000e+00> : vector<8xf32>
    %176 = vector.multi_reduction <add>, %175, %cst_134 [1] : vector<8x4xf32> to vector<8xf32>
    %177 = vector.shape_cast %176 : vector<8xf32> to vector<8x1xf32>
    %178 = tpu.reciprocal %177 {approx = true} : vector<8x1xf32> -> vector<8x1xf32>
    %179 = vector.broadcast %178 : vector<8x1xf32> to vector<8x4xf32>
    %180 = arith.mulf %175, %179 : vector<8x4xf32>
    %cst_135 = arith.constant dense<0.000000e+00> : vector<8x16xf32>
    %181 = tpu.matmul %180, %169, %cst_135 {dimension_numbers = #tpu.dot_dimension_numbers<[1], [0], [0], [1], [0, 0, 1, 1], [], []>} : vector<8x4xf32>, vector<4x16xf32>, vector<8x16xf32> -> vector<8x16xf32>
    %c0_136 = arith.constant 0 : index
    %c0_137 = arith.constant 0 : index
    %c0_138 = arith.constant 0 : index
    %182 = vector.load %arg28[%c0_136, %c0_137, %c0_138] : memref<4x16x32xf32, #tpu.memory_space<vmem>>, vector<1x16x32xf32>
    %183 = vector.shape_cast %182 : vector<1x16x32xf32> to vector<16x32xf32>
    %cst_139 = arith.constant dense<0.000000e+00> : vector<8x32xf32>
    %184 = tpu.matmul %181, %183, %cst_139 {dimension_numbers = #tpu.dot_dimension_numbers<[1], [0], [0], [1], [0, 0, 1, 1], [], []>} : vector<8x16xf32>, vector<16x32xf32>, vector<8x32xf32> -> vector<8x32xf32>
    %c1_140 = arith.constant 1 : index
    %c0_141 = arith.constant 0 : index
    %c0_142 = arith.constant 0 : index
    %185 = vector.load %arg22[%c1_140, %c0_141, %c0_142] : memref<4x32x16xf32, #tpu.memory_space<vmem>>, vector<1x32x16xf32>
    %186 = vector.shape_cast %185 : vector<1x32x16xf32> to vector<32x16xf32>
    %cst_143 = arith.constant dense<0.000000e+00> : vector<8x16xf32>
    %187 = tpu.matmul %146, %186, %cst_143 {dimension_numbers = #tpu.dot_dimension_numbers<[1], [0], [0], [1], [0, 0, 1, 1], [], []>} : vector<8x32xf32>, vector<32x16xf32>, vector<8x16xf32> -> vector<8x16xf32>
    %c1_144 = arith.constant 1 : index
    %c0_145 = arith.constant 0 : index
    %c0_146 = arith.constant 0 : index
    %188 = vector.load %arg23[%c1_144, %c0_145, %c0_146] : memref<4x1x16xf32, #tpu.memory_space<vmem>>, vector<1x1x16xf32>
    %189 = vector.shape_cast %188 : vector<1x1x16xf32> to vector<1x16xf32>
    %190 = vector.broadcast %189 : vector<1x16xf32> to vector<8x16xf32>
    %191 = arith.addf %187, %190 : vector<8x16xf32>
    %c1_147 = arith.constant 1 : index
    %c0_148 = arith.constant 0 : index
    %c0_149 = arith.constant 0 : index
    %192 = vector.load %arg24[%c1_147, %c0_148, %c0_149] : memref<4x16x16xf32, #tpu.memory_space<vmem>>, vector<1x16x16xf32>
    %193 = vector.shape_cast %192 : vector<1x16x16xf32> to vector<16x16xf32>
    %cst_150 = arith.constant dense<0.000000e+00> : vector<4x16xf32>
    %194 = tpu.matmul %8, %193, %cst_150 {dimension_numbers = #tpu.dot_dimension_numbers<[1], [0], [0], [1], [0, 0, 1, 1], [], []>} : vector<4x16xf32>, vector<16x16xf32>, vector<4x16xf32> -> vector<4x16xf32>
    %c1_151 = arith.constant 1 : index
    %c0_152 = arith.constant 0 : index
    %c0_153 = arith.constant 0 : index
    %195 = vector.load %arg25[%c1_151, %c0_152, %c0_153] : memref<4x1x16xf32, #tpu.memory_space<vmem>>, vector<1x1x16xf32>
    %196 = vector.shape_cast %195 : vector<1x1x16xf32> to vector<1x16xf32>
    %197 = vector.broadcast %196 : vector<1x16xf32> to vector<4x16xf32>
    %198 = arith.addf %194, %197 : vector<4x16xf32>
    %c1_154 = arith.constant 1 : index
    %c0_155 = arith.constant 0 : index
    %c0_156 = arith.constant 0 : index
    %199 = vector.load %arg26[%c1_154, %c0_155, %c0_156] : memref<4x16x16xf32, #tpu.memory_space<vmem>>, vector<1x16x16xf32>
    %200 = vector.shape_cast %199 : vector<1x16x16xf32> to vector<16x16xf32>
    %cst_157 = arith.constant dense<0.000000e+00> : vector<4x16xf32>
    %201 = tpu.matmul %7, %200, %cst_157 {dimension_numbers = #tpu.dot_dimension_numbers<[1], [0], [0], [1], [0, 0, 1, 1], [], []>} : vector<4x16xf32>, vector<16x16xf32>, vector<4x16xf32> -> vector<4x16xf32>
    %c1_158 = arith.constant 1 : index
    %c0_159 = arith.constant 0 : index
    %c0_160 = arith.constant 0 : index
    %202 = vector.load %arg27[%c1_158, %c0_159, %c0_160] : memref<4x1x16xf32, #tpu.memory_space<vmem>>, vector<1x1x16xf32>
    %203 = vector.shape_cast %202 : vector<1x1x16xf32> to vector<1x16xf32>
    %204 = vector.broadcast %203 : vector<1x16xf32> to vector<4x16xf32>
    %205 = arith.addf %201, %204 : vector<4x16xf32>
    %cst_161 = arith.constant dense<0.000000e+00> : vector<8x4xf32>
    %206 = tpu.matmul %191, %198, %cst_161 {dimension_numbers = #tpu.dot_dimension_numbers<[1], [1], [0], [0], [0, 0, 1, 0], [], []>} : vector<8x16xf32>, vector<4x16xf32>, vector<8x4xf32> -> vector<8x4xf32>
    %cst_162 = arith.constant dense<0xFF800000> : vector<8xf32>
    %207 = vector.multi_reduction <maximumf>, %206, %cst_162 [1] : vector<8x4xf32> to vector<8xf32>
    %208 = vector.shape_cast %207 : vector<8xf32> to vector<8x1xf32>
    %209 = vector.broadcast %208 : vector<8x1xf32> to vector<8x4xf32>
    %210 = arith.subf %206, %209 : vector<8x4xf32>
    %211 = math.exp %210 : vector<8x4xf32>
    %cst_163 = arith.constant dense<0.000000e+00> : vector<8xf32>
    %212 = vector.multi_reduction <add>, %211, %cst_163 [1] : vector<8x4xf32> to vector<8xf32>
    %213 = vector.shape_cast %212 : vector<8xf32> to vector<8x1xf32>
    %214 = tpu.reciprocal %213 {approx = true} : vector<8x1xf32> -> vector<8x1xf32>
    %215 = vector.broadcast %214 : vector<8x1xf32> to vector<8x4xf32>
    %216 = arith.mulf %211, %215 : vector<8x4xf32>
    %cst_164 = arith.constant dense<0.000000e+00> : vector<8x16xf32>
    %217 = tpu.matmul %216, %205, %cst_164 {dimension_numbers = #tpu.dot_dimension_numbers<[1], [0], [0], [1], [0, 0, 1, 1], [], []>} : vector<8x4xf32>, vector<4x16xf32>, vector<8x16xf32> -> vector<8x16xf32>
    %c1_165 = arith.constant 1 : index
    %c0_166 = arith.constant 0 : index
    %c0_167 = arith.constant 0 : index
    %218 = vector.load %arg28[%c1_165, %c0_166, %c0_167] : memref<4x16x32xf32, #tpu.memory_space<vmem>>, vector<1x16x32xf32>
    %219 = vector.shape_cast %218 : vector<1x16x32xf32> to vector<16x32xf32>
    %cst_168 = arith.constant dense<0.000000e+00> : vector<8x32xf32>
    %220 = tpu.matmul %217, %219, %cst_168 {dimension_numbers = #tpu.dot_dimension_numbers<[1], [0], [0], [1], [0, 0, 1, 1], [], []>} : vector<8x16xf32>, vector<16x32xf32>, vector<8x32xf32> -> vector<8x32xf32>
    %221 = arith.addf %184, %220 : vector<8x32xf32>
    %222 = vector.broadcast %148 : vector<1x32xf32> to vector<8x32xf32>
    %223 = arith.addf %221, %222 : vector<8x32xf32>
    %c0_169 = arith.constant 0 : index
    %c0_170 = arith.constant 0 : index
    %c0_171 = arith.constant 0 : index
    %224 = vector.load %arg37[%c0_169, %c0_170, %c0_171] : memref<2x1x32xf32, #tpu.memory_space<vmem>>, vector<1x1x32xf32>
    %225 = vector.shape_cast %224 : vector<1x1x32xf32> to vector<1x32xf32>
    %c0_172 = arith.constant 0 : index
    %c0_173 = arith.constant 0 : index
    %c0_174 = arith.constant 0 : index
    %226 = vector.load %arg30[%c0_172, %c0_173, %c0_174] : memref<4x32x16xf32, #tpu.memory_space<vmem>>, vector<1x32x16xf32>
    %227 = vector.shape_cast %226 : vector<1x32x16xf32> to vector<32x16xf32>
    %cst_175 = arith.constant dense<0.000000e+00> : vector<8x16xf32>
    %228 = tpu.matmul %146, %227, %cst_175 {dimension_numbers = #tpu.dot_dimension_numbers<[1], [0], [0], [1], [0, 0, 1, 1], [], []>} : vector<8x32xf32>, vector<32x16xf32>, vector<8x16xf32> -> vector<8x16xf32>
    %c0_176 = arith.constant 0 : index
    %c0_177 = arith.constant 0 : index
    %c0_178 = arith.constant 0 : index
    %229 = vector.load %arg31[%c0_176, %c0_177, %c0_178] : memref<4x1x16xf32, #tpu.memory_space<vmem>>, vector<1x1x16xf32>
    %230 = vector.shape_cast %229 : vector<1x1x16xf32> to vector<1x16xf32>
    %231 = vector.broadcast %230 : vector<1x16xf32> to vector<8x16xf32>
    %232 = arith.addf %228, %231 : vector<8x16xf32>
    %c0_179 = arith.constant 0 : index
    %c0_180 = arith.constant 0 : index
    %c0_181 = arith.constant 0 : index
    %233 = vector.load %arg32[%c0_179, %c0_180, %c0_181] : memref<4x24x16xf32, #tpu.memory_space<vmem>>, vector<1x24x16xf32>
    %234 = vector.shape_cast %233 : vector<1x24x16xf32> to vector<24x16xf32>
    %cst_182 = arith.constant dense<0.000000e+00> : vector<10x16xf32>
    %235 = tpu.matmul %5, %234, %cst_182 {dimension_numbers = #tpu.dot_dimension_numbers<[1], [0], [0], [1], [0, 0, 1, 1], [], []>} : vector<10x24xf32>, vector<24x16xf32>, vector<10x16xf32> -> vector<10x16xf32>
    %c0_183 = arith.constant 0 : index
    %c0_184 = arith.constant 0 : index
    %c0_185 = arith.constant 0 : index
    %236 = vector.load %arg33[%c0_183, %c0_184, %c0_185] : memref<4x1x16xf32, #tpu.memory_space<vmem>>, vector<1x1x16xf32>
    %237 = vector.shape_cast %236 : vector<1x1x16xf32> to vector<1x16xf32>
    %238 = vector.broadcast %237 : vector<1x16xf32> to vector<10x16xf32>
    %239 = arith.addf %235, %238 : vector<10x16xf32>
    %c0_186 = arith.constant 0 : index
    %c0_187 = arith.constant 0 : index
    %c0_188 = arith.constant 0 : index
    %240 = vector.load %arg34[%c0_186, %c0_187, %c0_188] : memref<4x24x16xf32, #tpu.memory_space<vmem>>, vector<1x24x16xf32>
    %241 = vector.shape_cast %240 : vector<1x24x16xf32> to vector<24x16xf32>
    %cst_189 = arith.constant dense<0.000000e+00> : vector<10x16xf32>
    %242 = tpu.matmul %5, %241, %cst_189 {dimension_numbers = #tpu.dot_dimension_numbers<[1], [0], [0], [1], [0, 0, 1, 1], [], []>} : vector<10x24xf32>, vector<24x16xf32>, vector<10x16xf32> -> vector<10x16xf32>
    %c0_190 = arith.constant 0 : index
    %c0_191 = arith.constant 0 : index
    %c0_192 = arith.constant 0 : index
    %243 = vector.load %arg35[%c0_190, %c0_191, %c0_192] : memref<4x1x16xf32, #tpu.memory_space<vmem>>, vector<1x1x16xf32>
    %244 = vector.shape_cast %243 : vector<1x1x16xf32> to vector<1x16xf32>
    %245 = vector.broadcast %244 : vector<1x16xf32> to vector<10x16xf32>
    %246 = arith.addf %242, %245 : vector<10x16xf32>
    %cst_193 = arith.constant dense<0.000000e+00> : vector<8x10xf32>
    %247 = tpu.matmul %232, %239, %cst_193 {dimension_numbers = #tpu.dot_dimension_numbers<[1], [1], [0], [0], [0, 0, 1, 0], [], []>} : vector<8x16xf32>, vector<10x16xf32>, vector<8x10xf32> -> vector<8x10xf32>
    %248 = arith.addf %247, %26 : vector<8x10xf32>
    %cst_194 = arith.constant dense<0xFF800000> : vector<8xf32>
    %249 = vector.multi_reduction <maximumf>, %248, %cst_194 [1] : vector<8x10xf32> to vector<8xf32>
    %250 = vector.shape_cast %249 : vector<8xf32> to vector<8x1xf32>
    %251 = vector.broadcast %250 : vector<8x1xf32> to vector<8x10xf32>
    %252 = arith.subf %248, %251 : vector<8x10xf32>
    %253 = math.exp %252 : vector<8x10xf32>
    %cst_195 = arith.constant dense<0.000000e+00> : vector<8xf32>
    %254 = vector.multi_reduction <add>, %253, %cst_195 [1] : vector<8x10xf32> to vector<8xf32>
    %255 = vector.shape_cast %254 : vector<8xf32> to vector<8x1xf32>
    %256 = tpu.reciprocal %255 {approx = true} : vector<8x1xf32> -> vector<8x1xf32>
    %257 = vector.broadcast %256 : vector<8x1xf32> to vector<8x10xf32>
    %258 = arith.mulf %253, %257 : vector<8x10xf32>
    %cst_196 = arith.constant dense<0.000000e+00> : vector<8x16xf32>
    %259 = tpu.matmul %258, %246, %cst_196 {dimension_numbers = #tpu.dot_dimension_numbers<[1], [0], [0], [1], [0, 0, 1, 1], [], []>} : vector<8x10xf32>, vector<10x16xf32>, vector<8x16xf32> -> vector<8x16xf32>
    %c0_197 = arith.constant 0 : index
    %c0_198 = arith.constant 0 : index
    %c0_199 = arith.constant 0 : index
    %260 = vector.load %arg36[%c0_197, %c0_198, %c0_199] : memref<4x16x32xf32, #tpu.memory_space<vmem>>, vector<1x16x32xf32>
    %261 = vector.shape_cast %260 : vector<1x16x32xf32> to vector<16x32xf32>
    %cst_200 = arith.constant dense<0.000000e+00> : vector<8x32xf32>
    %262 = tpu.matmul %259, %261, %cst_200 {dimension_numbers = #tpu.dot_dimension_numbers<[1], [0], [0], [1], [0, 0, 1, 1], [], []>} : vector<8x16xf32>, vector<16x32xf32>, vector<8x32xf32> -> vector<8x32xf32>
    %c1_201 = arith.constant 1 : index
    %c0_202 = arith.constant 0 : index
    %c0_203 = arith.constant 0 : index
    %263 = vector.load %arg30[%c1_201, %c0_202, %c0_203] : memref<4x32x16xf32, #tpu.memory_space<vmem>>, vector<1x32x16xf32>
    %264 = vector.shape_cast %263 : vector<1x32x16xf32> to vector<32x16xf32>
    %cst_204 = arith.constant dense<0.000000e+00> : vector<8x16xf32>
    %265 = tpu.matmul %146, %264, %cst_204 {dimension_numbers = #tpu.dot_dimension_numbers<[1], [0], [0], [1], [0, 0, 1, 1], [], []>} : vector<8x32xf32>, vector<32x16xf32>, vector<8x16xf32> -> vector<8x16xf32>
    %c1_205 = arith.constant 1 : index
    %c0_206 = arith.constant 0 : index
    %c0_207 = arith.constant 0 : index
    %266 = vector.load %arg31[%c1_205, %c0_206, %c0_207] : memref<4x1x16xf32, #tpu.memory_space<vmem>>, vector<1x1x16xf32>
    %267 = vector.shape_cast %266 : vector<1x1x16xf32> to vector<1x16xf32>
    %268 = vector.broadcast %267 : vector<1x16xf32> to vector<8x16xf32>
    %269 = arith.addf %265, %268 : vector<8x16xf32>
    %c1_208 = arith.constant 1 : index
    %c0_209 = arith.constant 0 : index
    %c0_210 = arith.constant 0 : index
    %270 = vector.load %arg32[%c1_208, %c0_209, %c0_210] : memref<4x24x16xf32, #tpu.memory_space<vmem>>, vector<1x24x16xf32>
    %271 = vector.shape_cast %270 : vector<1x24x16xf32> to vector<24x16xf32>
    %cst_211 = arith.constant dense<0.000000e+00> : vector<10x16xf32>
    %272 = tpu.matmul %5, %271, %cst_211 {dimension_numbers = #tpu.dot_dimension_numbers<[1], [0], [0], [1], [0, 0, 1, 1], [], []>} : vector<10x24xf32>, vector<24x16xf32>, vector<10x16xf32> -> vector<10x16xf32>
    %c1_212 = arith.constant 1 : index
    %c0_213 = arith.constant 0 : index
    %c0_214 = arith.constant 0 : index
    %273 = vector.load %arg33[%c1_212, %c0_213, %c0_214] : memref<4x1x16xf32, #tpu.memory_space<vmem>>, vector<1x1x16xf32>
    %274 = vector.shape_cast %273 : vector<1x1x16xf32> to vector<1x16xf32>
    %275 = vector.broadcast %274 : vector<1x16xf32> to vector<10x16xf32>
    %276 = arith.addf %272, %275 : vector<10x16xf32>
    %c1_215 = arith.constant 1 : index
    %c0_216 = arith.constant 0 : index
    %c0_217 = arith.constant 0 : index
    %277 = vector.load %arg34[%c1_215, %c0_216, %c0_217] : memref<4x24x16xf32, #tpu.memory_space<vmem>>, vector<1x24x16xf32>
    %278 = vector.shape_cast %277 : vector<1x24x16xf32> to vector<24x16xf32>
    %cst_218 = arith.constant dense<0.000000e+00> : vector<10x16xf32>
    %279 = tpu.matmul %5, %278, %cst_218 {dimension_numbers = #tpu.dot_dimension_numbers<[1], [0], [0], [1], [0, 0, 1, 1], [], []>} : vector<10x24xf32>, vector<24x16xf32>, vector<10x16xf32> -> vector<10x16xf32>
    %c1_219 = arith.constant 1 : index
    %c0_220 = arith.constant 0 : index
    %c0_221 = arith.constant 0 : index
    %280 = vector.load %arg35[%c1_219, %c0_220, %c0_221] : memref<4x1x16xf32, #tpu.memory_space<vmem>>, vector<1x1x16xf32>
    %281 = vector.shape_cast %280 : vector<1x1x16xf32> to vector<1x16xf32>
    %282 = vector.broadcast %281 : vector<1x16xf32> to vector<10x16xf32>
    %283 = arith.addf %279, %282 : vector<10x16xf32>
    %cst_222 = arith.constant dense<0.000000e+00> : vector<8x10xf32>
    %284 = tpu.matmul %269, %276, %cst_222 {dimension_numbers = #tpu.dot_dimension_numbers<[1], [1], [0], [0], [0, 0, 1, 0], [], []>} : vector<8x16xf32>, vector<10x16xf32>, vector<8x10xf32> -> vector<8x10xf32>
    %285 = arith.addf %284, %26 : vector<8x10xf32>
    %cst_223 = arith.constant dense<0xFF800000> : vector<8xf32>
    %286 = vector.multi_reduction <maximumf>, %285, %cst_223 [1] : vector<8x10xf32> to vector<8xf32>
    %287 = vector.shape_cast %286 : vector<8xf32> to vector<8x1xf32>
    %288 = vector.broadcast %287 : vector<8x1xf32> to vector<8x10xf32>
    %289 = arith.subf %285, %288 : vector<8x10xf32>
    %290 = math.exp %289 : vector<8x10xf32>
    %cst_224 = arith.constant dense<0.000000e+00> : vector<8xf32>
    %291 = vector.multi_reduction <add>, %290, %cst_224 [1] : vector<8x10xf32> to vector<8xf32>
    %292 = vector.shape_cast %291 : vector<8xf32> to vector<8x1xf32>
    %293 = tpu.reciprocal %292 {approx = true} : vector<8x1xf32> -> vector<8x1xf32>
    %294 = vector.broadcast %293 : vector<8x1xf32> to vector<8x10xf32>
    %295 = arith.mulf %290, %294 : vector<8x10xf32>
    %cst_225 = arith.constant dense<0.000000e+00> : vector<8x16xf32>
    %296 = tpu.matmul %295, %283, %cst_225 {dimension_numbers = #tpu.dot_dimension_numbers<[1], [0], [0], [1], [0, 0, 1, 1], [], []>} : vector<8x10xf32>, vector<10x16xf32>, vector<8x16xf32> -> vector<8x16xf32>
    %c1_226 = arith.constant 1 : index
    %c0_227 = arith.constant 0 : index
    %c0_228 = arith.constant 0 : index
    %297 = vector.load %arg36[%c1_226, %c0_227, %c0_228] : memref<4x16x32xf32, #tpu.memory_space<vmem>>, vector<1x16x32xf32>
    %298 = vector.shape_cast %297 : vector<1x16x32xf32> to vector<16x32xf32>
    %cst_229 = arith.constant dense<0.000000e+00> : vector<8x32xf32>
    %299 = tpu.matmul %296, %298, %cst_229 {dimension_numbers = #tpu.dot_dimension_numbers<[1], [0], [0], [1], [0, 0, 1, 1], [], []>} : vector<8x16xf32>, vector<16x32xf32>, vector<8x32xf32> -> vector<8x32xf32>
    %300 = arith.addf %262, %299 : vector<8x32xf32>
    %301 = vector.broadcast %225 : vector<1x32xf32> to vector<8x32xf32>
    %302 = arith.addf %300, %301 : vector<8x32xf32>
    %303 = vector.broadcast %12 : vector<8x1xf32> to vector<8x32xf32>
    %304 = arith.mulf %302, %303 : vector<8x32xf32>
    %305 = arith.addf %223, %304 : vector<8x32xf32>
    %306 = tpu.iota {dimensions = array<i32: 1>} : vector<1x32xi32>
    %c0_i32 = arith.constant 0 : i32
    %307 = vector.broadcast %c0_i32 : i32 to vector<1x32xi32>
    %308 = arith.cmpi eq, %306, %307 : vector<1x32xi32>
    %309 = arith.extui %308 : vector<1x32xi1> to vector<1x32xi32>
    %310 = arith.sitofp %309 : vector<1x32xi32> to vector<1x32xf32>
    %311 = vector.broadcast %310 : vector<1x32xf32> to vector<8x32xf32>
    %312 = arith.mulf %305, %311 : vector<8x32xf32>
    %cst_230 = arith.constant dense<0.000000e+00> : vector<8xf32>
    %313 = vector.multi_reduction <add>, %312, %cst_230 [1] : vector<8x32xf32> to vector<8xf32>
    %314 = vector.shape_cast %313 : vector<8xf32> to vector<8x1xf32>
    %c0_231 = arith.constant 0 : index
    %c0_232 = arith.constant 0 : index
    %c0_233 = arith.constant 0 : index
    %315 = vector.load %arg40[%c0_231, %c0_232, %c0_233] : memref<2x1x32xf32, #tpu.memory_space<vmem>>, vector<1x1x32xf32>
    %316 = vector.shape_cast %315 : vector<1x1x32xf32> to vector<1x32xf32>
    %c0_234 = arith.constant 0 : index
    %c0_235 = arith.constant 0 : index
    %c0_236 = arith.constant 0 : index
    %317 = vector.load %arg41[%c0_234, %c0_235, %c0_236] : memref<2x1x32xf32, #tpu.memory_space<vmem>>, vector<1x1x32xf32>
    %318 = vector.shape_cast %317 : vector<1x1x32xf32> to vector<1x32xf32>
    %319 = vector.broadcast %314 : vector<8x1xf32> to vector<8x32xf32>
    %320 = arith.addf %146, %319 : vector<8x32xf32>
    %cst_237 = arith.constant dense<0.000000e+00> : vector<8xf32>
    %321 = vector.multi_reduction <add>, %320, %cst_237 [1] : vector<8x32xf32> to vector<8xf32>
    %322 = vector.shape_cast %321 : vector<8xf32> to vector<8x1xf32>
    %cst_238 = arith.constant 3.200000e+01 : f32
    %323 = vector.broadcast %cst_238 : f32 to vector<8x1xf32>
    %324 = arith.divf %322, %323 : vector<8x1xf32>
    %325 = vector.broadcast %324 : vector<8x1xf32> to vector<8x32xf32>
    %326 = arith.subf %320, %325 : vector<8x32xf32>
    %327 = arith.mulf %326, %326 : vector<8x32xf32>
    %cst_239 = arith.constant dense<0.000000e+00> : vector<8xf32>
    %328 = vector.multi_reduction <add>, %327, %cst_239 [1] : vector<8x32xf32> to vector<8xf32>
    %329 = vector.shape_cast %328 : vector<8xf32> to vector<8x1xf32>
    %cst_240 = arith.constant 3.200000e+01 : f32
    %330 = vector.broadcast %cst_240 : f32 to vector<8x1xf32>
    %331 = arith.divf %329, %330 : vector<8x1xf32>
    %332 = vector.broadcast %324 : vector<8x1xf32> to vector<8x32xf32>
    %333 = arith.subf %320, %332 : vector<8x32xf32>
    %cst_241 = arith.constant 9.99999974E-6 : f32
    %334 = vector.broadcast %cst_241 : f32 to vector<8x1xf32>
    %335 = arith.addf %331, %334 : vector<8x1xf32>
    %336 = math.rsqrt %335 : vector<8x1xf32>
    %337 = vector.broadcast %336 : vector<8x1xf32> to vector<8x32xf32>
    %338 = arith.mulf %333, %337 : vector<8x32xf32>
    %339 = vector.broadcast %316 : vector<1x32xf32> to vector<8x32xf32>
    %340 = arith.mulf %338, %339 : vector<8x32xf32>
    %341 = vector.broadcast %318 : vector<1x32xf32> to vector<8x32xf32>
    %342 = arith.addf %340, %341 : vector<8x32xf32>
    %c0_242 = arith.constant 0 : index
    %c0_243 = arith.constant 0 : index
    %c0_244 = arith.constant 0 : index
    %343 = vector.load %arg44[%c0_242, %c0_243, %c0_244] : memref<2x32x48xf32, #tpu.memory_space<vmem>>, vector<1x32x48xf32>
    %344 = vector.shape_cast %343 : vector<1x32x48xf32> to vector<32x48xf32>
    %cst_245 = arith.constant dense<0.000000e+00> : vector<8x48xf32>
    %345 = tpu.matmul %342, %344, %cst_245 {dimension_numbers = #tpu.dot_dimension_numbers<[1], [0], [0], [1], [0, 0, 1, 1], [], []>} : vector<8x32xf32>, vector<32x48xf32>, vector<8x48xf32> -> vector<8x48xf32>
    %c0_246 = arith.constant 0 : index
    %c0_247 = arith.constant 0 : index
    %c0_248 = arith.constant 0 : index
    %346 = vector.load %arg45[%c0_246, %c0_247, %c0_248] : memref<2x1x48xf32, #tpu.memory_space<vmem>>, vector<1x1x48xf32>
    %347 = vector.shape_cast %346 : vector<1x1x48xf32> to vector<1x48xf32>
    %348 = vector.broadcast %347 : vector<1x48xf32> to vector<8x48xf32>
    %349 = arith.addf %345, %348 : vector<8x48xf32>
    %cst_249 = arith.constant 0.000000e+00 : f32
    %350 = vector.broadcast %cst_249 : f32 to vector<8x48xf32>
    %351 = arith.maximumf %349, %350 : vector<8x48xf32>
    %c0_250 = arith.constant 0 : index
    %c0_251 = arith.constant 0 : index
    %c0_252 = arith.constant 0 : index
    %352 = vector.load %arg46[%c0_250, %c0_251, %c0_252] : memref<2x48x32xf32, #tpu.memory_space<vmem>>, vector<1x48x32xf32>
    %353 = vector.shape_cast %352 : vector<1x48x32xf32> to vector<48x32xf32>
    %cst_253 = arith.constant dense<0.000000e+00> : vector<8x32xf32>
    %354 = tpu.matmul %351, %353, %cst_253 {dimension_numbers = #tpu.dot_dimension_numbers<[1], [0], [0], [1], [0, 0, 1, 1], [], []>} : vector<8x48xf32>, vector<48x32xf32>, vector<8x32xf32> -> vector<8x32xf32>
    %c0_254 = arith.constant 0 : index
    %c0_255 = arith.constant 0 : index
    %c0_256 = arith.constant 0 : index
    %355 = vector.load %arg47[%c0_254, %c0_255, %c0_256] : memref<2x1x32xf32, #tpu.memory_space<vmem>>, vector<1x1x32xf32>
    %356 = vector.shape_cast %355 : vector<1x1x32xf32> to vector<1x32xf32>
    %357 = vector.broadcast %356 : vector<1x32xf32> to vector<8x32xf32>
    %358 = arith.addf %354, %357 : vector<8x32xf32>
    %c0_257 = arith.constant 0 : index
    %c0_258 = arith.constant 0 : index
    %c0_259 = arith.constant 0 : index
    %359 = vector.load %arg42[%c0_257, %c0_258, %c0_259] : memref<2x1x32xf32, #tpu.memory_space<vmem>>, vector<1x1x32xf32>
    %360 = vector.shape_cast %359 : vector<1x1x32xf32> to vector<1x32xf32>
    %c0_260 = arith.constant 0 : index
    %c0_261 = arith.constant 0 : index
    %c0_262 = arith.constant 0 : index
    %361 = vector.load %arg43[%c0_260, %c0_261, %c0_262] : memref<2x1x32xf32, #tpu.memory_space<vmem>>, vector<1x1x32xf32>
    %362 = vector.shape_cast %361 : vector<1x1x32xf32> to vector<1x32xf32>
    %363 = arith.addf %342, %358 : vector<8x32xf32>
    %cst_263 = arith.constant dense<0.000000e+00> : vector<8xf32>
    %364 = vector.multi_reduction <add>, %363, %cst_263 [1] : vector<8x32xf32> to vector<8xf32>
    %365 = vector.shape_cast %364 : vector<8xf32> to vector<8x1xf32>
    %cst_264 = arith.constant 3.200000e+01 : f32
    %366 = vector.broadcast %cst_264 : f32 to vector<8x1xf32>
    %367 = arith.divf %365, %366 : vector<8x1xf32>
    %368 = vector.broadcast %367 : vector<8x1xf32> to vector<8x32xf32>
    %369 = arith.subf %363, %368 : vector<8x32xf32>
    %370 = arith.mulf %369, %369 : vector<8x32xf32>
    %cst_265 = arith.constant dense<0.000000e+00> : vector<8xf32>
    %371 = vector.multi_reduction <add>, %370, %cst_265 [1] : vector<8x32xf32> to vector<8xf32>
    %372 = vector.shape_cast %371 : vector<8xf32> to vector<8x1xf32>
    %cst_266 = arith.constant 3.200000e+01 : f32
    %373 = vector.broadcast %cst_266 : f32 to vector<8x1xf32>
    %374 = arith.divf %372, %373 : vector<8x1xf32>
    %375 = vector.broadcast %367 : vector<8x1xf32> to vector<8x32xf32>
    %376 = arith.subf %363, %375 : vector<8x32xf32>
    %cst_267 = arith.constant 9.99999974E-6 : f32
    %377 = vector.broadcast %cst_267 : f32 to vector<8x1xf32>
    %378 = arith.addf %374, %377 : vector<8x1xf32>
    %379 = math.rsqrt %378 : vector<8x1xf32>
    %380 = vector.broadcast %379 : vector<8x1xf32> to vector<8x32xf32>
    %381 = arith.mulf %376, %380 : vector<8x32xf32>
    %382 = vector.broadcast %360 : vector<1x32xf32> to vector<8x32xf32>
    %383 = arith.mulf %381, %382 : vector<8x32xf32>
    %384 = vector.broadcast %362 : vector<1x32xf32> to vector<8x32xf32>
    %385 = arith.addf %383, %384 : vector<8x32xf32>
    %c1_268 = arith.constant 1 : index
    %c0_269 = arith.constant 0 : index
    %c0_270 = arith.constant 0 : index
    %386 = vector.load %arg12[%c1_268, %c0_269, %c0_270] : memref<2x20x32xf32, #tpu.memory_space<vmem>>, vector<1x20x32xf32>
    %387 = vector.shape_cast %386 : vector<1x20x32xf32> to vector<20x32xf32>
    %cst_271 = arith.constant dense<0.000000e+00> : vector<1x32xf32>
    %388 = tpu.matmul %10, %387, %cst_271 {dimension_numbers = #tpu.dot_dimension_numbers<[1], [0], [0], [1], [0, 0, 1, 1], [], []>} : vector<1x20xf32>, vector<20x32xf32>, vector<1x32xf32> -> vector<1x32xf32>
    %c1_272 = arith.constant 1 : index
    %c0_273 = arith.constant 0 : index
    %c0_274 = arith.constant 0 : index
    %389 = vector.load %arg13[%c1_272, %c0_273, %c0_274] : memref<2x1x32xf32, #tpu.memory_space<vmem>>, vector<1x1x32xf32>
    %390 = vector.shape_cast %389 : vector<1x1x32xf32> to vector<1x32xf32>
    %391 = arith.addf %388, %390 : vector<1x32xf32>
    %392 = vector.broadcast %391 : vector<1x32xf32> to vector<8x32xf32>
    %393 = arith.addf %385, %392 : vector<8x32xf32>
    %c1_275 = arith.constant 1 : index
    %c0_276 = arith.constant 0 : index
    %c0_277 = arith.constant 0 : index
    %394 = vector.load %arg21[%c1_275, %c0_276, %c0_277] : memref<2x1x32xf32, #tpu.memory_space<vmem>>, vector<1x1x32xf32>
    %395 = vector.shape_cast %394 : vector<1x1x32xf32> to vector<1x32xf32>
    %c2 = arith.constant 2 : index
    %c0_278 = arith.constant 0 : index
    %c0_279 = arith.constant 0 : index
    %396 = vector.load %arg14[%c2, %c0_278, %c0_279] : memref<4x32x16xf32, #tpu.memory_space<vmem>>, vector<1x32x16xf32>
    %397 = vector.shape_cast %396 : vector<1x32x16xf32> to vector<32x16xf32>
    %cst_280 = arith.constant dense<0.000000e+00> : vector<8x16xf32>
    %398 = tpu.matmul %393, %397, %cst_280 {dimension_numbers = #tpu.dot_dimension_numbers<[1], [0], [0], [1], [0, 0, 1, 1], [], []>} : vector<8x32xf32>, vector<32x16xf32>, vector<8x16xf32> -> vector<8x16xf32>
    %c2_281 = arith.constant 2 : index
    %c0_282 = arith.constant 0 : index
    %c0_283 = arith.constant 0 : index
    %399 = vector.load %arg15[%c2_281, %c0_282, %c0_283] : memref<4x1x16xf32, #tpu.memory_space<vmem>>, vector<1x1x16xf32>
    %400 = vector.shape_cast %399 : vector<1x1x16xf32> to vector<1x16xf32>
    %401 = vector.broadcast %400 : vector<1x16xf32> to vector<8x16xf32>
    %402 = arith.addf %398, %401 : vector<8x16xf32>
    %c2_284 = arith.constant 2 : index
    %c0_285 = arith.constant 0 : index
    %c0_286 = arith.constant 0 : index
    %403 = vector.load %arg16[%c2_284, %c0_285, %c0_286] : memref<4x32x16xf32, #tpu.memory_space<vmem>>, vector<1x32x16xf32>
    %404 = vector.shape_cast %403 : vector<1x32x16xf32> to vector<32x16xf32>
    %cst_287 = arith.constant dense<0.000000e+00> : vector<8x16xf32>
    %405 = tpu.matmul %393, %404, %cst_287 {dimension_numbers = #tpu.dot_dimension_numbers<[1], [0], [0], [1], [0, 0, 1, 1], [], []>} : vector<8x32xf32>, vector<32x16xf32>, vector<8x16xf32> -> vector<8x16xf32>
    %c2_288 = arith.constant 2 : index
    %c0_289 = arith.constant 0 : index
    %c0_290 = arith.constant 0 : index
    %406 = vector.load %arg17[%c2_288, %c0_289, %c0_290] : memref<4x1x16xf32, #tpu.memory_space<vmem>>, vector<1x1x16xf32>
    %407 = vector.shape_cast %406 : vector<1x1x16xf32> to vector<1x16xf32>
    %408 = vector.broadcast %407 : vector<1x16xf32> to vector<8x16xf32>
    %409 = arith.addf %405, %408 : vector<8x16xf32>
    %c2_291 = arith.constant 2 : index
    %c0_292 = arith.constant 0 : index
    %c0_293 = arith.constant 0 : index
    %410 = vector.load %arg18[%c2_291, %c0_292, %c0_293] : memref<4x32x16xf32, #tpu.memory_space<vmem>>, vector<1x32x16xf32>
    %411 = vector.shape_cast %410 : vector<1x32x16xf32> to vector<32x16xf32>
    %cst_294 = arith.constant dense<0.000000e+00> : vector<8x16xf32>
    %412 = tpu.matmul %393, %411, %cst_294 {dimension_numbers = #tpu.dot_dimension_numbers<[1], [0], [0], [1], [0, 0, 1, 1], [], []>} : vector<8x32xf32>, vector<32x16xf32>, vector<8x16xf32> -> vector<8x16xf32>
    %c2_295 = arith.constant 2 : index
    %c0_296 = arith.constant 0 : index
    %c0_297 = arith.constant 0 : index
    %413 = vector.load %arg19[%c2_295, %c0_296, %c0_297] : memref<4x1x16xf32, #tpu.memory_space<vmem>>, vector<1x1x16xf32>
    %414 = vector.shape_cast %413 : vector<1x1x16xf32> to vector<1x16xf32>
    %415 = vector.broadcast %414 : vector<1x16xf32> to vector<8x16xf32>
    %416 = arith.addf %412, %415 : vector<8x16xf32>
    %cst_298 = arith.constant dense<0.000000e+00> : vector<8x8xf32>
    %417 = tpu.matmul %402, %409, %cst_298 {dimension_numbers = #tpu.dot_dimension_numbers<[1], [1], [0], [0], [0, 0, 1, 0], [], []>} : vector<8x16xf32>, vector<8x16xf32>, vector<8x8xf32> -> vector<8x8xf32>
    %418 = vector.broadcast %20 : vector<1x8xf32> to vector<8x8xf32>
    %419 = arith.addf %417, %418 : vector<8x8xf32>
    %cst_299 = arith.constant dense<0xFF800000> : vector<8xf32>
    %420 = vector.multi_reduction <maximumf>, %419, %cst_299 [1] : vector<8x8xf32> to vector<8xf32>
    %421 = vector.shape_cast %420 : vector<8xf32> to vector<8x1xf32>
    %422 = vector.broadcast %421 : vector<8x1xf32> to vector<8x8xf32>
    %423 = arith.subf %419, %422 : vector<8x8xf32>
    %424 = math.exp %423 : vector<8x8xf32>
    %cst_300 = arith.constant dense<0.000000e+00> : vector<8xf32>
    %425 = vector.multi_reduction <add>, %424, %cst_300 [1] : vector<8x8xf32> to vector<8xf32>
    %426 = vector.shape_cast %425 : vector<8xf32> to vector<8x1xf32>
    %427 = tpu.reciprocal %426 {approx = true} : vector<8x1xf32> -> vector<8x1xf32>
    %428 = vector.broadcast %427 : vector<8x1xf32> to vector<8x8xf32>
    %429 = arith.mulf %424, %428 : vector<8x8xf32>
    %cst_301 = arith.constant dense<0.000000e+00> : vector<8x16xf32>
    %430 = tpu.matmul %429, %416, %cst_301 {dimension_numbers = #tpu.dot_dimension_numbers<[1], [0], [0], [1], [0, 0, 1, 1], [], []>} : vector<8x8xf32>, vector<8x16xf32>, vector<8x16xf32> -> vector<8x16xf32>
    %c2_302 = arith.constant 2 : index
    %c0_303 = arith.constant 0 : index
    %c0_304 = arith.constant 0 : index
    %431 = vector.load %arg20[%c2_302, %c0_303, %c0_304] : memref<4x16x32xf32, #tpu.memory_space<vmem>>, vector<1x16x32xf32>
    %432 = vector.shape_cast %431 : vector<1x16x32xf32> to vector<16x32xf32>
    %cst_305 = arith.constant dense<0.000000e+00> : vector<8x32xf32>
    %433 = tpu.matmul %430, %432, %cst_305 {dimension_numbers = #tpu.dot_dimension_numbers<[1], [0], [0], [1], [0, 0, 1, 1], [], []>} : vector<8x16xf32>, vector<16x32xf32>, vector<8x32xf32> -> vector<8x32xf32>
    %c3 = arith.constant 3 : index
    %c0_306 = arith.constant 0 : index
    %c0_307 = arith.constant 0 : index
    %434 = vector.load %arg14[%c3, %c0_306, %c0_307] : memref<4x32x16xf32, #tpu.memory_space<vmem>>, vector<1x32x16xf32>
    %435 = vector.shape_cast %434 : vector<1x32x16xf32> to vector<32x16xf32>
    %cst_308 = arith.constant dense<0.000000e+00> : vector<8x16xf32>
    %436 = tpu.matmul %393, %435, %cst_308 {dimension_numbers = #tpu.dot_dimension_numbers<[1], [0], [0], [1], [0, 0, 1, 1], [], []>} : vector<8x32xf32>, vector<32x16xf32>, vector<8x16xf32> -> vector<8x16xf32>
    %c3_309 = arith.constant 3 : index
    %c0_310 = arith.constant 0 : index
    %c0_311 = arith.constant 0 : index
    %437 = vector.load %arg15[%c3_309, %c0_310, %c0_311] : memref<4x1x16xf32, #tpu.memory_space<vmem>>, vector<1x1x16xf32>
    %438 = vector.shape_cast %437 : vector<1x1x16xf32> to vector<1x16xf32>
    %439 = vector.broadcast %438 : vector<1x16xf32> to vector<8x16xf32>
    %440 = arith.addf %436, %439 : vector<8x16xf32>
    %c3_312 = arith.constant 3 : index
    %c0_313 = arith.constant 0 : index
    %c0_314 = arith.constant 0 : index
    %441 = vector.load %arg16[%c3_312, %c0_313, %c0_314] : memref<4x32x16xf32, #tpu.memory_space<vmem>>, vector<1x32x16xf32>
    %442 = vector.shape_cast %441 : vector<1x32x16xf32> to vector<32x16xf32>
    %cst_315 = arith.constant dense<0.000000e+00> : vector<8x16xf32>
    %443 = tpu.matmul %393, %442, %cst_315 {dimension_numbers = #tpu.dot_dimension_numbers<[1], [0], [0], [1], [0, 0, 1, 1], [], []>} : vector<8x32xf32>, vector<32x16xf32>, vector<8x16xf32> -> vector<8x16xf32>
    %c3_316 = arith.constant 3 : index
    %c0_317 = arith.constant 0 : index
    %c0_318 = arith.constant 0 : index
    %444 = vector.load %arg17[%c3_316, %c0_317, %c0_318] : memref<4x1x16xf32, #tpu.memory_space<vmem>>, vector<1x1x16xf32>
    %445 = vector.shape_cast %444 : vector<1x1x16xf32> to vector<1x16xf32>
    %446 = vector.broadcast %445 : vector<1x16xf32> to vector<8x16xf32>
    %447 = arith.addf %443, %446 : vector<8x16xf32>
    %c3_319 = arith.constant 3 : index
    %c0_320 = arith.constant 0 : index
    %c0_321 = arith.constant 0 : index
    %448 = vector.load %arg18[%c3_319, %c0_320, %c0_321] : memref<4x32x16xf32, #tpu.memory_space<vmem>>, vector<1x32x16xf32>
    %449 = vector.shape_cast %448 : vector<1x32x16xf32> to vector<32x16xf32>
    %cst_322 = arith.constant dense<0.000000e+00> : vector<8x16xf32>
    %450 = tpu.matmul %393, %449, %cst_322 {dimension_numbers = #tpu.dot_dimension_numbers<[1], [0], [0], [1], [0, 0, 1, 1], [], []>} : vector<8x32xf32>, vector<32x16xf32>, vector<8x16xf32> -> vector<8x16xf32>
    %c3_323 = arith.constant 3 : index
    %c0_324 = arith.constant 0 : index
    %c0_325 = arith.constant 0 : index
    %451 = vector.load %arg19[%c3_323, %c0_324, %c0_325] : memref<4x1x16xf32, #tpu.memory_space<vmem>>, vector<1x1x16xf32>
    %452 = vector.shape_cast %451 : vector<1x1x16xf32> to vector<1x16xf32>
    %453 = vector.broadcast %452 : vector<1x16xf32> to vector<8x16xf32>
    %454 = arith.addf %450, %453 : vector<8x16xf32>
    %cst_326 = arith.constant dense<0.000000e+00> : vector<8x8xf32>
    %455 = tpu.matmul %440, %447, %cst_326 {dimension_numbers = #tpu.dot_dimension_numbers<[1], [1], [0], [0], [0, 0, 1, 0], [], []>} : vector<8x16xf32>, vector<8x16xf32>, vector<8x8xf32> -> vector<8x8xf32>
    %456 = vector.broadcast %20 : vector<1x8xf32> to vector<8x8xf32>
    %457 = arith.addf %455, %456 : vector<8x8xf32>
    %cst_327 = arith.constant dense<0xFF800000> : vector<8xf32>
    %458 = vector.multi_reduction <maximumf>, %457, %cst_327 [1] : vector<8x8xf32> to vector<8xf32>
    %459 = vector.shape_cast %458 : vector<8xf32> to vector<8x1xf32>
    %460 = vector.broadcast %459 : vector<8x1xf32> to vector<8x8xf32>
    %461 = arith.subf %457, %460 : vector<8x8xf32>
    %462 = math.exp %461 : vector<8x8xf32>
    %cst_328 = arith.constant dense<0.000000e+00> : vector<8xf32>
    %463 = vector.multi_reduction <add>, %462, %cst_328 [1] : vector<8x8xf32> to vector<8xf32>
    %464 = vector.shape_cast %463 : vector<8xf32> to vector<8x1xf32>
    %465 = tpu.reciprocal %464 {approx = true} : vector<8x1xf32> -> vector<8x1xf32>
    %466 = vector.broadcast %465 : vector<8x1xf32> to vector<8x8xf32>
    %467 = arith.mulf %462, %466 : vector<8x8xf32>
    %cst_329 = arith.constant dense<0.000000e+00> : vector<8x16xf32>
    %468 = tpu.matmul %467, %454, %cst_329 {dimension_numbers = #tpu.dot_dimension_numbers<[1], [0], [0], [1], [0, 0, 1, 1], [], []>} : vector<8x8xf32>, vector<8x16xf32>, vector<8x16xf32> -> vector<8x16xf32>
    %c3_330 = arith.constant 3 : index
    %c0_331 = arith.constant 0 : index
    %c0_332 = arith.constant 0 : index
    %469 = vector.load %arg20[%c3_330, %c0_331, %c0_332] : memref<4x16x32xf32, #tpu.memory_space<vmem>>, vector<1x16x32xf32>
    %470 = vector.shape_cast %469 : vector<1x16x32xf32> to vector<16x32xf32>
    %cst_333 = arith.constant dense<0.000000e+00> : vector<8x32xf32>
    %471 = tpu.matmul %468, %470, %cst_333 {dimension_numbers = #tpu.dot_dimension_numbers<[1], [0], [0], [1], [0, 0, 1, 1], [], []>} : vector<8x16xf32>, vector<16x32xf32>, vector<8x32xf32> -> vector<8x32xf32>
    %472 = arith.addf %433, %471 : vector<8x32xf32>
    %473 = vector.broadcast %395 : vector<1x32xf32> to vector<8x32xf32>
    %474 = arith.addf %472, %473 : vector<8x32xf32>
    %475 = vector.broadcast %14 : vector<1x1xf32> to vector<8x1xf32>
    %476 = arith.mulf %12, %475 : vector<8x1xf32>
    %477 = vector.broadcast %476 : vector<8x1xf32> to vector<8x32xf32>
    %478 = arith.mulf %474, %477 : vector<8x32xf32>
    %c1_334 = arith.constant 1 : index
    %c0_335 = arith.constant 0 : index
    %c0_336 = arith.constant 0 : index
    %479 = vector.load %arg38[%c1_334, %c0_335, %c0_336] : memref<2x1x32xf32, #tpu.memory_space<vmem>>, vector<1x1x32xf32>
    %480 = vector.shape_cast %479 : vector<1x1x32xf32> to vector<1x32xf32>
    %c1_337 = arith.constant 1 : index
    %c0_338 = arith.constant 0 : index
    %c0_339 = arith.constant 0 : index
    %481 = vector.load %arg39[%c1_337, %c0_338, %c0_339] : memref<2x1x32xf32, #tpu.memory_space<vmem>>, vector<1x1x32xf32>
    %482 = vector.shape_cast %481 : vector<1x1x32xf32> to vector<1x32xf32>
    %483 = arith.addf %393, %478 : vector<8x32xf32>
    %cst_340 = arith.constant dense<0.000000e+00> : vector<8xf32>
    %484 = vector.multi_reduction <add>, %483, %cst_340 [1] : vector<8x32xf32> to vector<8xf32>
    %485 = vector.shape_cast %484 : vector<8xf32> to vector<8x1xf32>
    %cst_341 = arith.constant 3.200000e+01 : f32
    %486 = vector.broadcast %cst_341 : f32 to vector<8x1xf32>
    %487 = arith.divf %485, %486 : vector<8x1xf32>
    %488 = vector.broadcast %487 : vector<8x1xf32> to vector<8x32xf32>
    %489 = arith.subf %483, %488 : vector<8x32xf32>
    %490 = arith.mulf %489, %489 : vector<8x32xf32>
    %cst_342 = arith.constant dense<0.000000e+00> : vector<8xf32>
    %491 = vector.multi_reduction <add>, %490, %cst_342 [1] : vector<8x32xf32> to vector<8xf32>
    %492 = vector.shape_cast %491 : vector<8xf32> to vector<8x1xf32>
    %cst_343 = arith.constant 3.200000e+01 : f32
    %493 = vector.broadcast %cst_343 : f32 to vector<8x1xf32>
    %494 = arith.divf %492, %493 : vector<8x1xf32>
    %495 = vector.broadcast %487 : vector<8x1xf32> to vector<8x32xf32>
    %496 = arith.subf %483, %495 : vector<8x32xf32>
    %cst_344 = arith.constant 9.99999974E-6 : f32
    %497 = vector.broadcast %cst_344 : f32 to vector<8x1xf32>
    %498 = arith.addf %494, %497 : vector<8x1xf32>
    %499 = math.rsqrt %498 : vector<8x1xf32>
    %500 = vector.broadcast %499 : vector<8x1xf32> to vector<8x32xf32>
    %501 = arith.mulf %496, %500 : vector<8x32xf32>
    %502 = vector.broadcast %480 : vector<1x32xf32> to vector<8x32xf32>
    %503 = arith.mulf %501, %502 : vector<8x32xf32>
    %504 = vector.broadcast %482 : vector<1x32xf32> to vector<8x32xf32>
    %505 = arith.addf %503, %504 : vector<8x32xf32>
    %c1_345 = arith.constant 1 : index
    %c0_346 = arith.constant 0 : index
    %c0_347 = arith.constant 0 : index
    %506 = vector.load %arg29[%c1_345, %c0_346, %c0_347] : memref<2x1x32xf32, #tpu.memory_space<vmem>>, vector<1x1x32xf32>
    %507 = vector.shape_cast %506 : vector<1x1x32xf32> to vector<1x32xf32>
    %c2_348 = arith.constant 2 : index
    %c0_349 = arith.constant 0 : index
    %c0_350 = arith.constant 0 : index
    %508 = vector.load %arg22[%c2_348, %c0_349, %c0_350] : memref<4x32x16xf32, #tpu.memory_space<vmem>>, vector<1x32x16xf32>
    %509 = vector.shape_cast %508 : vector<1x32x16xf32> to vector<32x16xf32>
    %cst_351 = arith.constant dense<0.000000e+00> : vector<8x16xf32>
    %510 = tpu.matmul %505, %509, %cst_351 {dimension_numbers = #tpu.dot_dimension_numbers<[1], [0], [0], [1], [0, 0, 1, 1], [], []>} : vector<8x32xf32>, vector<32x16xf32>, vector<8x16xf32> -> vector<8x16xf32>
    %c2_352 = arith.constant 2 : index
    %c0_353 = arith.constant 0 : index
    %c0_354 = arith.constant 0 : index
    %511 = vector.load %arg23[%c2_352, %c0_353, %c0_354] : memref<4x1x16xf32, #tpu.memory_space<vmem>>, vector<1x1x16xf32>
    %512 = vector.shape_cast %511 : vector<1x1x16xf32> to vector<1x16xf32>
    %513 = vector.broadcast %512 : vector<1x16xf32> to vector<8x16xf32>
    %514 = arith.addf %510, %513 : vector<8x16xf32>
    %c2_355 = arith.constant 2 : index
    %c0_356 = arith.constant 0 : index
    %c0_357 = arith.constant 0 : index
    %515 = vector.load %arg24[%c2_355, %c0_356, %c0_357] : memref<4x16x16xf32, #tpu.memory_space<vmem>>, vector<1x16x16xf32>
    %516 = vector.shape_cast %515 : vector<1x16x16xf32> to vector<16x16xf32>
    %cst_358 = arith.constant dense<0.000000e+00> : vector<4x16xf32>
    %517 = tpu.matmul %8, %516, %cst_358 {dimension_numbers = #tpu.dot_dimension_numbers<[1], [0], [0], [1], [0, 0, 1, 1], [], []>} : vector<4x16xf32>, vector<16x16xf32>, vector<4x16xf32> -> vector<4x16xf32>
    %c2_359 = arith.constant 2 : index
    %c0_360 = arith.constant 0 : index
    %c0_361 = arith.constant 0 : index
    %518 = vector.load %arg25[%c2_359, %c0_360, %c0_361] : memref<4x1x16xf32, #tpu.memory_space<vmem>>, vector<1x1x16xf32>
    %519 = vector.shape_cast %518 : vector<1x1x16xf32> to vector<1x16xf32>
    %520 = vector.broadcast %519 : vector<1x16xf32> to vector<4x16xf32>
    %521 = arith.addf %517, %520 : vector<4x16xf32>
    %c2_362 = arith.constant 2 : index
    %c0_363 = arith.constant 0 : index
    %c0_364 = arith.constant 0 : index
    %522 = vector.load %arg26[%c2_362, %c0_363, %c0_364] : memref<4x16x16xf32, #tpu.memory_space<vmem>>, vector<1x16x16xf32>
    %523 = vector.shape_cast %522 : vector<1x16x16xf32> to vector<16x16xf32>
    %cst_365 = arith.constant dense<0.000000e+00> : vector<4x16xf32>
    %524 = tpu.matmul %7, %523, %cst_365 {dimension_numbers = #tpu.dot_dimension_numbers<[1], [0], [0], [1], [0, 0, 1, 1], [], []>} : vector<4x16xf32>, vector<16x16xf32>, vector<4x16xf32> -> vector<4x16xf32>
    %c2_366 = arith.constant 2 : index
    %c0_367 = arith.constant 0 : index
    %c0_368 = arith.constant 0 : index
    %525 = vector.load %arg27[%c2_366, %c0_367, %c0_368] : memref<4x1x16xf32, #tpu.memory_space<vmem>>, vector<1x1x16xf32>
    %526 = vector.shape_cast %525 : vector<1x1x16xf32> to vector<1x16xf32>
    %527 = vector.broadcast %526 : vector<1x16xf32> to vector<4x16xf32>
    %528 = arith.addf %524, %527 : vector<4x16xf32>
    %cst_369 = arith.constant dense<0.000000e+00> : vector<8x4xf32>
    %529 = tpu.matmul %514, %521, %cst_369 {dimension_numbers = #tpu.dot_dimension_numbers<[1], [1], [0], [0], [0, 0, 1, 0], [], []>} : vector<8x16xf32>, vector<4x16xf32>, vector<8x4xf32> -> vector<8x4xf32>
    %cst_370 = arith.constant dense<0xFF800000> : vector<8xf32>
    %530 = vector.multi_reduction <maximumf>, %529, %cst_370 [1] : vector<8x4xf32> to vector<8xf32>
    %531 = vector.shape_cast %530 : vector<8xf32> to vector<8x1xf32>
    %532 = vector.broadcast %531 : vector<8x1xf32> to vector<8x4xf32>
    %533 = arith.subf %529, %532 : vector<8x4xf32>
    %534 = math.exp %533 : vector<8x4xf32>
    %cst_371 = arith.constant dense<0.000000e+00> : vector<8xf32>
    %535 = vector.multi_reduction <add>, %534, %cst_371 [1] : vector<8x4xf32> to vector<8xf32>
    %536 = vector.shape_cast %535 : vector<8xf32> to vector<8x1xf32>
    %537 = tpu.reciprocal %536 {approx = true} : vector<8x1xf32> -> vector<8x1xf32>
    %538 = vector.broadcast %537 : vector<8x1xf32> to vector<8x4xf32>
    %539 = arith.mulf %534, %538 : vector<8x4xf32>
    %cst_372 = arith.constant dense<0.000000e+00> : vector<8x16xf32>
    %540 = tpu.matmul %539, %528, %cst_372 {dimension_numbers = #tpu.dot_dimension_numbers<[1], [0], [0], [1], [0, 0, 1, 1], [], []>} : vector<8x4xf32>, vector<4x16xf32>, vector<8x16xf32> -> vector<8x16xf32>
    %c2_373 = arith.constant 2 : index
    %c0_374 = arith.constant 0 : index
    %c0_375 = arith.constant 0 : index
    %541 = vector.load %arg28[%c2_373, %c0_374, %c0_375] : memref<4x16x32xf32, #tpu.memory_space<vmem>>, vector<1x16x32xf32>
    %542 = vector.shape_cast %541 : vector<1x16x32xf32> to vector<16x32xf32>
    %cst_376 = arith.constant dense<0.000000e+00> : vector<8x32xf32>
    %543 = tpu.matmul %540, %542, %cst_376 {dimension_numbers = #tpu.dot_dimension_numbers<[1], [0], [0], [1], [0, 0, 1, 1], [], []>} : vector<8x16xf32>, vector<16x32xf32>, vector<8x32xf32> -> vector<8x32xf32>
    %c3_377 = arith.constant 3 : index
    %c0_378 = arith.constant 0 : index
    %c0_379 = arith.constant 0 : index
    %544 = vector.load %arg22[%c3_377, %c0_378, %c0_379] : memref<4x32x16xf32, #tpu.memory_space<vmem>>, vector<1x32x16xf32>
    %545 = vector.shape_cast %544 : vector<1x32x16xf32> to vector<32x16xf32>
    %cst_380 = arith.constant dense<0.000000e+00> : vector<8x16xf32>
    %546 = tpu.matmul %505, %545, %cst_380 {dimension_numbers = #tpu.dot_dimension_numbers<[1], [0], [0], [1], [0, 0, 1, 1], [], []>} : vector<8x32xf32>, vector<32x16xf32>, vector<8x16xf32> -> vector<8x16xf32>
    %c3_381 = arith.constant 3 : index
    %c0_382 = arith.constant 0 : index
    %c0_383 = arith.constant 0 : index
    %547 = vector.load %arg23[%c3_381, %c0_382, %c0_383] : memref<4x1x16xf32, #tpu.memory_space<vmem>>, vector<1x1x16xf32>
    %548 = vector.shape_cast %547 : vector<1x1x16xf32> to vector<1x16xf32>
    %549 = vector.broadcast %548 : vector<1x16xf32> to vector<8x16xf32>
    %550 = arith.addf %546, %549 : vector<8x16xf32>
    %c3_384 = arith.constant 3 : index
    %c0_385 = arith.constant 0 : index
    %c0_386 = arith.constant 0 : index
    %551 = vector.load %arg24[%c3_384, %c0_385, %c0_386] : memref<4x16x16xf32, #tpu.memory_space<vmem>>, vector<1x16x16xf32>
    %552 = vector.shape_cast %551 : vector<1x16x16xf32> to vector<16x16xf32>
    %cst_387 = arith.constant dense<0.000000e+00> : vector<4x16xf32>
    %553 = tpu.matmul %8, %552, %cst_387 {dimension_numbers = #tpu.dot_dimension_numbers<[1], [0], [0], [1], [0, 0, 1, 1], [], []>} : vector<4x16xf32>, vector<16x16xf32>, vector<4x16xf32> -> vector<4x16xf32>
    %c3_388 = arith.constant 3 : index
    %c0_389 = arith.constant 0 : index
    %c0_390 = arith.constant 0 : index
    %554 = vector.load %arg25[%c3_388, %c0_389, %c0_390] : memref<4x1x16xf32, #tpu.memory_space<vmem>>, vector<1x1x16xf32>
    %555 = vector.shape_cast %554 : vector<1x1x16xf32> to vector<1x16xf32>
    %556 = vector.broadcast %555 : vector<1x16xf32> to vector<4x16xf32>
    %557 = arith.addf %553, %556 : vector<4x16xf32>
    %c3_391 = arith.constant 3 : index
    %c0_392 = arith.constant 0 : index
    %c0_393 = arith.constant 0 : index
    %558 = vector.load %arg26[%c3_391, %c0_392, %c0_393] : memref<4x16x16xf32, #tpu.memory_space<vmem>>, vector<1x16x16xf32>
    %559 = vector.shape_cast %558 : vector<1x16x16xf32> to vector<16x16xf32>
    %cst_394 = arith.constant dense<0.000000e+00> : vector<4x16xf32>
    %560 = tpu.matmul %7, %559, %cst_394 {dimension_numbers = #tpu.dot_dimension_numbers<[1], [0], [0], [1], [0, 0, 1, 1], [], []>} : vector<4x16xf32>, vector<16x16xf32>, vector<4x16xf32> -> vector<4x16xf32>
    %c3_395 = arith.constant 3 : index
    %c0_396 = arith.constant 0 : index
    %c0_397 = arith.constant 0 : index
    %561 = vector.load %arg27[%c3_395, %c0_396, %c0_397] : memref<4x1x16xf32, #tpu.memory_space<vmem>>, vector<1x1x16xf32>
    %562 = vector.shape_cast %561 : vector<1x1x16xf32> to vector<1x16xf32>
    %563 = vector.broadcast %562 : vector<1x16xf32> to vector<4x16xf32>
    %564 = arith.addf %560, %563 : vector<4x16xf32>
    %cst_398 = arith.constant dense<0.000000e+00> : vector<8x4xf32>
    %565 = tpu.matmul %550, %557, %cst_398 {dimension_numbers = #tpu.dot_dimension_numbers<[1], [1], [0], [0], [0, 0, 1, 0], [], []>} : vector<8x16xf32>, vector<4x16xf32>, vector<8x4xf32> -> vector<8x4xf32>
    %cst_399 = arith.constant dense<0xFF800000> : vector<8xf32>
    %566 = vector.multi_reduction <maximumf>, %565, %cst_399 [1] : vector<8x4xf32> to vector<8xf32>
    %567 = vector.shape_cast %566 : vector<8xf32> to vector<8x1xf32>
    %568 = vector.broadcast %567 : vector<8x1xf32> to vector<8x4xf32>
    %569 = arith.subf %565, %568 : vector<8x4xf32>
    %570 = math.exp %569 : vector<8x4xf32>
    %cst_400 = arith.constant dense<0.000000e+00> : vector<8xf32>
    %571 = vector.multi_reduction <add>, %570, %cst_400 [1] : vector<8x4xf32> to vector<8xf32>
    %572 = vector.shape_cast %571 : vector<8xf32> to vector<8x1xf32>
    %573 = tpu.reciprocal %572 {approx = true} : vector<8x1xf32> -> vector<8x1xf32>
    %574 = vector.broadcast %573 : vector<8x1xf32> to vector<8x4xf32>
    %575 = arith.mulf %570, %574 : vector<8x4xf32>
    %cst_401 = arith.constant dense<0.000000e+00> : vector<8x16xf32>
    %576 = tpu.matmul %575, %564, %cst_401 {dimension_numbers = #tpu.dot_dimension_numbers<[1], [0], [0], [1], [0, 0, 1, 1], [], []>} : vector<8x4xf32>, vector<4x16xf32>, vector<8x16xf32> -> vector<8x16xf32>
    %c3_402 = arith.constant 3 : index
    %c0_403 = arith.constant 0 : index
    %c0_404 = arith.constant 0 : index
    %577 = vector.load %arg28[%c3_402, %c0_403, %c0_404] : memref<4x16x32xf32, #tpu.memory_space<vmem>>, vector<1x16x32xf32>
    %578 = vector.shape_cast %577 : vector<1x16x32xf32> to vector<16x32xf32>
    %cst_405 = arith.constant dense<0.000000e+00> : vector<8x32xf32>
    %579 = tpu.matmul %576, %578, %cst_405 {dimension_numbers = #tpu.dot_dimension_numbers<[1], [0], [0], [1], [0, 0, 1, 1], [], []>} : vector<8x16xf32>, vector<16x32xf32>, vector<8x32xf32> -> vector<8x32xf32>
    %580 = arith.addf %543, %579 : vector<8x32xf32>
    %581 = vector.broadcast %507 : vector<1x32xf32> to vector<8x32xf32>
    %582 = arith.addf %580, %581 : vector<8x32xf32>
    %c1_406 = arith.constant 1 : index
    %c0_407 = arith.constant 0 : index
    %c0_408 = arith.constant 0 : index
    %583 = vector.load %arg37[%c1_406, %c0_407, %c0_408] : memref<2x1x32xf32, #tpu.memory_space<vmem>>, vector<1x1x32xf32>
    %584 = vector.shape_cast %583 : vector<1x1x32xf32> to vector<1x32xf32>
    %c2_409 = arith.constant 2 : index
    %c0_410 = arith.constant 0 : index
    %c0_411 = arith.constant 0 : index
    %585 = vector.load %arg30[%c2_409, %c0_410, %c0_411] : memref<4x32x16xf32, #tpu.memory_space<vmem>>, vector<1x32x16xf32>
    %586 = vector.shape_cast %585 : vector<1x32x16xf32> to vector<32x16xf32>
    %cst_412 = arith.constant dense<0.000000e+00> : vector<8x16xf32>
    %587 = tpu.matmul %505, %586, %cst_412 {dimension_numbers = #tpu.dot_dimension_numbers<[1], [0], [0], [1], [0, 0, 1, 1], [], []>} : vector<8x32xf32>, vector<32x16xf32>, vector<8x16xf32> -> vector<8x16xf32>
    %c2_413 = arith.constant 2 : index
    %c0_414 = arith.constant 0 : index
    %c0_415 = arith.constant 0 : index
    %588 = vector.load %arg31[%c2_413, %c0_414, %c0_415] : memref<4x1x16xf32, #tpu.memory_space<vmem>>, vector<1x1x16xf32>
    %589 = vector.shape_cast %588 : vector<1x1x16xf32> to vector<1x16xf32>
    %590 = vector.broadcast %589 : vector<1x16xf32> to vector<8x16xf32>
    %591 = arith.addf %587, %590 : vector<8x16xf32>
    %c2_416 = arith.constant 2 : index
    %c0_417 = arith.constant 0 : index
    %c0_418 = arith.constant 0 : index
    %592 = vector.load %arg32[%c2_416, %c0_417, %c0_418] : memref<4x24x16xf32, #tpu.memory_space<vmem>>, vector<1x24x16xf32>
    %593 = vector.shape_cast %592 : vector<1x24x16xf32> to vector<24x16xf32>
    %cst_419 = arith.constant dense<0.000000e+00> : vector<10x16xf32>
    %594 = tpu.matmul %5, %593, %cst_419 {dimension_numbers = #tpu.dot_dimension_numbers<[1], [0], [0], [1], [0, 0, 1, 1], [], []>} : vector<10x24xf32>, vector<24x16xf32>, vector<10x16xf32> -> vector<10x16xf32>
    %c2_420 = arith.constant 2 : index
    %c0_421 = arith.constant 0 : index
    %c0_422 = arith.constant 0 : index
    %595 = vector.load %arg33[%c2_420, %c0_421, %c0_422] : memref<4x1x16xf32, #tpu.memory_space<vmem>>, vector<1x1x16xf32>
    %596 = vector.shape_cast %595 : vector<1x1x16xf32> to vector<1x16xf32>
    %597 = vector.broadcast %596 : vector<1x16xf32> to vector<10x16xf32>
    %598 = arith.addf %594, %597 : vector<10x16xf32>
    %c2_423 = arith.constant 2 : index
    %c0_424 = arith.constant 0 : index
    %c0_425 = arith.constant 0 : index
    %599 = vector.load %arg34[%c2_423, %c0_424, %c0_425] : memref<4x24x16xf32, #tpu.memory_space<vmem>>, vector<1x24x16xf32>
    %600 = vector.shape_cast %599 : vector<1x24x16xf32> to vector<24x16xf32>
    %cst_426 = arith.constant dense<0.000000e+00> : vector<10x16xf32>
    %601 = tpu.matmul %5, %600, %cst_426 {dimension_numbers = #tpu.dot_dimension_numbers<[1], [0], [0], [1], [0, 0, 1, 1], [], []>} : vector<10x24xf32>, vector<24x16xf32>, vector<10x16xf32> -> vector<10x16xf32>
    %c2_427 = arith.constant 2 : index
    %c0_428 = arith.constant 0 : index
    %c0_429 = arith.constant 0 : index
    %602 = vector.load %arg35[%c2_427, %c0_428, %c0_429] : memref<4x1x16xf32, #tpu.memory_space<vmem>>, vector<1x1x16xf32>
    %603 = vector.shape_cast %602 : vector<1x1x16xf32> to vector<1x16xf32>
    %604 = vector.broadcast %603 : vector<1x16xf32> to vector<10x16xf32>
    %605 = arith.addf %601, %604 : vector<10x16xf32>
    %cst_430 = arith.constant dense<0.000000e+00> : vector<8x10xf32>
    %606 = tpu.matmul %591, %598, %cst_430 {dimension_numbers = #tpu.dot_dimension_numbers<[1], [1], [0], [0], [0, 0, 1, 0], [], []>} : vector<8x16xf32>, vector<10x16xf32>, vector<8x10xf32> -> vector<8x10xf32>
    %607 = arith.addf %606, %26 : vector<8x10xf32>
    %cst_431 = arith.constant dense<0xFF800000> : vector<8xf32>
    %608 = vector.multi_reduction <maximumf>, %607, %cst_431 [1] : vector<8x10xf32> to vector<8xf32>
    %609 = vector.shape_cast %608 : vector<8xf32> to vector<8x1xf32>
    %610 = vector.broadcast %609 : vector<8x1xf32> to vector<8x10xf32>
    %611 = arith.subf %607, %610 : vector<8x10xf32>
    %612 = math.exp %611 : vector<8x10xf32>
    %cst_432 = arith.constant dense<0.000000e+00> : vector<8xf32>
    %613 = vector.multi_reduction <add>, %612, %cst_432 [1] : vector<8x10xf32> to vector<8xf32>
    %614 = vector.shape_cast %613 : vector<8xf32> to vector<8x1xf32>
    %615 = tpu.reciprocal %614 {approx = true} : vector<8x1xf32> -> vector<8x1xf32>
    %616 = vector.broadcast %615 : vector<8x1xf32> to vector<8x10xf32>
    %617 = arith.mulf %612, %616 : vector<8x10xf32>
    %cst_433 = arith.constant dense<0.000000e+00> : vector<8x16xf32>
    %618 = tpu.matmul %617, %605, %cst_433 {dimension_numbers = #tpu.dot_dimension_numbers<[1], [0], [0], [1], [0, 0, 1, 1], [], []>} : vector<8x10xf32>, vector<10x16xf32>, vector<8x16xf32> -> vector<8x16xf32>
    %c2_434 = arith.constant 2 : index
    %c0_435 = arith.constant 0 : index
    %c0_436 = arith.constant 0 : index
    %619 = vector.load %arg36[%c2_434, %c0_435, %c0_436] : memref<4x16x32xf32, #tpu.memory_space<vmem>>, vector<1x16x32xf32>
    %620 = vector.shape_cast %619 : vector<1x16x32xf32> to vector<16x32xf32>
    %cst_437 = arith.constant dense<0.000000e+00> : vector<8x32xf32>
    %621 = tpu.matmul %618, %620, %cst_437 {dimension_numbers = #tpu.dot_dimension_numbers<[1], [0], [0], [1], [0, 0, 1, 1], [], []>} : vector<8x16xf32>, vector<16x32xf32>, vector<8x32xf32> -> vector<8x32xf32>
    %c3_438 = arith.constant 3 : index
    %c0_439 = arith.constant 0 : index
    %c0_440 = arith.constant 0 : index
    %622 = vector.load %arg30[%c3_438, %c0_439, %c0_440] : memref<4x32x16xf32, #tpu.memory_space<vmem>>, vector<1x32x16xf32>
    %623 = vector.shape_cast %622 : vector<1x32x16xf32> to vector<32x16xf32>
    %cst_441 = arith.constant dense<0.000000e+00> : vector<8x16xf32>
    %624 = tpu.matmul %505, %623, %cst_441 {dimension_numbers = #tpu.dot_dimension_numbers<[1], [0], [0], [1], [0, 0, 1, 1], [], []>} : vector<8x32xf32>, vector<32x16xf32>, vector<8x16xf32> -> vector<8x16xf32>
    %c3_442 = arith.constant 3 : index
    %c0_443 = arith.constant 0 : index
    %c0_444 = arith.constant 0 : index
    %625 = vector.load %arg31[%c3_442, %c0_443, %c0_444] : memref<4x1x16xf32, #tpu.memory_space<vmem>>, vector<1x1x16xf32>
    %626 = vector.shape_cast %625 : vector<1x1x16xf32> to vector<1x16xf32>
    %627 = vector.broadcast %626 : vector<1x16xf32> to vector<8x16xf32>
    %628 = arith.addf %624, %627 : vector<8x16xf32>
    %c3_445 = arith.constant 3 : index
    %c0_446 = arith.constant 0 : index
    %c0_447 = arith.constant 0 : index
    %629 = vector.load %arg32[%c3_445, %c0_446, %c0_447] : memref<4x24x16xf32, #tpu.memory_space<vmem>>, vector<1x24x16xf32>
    %630 = vector.shape_cast %629 : vector<1x24x16xf32> to vector<24x16xf32>
    %cst_448 = arith.constant dense<0.000000e+00> : vector<10x16xf32>
    %631 = tpu.matmul %5, %630, %cst_448 {dimension_numbers = #tpu.dot_dimension_numbers<[1], [0], [0], [1], [0, 0, 1, 1], [], []>} : vector<10x24xf32>, vector<24x16xf32>, vector<10x16xf32> -> vector<10x16xf32>
    %c3_449 = arith.constant 3 : index
    %c0_450 = arith.constant 0 : index
    %c0_451 = arith.constant 0 : index
    %632 = vector.load %arg33[%c3_449, %c0_450, %c0_451] : memref<4x1x16xf32, #tpu.memory_space<vmem>>, vector<1x1x16xf32>
    %633 = vector.shape_cast %632 : vector<1x1x16xf32> to vector<1x16xf32>
    %634 = vector.broadcast %633 : vector<1x16xf32> to vector<10x16xf32>
    %635 = arith.addf %631, %634 : vector<10x16xf32>
    %c3_452 = arith.constant 3 : index
    %c0_453 = arith.constant 0 : index
    %c0_454 = arith.constant 0 : index
    %636 = vector.load %arg34[%c3_452, %c0_453, %c0_454] : memref<4x24x16xf32, #tpu.memory_space<vmem>>, vector<1x24x16xf32>
    %637 = vector.shape_cast %636 : vector<1x24x16xf32> to vector<24x16xf32>
    %cst_455 = arith.constant dense<0.000000e+00> : vector<10x16xf32>
    %638 = tpu.matmul %5, %637, %cst_455 {dimension_numbers = #tpu.dot_dimension_numbers<[1], [0], [0], [1], [0, 0, 1, 1], [], []>} : vector<10x24xf32>, vector<24x16xf32>, vector<10x16xf32> -> vector<10x16xf32>
    %c3_456 = arith.constant 3 : index
    %c0_457 = arith.constant 0 : index
    %c0_458 = arith.constant 0 : index
    %639 = vector.load %arg35[%c3_456, %c0_457, %c0_458] : memref<4x1x16xf32, #tpu.memory_space<vmem>>, vector<1x1x16xf32>
    %640 = vector.shape_cast %639 : vector<1x1x16xf32> to vector<1x16xf32>
    %641 = vector.broadcast %640 : vector<1x16xf32> to vector<10x16xf32>
    %642 = arith.addf %638, %641 : vector<10x16xf32>
    %cst_459 = arith.constant dense<0.000000e+00> : vector<8x10xf32>
    %643 = tpu.matmul %628, %635, %cst_459 {dimension_numbers = #tpu.dot_dimension_numbers<[1], [1], [0], [0], [0, 0, 1, 0], [], []>} : vector<8x16xf32>, vector<10x16xf32>, vector<8x10xf32> -> vector<8x10xf32>
    %644 = arith.addf %643, %26 : vector<8x10xf32>
    %cst_460 = arith.constant dense<0xFF800000> : vector<8xf32>
    %645 = vector.multi_reduction <maximumf>, %644, %cst_460 [1] : vector<8x10xf32> to vector<8xf32>
    %646 = vector.shape_cast %645 : vector<8xf32> to vector<8x1xf32>
    %647 = vector.broadcast %646 : vector<8x1xf32> to vector<8x10xf32>
    %648 = arith.subf %644, %647 : vector<8x10xf32>
    %649 = math.exp %648 : vector<8x10xf32>
    %cst_461 = arith.constant dense<0.000000e+00> : vector<8xf32>
    %650 = vector.multi_reduction <add>, %649, %cst_461 [1] : vector<8x10xf32> to vector<8xf32>
    %651 = vector.shape_cast %650 : vector<8xf32> to vector<8x1xf32>
    %652 = tpu.reciprocal %651 {approx = true} : vector<8x1xf32> -> vector<8x1xf32>
    %653 = vector.broadcast %652 : vector<8x1xf32> to vector<8x10xf32>
    %654 = arith.mulf %649, %653 : vector<8x10xf32>
    %cst_462 = arith.constant dense<0.000000e+00> : vector<8x16xf32>
    %655 = tpu.matmul %654, %642, %cst_462 {dimension_numbers = #tpu.dot_dimension_numbers<[1], [0], [0], [1], [0, 0, 1, 1], [], []>} : vector<8x10xf32>, vector<10x16xf32>, vector<8x16xf32> -> vector<8x16xf32>
    %c3_463 = arith.constant 3 : index
    %c0_464 = arith.constant 0 : index
    %c0_465 = arith.constant 0 : index
    %656 = vector.load %arg36[%c3_463, %c0_464, %c0_465] : memref<4x16x32xf32, #tpu.memory_space<vmem>>, vector<1x16x32xf32>
    %657 = vector.shape_cast %656 : vector<1x16x32xf32> to vector<16x32xf32>
    %cst_466 = arith.constant dense<0.000000e+00> : vector<8x32xf32>
    %658 = tpu.matmul %655, %657, %cst_466 {dimension_numbers = #tpu.dot_dimension_numbers<[1], [0], [0], [1], [0, 0, 1, 1], [], []>} : vector<8x16xf32>, vector<16x32xf32>, vector<8x32xf32> -> vector<8x32xf32>
    %659 = arith.addf %621, %658 : vector<8x32xf32>
    %660 = vector.broadcast %584 : vector<1x32xf32> to vector<8x32xf32>
    %661 = arith.addf %659, %660 : vector<8x32xf32>
    %662 = vector.broadcast %12 : vector<8x1xf32> to vector<8x32xf32>
    %663 = arith.mulf %661, %662 : vector<8x32xf32>
    %664 = arith.addf %582, %663 : vector<8x32xf32>
    %665 = tpu.iota {dimensions = array<i32: 1>} : vector<1x32xi32>
    %c0_i32_467 = arith.constant 0 : i32
    %666 = vector.broadcast %c0_i32_467 : i32 to vector<1x32xi32>
    %667 = arith.cmpi eq, %665, %666 : vector<1x32xi32>
    %668 = arith.extui %667 : vector<1x32xi1> to vector<1x32xi32>
    %669 = arith.sitofp %668 : vector<1x32xi32> to vector<1x32xf32>
    %670 = vector.broadcast %669 : vector<1x32xf32> to vector<8x32xf32>
    %671 = arith.mulf %664, %670 : vector<8x32xf32>
    %cst_468 = arith.constant dense<0.000000e+00> : vector<8xf32>
    %672 = vector.multi_reduction <add>, %671, %cst_468 [1] : vector<8x32xf32> to vector<8xf32>
    %673 = vector.shape_cast %672 : vector<8xf32> to vector<8x1xf32>
    %c1_469 = arith.constant 1 : index
    %c0_470 = arith.constant 0 : index
    %c0_471 = arith.constant 0 : index
    %674 = vector.load %arg40[%c1_469, %c0_470, %c0_471] : memref<2x1x32xf32, #tpu.memory_space<vmem>>, vector<1x1x32xf32>
    %675 = vector.shape_cast %674 : vector<1x1x32xf32> to vector<1x32xf32>
    %c1_472 = arith.constant 1 : index
    %c0_473 = arith.constant 0 : index
    %c0_474 = arith.constant 0 : index
    %676 = vector.load %arg41[%c1_472, %c0_473, %c0_474] : memref<2x1x32xf32, #tpu.memory_space<vmem>>, vector<1x1x32xf32>
    %677 = vector.shape_cast %676 : vector<1x1x32xf32> to vector<1x32xf32>
    %678 = vector.broadcast %673 : vector<8x1xf32> to vector<8x32xf32>
    %679 = arith.addf %505, %678 : vector<8x32xf32>
    %cst_475 = arith.constant dense<0.000000e+00> : vector<8xf32>
    %680 = vector.multi_reduction <add>, %679, %cst_475 [1] : vector<8x32xf32> to vector<8xf32>
    %681 = vector.shape_cast %680 : vector<8xf32> to vector<8x1xf32>
    %cst_476 = arith.constant 3.200000e+01 : f32
    %682 = vector.broadcast %cst_476 : f32 to vector<8x1xf32>
    %683 = arith.divf %681, %682 : vector<8x1xf32>
    %684 = vector.broadcast %683 : vector<8x1xf32> to vector<8x32xf32>
    %685 = arith.subf %679, %684 : vector<8x32xf32>
    %686 = arith.mulf %685, %685 : vector<8x32xf32>
    %cst_477 = arith.constant dense<0.000000e+00> : vector<8xf32>
    %687 = vector.multi_reduction <add>, %686, %cst_477 [1] : vector<8x32xf32> to vector<8xf32>
    %688 = vector.shape_cast %687 : vector<8xf32> to vector<8x1xf32>
    %cst_478 = arith.constant 3.200000e+01 : f32
    %689 = vector.broadcast %cst_478 : f32 to vector<8x1xf32>
    %690 = arith.divf %688, %689 : vector<8x1xf32>
    %691 = vector.broadcast %683 : vector<8x1xf32> to vector<8x32xf32>
    %692 = arith.subf %679, %691 : vector<8x32xf32>
    %cst_479 = arith.constant 9.99999974E-6 : f32
    %693 = vector.broadcast %cst_479 : f32 to vector<8x1xf32>
    %694 = arith.addf %690, %693 : vector<8x1xf32>
    %695 = math.rsqrt %694 : vector<8x1xf32>
    %696 = vector.broadcast %695 : vector<8x1xf32> to vector<8x32xf32>
    %697 = arith.mulf %692, %696 : vector<8x32xf32>
    %698 = vector.broadcast %675 : vector<1x32xf32> to vector<8x32xf32>
    %699 = arith.mulf %697, %698 : vector<8x32xf32>
    %700 = vector.broadcast %677 : vector<1x32xf32> to vector<8x32xf32>
    %701 = arith.addf %699, %700 : vector<8x32xf32>
    %c1_480 = arith.constant 1 : index
    %c0_481 = arith.constant 0 : index
    %c0_482 = arith.constant 0 : index
    %702 = vector.load %arg44[%c1_480, %c0_481, %c0_482] : memref<2x32x48xf32, #tpu.memory_space<vmem>>, vector<1x32x48xf32>
    %703 = vector.shape_cast %702 : vector<1x32x48xf32> to vector<32x48xf32>
    %cst_483 = arith.constant dense<0.000000e+00> : vector<8x48xf32>
    %704 = tpu.matmul %701, %703, %cst_483 {dimension_numbers = #tpu.dot_dimension_numbers<[1], [0], [0], [1], [0, 0, 1, 1], [], []>} : vector<8x32xf32>, vector<32x48xf32>, vector<8x48xf32> -> vector<8x48xf32>
    %c1_484 = arith.constant 1 : index
    %c0_485 = arith.constant 0 : index
    %c0_486 = arith.constant 0 : index
    %705 = vector.load %arg45[%c1_484, %c0_485, %c0_486] : memref<2x1x48xf32, #tpu.memory_space<vmem>>, vector<1x1x48xf32>
    %706 = vector.shape_cast %705 : vector<1x1x48xf32> to vector<1x48xf32>
    %707 = vector.broadcast %706 : vector<1x48xf32> to vector<8x48xf32>
    %708 = arith.addf %704, %707 : vector<8x48xf32>
    %cst_487 = arith.constant 0.000000e+00 : f32
    %709 = vector.broadcast %cst_487 : f32 to vector<8x48xf32>
    %710 = arith.maximumf %708, %709 : vector<8x48xf32>
    %c1_488 = arith.constant 1 : index
    %c0_489 = arith.constant 0 : index
    %c0_490 = arith.constant 0 : index
    %711 = vector.load %arg46[%c1_488, %c0_489, %c0_490] : memref<2x48x32xf32, #tpu.memory_space<vmem>>, vector<1x48x32xf32>
    %712 = vector.shape_cast %711 : vector<1x48x32xf32> to vector<48x32xf32>
    %cst_491 = arith.constant dense<0.000000e+00> : vector<8x32xf32>
    %713 = tpu.matmul %710, %712, %cst_491 {dimension_numbers = #tpu.dot_dimension_numbers<[1], [0], [0], [1], [0, 0, 1, 1], [], []>} : vector<8x48xf32>, vector<48x32xf32>, vector<8x32xf32> -> vector<8x32xf32>
    %c1_492 = arith.constant 1 : index
    %c0_493 = arith.constant 0 : index
    %c0_494 = arith.constant 0 : index
    %714 = vector.load %arg47[%c1_492, %c0_493, %c0_494] : memref<2x1x32xf32, #tpu.memory_space<vmem>>, vector<1x1x32xf32>
    %715 = vector.shape_cast %714 : vector<1x1x32xf32> to vector<1x32xf32>
    %716 = vector.broadcast %715 : vector<1x32xf32> to vector<8x32xf32>
    %717 = arith.addf %713, %716 : vector<8x32xf32>
    %c1_495 = arith.constant 1 : index
    %c0_496 = arith.constant 0 : index
    %c0_497 = arith.constant 0 : index
    %718 = vector.load %arg42[%c1_495, %c0_496, %c0_497] : memref<2x1x32xf32, #tpu.memory_space<vmem>>, vector<1x1x32xf32>
    %719 = vector.shape_cast %718 : vector<1x1x32xf32> to vector<1x32xf32>
    %c1_498 = arith.constant 1 : index
    %c0_499 = arith.constant 0 : index
    %c0_500 = arith.constant 0 : index
    %720 = vector.load %arg43[%c1_498, %c0_499, %c0_500] : memref<2x1x32xf32, #tpu.memory_space<vmem>>, vector<1x1x32xf32>
    %721 = vector.shape_cast %720 : vector<1x1x32xf32> to vector<1x32xf32>
    %722 = arith.addf %701, %717 : vector<8x32xf32>
    %cst_501 = arith.constant dense<0.000000e+00> : vector<8xf32>
    %723 = vector.multi_reduction <add>, %722, %cst_501 [1] : vector<8x32xf32> to vector<8xf32>
    %724 = vector.shape_cast %723 : vector<8xf32> to vector<8x1xf32>
    %cst_502 = arith.constant 3.200000e+01 : f32
    %725 = vector.broadcast %cst_502 : f32 to vector<8x1xf32>
    %726 = arith.divf %724, %725 : vector<8x1xf32>
    %727 = vector.broadcast %726 : vector<8x1xf32> to vector<8x32xf32>
    %728 = arith.subf %722, %727 : vector<8x32xf32>
    %729 = arith.mulf %728, %728 : vector<8x32xf32>
    %cst_503 = arith.constant dense<0.000000e+00> : vector<8xf32>
    %730 = vector.multi_reduction <add>, %729, %cst_503 [1] : vector<8x32xf32> to vector<8xf32>
    %731 = vector.shape_cast %730 : vector<8xf32> to vector<8x1xf32>
    %cst_504 = arith.constant 3.200000e+01 : f32
    %732 = vector.broadcast %cst_504 : f32 to vector<8x1xf32>
    %733 = arith.divf %731, %732 : vector<8x1xf32>
    %734 = vector.broadcast %726 : vector<8x1xf32> to vector<8x32xf32>
    %735 = arith.subf %722, %734 : vector<8x32xf32>
    %cst_505 = arith.constant 9.99999974E-6 : f32
    %736 = vector.broadcast %cst_505 : f32 to vector<8x1xf32>
    %737 = arith.addf %733, %736 : vector<8x1xf32>
    %738 = math.rsqrt %737 : vector<8x1xf32>
    %739 = vector.broadcast %738 : vector<8x1xf32> to vector<8x32xf32>
    %740 = arith.mulf %735, %739 : vector<8x32xf32>
    %741 = vector.broadcast %719 : vector<1x32xf32> to vector<8x32xf32>
    %742 = arith.mulf %740, %741 : vector<8x32xf32>
    %743 = vector.broadcast %721 : vector<1x32xf32> to vector<8x32xf32>
    %744 = arith.addf %742, %743 : vector<8x32xf32>
    %c0_506 = arith.constant 0 : index
    %c0_507 = arith.constant 0 : index
    %c0_508 = arith.constant 0 : index
    %745 = vector.load %arg48[%c0_506, %c0_507, %c0_508] : memref<1x32x12xf32, #tpu.memory_space<vmem>>, vector<1x32x12xf32>
    %746 = vector.shape_cast %745 : vector<1x32x12xf32> to vector<32x12xf32>
    %cst_509 = arith.constant dense<0.000000e+00> : vector<8x12xf32>
    %747 = tpu.matmul %744, %746, %cst_509 {dimension_numbers = #tpu.dot_dimension_numbers<[1], [0], [0], [1], [0, 0, 1, 1], [], []>} : vector<8x32xf32>, vector<32x12xf32>, vector<8x12xf32> -> vector<8x12xf32>
    %c0_510 = arith.constant 0 : index
    %c0_511 = arith.constant 0 : index
    %c0_512 = arith.constant 0 : index
    %748 = vector.load %arg49[%c0_510, %c0_511, %c0_512] : memref<1x1x12xf32, #tpu.memory_space<vmem>>, vector<1x1x12xf32>
    %749 = vector.shape_cast %748 : vector<1x1x12xf32> to vector<1x12xf32>
    %750 = vector.broadcast %749 : vector<1x12xf32> to vector<8x12xf32>
    %751 = arith.addf %747, %750 : vector<8x12xf32>
    %752 = vector.broadcast %12 : vector<8x1xf32> to vector<8x12xf32>
    %753 = arith.mulf %751, %752 : vector<8x12xf32>
    %c0_513 = arith.constant 0 : index
    %c0_514 = arith.constant 0 : index
    %c0_515 = arith.constant 0 : index
    %754 = vector.load %arg50[%c0_513, %c0_514, %c0_515] : memref<1x8x12xf32, #tpu.memory_space<vmem>>, vector<1x8x12xf32>
    %755 = vector.shape_cast %754 : vector<1x8x12xf32> to vector<8x12xf32>
    %756 = vector.shape_cast %753 : vector<8x12xf32> to vector<1x8x12xf32>
    tpu.vector_store %arg50[%c0_513, %c0_514, %c0_515], %756 {strides = array<i32>} : memref<1x8x12xf32, #tpu.memory_space<vmem>>, vector<1x8x12xf32>,
    return
  }
  func.func @transform_0(%arg0: i32, %arg1: memref<2xi32, #tpu.memory_space<smem>>) -> (i32, i32, i32) {
    %c0_i32 = arith.constant 0 : i32
    %c0_i32_0 = arith.constant 0 : i32
    %c0_i32_1 = arith.constant 0 : i32
    return %arg0, %c0_i32, %c0_i32_0 : i32, i32, i32
  }
  func.func @transform_1(%arg0: i32, %arg1: memref<2xi32, #tpu.memory_space<smem>>) -> (i32, i32, i32) {
    %c0_i32 = arith.constant 0 : i32
    %c0_i32_0 = arith.constant 0 : i32
    %c0_i32_1 = arith.constant 0 : i32
    return %arg0, %c0_i32, %c0_i32_0 : i32, i32, i32
  }
  func.func @transform_2(%arg0: i32, %arg1: memref<2xi32, #tpu.memory_space<smem>>) -> (i32, i32, i32) {
    %c0_i32 = arith.constant 0 : i32
    %c0_i32_0 = arith.constant 0 : i32
    %c0_i32_1 = arith.constant 0 : i32
    return %arg0, %c0_i32, %c0_i32_0 : i32, i32, i32
  }
  func.func @transform_3(%arg0: i32, %arg1: memref<2xi32, #tpu.memory_space<smem>>) -> (i32, i32, i32) {
    %c0_i32 = arith.constant 0 : i32
    %c0_i32_0 = arith.constant 0 : i32
    %c0_i32_1 = arith.constant 0 : i32
    return %arg0, %c0_i32, %c0_i32_0 : i32, i32, i32
  }
  func.func @transform_4(%arg0: i32, %arg1: memref<2xi32, #tpu.memory_space<smem>>) -> (i32, i32, i32) {
    %c0_i32 = arith.constant 0 : i32
    %c0_i32_0 = arith.constant 0 : i32
    %c0_i32_1 = arith.constant 0 : i32
    return %arg0, %c0_i32, %c0_i32_0 : i32, i32, i32
  }
  func.func @transform_5(%arg0: i32, %arg1: memref<2xi32, #tpu.memory_space<smem>>) -> (i32, i32, i32) {
    %c0_i32 = arith.constant 0 : i32
    %c0_i32_0 = arith.constant 0 : i32
    %c0_i32_1 = arith.constant 0 : i32
    return %arg0, %c0_i32, %c0_i32_0 : i32, i32, i32
  }
  func.func @transform_6(%arg0: i32, %arg1: memref<2xi32, #tpu.memory_space<smem>>) -> (i32, i32, i32) {
    %c0_i32 = arith.constant 0 : i32
    %c0_i32_0 = arith.constant 0 : i32
    %c0_i32_1 = arith.constant 0 : i32
    return %arg0, %c0_i32, %c0_i32_0 : i32, i32, i32
  }
  func.func @transform_7(%arg0: i32, %arg1: memref<2xi32, #tpu.memory_space<smem>>) -> (i32, i32, i32) {
    %c0_i32 = arith.constant 0 : i32
    %c0_i32_0 = arith.constant 0 : i32
    %c0_i32_1 = arith.constant 0 : i32
    return %arg0, %c0_i32, %c0_i32_0 : i32, i32, i32
  }
  func.func @transform_8(%arg0: i32, %arg1: memref<2xi32, #tpu.memory_space<smem>>) -> (i32, i32) {
    %c0_i32 = arith.constant 0 : i32
    %c0_i32_0 = arith.constant 0 : i32
    %c0_i32_1 = arith.constant 0 : i32
    return %c0_i32, %c0_i32_0 : i32, i32
  }
  func.func @transform_9(%arg0: i32, %arg1: memref<2xi32, #tpu.memory_space<smem>>) -> (i32, i32) {
    %c0_i32 = arith.constant 0 : i32
    %c0_i32_0 = arith.constant 0 : i32
    %c0_i32_1 = arith.constant 0 : i32
    return %c0_i32, %c0_i32_0 : i32, i32
  }
  func.func @transform_10(%arg0: i32, %arg1: memref<2xi32, #tpu.memory_space<smem>>) -> (i32, i32, i32) {
    %c0_i32 = arith.constant 0 : i32
    %c0_i32_0 = arith.constant 0 : i32
    %c0_i32_1 = arith.constant 0 : i32
    %c0_i32_2 = arith.constant 0 : i32
    return %c0_i32, %c0_i32_0, %c0_i32_1 : i32, i32, i32
  }
  func.func @transform_11(%arg0: i32, %arg1: memref<2xi32, #tpu.memory_space<smem>>) -> (i32, i32, i32) {
    %c0_i32 = arith.constant 0 : i32
    %c0_i32_0 = arith.constant 0 : i32
    %c0_i32_1 = arith.constant 0 : i32
    %c0_i32_2 = arith.constant 0 : i32
    return %c0_i32, %c0_i32_0, %c0_i32_1 : i32, i32, i32
  }
  func.func @transform_12(%arg0: i32, %arg1: memref<2xi32, #tpu.memory_space<smem>>) -> (i32, i32, i32) {
    %c0_i32 = arith.constant 0 : i32
    %c0_i32_0 = arith.constant 0 : i32
    %c0_i32_1 = arith.constant 0 : i32
    %c0_i32_2 = arith.constant 0 : i32
    return %c0_i32, %c0_i32_0, %c0_i32_1 : i32, i32, i32
  }
  func.func @transform_13(%arg0: i32, %arg1: memref<2xi32, #tpu.memory_space<smem>>) -> (i32, i32, i32) {
    %c0_i32 = arith.constant 0 : i32
    %c0_i32_0 = arith.constant 0 : i32
    %c0_i32_1 = arith.constant 0 : i32
    %c0_i32_2 = arith.constant 0 : i32
    return %c0_i32, %c0_i32_0, %c0_i32_1 : i32, i32, i32
  }
  func.func @transform_14(%arg0: i32, %arg1: memref<2xi32, #tpu.memory_space<smem>>) -> (i32, i32, i32) {
    %c0_i32 = arith.constant 0 : i32
    %c0_i32_0 = arith.constant 0 : i32
    %c0_i32_1 = arith.constant 0 : i32
    %c0_i32_2 = arith.constant 0 : i32
    return %c0_i32, %c0_i32_0, %c0_i32_1 : i32, i32, i32
  }
  func.func @transform_15(%arg0: i32, %arg1: memref<2xi32, #tpu.memory_space<smem>>) -> (i32, i32, i32) {
    %c0_i32 = arith.constant 0 : i32
    %c0_i32_0 = arith.constant 0 : i32
    %c0_i32_1 = arith.constant 0 : i32
    %c0_i32_2 = arith.constant 0 : i32
    return %c0_i32, %c0_i32_0, %c0_i32_1 : i32, i32, i32
  }
  func.func @transform_16(%arg0: i32, %arg1: memref<2xi32, #tpu.memory_space<smem>>) -> (i32, i32, i32) {
    %c0_i32 = arith.constant 0 : i32
    %c0_i32_0 = arith.constant 0 : i32
    %c0_i32_1 = arith.constant 0 : i32
    %c0_i32_2 = arith.constant 0 : i32
    return %c0_i32, %c0_i32_0, %c0_i32_1 : i32, i32, i32
  }
  func.func @transform_17(%arg0: i32, %arg1: memref<2xi32, #tpu.memory_space<smem>>) -> (i32, i32, i32) {
    %c0_i32 = arith.constant 0 : i32
    %c0_i32_0 = arith.constant 0 : i32
    %c0_i32_1 = arith.constant 0 : i32
    %c0_i32_2 = arith.constant 0 : i32
    return %c0_i32, %c0_i32_0, %c0_i32_1 : i32, i32, i32
  }
  func.func @transform_18(%arg0: i32, %arg1: memref<2xi32, #tpu.memory_space<smem>>) -> (i32, i32, i32) {
    %c0_i32 = arith.constant 0 : i32
    %c0_i32_0 = arith.constant 0 : i32
    %c0_i32_1 = arith.constant 0 : i32
    %c0_i32_2 = arith.constant 0 : i32
    return %c0_i32, %c0_i32_0, %c0_i32_1 : i32, i32, i32
  }
  func.func @transform_19(%arg0: i32, %arg1: memref<2xi32, #tpu.memory_space<smem>>) -> (i32, i32, i32) {
    %c0_i32 = arith.constant 0 : i32
    %c0_i32_0 = arith.constant 0 : i32
    %c0_i32_1 = arith.constant 0 : i32
    %c0_i32_2 = arith.constant 0 : i32
    return %c0_i32, %c0_i32_0, %c0_i32_1 : i32, i32, i32
  }
  func.func @transform_20(%arg0: i32, %arg1: memref<2xi32, #tpu.memory_space<smem>>) -> (i32, i32, i32) {
    %c0_i32 = arith.constant 0 : i32
    %c0_i32_0 = arith.constant 0 : i32
    %c0_i32_1 = arith.constant 0 : i32
    %c0_i32_2 = arith.constant 0 : i32
    return %c0_i32, %c0_i32_0, %c0_i32_1 : i32, i32, i32
  }
  func.func @transform_21(%arg0: i32, %arg1: memref<2xi32, #tpu.memory_space<smem>>) -> (i32, i32, i32) {
    %c0_i32 = arith.constant 0 : i32
    %c0_i32_0 = arith.constant 0 : i32
    %c0_i32_1 = arith.constant 0 : i32
    %c0_i32_2 = arith.constant 0 : i32
    return %c0_i32, %c0_i32_0, %c0_i32_1 : i32, i32, i32
  }
  func.func @transform_22(%arg0: i32, %arg1: memref<2xi32, #tpu.memory_space<smem>>) -> (i32, i32, i32) {
    %c0_i32 = arith.constant 0 : i32
    %c0_i32_0 = arith.constant 0 : i32
    %c0_i32_1 = arith.constant 0 : i32
    %c0_i32_2 = arith.constant 0 : i32
    return %c0_i32, %c0_i32_0, %c0_i32_1 : i32, i32, i32
  }
  func.func @transform_23(%arg0: i32, %arg1: memref<2xi32, #tpu.memory_space<smem>>) -> (i32, i32, i32) {
    %c0_i32 = arith.constant 0 : i32
    %c0_i32_0 = arith.constant 0 : i32
    %c0_i32_1 = arith.constant 0 : i32
    %c0_i32_2 = arith.constant 0 : i32
    return %c0_i32, %c0_i32_0, %c0_i32_1 : i32, i32, i32
  }
  func.func @transform_24(%arg0: i32, %arg1: memref<2xi32, #tpu.memory_space<smem>>) -> (i32, i32, i32) {
    %c0_i32 = arith.constant 0 : i32
    %c0_i32_0 = arith.constant 0 : i32
    %c0_i32_1 = arith.constant 0 : i32
    %c0_i32_2 = arith.constant 0 : i32
    return %c0_i32, %c0_i32_0, %c0_i32_1 : i32, i32, i32
  }
  func.func @transform_25(%arg0: i32, %arg1: memref<2xi32, #tpu.memory_space<smem>>) -> (i32, i32, i32) {
    %c0_i32 = arith.constant 0 : i32
    %c0_i32_0 = arith.constant 0 : i32
    %c0_i32_1 = arith.constant 0 : i32
    %c0_i32_2 = arith.constant 0 : i32
    return %c0_i32, %c0_i32_0, %c0_i32_1 : i32, i32, i32
  }
  func.func @transform_26(%arg0: i32, %arg1: memref<2xi32, #tpu.memory_space<smem>>) -> (i32, i32, i32) {
    %c0_i32 = arith.constant 0 : i32
    %c0_i32_0 = arith.constant 0 : i32
    %c0_i32_1 = arith.constant 0 : i32
    %c0_i32_2 = arith.constant 0 : i32
    return %c0_i32, %c0_i32_0, %c0_i32_1 : i32, i32, i32
  }
  func.func @transform_27(%arg0: i32, %arg1: memref<2xi32, #tpu.memory_space<smem>>) -> (i32, i32, i32) {
    %c0_i32 = arith.constant 0 : i32
    %c0_i32_0 = arith.constant 0 : i32
    %c0_i32_1 = arith.constant 0 : i32
    %c0_i32_2 = arith.constant 0 : i32
    return %c0_i32, %c0_i32_0, %c0_i32_1 : i32, i32, i32
  }
  func.func @transform_28(%arg0: i32, %arg1: memref<2xi32, #tpu.memory_space<smem>>) -> (i32, i32, i32) {
    %c0_i32 = arith.constant 0 : i32
    %c0_i32_0 = arith.constant 0 : i32
    %c0_i32_1 = arith.constant 0 : i32
    %c0_i32_2 = arith.constant 0 : i32
    return %c0_i32, %c0_i32_0, %c0_i32_1 : i32, i32, i32
  }
  func.func @transform_29(%arg0: i32, %arg1: memref<2xi32, #tpu.memory_space<smem>>) -> (i32, i32, i32) {
    %c0_i32 = arith.constant 0 : i32
    %c0_i32_0 = arith.constant 0 : i32
    %c0_i32_1 = arith.constant 0 : i32
    %c0_i32_2 = arith.constant 0 : i32
    return %c0_i32, %c0_i32_0, %c0_i32_1 : i32, i32, i32
  }
  func.func @transform_30(%arg0: i32, %arg1: memref<2xi32, #tpu.memory_space<smem>>) -> (i32, i32, i32) {
    %c0_i32 = arith.constant 0 : i32
    %c0_i32_0 = arith.constant 0 : i32
    %c0_i32_1 = arith.constant 0 : i32
    %c0_i32_2 = arith.constant 0 : i32
    return %c0_i32, %c0_i32_0, %c0_i32_1 : i32, i32, i32
  }
  func.func @transform_31(%arg0: i32, %arg1: memref<2xi32, #tpu.memory_space<smem>>) -> (i32, i32, i32) {
    %c0_i32 = arith.constant 0 : i32
    %c0_i32_0 = arith.constant 0 : i32
    %c0_i32_1 = arith.constant 0 : i32
    %c0_i32_2 = arith.constant 0 : i32
    return %c0_i32, %c0_i32_0, %c0_i32_1 : i32, i32, i32
  }
  func.func @transform_32(%arg0: i32, %arg1: memref<2xi32, #tpu.memory_space<smem>>) -> (i32, i32, i32) {
    %c0_i32 = arith.constant 0 : i32
    %c0_i32_0 = arith.constant 0 : i32
    %c0_i32_1 = arith.constant 0 : i32
    %c0_i32_2 = arith.constant 0 : i32
    return %c0_i32, %c0_i32_0, %c0_i32_1 : i32, i32, i32
  }
  func.func @transform_33(%arg0: i32, %arg1: memref<2xi32, #tpu.memory_space<smem>>) -> (i32, i32, i32) {
    %c0_i32 = arith.constant 0 : i32
    %c0_i32_0 = arith.constant 0 : i32
    %c0_i32_1 = arith.constant 0 : i32
    %c0_i32_2 = arith.constant 0 : i32
    return %c0_i32, %c0_i32_0, %c0_i32_1 : i32, i32, i32
  }
  func.func @transform_34(%arg0: i32, %arg1: memref<2xi32, #tpu.memory_space<smem>>) -> (i32, i32, i32) {
    %c0_i32 = arith.constant 0 : i32
    %c0_i32_0 = arith.constant 0 : i32
    %c0_i32_1 = arith.constant 0 : i32
    %c0_i32_2 = arith.constant 0 : i32
    return %c0_i32, %c0_i32_0, %c0_i32_1 : i32, i32, i32
  }
  func.func @transform_35(%arg0: i32, %arg1: memref<2xi32, #tpu.memory_space<smem>>) -> (i32, i32, i32) {
    %c0_i32 = arith.constant 0 : i32
    %c0_i32_0 = arith.constant 0 : i32
    %c0_i32_1 = arith.constant 0 : i32
    %c0_i32_2 = arith.constant 0 : i32
    return %c0_i32, %c0_i32_0, %c0_i32_1 : i32, i32, i32
  }
  func.func @transform_36(%arg0: i32, %arg1: memref<2xi32, #tpu.memory_space<smem>>) -> (i32, i32, i32) {
    %c0_i32 = arith.constant 0 : i32
    %c0_i32_0 = arith.constant 0 : i32
    %c0_i32_1 = arith.constant 0 : i32
    %c0_i32_2 = arith.constant 0 : i32
    return %c0_i32, %c0_i32_0, %c0_i32_1 : i32, i32, i32
  }
  func.func @transform_37(%arg0: i32, %arg1: memref<2xi32, #tpu.memory_space<smem>>) -> (i32, i32, i32) {
    %c0_i32 = arith.constant 0 : i32
    %c0_i32_0 = arith.constant 0 : i32
    %c0_i32_1 = arith.constant 0 : i32
    %c0_i32_2 = arith.constant 0 : i32
    return %c0_i32, %c0_i32_0, %c0_i32_1 : i32, i32, i32
  }
  func.func @transform_38(%arg0: i32, %arg1: memref<2xi32, #tpu.memory_space<smem>>) -> (i32, i32, i32) {
    %c0_i32 = arith.constant 0 : i32
    %c0_i32_0 = arith.constant 0 : i32
    %c0_i32_1 = arith.constant 0 : i32
    %c0_i32_2 = arith.constant 0 : i32
    return %c0_i32, %c0_i32_0, %c0_i32_1 : i32, i32, i32
  }
  func.func @transform_39(%arg0: i32, %arg1: memref<2xi32, #tpu.memory_space<smem>>) -> (i32, i32, i32) {
    %c0_i32 = arith.constant 0 : i32
    %c0_i32_0 = arith.constant 0 : i32
    %c0_i32_1 = arith.constant 0 : i32
    %c0_i32_2 = arith.constant 0 : i32
    return %c0_i32, %c0_i32_0, %c0_i32_1 : i32, i32, i32
  }
  func.func @transform_40(%arg0: i32, %arg1: memref<2xi32, #tpu.memory_space<smem>>) -> (i32, i32, i32) {
    %c0_i32 = arith.constant 0 : i32
    %c0_i32_0 = arith.constant 0 : i32
    %c0_i32_1 = arith.constant 0 : i32
    %c0_i32_2 = arith.constant 0 : i32
    return %c0_i32, %c0_i32_0, %c0_i32_1 : i32, i32, i32
  }
  func.func @transform_41(%arg0: i32, %arg1: memref<2xi32, #tpu.memory_space<smem>>) -> (i32, i32, i32) {
    %c0_i32 = arith.constant 0 : i32
    %c0_i32_0 = arith.constant 0 : i32
    %c0_i32_1 = arith.constant 0 : i32
    %c0_i32_2 = arith.constant 0 : i32
    return %c0_i32, %c0_i32_0, %c0_i32_1 : i32, i32, i32
  }
  func.func @transform_42(%arg0: i32, %arg1: memref<2xi32, #tpu.memory_space<smem>>) -> (i32, i32, i32) {
    %c0_i32 = arith.constant 0 : i32
    %c0_i32_0 = arith.constant 0 : i32
    %c0_i32_1 = arith.constant 0 : i32
    %c0_i32_2 = arith.constant 0 : i32
    return %c0_i32, %c0_i32_0, %c0_i32_1 : i32, i32, i32
  }
  func.func @transform_43(%arg0: i32, %arg1: memref<2xi32, #tpu.memory_space<smem>>) -> (i32, i32, i32) {
    %c0_i32 = arith.constant 0 : i32
    %c0_i32_0 = arith.constant 0 : i32
    %c0_i32_1 = arith.constant 0 : i32
    %c0_i32_2 = arith.constant 0 : i32
    return %c0_i32, %c0_i32_0, %c0_i32_1 : i32, i32, i32
  }
  func.func @transform_44(%arg0: i32, %arg1: memref<2xi32, #tpu.memory_space<smem>>) -> (i32, i32, i32) {
    %c0_i32 = arith.constant 0 : i32
    %c0_i32_0 = arith.constant 0 : i32
    %c0_i32_1 = arith.constant 0 : i32
    %c0_i32_2 = arith.constant 0 : i32
    return %c0_i32, %c0_i32_0, %c0_i32_1 : i32, i32, i32
  }
  func.func @transform_45(%arg0: i32, %arg1: memref<2xi32, #tpu.memory_space<smem>>) -> (i32, i32, i32) {
    %c0_i32 = arith.constant 0 : i32
    %c0_i32_0 = arith.constant 0 : i32
    %c0_i32_1 = arith.constant 0 : i32
    %c0_i32_2 = arith.constant 0 : i32
    return %c0_i32, %c0_i32_0, %c0_i32_1 : i32, i32, i32
  }
  func.func @transform_46(%arg0: i32, %arg1: memref<2xi32, #tpu.memory_space<smem>>) -> (i32, i32, i32) {
    %0 = arith.index_cast %arg0 : i32 to index
    %1 = memref.load %arg1[%0] : memref<2xi32, #tpu.memory_space<smem>>
    %c0_i32 = arith.constant 0 : i32
    %c0_i32_0 = arith.constant 0 : i32
    %c0_i32_1 = arith.constant 0 : i32
    return %1, %c0_i32, %c0_i32_0 : i32, i32, i32
  }
  func.func @transform_47(%arg0: i32, %arg1: memref<2xi32, #tpu.memory_space<smem>>) -> (i32, i32, i32) {
    %0 = arith.index_cast %arg0 : i32 to index
    %1 = memref.load %arg1[%0] : memref<2xi32, #tpu.memory_space<smem>>
    %c0_i32 = arith.constant 0 : i32
    %c0_i32_0 = arith.constant 0 : i32
    %c0_i32_1 = arith.constant 0 : i32
    return %1, %c0_i32, %c0_i32_0 : i32, i32, i32
  }
  func.func @transform_48(%arg0: i32, %arg1: memref<2xi32, #tpu.memory_space<smem>>) -> (i32, i32, i32) {
    %c0_i32 = arith.constant 0 : i32
    %c0_i32_0 = arith.constant 0 : i32
    %c0_i32_1 = arith.constant 0 : i32
    return %arg0, %c0_i32, %c0_i32_0 : i32, i32, i32
  }
}

</mosaic_0001>

<llo_original>
// kernel: decoder_forward.1
$region0: #{decoder_forward.1}
  #allocation0 [shape = 'u32[]', space=smem, size = 0x4, offset = 0x4, fixed_abs, tag = 'smem constant byte address 0x4 - core index']
  #allocation1 [shape = 'u32[144,128]{1,0:T(1,128)}', space=vmem, size = 0x12000, scoped, tag = 'internal scratch']
  #allocation2 [shape = 's32[1]{0}', space=sflag, size = 0x4, scoped, tag = 'scoped memory for decoder_forward.1']
  #allocation3 [shape = 'u8[512]{0}', space=smem, size = 0x200, scoped, tag = 'prefetched SMEM operand 0']
  %s0 = inlined_call_operand.smem [shape: u32[50], index: -1, kind: input, shape index: {}]
  %s1 = sld [smem:[%s0]]
  %s2 = scalar_lea.smem %s0, 1
  %s3 = sld [smem:[%s2]]
  %s4 = scalar_lea.smem %s0, 2
  %s5 = sld [smem:[%s4]]
  %s6 = scalar_lea.smem %s0, 3
  %s7 = sld [smem:[%s6]]
  %s8 = scalar_lea.smem %s0, 4
  %s9 = sld [smem:[%s8]]
  %s10 = scalar_lea.smem %s0, 5
  %s11 = sld [smem:[%s10]]
  %s12 = scalar_lea.smem %s0, 6
  %s13 = sld [smem:[%s12]]
  %s14 = scalar_lea.smem %s0, 7
  %s15 = sld [smem:[%s14]]
  %s16 = scalar_lea.smem %s0, 8
  %s17 = sld [smem:[%s16]]
  %s18 = scalar_lea.smem %s0, 9
  %s19 = sld [smem:[%s18]]
  %s20 = scalar_lea.smem %s0, 10
  %s21 = sld [smem:[%s20]]
  %s22 = scalar_lea.smem %s0, 11
  %s23 = sld [smem:[%s22]]
  %s24 = scalar_lea.smem %s0, 12
  %s25 = sld [smem:[%s24]]
  %s26 = scalar_lea.smem %s0, 13
  %s27 = sld [smem:[%s26]]
  %s28 = scalar_lea.smem %s0, 14
  %s29 = sld [smem:[%s28]]
  %s30 = scalar_lea.smem %s0, 15
  %s31 = sld [smem:[%s30]]
  %s32 = scalar_lea.smem %s0, 16
  %s33 = sld [smem:[%s32]]
  %s34 = scalar_lea.smem %s0, 17
  %s35 = sld [smem:[%s34]]
  %s36 = scalar_lea.smem %s0, 18
  %s37 = sld [smem:[%s36]]
  %s38 = scalar_lea.smem %s0, 19
  %s39 = sld [smem:[%s38]]
  %s40 = scalar_lea.smem %s0, 20
  %s41 = sld [smem:[%s40]]
  %s42 = scalar_lea.smem %s0, 21
  %s43 = sld [smem:[%s42]]
  %s44 = scalar_lea.smem %s0, 22
  %s45 = sld [smem:[%s44]]
  %s46 = scalar_lea.smem %s0, 23
  %s47 = sld [smem:[%s46]]
  %s48 = scalar_lea.smem %s0, 24
  %s49 = sld [smem:[%s48]]
  %s50 = scalar_lea.smem %s0, 25
  %s51 = sld [smem:[%s50]]
  %s52 = scalar_lea.smem %s0, 26
  %s53 = sld [smem:[%s52]]
  %s54 = scalar_lea.smem %s0, 27
  %s55 = sld [smem:[%s54]]
  %s56 = scalar_lea.smem %s0, 28
  %s57 = sld [smem:[%s56]]
  %s58 = scalar_lea.smem %s0, 29
  %s59 = sld [smem:[%s58]]
  %s60 = scalar_lea.smem %s0, 30
  %s61 = sld [smem:[%s60]]
  %s62 = scalar_lea.smem %s0, 31
  %s63 = sld [smem:[%s62]]
  %s64 = scalar_lea.smem %s0, 32
  %s65 = sld [smem:[%s64]]
  %s66 = scalar_lea.smem %s0, 33
  %s67 = sld [smem:[%s66]]
  %s68 = scalar_lea.smem %s0, 34
  %s69 = sld [smem:[%s68]]
  %s70 = scalar_lea.smem %s0, 35
  %s71 = sld [smem:[%s70]]
  %s72 = scalar_lea.smem %s0, 36
  %s73 = sld [smem:[%s72]]
  %s74 = scalar_lea.smem %s0, 37
  %s75 = sld [smem:[%s74]]
  %s76 = scalar_lea.smem %s0, 38
  %s77 = sld [smem:[%s76]]
  %s78 = scalar_lea.smem %s0, 39
  %s79 = sld [smem:[%s78]]
  %s80 = scalar_lea.smem %s0, 40
  %s81 = sld [smem:[%s80]]
  %s82 = scalar_lea.smem %s0, 41
  %s83 = sld [smem:[%s82]]
  %s84 = scalar_lea.smem %s0, 42
  %s85 = sld [smem:[%s84]]
  %s86 = scalar_lea.smem %s0, 43
  %s87 = sld [smem:[%s86]]
  %s88 = scalar_lea.smem %s0, 44
  %s89 = sld [smem:[%s88]]
  %s90 = scalar_lea.smem %s0, 45
  %s91 = sld [smem:[%s90]]
  %s92 = scalar_lea.smem %s0, 46
  %s93 = sld [smem:[%s92]]
  %s94 = scalar_lea.smem %s0, 47
  %s95 = sld [smem:[%s94]]
  %s96 = scalar_lea.smem %s0, 48
  %s97 = sld [smem:[%s96]]
  %s98 = scalar_lea.smem %s0, 49
  %s99 = sld [smem:[%s98]]
  %s100 = sld [smem:[#allocation0]]
  $region225: #{decoder_forward.1} parent=0
    _
  %s102 = ssub.s32 1, %s100
  %s103 = scalar_select 0, %s102, %s100
  %s104 = sshll.u32 %s1, 4
  %s105 = int_to_ptr.vmem [resolvable:$true] %s104
  %107 = dma.vmem_to_smem %s105, 16, [#allocation3], [#allocation2]
  %108 = dma.done [#allocation2], 16
  %109 = sfence
  $region1: #{decoder_forward.1} parent=0
    #allocation4 [shape = 'u8[8192]{0}', space=vmem, size = 0x2000, scoped, tag = 'output window, operand 0']
    #allocation5 [shape = 's32[2]{0}', space=sflag, size = 0x8, scoped, tag = 'scoped memory for decoder_forward.1']
    %110 = vsyncpa [#allocation5], 0
    %s111 = scalar_lea.sflag [#allocation5], 1
    %112 = vsyncpa %s111, 0
    loop: start=0, step=1, limit=4
    $region2: #{decoder_forward.1} parent=1 // loop_pre_header
      _
    $region3: #{decoder_forward.1} parent=1 // loop_header
      %s114 = sphi 0, %s118
      %p115 = scmp.ge.s32.totalorder %s114, 4
      %s124 = sphi 0, %s126
      %s127 = sphi 0, %s124
      %s128 = sphi 0, %s127
      %s144 = sphi 0, %s128
      %s150 = sphi 0, %s152
      %s153 = sphi 0, %s150
      %s154 = sphi 0, %s153
      %s170 = sphi 0, %s154
      %s176 = sphi 0, %s178
      %s179 = sphi 0, %s176
      %s180 = sphi 0, %s179
      %s196 = sphi 0, %s180
      %s202 = sphi 0, %s204
      %s205 = sphi 0, %s202
      %s206 = sphi 0, %s205
      %s222 = sphi 0, %s206
      %s228 = sphi 0, %s230
      %s231 = sphi 0, %s228
      %s232 = sphi 0, %s231
      %s248 = sphi 0, %s232
      %s254 = sphi 0, %s256
      %s257 = sphi 0, %s254
      %s258 = sphi 0, %s257
      %s274 = sphi 0, %s258
      %s280 = sphi 0, %s282
      %s283 = sphi 0, %s280
      %s284 = sphi 0, %s283
      %s300 = sphi 0, %s284
      %s306 = sphi 0, %s308
      %s309 = sphi 0, %s306
      %s310 = sphi 0, %s309
      %s326 = sphi 0, %s310
      %s330 = sphi 0, %s330
      %s332 = sphi 0, %s330
      %s333 = sphi 0, %s332
      %s347 = sphi 0, %s333
      %s351 = sphi 0, %s351
      %s353 = sphi 0, %s351
      %s354 = sphi 0, %s353
      %s368 = sphi 0, %s354
      %s372 = sphi 0, %s372
      %s374 = sphi 0, %s372
      %s375 = sphi 0, %s374
      %s389 = sphi 0, %s375
      %s393 = sphi 0, %s393
      %s395 = sphi 0, %s393
      %s396 = sphi 0, %s395
      %s410 = sphi 0, %s396
      %s414 = sphi 0, %s414
      %s416 = sphi 0, %s414
      %s417 = sphi 0, %s416
      %s431 = sphi 0, %s417
      %s435 = sphi 0, %s435
      %s437 = sphi 0, %s435
      %s438 = sphi 0, %s437
      %s452 = sphi 0, %s438
      %s456 = sphi 0, %s456
      %s458 = sphi 0, %s456
      %s459 = sphi 0, %s458
      %s473 = sphi 0, %s459
      %s477 = sphi 0, %s477
      %s479 = sphi 0, %s477
      %s480 = sphi 0, %s479
      %s494 = sphi 0, %s480
      %s498 = sphi 0, %s498
      %s500 = sphi 0, %s498
      %s501 = sphi 0, %s500
      %s515 = sphi 0, %s501
      %s519 = sphi 0, %s519
      %s521 = sphi 0, %s519
      %s522 = sphi 0, %s521
      %s536 = sphi 0, %s522
      %s540 = sphi 0, %s540
      %s542 = sphi 0, %s540
      %s543 = sphi 0, %s542
      %s557 = sphi 0, %s543
      %s561 = sphi 0, %s561
      %s563 = sphi 0, %s561
      %s564 = sphi 0, %s563
      %s578 = sphi 0, %s564
      %s582 = sphi 0, %s582
      %s584 = sphi 0, %s582
      %s585 = sphi 0, %s584
      %s599 = sphi 0, %s585
      %s603 = sphi 0, %s603
      %s605 = sphi 0, %s603
      %s606 = sphi 0, %s605
      %s620 = sphi 0, %s606
      %s624 = sphi 0, %s624
      %s626 = sphi 0, %s624
      %s627 = sphi 0, %s626
      %s641 = sphi 0, %s627
      %s645 = sphi 0, %s645
      %s647 = sphi 0, %s645
      %s648 = sphi 0, %s647
      %s662 = sphi 0, %s648
      %s666 = sphi 0, %s666
      %s668 = sphi 0, %s666
      %s669 = sphi 0, %s668
      %s683 = sphi 0, %s669
      %s687 = sphi 0, %s687
      %s689 = sphi 0, %s687
      %s690 = sphi 0, %s689
      %s704 = sphi 0, %s690
      %s708 = sphi 0, %s708
      %s710 = sphi 0, %s708
      %s711 = sphi 0, %s710
      %s725 = sphi 0, %s711
      %s729 = sphi 0, %s729
      %s731 = sphi 0, %s729
      %s732 = sphi 0, %s731
      %s746 = sphi 0, %s732
      %s750 = sphi 0, %s750
      %s752 = sphi 0, %s750
      %s753 = sphi 0, %s752
      %s767 = sphi 0, %s753
      %s771 = sphi 0, %s771
      %s773 = sphi 0, %s771
      %s774 = sphi 0, %s773
      %s788 = sphi 0, %s774
      %s792 = sphi 0, %s792
      %s794 = sphi 0, %s792
      %s795 = sphi 0, %s794
      %s809 = sphi 0, %s795
      %s813 = sphi 0, %s813
      %s815 = sphi 0, %s813
      %s816 = sphi 0, %s815
      %s830 = sphi 0, %s816
      %s834 = sphi 0, %s834
      %s836 = sphi 0, %s834
      %s837 = sphi 0, %s836
      %s851 = sphi 0, %s837
      %s855 = sphi 0, %s855
      %s857 = sphi 0, %s855
      %s858 = sphi 0, %s857
      %s872 = sphi 0, %s858
      %s876 = sphi 0, %s876
      %s878 = sphi 0, %s876
      %s879 = sphi 0, %s878
      %s893 = sphi 0, %s879
      %s897 = sphi 0, %s897
      %s899 = sphi 0, %s897
      %s900 = sphi 0, %s899
      %s914 = sphi 0, %s900
      %s918 = sphi 0, %s918
      %s920 = sphi 0, %s918
      %s921 = sphi 0, %s920
      %s935 = sphi 0, %s921
      %s939 = sphi 0, %s939
      %s941 = sphi 0, %s939
      %s942 = sphi 0, %s941
      %s956 = sphi 0, %s942
      %s960 = sphi 0, %s960
      %s962 = sphi 0, %s960
      %s963 = sphi 0, %s962
      %s977 = sphi 0, %s963
      %s981 = sphi 0, %s981
      %s983 = sphi 0, %s981
      %s984 = sphi 0, %s983
      %s998 = sphi 0, %s984
      %s1002 = sphi 0, %s1002
      %s1004 = sphi 0, %s1002
      %s1005 = sphi 0, %s1004
      %s1019 = sphi 0, %s1005
      %s1023 = sphi 0, %s1023
      %s1025 = sphi 0, %s1023
      %s1026 = sphi 0, %s1025
      %s1040 = sphi 0, %s1026
      %s1044 = sphi 0, %s1044
      %s1046 = sphi 0, %s1044
      %s1047 = sphi 0, %s1046
      %s1061 = sphi 0, %s1047
      %s1065 = sphi 0, %s1065
      %s1067 = sphi 0, %s1065
      %s1068 = sphi 0, %s1067
      %s1082 = sphi 0, %s1068
      %s1086 = sphi 0, %s1086
      %s1088 = sphi 0, %s1086
      %s1089 = sphi 0, %s1088
      %s1103 = sphi 0, %s1089
      %s1107 = sphi 0, %s1107
      %s1109 = sphi 0, %s1107
      %s1110 = sphi 0, %s1109
      %s1124 = sphi 0, %s1110
      %s1132 = sphi 0, %s1134
      %s1135 = sphi 0, %s1132
      %s1136 = sphi 0, %s1135
      %s1152 = sphi 0, %s1136
      %s1160 = sphi 0, %s1162
      %s1163 = sphi 0, %s1160
      %s1164 = sphi 0, %s1163
      %s1180 = sphi 0, %s1164
      %s1186 = sphi 0, %s1188
      %s1189 = sphi 0, %s1186
      %s1190 = sphi 0, %s1189
      %s1206 = sphi 0, %s1190
    $region4: #{decoder_forward.1} parent=1 // loop_header_branch
      %117 = sbr.rel (%p115) target = $region8
    $region5: #{decoder_forward.1} parent=1 // loop_body
      %s119 = ssub.s32 %s114, 1
      %s120 = ssub.s32 %s114, 2
      %s121 = sadd.s32 %s114, 1
      %s122 = ssub.s32 %s114, %s121
      %p123 = scmp.eq.s32.totalorder %s122, 0
      %s125 = sadd.s32 %s124, 1
      %s126 = scalar_select %p123, %s124, %s125
      %p129 = pneg %p123
      %p130 = scmp.eq.s32.totalorder %s114, 1
      %p131 = por %p129, %p130
      %p132 = scmp.ne.s32.totalorder %s124, %s127
      %p133 = scmp.eq.s32.totalorder %s114, 0
      %p134 = por %p132, %p133
      %p135 = scmp.ne.s32.totalorder %s124, %s127
      %p136 = scmp.eq.s32.totalorder %s119, 1
      %p137 = por %p135, %p136
      %p138 = scmp.ne.s32.totalorder %s127, %s128
      %p139 = scmp.eq.s32.totalorder %s119, 0
      %p140 = por %p138, %p139
      %p141 = scmp.ne.s32.totalorder %s127, %s128
      %p142 = scmp.eq.s32.totalorder %s120, 1
      %p143 = por %p141, %p142
      %p145 = scmp.ne.s32.totalorder %s128, %s144
      %p146 = scmp.eq.s32.totalorder %s120, 0
      %p147 = por %p145, %p146
      %s148 = ssub.s32 %s114, %s121
      %p149 = scmp.eq.s32.totalorder %s148, 0
      %s151 = sadd.s32 %s150, 1
      %s152 = scalar_select %p149, %s150, %s151
      %p155 = pneg %p149
      %p156 = scmp.eq.s32.totalorder %s114, 1
      %p157 = por %p155, %p156
      %p158 = scmp.ne.s32.totalorder %s150, %s153
      %p159 = scmp.eq.s32.totalorder %s114, 0
      %p160 = por %p158, %p159
      %p161 = scmp.ne.s32.totalorder %s150, %s153
      %p162 = scmp.eq.s32.totalorder %s119, 1
      %p163 = por %p161, %p162
      %p164 = scmp.ne.s32.totalorder %s153, %s154
      %p165 = scmp.eq.s32.totalorder %s119, 0
      %p166 = por %p164, %p165
      %p167 = scmp.ne.s32.totalorder %s153, %s154
      %p168 = scmp.eq.s32.totalorder %s120, 1
      %p169 = por %p167, %p168
      %p171 = scmp.ne.s32.totalorder %s154, %s170
      %p172 = scmp.eq.s32.totalorder %s120, 0
      %p173 = por %p171, %p172
      %s174 = ssub.s32 %s114, %s121
      %p175 = scmp.eq.s32.totalorder %s174, 0
      %s177 = sadd.s32 %s176, 1
      %s178 = scalar_select %p175, %s176, %s177
      %p181 = pneg %p175
      %p182 = scmp.eq.s32.totalorder %s114, 1
      %p183 = por %p181, %p182
      %p184 = scmp.ne.s32.totalorder %s176, %s179
      %p185 = scmp.eq.s32.totalorder %s114, 0
      %p186 = por %p184, %p185
      %p187 = scmp.ne.s32.totalorder %s176, %s179
      %p188 = scmp.eq.s32.totalorder %s119, 1
      %p189 = por %p187, %p188
      %p190 = scmp.ne.s32.totalorder %s179, %s180
      %p191 = scmp.eq.s32.totalorder %s119, 0
      %p192 = por %p190, %p191
      %p193 = scmp.ne.s32.totalorder %s179, %s180
      %p194 = scmp.eq.s32.totalorder %s120, 1
      %p195 = por %p193, %p194
      %p197 = scmp.ne.s32.totalorder %s180, %s196
      %p198 = scmp.eq.s32.totalorder %s120, 0
      %p199 = por %p197, %p198
      %s200 = ssub.s32 %s114, %s121
      %p201 = scmp.eq.s32.totalorder %s200, 0
      %s203 = sadd.s32 %s202, 1
      %s204 = scalar_select %p201, %s202, %s203
      %p207 = pneg %p201
      %p208 = scmp.eq.s32.totalorder %s114, 1
      %p209 = por %p207, %p208
      %p210 = scmp.ne.s32.totalorder %s202, %s205
      %p211 = scmp.eq.s32.totalorder %s114, 0
      %p212 = por %p210, %p211
      %p213 = scmp.ne.s32.totalorder %s202, %s205
      %p214 = scmp.eq.s32.totalorder %s119, 1
      %p215 = por %p213, %p214
      %p216 = scmp.ne.s32.totalorder %s205, %s206
      %p217 = scmp.eq.s32.totalorder %s119, 0
      %p218 = por %p216, %p217
      %p219 = scmp.ne.s32.totalorder %s205, %s206
      %p220 = scmp.eq.s32.totalorder %s120, 1
      %p221 = por %p219, %p220
      %p223 = scmp.ne.s32.totalorder %s206, %s222
      %p224 = scmp.eq.s32.totalorder %s120, 0
      %p225 = por %p223, %p224
      %s226 = ssub.s32 %s114, %s121
      %p227 = scmp.eq.s32.totalorder %s226, 0
      %s229 = sadd.s32 %s228, 1
      %s230 = scalar_select %p227, %s228, %s229
      %p233 = pneg %p227
      %p234 = scmp.eq.s32.totalorder %s114, 1
      %p235 = por %p233, %p234
      %p236 = scmp.ne.s32.totalorder %s228, %s231
      %p237 = scmp.eq.s32.totalorder %s114, 0
      %p238 = por %p236, %p237
      %p239 = scmp.ne.s32.totalorder %s228, %s231
      %p240 = scmp.eq.s32.totalorder %s119, 1
      %p241 = por %p239, %p240
      %p242 = scmp.ne.s32.totalorder %s231, %s232
      %p243 = scmp.eq.s32.totalorder %s119, 0
      %p244 = por %p242, %p243
      %p245 = scmp.ne.s32.totalorder %s231, %s232
      %p246 = scmp.eq.s32.totalorder %s120, 1
      %p247 = por %p245, %p246
      %p249 = scmp.ne.s32.totalorder %s232, %s248
      %p250 = scmp.eq.s32.totalorder %s120, 0
      %p251 = por %p249, %p250
      %s252 = ssub.s32 %s114, %s121
      %p253 = scmp.eq.s32.totalorder %s252, 0
      %s255 = sadd.s32 %s254, 1
      %s256 = scalar_select %p253, %s254, %s255
      %p259 = pneg %p253
      %p260 = scmp.eq.s32.totalorder %s114, 1
      %p261 = por %p259, %p260
      %p262 = scmp.ne.s32.totalorder %s254, %s257
      %p263 = scmp.eq.s32.totalorder %s114, 0
      %p264 = por %p262, %p263
      %p265 = scmp.ne.s32.totalorder %s254, %s257
      %p266 = scmp.eq.s32.totalorder %s119, 1
      %p267 = por %p265, %p266
      %p268 = scmp.ne.s32.totalorder %s257, %s258
      %p269 = scmp.eq.s32.totalorder %s119, 0
      %p270 = por %p268, %p269
      %p271 = scmp.ne.s32.totalorder %s257, %s258
      %p272 = scmp.eq.s32.totalorder %s120, 1
      %p273 = por %p271, %p272
      %p275 = scmp.ne.s32.totalorder %s258, %s274
      %p276 = scmp.eq.s32.totalorder %s120, 0
      %p277 = por %p275, %p276
      %s278 = ssub.s32 %s114, %s121
      %p279 = scmp.eq.s32.totalorder %s278, 0
      %s281 = sadd.s32 %s280, 1
      %s282 = scalar_select %p279, %s280, %s281
      %p285 = pneg %p279
      %p286 = scmp.eq.s32.totalorder %s114, 1
      %p287 = por %p285, %p286
      %p288 = scmp.ne.s32.totalorder %s280, %s283
      %p289 = scmp.eq.s32.totalorder %s114, 0
      %p290 = por %p288, %p289
      %p291 = scmp.ne.s32.totalorder %s280, %s283
      %p292 = scmp.eq.s32.totalorder %s119, 1
      %p293 = por %p291, %p292
      %p294 = scmp.ne.s32.totalorder %s283, %s284
      %p295 = scmp.eq.s32.totalorder %s119, 0
      %p296 = por %p294, %p295
      %p297 = scmp.ne.s32.totalorder %s283, %s284
      %p298 = scmp.eq.s32.totalorder %s120, 1
      %p299 = por %p297, %p298
      %p301 = scmp.ne.s32.totalorder %s284, %s300
      %p302 = scmp.eq.s32.totalorder %s120, 0
      %p303 = por %p301, %p302
      %s304 = ssub.s32 %s114, %s121
      %p305 = scmp.eq.s32.totalorder %s304, 0
      %s307 = sadd.s32 %s306, 1
      %s308 = scalar_select %p305, %s306, %s307
      %p311 = pneg %p305
      %p312 = scmp.eq.s32.totalorder %s114, 1
      %p313 = por %p311, %p312
      %p314 = scmp.ne.s32.totalorder %s306, %s309
      %p315 = scmp.eq.s32.totalorder %s114, 0
      %p316 = por %p314, %p315
      %p317 = scmp.ne.s32.totalorder %s306, %s309
      %p318 = scmp.eq.s32.totalorder %s119, 1
      %p319 = por %p317, %p318
      %p320 = scmp.ne.s32.totalorder %s309, %s310
      %p321 = scmp.eq.s32.totalorder %s119, 0
      %p322 = por %p320, %p321
      %p323 = scmp.ne.s32.totalorder %s309, %s310
      %p324 = scmp.eq.s32.totalorder %s120, 1
      %p325 = por %p323, %p324
      %p327 = scmp.ne.s32.totalorder %s310, %s326
      %p328 = scmp.eq.s32.totalorder %s120, 0
      %p329 = por %p327, %p328
      %s331 = sadd.s32 %s330, 1
      %p334 = scmp.eq.s32.totalorder %s114, 1
      %p335 = scmp.ne.s32.totalorder %s330, %s332
      %p336 = scmp.eq.s32.totalorder %s114, 0
      %p337 = por %p335, %p336
      %p338 = scmp.ne.s32.totalorder %s330, %s332
      %p339 = scmp.eq.s32.totalorder %s119, 1
      %p340 = por %p338, %p339
      %p341 = scmp.ne.s32.totalorder %s332, %s333
      %p342 = scmp.eq.s32.totalorder %s119, 0
      %p343 = por %p341, %p342
      %p344 = scmp.ne.s32.totalorder %s332, %s333
      %p345 = scmp.eq.s32.totalorder %s120, 1
      %p346 = por %p344, %p345
      %p348 = scmp.ne.s32.totalorder %s333, %s347
      %p349 = scmp.eq.s32.totalorder %s120, 0
      %p350 = por %p348, %p349
      %s352 = sadd.s32 %s351, 1
      %p355 = scmp.eq.s32.totalorder %s114, 1
      %p356 = scmp.ne.s32.totalorder %s351, %s353
      %p357 = scmp.eq.s32.totalorder %s114, 0
      %p358 = por %p356, %p357
      %p359 = scmp.ne.s32.totalorder %s351, %s353
      %p360 = scmp.eq.s32.totalorder %s119, 1
      %p361 = por %p359, %p360
      %p362 = scmp.ne.s32.totalorder %s353, %s354
      %p363 = scmp.eq.s32.totalorder %s119, 0
      %p364 = por %p362, %p363
      %p365 = scmp.ne.s32.totalorder %s353, %s354
      %p366 = scmp.eq.s32.totalorder %s120, 1
      %p367 = por %p365, %p366
      %p369 = scmp.ne.s32.totalorder %s354, %s368
      %p370 = scmp.eq.s32.totalorder %s120, 0
      %p371 = por %p369, %p370
      %s373 = sadd.s32 %s372, 1
      %p376 = scmp.eq.s32.totalorder %s114, 1
      %p377 = scmp.ne.s32.totalorder %s372, %s374
      %p378 = scmp.eq.s32.totalorder %s114, 0
      %p379 = por %p377, %p378
      %p380 = scmp.ne.s32.totalorder %s372, %s374
      %p381 = scmp.eq.s32.totalorder %s119, 1
      %p382 = por %p380, %p381
      %p383 = scmp.ne.s32.totalorder %s374, %s375
      %p384 = scmp.eq.s32.totalorder %s119, 0
      %p385 = por %p383, %p384
      %p386 = scmp.ne.s32.totalorder %s374, %s375
      %p387 = scmp.eq.s32.totalorder %s120, 1
      %p388 = por %p386, %p387
      %p390 = scmp.ne.s32.totalorder %s375, %s389
      %p391 = scmp.eq.s32.totalorder %s120, 0
      %p392 = por %p390, %p391
      %s394 = sadd.s32 %s393, 1
      %p397 = scmp.eq.s32.totalorder %s114, 1
      %p398 = scmp.ne.s32.totalorder %s393, %s395
      %p399 = scmp.eq.s32.totalorder %s114, 0
      %p400 = por %p398, %p399
      %p401 = scmp.ne.s32.totalorder %s393, %s395
      %p402 = scmp.eq.s32.totalorder %s119, 1
      %p403 = por %p401, %p402
      %p404 = scmp.ne.s32.totalorder %s395, %s396
      %p405 = scmp.eq.s32.totalorder %s119, 0
      %p406 = por %p404, %p405
      %p407 = scmp.ne.s32.totalorder %s395, %s396
      %p408 = scmp.eq.s32.totalorder %s120, 1
      %p409 = por %p407, %p408
      %p411 = scmp.ne.s32.totalorder %s396, %s410
      %p412 = scmp.eq.s32.totalorder %s120, 0
      %p413 = por %p411, %p412
      %s415 = sadd.s32 %s414, 1
      %p418 = scmp.eq.s32.totalorder %s114, 1
      %p419 = scmp.ne.s32.totalorder %s414, %s416
      %p420 = scmp.eq.s32.totalorder %s114, 0
      %p421 = por %p419, %p420
      %p422 = scmp.ne.s32.totalorder %s414, %s416
      %p423 = scmp.eq.s32.totalorder %s119, 1
      %p424 = por %p422, %p423
      %p425 = scmp.ne.s32.totalorder %s416, %s417
      %p426 = scmp.eq.s32.totalorder %s119, 0
      %p427 = por %p425, %p426
      %p428 = scmp.ne.s32.totalorder %s416, %s417
      %p429 = scmp.eq.s32.totalorder %s120, 1
      %p430 = por %p428, %p429
      %p432 = scmp.ne.s32.totalorder %s417, %s431
      %p433 = scmp.eq.s32.totalorder %s120, 0
      %p434 = por %p432, %p433
      %s436 = sadd.s32 %s435, 1
      %p439 = scmp.eq.s32.totalorder %s114, 1
      %p440 = scmp.ne.s32.totalorder %s435, %s437
      %p441 = scmp.eq.s32.totalorder %s114, 0
      %p442 = por %p440, %p441
      %p443 = scmp.ne.s32.totalorder %s435, %s437
      %p444 = scmp.eq.s32.totalorder %s119, 1
      %p445 = por %p443, %p444
      %p446 = scmp.ne.s32.totalorder %s437, %s438
      %p447 = scmp.eq.s32.totalorder %s119, 0
      %p448 = por %p446, %p447
      %p449 = scmp.ne.s32.totalorder %s437, %s438
      %p450 = scmp.eq.s32.totalorder %s120, 1
      %p451 = por %p449, %p450
      %p453 = scmp.ne.s32.totalorder %s438, %s452
      %p454 = scmp.eq.s32.totalorder %s120, 0
      %p455 = por %p453, %p454
      %s457 = sadd.s32 %s456, 1
      %p460 = scmp.eq.s32.totalorder %s114, 1
      %p461 = scmp.ne.s32.totalorder %s456, %s458
      %p462 = scmp.eq.s32.totalorder %s114, 0
      %p463 = por %p461, %p462
      %p464 = scmp.ne.s32.totalorder %s456, %s458
      %p465 = scmp.eq.s32.totalorder %s119, 1
      %p466 = por %p464, %p465
      %p467 = scmp.ne.s32.totalorder %s458, %s459
      %p468 = scmp.eq.s32.totalorder %s119, 0
      %p469 = por %p467, %p468
      %p470 = scmp.ne.s32.totalorder %s458, %s459
      %p471 = scmp.eq.s32.totalorder %s120, 1
      %p472 = por %p470, %p471
      %p474 = scmp.ne.s32.totalorder %s459, %s473
      %p475 = scmp.eq.s32.totalorder %s120, 0
      %p476 = por %p474, %p475
      %s478 = sadd.s32 %s477, 1
      %p481 = scmp.eq.s32.totalorder %s114, 1
      %p482 = scmp.ne.s32.totalorder %s477, %s479
      %p483 = scmp.eq.s32.totalorder %s114, 0
      %p484 = por %p482, %p483
      %p485 = scmp.ne.s32.totalorder %s477, %s479
      %p486 = scmp.eq.s32.totalorder %s119, 1
      %p487 = por %p485, %p486
      %p488 = scmp.ne.s32.totalorder %s479, %s480
      %p489 = scmp.eq.s32.totalorder %s119, 0
      %p490 = por %p488, %p489
      %p491 = scmp.ne.s32.totalorder %s479, %s480
      %p492 = scmp.eq.s32.totalorder %s120, 1
      %p493 = por %p491, %p492
      %p495 = scmp.ne.s32.totalorder %s480, %s494
      %p496 = scmp.eq.s32.totalorder %s120, 0
      %p497 = por %p495, %p496
      %s499 = sadd.s32 %s498, 1
      %p502 = scmp.eq.s32.totalorder %s114, 1
      %p503 = scmp.ne.s32.totalorder %s498, %s500
      %p504 = scmp.eq.s32.totalorder %s114, 0
      %p505 = por %p503, %p504
      %p506 = scmp.ne.s32.totalorder %s498, %s500
      %p507 = scmp.eq.s32.totalorder %s119, 1
      %p508 = por %p506, %p507
      %p509 = scmp.ne.s32.totalorder %s500, %s501
      %p510 = scmp.eq.s32.totalorder %s119, 0
      %p511 = por %p509, %p510
      %p512 = scmp.ne.s32.totalorder %s500, %s501
      %p513 = scmp.eq.s32.totalorder %s120, 1
      %p514 = por %p512, %p513
      %p516 = scmp.ne.s32.totalorder %s501, %s515
      %p517 = scmp.eq.s32.totalorder %s120, 0
      %p518 = por %p516, %p517
      %s520 = sadd.s32 %s519, 1
      %p523 = scmp.eq.s32.totalorder %s114, 1
      %p524 = scmp.ne.s32.totalorder %s519, %s521
      %p525 = scmp.eq.s32.totalorder %s114, 0
      %p526 = por %p524, %p525
      %p527 = scmp.ne.s32.totalorder %s519, %s521
      %p528 = scmp.eq.s32.totalorder %s119, 1
      %p529 = por %p527, %p528
      %p530 = scmp.ne.s32.totalorder %s521, %s522
      %p531 = scmp.eq.s32.totalorder %s119, 0
      %p532 = por %p530, %p531
      %p533 = scmp.ne.s32.totalorder %s521, %s522
      %p534 = scmp.eq.s32.totalorder %s120, 1
      %p535 = por %p533, %p534
      %p537 = scmp.ne.s32.totalorder %s522, %s536
      %p538 = scmp.eq.s32.totalorder %s120, 0
      %p539 = por %p537, %p538
      %s541 = sadd.s32 %s540, 1
      %p544 = scmp.eq.s32.totalorder %s114, 1
      %p545 = scmp.ne.s32.totalorder %s540, %s542
      %p546 = scmp.eq.s32.totalorder %s114, 0
      %p547 = por %p545, %p546
      %p548 = scmp.ne.s32.totalorder %s540, %s542
      %p549 = scmp.eq.s32.totalorder %s119, 1
      %p550 = por %p548, %p549
      %p551 = scmp.ne.s32.totalorder %s542, %s543
      %p552 = scmp.eq.s32.totalorder %s119, 0
      %p553 = por %p551, %p552
      %p554 = scmp.ne.s32.totalorder %s542, %s543
      %p555 = scmp.eq.s32.totalorder %s120, 1
      %p556 = por %p554, %p555
      %p558 = scmp.ne.s32.totalorder %s543, %s557
      %p559 = scmp.eq.s32.totalorder %s120, 0
      %p560 = por %p558, %p559
      %s562 = sadd.s32 %s561, 1
      %p565 = scmp.eq.s32.totalorder %s114, 1
      %p566 = scmp.ne.s32.totalorder %s561, %s563
      %p567 = scmp.eq.s32.totalorder %s114, 0
      %p568 = por %p566, %p567
      %p569 = scmp.ne.s32.totalorder %s561, %s563
      %p570 = scmp.eq.s32.totalorder %s119, 1
      %p571 = por %p569, %p570
      %p572 = scmp.ne.s32.totalorder %s563, %s564
      %p573 = scmp.eq.s32.totalorder %s119, 0
      %p574 = por %p572, %p573
      %p575 = scmp.ne.s32.totalorder %s563, %s564
      %p576 = scmp.eq.s32.totalorder %s120, 1
      %p577 = por %p575, %p576
      %p579 = scmp.ne.s32.totalorder %s564, %s578
      %p580 = scmp.eq.s32.totalorder %s120, 0
      %p581 = por %p579, %p580
      %s583 = sadd.s32 %s582, 1
      %p586 = scmp.eq.s32.totalorder %s114, 1
      %p587 = scmp.ne.s32.totalorder %s582, %s584
      %p588 = scmp.eq.s32.totalorder %s114, 0
      %p589 = por %p587, %p588
      %p590 = scmp.ne.s32.totalorder %s582, %s584
      %p591 = scmp.eq.s32.totalorder %s119, 1
      %p592 = por %p590, %p591
      %p593 = scmp.ne.s32.totalorder %s584, %s585
      %p594 = scmp.eq.s32.totalorder %s119, 0
      %p595 = por %p593, %p594
      %p596 = scmp.ne.s32.totalorder %s584, %s585
      %p597 = scmp.eq.s32.totalorder %s120, 1
      %p598 = por %p596, %p597
      %p600 = scmp.ne.s32.totalorder %s585, %s599
      %p601 = scmp.eq.s32.totalorder %s120, 0
      %p602 = por %p600, %p601
      %s604 = sadd.s32 %s603, 1
      %p607 = scmp.eq.s32.totalorder %s114, 1
      %p608 = scmp.ne.s32.totalorder %s603, %s605
      %p609 = scmp.eq.s32.totalorder %s114, 0
      %p610 = por %p608, %p609
      %p611 = scmp.ne.s32.totalorder %s603, %s605
      %p612 = scmp.eq.s32.totalorder %s119, 1
      %p613 = por %p611, %p612
      %p614 = scmp.ne.s32.totalorder %s605, %s606
      %p615 = scmp.eq.s32.totalorder %s119, 0
      %p616 = por %p614, %p615
      %p617 = scmp.ne.s32.totalorder %s605, %s606
      %p618 = scmp.eq.s32.totalorder %s120, 1
      %p619 = por %p617, %p618
      %p621 = scmp.ne.s32.totalorder %s606, %s620
      %p622 = scmp.eq.s32.totalorder %s120, 0
      %p623 = por %p621, %p622
      %s625 = sadd.s32 %s624, 1
      %p628 = scmp.eq.s32.totalorder %s114, 1
      %p629 = scmp.ne.s32.totalorder %s624, %s626
      %p630 = scmp.eq.s32.totalorder %s114, 0
      %p631 = por %p629, %p630
      %p632 = scmp.ne.s32.totalorder %s624, %s626
      %p633 = scmp.eq.s32.totalorder %s119, 1
      %p634 = por %p632, %p633
      %p635 = scmp.ne.s32.totalorder %s626, %s627
      %p636 = scmp.eq.s32.totalorder %s119, 0
      %p637 = por %p635, %p636
      %p638 = scmp.ne.s32.totalorder %s626, %s627
      %p639 = scmp.eq.s32.totalorder %s120, 1
      %p640 = por %p638, %p639
      %p642 = scmp.ne.s32.totalorder %s627, %s641
      %p643 = scmp.eq.s32.totalorder %s120, 0
      %p644 = por %p642, %p643
      %s646 = sadd.s32 %s645, 1
      %p649 = scmp.eq.s32.totalorder %s114, 1
      %p650 = scmp.ne.s32.totalorder %s645, %s647
      %p651 = scmp.eq.s32.totalorder %s114, 0
      %p652 = por %p650, %p651
      %p653 = scmp.ne.s32.totalorder %s645, %s647
      %p654 = scmp.eq.s32.totalorder %s119, 1
      %p655 = por %p653, %p654
      %p656 = scmp.ne.s32.totalorder %s647, %s648
      %p657 = scmp.eq.s32.totalorder %s119, 0
      %p658 = por %p656, %p657
      %p659 = scmp.ne.s32.totalorder %s647, %s648
      %p660 = scmp.eq.s32.totalorder %s120, 1
      %p661 = por %p659, %p660
      %p663 = scmp.ne.s32.totalorder %s648, %s662
      %p664 = scmp.eq.s32.totalorder %s120, 0
      %p665 = por %p663, %p664
      %s667 = sadd.s32 %s666, 1
      %p670 = scmp.eq.s32.totalorder %s114, 1
      %p671 = scmp.ne.s32.totalorder %s666, %s668
      %p672 = scmp.eq.s32.totalorder %s114, 0
      %p673 = por %p671, %p672
      %p674 = scmp.ne.s32.totalorder %s666, %s668
      %p675 = scmp.eq.s32.totalorder %s119, 1
      %p676 = por %p674, %p675
      %p677 = scmp.ne.s32.totalorder %s668, %s669
      %p678 = scmp.eq.s32.totalorder %s119, 0
      %p679 = por %p677, %p678
      %p680 = scmp.ne.s32.totalorder %s668, %s669
      %p681 = scmp.eq.s32.totalorder %s120, 1
      %p682 = por %p680, %p681
      %p684 = scmp.ne.s32.totalorder %s669, %s683
      %p685 = scmp.eq.s32.totalorder %s120, 0
      %p686 = por %p684, %p685
      %s688 = sadd.s32 %s687, 1
      %p691 = scmp.eq.s32.totalorder %s114, 1
      %p692 = scmp.ne.s32.totalorder %s687, %s689
      %p693 = scmp.eq.s32.totalorder %s114, 0
      %p694 = por %p692, %p693
      %p695 = scmp.ne.s32.totalorder %s687, %s689
      %p696 = scmp.eq.s32.totalorder %s119, 1
      %p697 = por %p695, %p696
      %p698 = scmp.ne.s32.totalorder %s689, %s690
      %p699 = scmp.eq.s32.totalorder %s119, 0
      %p700 = por %p698, %p699
      %p701 = scmp.ne.s32.totalorder %s689, %s690
      %p702 = scmp.eq.s32.totalorder %s120, 1
      %p703 = por %p701, %p702
      %p705 = scmp.ne.s32.totalorder %s690, %s704
      %p706 = scmp.eq.s32.totalorder %s120, 0
      %p707 = por %p705, %p706
      %s709 = sadd.s32 %s708, 1
      %p712 = scmp.eq.s32.totalorder %s114, 1
      %p713 = scmp.ne.s32.totalorder %s708, %s710
      %p714 = scmp.eq.s32.totalorder %s114, 0
      %p715 = por %p713, %p714
      %p716 = scmp.ne.s32.totalorder %s708, %s710
      %p717 = scmp.eq.s32.totalorder %s119, 1
      %p718 = por %p716, %p717
      %p719 = scmp.ne.s32.totalorder %s710, %s711
      %p720 = scmp.eq.s32.totalorder %s119, 0
      %p721 = por %p719, %p720
      %p722 = scmp.ne.s32.totalorder %s710, %s711
      %p723 = scmp.eq.s32.totalorder %s120, 1
      %p724 = por %p722, %p723
      %p726 = scmp.ne.s32.totalorder %s711, %s725
      %p727 = scmp.eq.s32.totalorder %s120, 0
      %p728 = por %p726, %p727
      %s730 = sadd.s32 %s729, 1
      %p733 = scmp.eq.s32.totalorder %s114, 1
      %p734 = scmp.ne.s32.totalorder %s729, %s731
      %p735 = scmp.eq.s32.totalorder %s114, 0
      %p736 = por %p734, %p735
      %p737 = scmp.ne.s32.totalorder %s729, %s731
      %p738 = scmp.eq.s32.totalorder %s119, 1
      %p739 = por %p737, %p738
      %p740 = scmp.ne.s32.totalorder %s731, %s732
      %p741 = scmp.eq.s32.totalorder %s119, 0
      %p742 = por %p740, %p741
      %p743 = scmp.ne.s32.totalorder %s731, %s732
      %p744 = scmp.eq.s32.totalorder %s120, 1
      %p745 = por %p743, %p744
      %p747 = scmp.ne.s32.totalorder %s732, %s746
      %p748 = scmp.eq.s32.totalorder %s120, 0
      %p749 = por %p747, %p748
      %s751 = sadd.s32 %s750, 1
      %p754 = scmp.eq.s32.totalorder %s114, 1
      %p755 = scmp.ne.s32.totalorder %s750, %s752
      %p756 = scmp.eq.s32.totalorder %s114, 0
      %p757 = por %p755, %p756
      %p758 = scmp.ne.s32.totalorder %s750, %s752
      %p759 = scmp.eq.s32.totalorder %s119, 1
      %p760 = por %p758, %p759
      %p761 = scmp.ne.s32.totalorder %s752, %s753
      %p762 = scmp.eq.s32.totalorder %s119, 0
      %p763 = por %p761, %p762
      %p764 = scmp.ne.s32.totalorder %s752, %s753
      %p765 = scmp.eq.s32.totalorder %s120, 1
      %p766 = por %p764, %p765
      %p768 = scmp.ne.s32.totalorder %s753, %s767
      %p769 = scmp.eq.s32.totalorder %s120, 0
      %p770 = por %p768, %p769
      %s772 = sadd.s32 %s771, 1
      %p775 = scmp.eq.s32.totalorder %s114, 1
      %p776 = scmp.ne.s32.totalorder %s771, %s773
      %p777 = scmp.eq.s32.totalorder %s114, 0
      %p778 = por %p776, %p777
      %p779 = scmp.ne.s32.totalorder %s771, %s773
      %p780 = scmp.eq.s32.totalorder %s119, 1
      %p781 = por %p779, %p780
      %p782 = scmp.ne.s32.totalorder %s773, %s774
      %p783 = scmp.eq.s32.totalorder %s119, 0
      %p784 = por %p782, %p783
      %p785 = scmp.ne.s32.totalorder %s773, %s774
      %p786 = scmp.eq.s32.totalorder %s120, 1
      %p787 = por %p785, %p786
      %p789 = scmp.ne.s32.totalorder %s774, %s788
      %p790 = scmp.eq.s32.totalorder %s120, 0
      %p791 = por %p789, %p790
      %s793 = sadd.s32 %s792, 1
      %p796 = scmp.eq.s32.totalorder %s114, 1
      %p797 = scmp.ne.s32.totalorder %s792, %s794
      %p798 = scmp.eq.s32.totalorder %s114, 0
      %p799 = por %p797, %p798
      %p800 = scmp.ne.s32.totalorder %s792, %s794
      %p801 = scmp.eq.s32.totalorder %s119, 1
      %p802 = por %p800, %p801
      %p803 = scmp.ne.s32.totalorder %s794, %s795
      %p804 = scmp.eq.s32.totalorder %s119, 0
      %p805 = por %p803, %p804
      %p806 = scmp.ne.s32.totalorder %s794, %s795
      %p807 = scmp.eq.s32.totalorder %s120, 1
      %p808 = por %p806, %p807
      %p810 = scmp.ne.s32.totalorder %s795, %s809
      %p811 = scmp.eq.s32.totalorder %s120, 0
      %p812 = por %p810, %p811
      %s814 = sadd.s32 %s813, 1
      %p817 = scmp.eq.s32.totalorder %s114, 1
      %p818 = scmp.ne.s32.totalorder %s813, %s815
      %p819 = scmp.eq.s32.totalorder %s114, 0
      %p820 = por %p818, %p819
      %p821 = scmp.ne.s32.totalorder %s813, %s815
      %p822 = scmp.eq.s32.totalorder %s119, 1
      %p823 = por %p821, %p822
      %p824 = scmp.ne.s32.totalorder %s815, %s816
      %p825 = scmp.eq.s32.totalorder %s119, 0
      %p826 = por %p824, %p825
      %p827 = scmp.ne.s32.totalorder %s815, %s816
      %p828 = scmp.eq.s32.totalorder %s120, 1
      %p829 = por %p827, %p828
      %p831 = scmp.ne.s32.totalorder %s816, %s830
      %p832 = scmp.eq.s32.totalorder %s120, 0
      %p833 = por %p831, %p832
      %s835 = sadd.s32 %s834, 1
      %p838 = scmp.eq.s32.totalorder %s114, 1
      %p839 = scmp.ne.s32.totalorder %s834, %s836
      %p840 = scmp.eq.s32.totalorder %s114, 0
      %p841 = por %p839, %p840
      %p842 = scmp.ne.s32.totalorder %s834, %s836
      %p843 = scmp.eq.s32.totalorder %s119, 1
      %p844 = por %p842, %p843
      %p845 = scmp.ne.s32.totalorder %s836, %s837
      %p846 = scmp.eq.s32.totalorder %s119, 0
      %p847 = por %p845, %p846
      %p848 = scmp.ne.s32.totalorder %s836, %s837
      %p849 = scmp.eq.s32.totalorder %s120, 1
      %p850 = por %p848, %p849
      %p852 = scmp.ne.s32.totalorder %s837, %s851
      %p853 = scmp.eq.s32.totalorder %s120, 0
      %p854 = por %p852, %p853
      %s856 = sadd.s32 %s855, 1
      %p859 = scmp.eq.s32.totalorder %s114, 1
      %p860 = scmp.ne.s32.totalorder %s855, %s857
      %p861 = scmp.eq.s32.totalorder %s114, 0
      %p862 = por %p860, %p861
      %p863 = scmp.ne.s32.totalorder %s855, %s857
      %p864 = scmp.eq.s32.totalorder %s119, 1
      %p865 = por %p863, %p864
      %p866 = scmp.ne.s32.totalorder %s857, %s858
      %p867 = scmp.eq.s32.totalorder %s119, 0
      %p868 = por %p866, %p867
      %p869 = scmp.ne.s32.totalorder %s857, %s858
      %p870 = scmp.eq.s32.totalorder %s120, 1
      %p871 = por %p869, %p870
      %p873 = scmp.ne.s32.totalorder %s858, %s872
      %p874 = scmp.eq.s32.totalorder %s120, 0
      %p875 = por %p873, %p874
      %s877 = sadd.s32 %s876, 1
      %p880 = scmp.eq.s32.totalorder %s114, 1
      %p881 = scmp.ne.s32.totalorder %s876, %s878
      %p882 = scmp.eq.s32.totalorder %s114, 0
      %p883 = por %p881, %p882
      %p884 = scmp.ne.s32.totalorder %s876, %s878
      %p885 = scmp.eq.s32.totalorder %s119, 1
      %p886 = por %p884, %p885
      %p887 = scmp.ne.s32.totalorder %s878, %s879
      %p888 = scmp.eq.s32.totalorder %s119, 0
      %p889 = por %p887, %p888
      %p890 = scmp.ne.s32.totalorder %s878, %s879
      %p891 = scmp.eq.s32.totalorder %s120, 1
      %p892 = por %p890, %p891
      %p894 = scmp.ne.s32.totalorder %s879, %s893
      %p895 = scmp.eq.s32.totalorder %s120, 0
      %p896 = por %p894, %p895
      %s898 = sadd.s32 %s897, 1
      %p901 = scmp.eq.s32.totalorder %s114, 1
      %p902 = scmp.ne.s32.totalorder %s897, %s899
      %p903 = scmp.eq.s32.totalorder %s114, 0
      %p904 = por %p902, %p903
      %p905 = scmp.ne.s32.totalorder %s897, %s899
      %p906 = scmp.eq.s32.totalorder %s119, 1
      %p907 = por %p905, %p906
      %p908 = scmp.ne.s32.totalorder %s899, %s900
      %p909 = scmp.eq.s32.totalorder %s119, 0
      %p910 = por %p908, %p909
      %p911 = scmp.ne.s32.totalorder %s899, %s900
      %p912 = scmp.eq.s32.totalorder %s120, 1
      %p913 = por %p911, %p912
      %p915 = scmp.ne.s32.totalorder %s900, %s914
      %p916 = scmp.eq.s32.totalorder %s120, 0
      %p917 = por %p915, %p916
      %s919 = sadd.s32 %s918, 1
      %p922 = scmp.eq.s32.totalorder %s114, 1
      %p923 = scmp.ne.s32.totalorder %s918, %s920
      %p924 = scmp.eq.s32.totalorder %s114, 0
      %p925 = por %p923, %p924
      %p926 = scmp.ne.s32.totalorder %s918, %s920
      %p927 = scmp.eq.s32.totalorder %s119, 1
      %p928 = por %p926, %p927
      %p929 = scmp.ne.s32.totalorder %s920, %s921
      %p930 = scmp.eq.s32.totalorder %s119, 0
      %p931 = por %p929, %p930
      %p932 = scmp.ne.s32.totalorder %s920, %s921
      %p933 = scmp.eq.s32.totalorder %s120, 1
      %p934 = por %p932, %p933
      %p936 = scmp.ne.s32.totalorder %s921, %s935
      %p937 = scmp.eq.s32.totalorder %s120, 0
      %p938 = por %p936, %p937
      %s940 = sadd.s32 %s939, 1
      %p943 = scmp.eq.s32.totalorder %s114, 1
      %p944 = scmp.ne.s32.totalorder %s939, %s941
      %p945 = scmp.eq.s32.totalorder %s114, 0
      %p946 = por %p944, %p945
      %p947 = scmp.ne.s32.totalorder %s939, %s941
      %p948 = scmp.eq.s32.totalorder %s119, 1
      %p949 = por %p947, %p948
      %p950 = scmp.ne.s32.totalorder %s941, %s942
      %p951 = scmp.eq.s32.totalorder %s119, 0
      %p952 = por %p950, %p951
      %p953 = scmp.ne.s32.totalorder %s941, %s942
      %p954 = scmp.eq.s32.totalorder %s120, 1
      %p955 = por %p953, %p954
      %p957 = scmp.ne.s32.totalorder %s942, %s956
      %p958 = scmp.eq.s32.totalorder %s120, 0
      %p959 = por %p957, %p958
      %s961 = sadd.s32 %s960, 1
      %p964 = scmp.eq.s32.totalorder %s114, 1
      %p965 = scmp.ne.s32.totalorder %s960, %s962
      %p966 = scmp.eq.s32.totalorder %s114, 0
      %p967 = por %p965, %p966
      %p968 = scmp.ne.s32.totalorder %s960, %s962
      %p969 = scmp.eq.s32.totalorder %s119, 1
      %p970 = por %p968, %p969
      %p971 = scmp.ne.s32.totalorder %s962, %s963
      %p972 = scmp.eq.s32.totalorder %s119, 0
      %p973 = por %p971, %p972
      %p974 = scmp.ne.s32.totalorder %s962, %s963
      %p975 = scmp.eq.s32.totalorder %s120, 1
      %p976 = por %p974, %p975
      %p978 = scmp.ne.s32.totalorder %s963, %s977
      %p979 = scmp.eq.s32.totalorder %s120, 0
      %p980 = por %p978, %p979
      %s982 = sadd.s32 %s981, 1
      %p985 = scmp.eq.s32.totalorder %s114, 1
      %p986 = scmp.ne.s32.totalorder %s981, %s983
      %p987 = scmp.eq.s32.totalorder %s114, 0
      %p988 = por %p986, %p987
      %p989 = scmp.ne.s32.totalorder %s981, %s983
      %p990 = scmp.eq.s32.totalorder %s119, 1
      %p991 = por %p989, %p990
      %p992 = scmp.ne.s32.totalorder %s983, %s984
      %p993 = scmp.eq.s32.totalorder %s119, 0
      %p994 = por %p992, %p993
      %p995 = scmp.ne.s32.totalorder %s983, %s984
      %p996 = scmp.eq.s32.totalorder %s120, 1
      %p997 = por %p995, %p996
      %p999 = scmp.ne.s32.totalorder %s984, %s998
      %p1000 = scmp.eq.s32.totalorder %s120, 0
      %p1001 = por %p999, %p1000
      %s1003 = sadd.s32 %s1002, 1
      %p1006 = scmp.eq.s32.totalorder %s114, 1
      %p1007 = scmp.ne.s32.totalorder %s1002, %s1004
      %p1008 = scmp.eq.s32.totalorder %s114, 0
      %p1009 = por %p1007, %p1008
      %p1010 = scmp.ne.s32.totalorder %s1002, %s1004
      %p1011 = scmp.eq.s32.totalorder %s119, 1
      %p1012 = por %p1010, %p1011
      %p1013 = scmp.ne.s32.totalorder %s1004, %s1005
      %p1014 = scmp.eq.s32.totalorder %s119, 0
      %p1015 = por %p1013, %p1014
      %p1016 = scmp.ne.s32.totalorder %s1004, %s1005
      %p1017 = scmp.eq.s32.totalorder %s120, 1
      %p1018 = por %p1016, %p1017
      %p1020 = scmp.ne.s32.totalorder %s1005, %s1019
      %p1021 = scmp.eq.s32.totalorder %s120, 0
      %p1022 = por %p1020, %p1021
      %s1024 = sadd.s32 %s1023, 1
      %p1027 = scmp.eq.s32.totalorder %s114, 1
      %p1028 = scmp.ne.s32.totalorder %s1023, %s1025
      %p1029 = scmp.eq.s32.totalorder %s114, 0
      %p1030 = por %p1028, %p1029
      %p1031 = scmp.ne.s32.totalorder %s1023, %s1025
      %p1032 = scmp.eq.s32.totalorder %s119, 1
      %p1033 = por %p1031, %p1032
      %p1034 = scmp.ne.s32.totalorder %s1025, %s1026
      %p1035 = scmp.eq.s32.totalorder %s119, 0
      %p1036 = por %p1034, %p1035
      %p1037 = scmp.ne.s32.totalorder %s1025, %s1026
      %p1038 = scmp.eq.s32.totalorder %s120, 1
      %p1039 = por %p1037, %p1038
      %p1041 = scmp.ne.s32.totalorder %s1026, %s1040
      %p1042 = scmp.eq.s32.totalorder %s120, 0
      %p1043 = por %p1041, %p1042
      %s1045 = sadd.s32 %s1044, 1
      %p1048 = scmp.eq.s32.totalorder %s114, 1
      %p1049 = scmp.ne.s32.totalorder %s1044, %s1046
      %p1050 = scmp.eq.s32.totalorder %s114, 0
      %p1051 = por %p1049, %p1050
      %p1052 = scmp.ne.s32.totalorder %s1044, %s1046
      %p1053 = scmp.eq.s32.totalorder %s119, 1
      %p1054 = por %p1052, %p1053
      %p1055 = scmp.ne.s32.totalorder %s1046, %s1047
      %p1056 = scmp.eq.s32.totalorder %s119, 0
      %p1057 = por %p1055, %p1056
      %p1058 = scmp.ne.s32.totalorder %s1046, %s1047
      %p1059 = scmp.eq.s32.totalorder %s120, 1
      %p1060 = por %p1058, %p1059
      %p1062 = scmp.ne.s32.totalorder %s1047, %s1061
      %p1063 = scmp.eq.s32.totalorder %s120, 0
      %p1064 = por %p1062, %p1063
      %s1066 = sadd.s32 %s1065, 1
      %p1069 = scmp.eq.s32.totalorder %s114, 1
      %p1070 = scmp.ne.s32.totalorder %s1065, %s1067
      %p1071 = scmp.eq.s32.totalorder %s114, 0
      %p1072 = por %p1070, %p1071
      %p1073 = scmp.ne.s32.totalorder %s1065, %s1067
      %p1074 = scmp.eq.s32.totalorder %s119, 1
      %p1075 = por %p1073, %p1074
      %p1076 = scmp.ne.s32.totalorder %s1067, %s1068
      %p1077 = scmp.eq.s32.totalorder %s119, 0
      %p1078 = por %p1076, %p1077
      %p1079 = scmp.ne.s32.totalorder %s1067, %s1068
      %p1080 = scmp.eq.s32.totalorder %s120, 1
      %p1081 = por %p1079, %p1080
      %p1083 = scmp.ne.s32.totalorder %s1068, %s1082
      %p1084 = scmp.eq.s32.totalorder %s120, 0
      %p1085 = por %p1083, %p1084
      %s1087 = sadd.s32 %s1086, 1
      %p1090 = scmp.eq.s32.totalorder %s114, 1
      %p1091 = scmp.ne.s32.totalorder %s1086, %s1088
      %p1092 = scmp.eq.s32.totalorder %s114, 0
      %p1093 = por %p1091, %p1092
      %p1094 = scmp.ne.s32.totalorder %s1086, %s1088
      %p1095 = scmp.eq.s32.totalorder %s119, 1
      %p1096 = por %p1094, %p1095
      %p1097 = scmp.ne.s32.totalorder %s1088, %s1089
      %p1098 = scmp.eq.s32.totalorder %s119, 0
      %p1099 = por %p1097, %p1098
      %p1100 = scmp.ne.s32.totalorder %s1088, %s1089
      %p1101 = scmp.eq.s32.totalorder %s120, 1
      %p1102 = por %p1100, %p1101
      %p1104 = scmp.ne.s32.totalorder %s1089, %s1103
      %p1105 = scmp.eq.s32.totalorder %s120, 0
      %p1106 = por %p1104, %p1105
      %s1108 = sadd.s32 %s1107, 1
      %p1111 = scmp.eq.s32.totalorder %s114, 1
      %p1112 = scmp.ne.s32.totalorder %s1107, %s1109
      %p1113 = scmp.eq.s32.totalorder %s114, 0
      %p1114 = por %p1112, %p1113
      %p1115 = scmp.ne.s32.totalorder %s1107, %s1109
      %p1116 = scmp.eq.s32.totalorder %s119, 1
      %p1117 = por %p1115, %p1116
      %p1118 = scmp.ne.s32.totalorder %s1109, %s1110
      %p1119 = scmp.eq.s32.totalorder %s119, 0
      %p1120 = por %p1118, %p1119
      %p1121 = scmp.ne.s32.totalorder %s1109, %s1110
      %p1122 = scmp.eq.s32.totalorder %s120, 1
      %p1123 = por %p1121, %p1122
      %p1125 = scmp.ne.s32.totalorder %s1110, %s1124
      %p1126 = scmp.eq.s32.totalorder %s120, 0
      %p1127 = por %p1125, %p1126
      %s1128 = sld [smem:[#allocation3 + %s114]]
      %s1129 = sld [smem:[#allocation3 + %s121]]
      %s1130 = ssub.s32 %s1128, %s1129
      %p1131 = scmp.eq.s32.totalorder %s1130, 0
      %s1133 = sadd.s32 %s1132, 1
      %s1134 = scalar_select %p1131, %s1132, %s1133
      %p1137 = pneg %p1131
      %p1138 = scmp.eq.s32.totalorder %s114, 1
      %p1139 = por %p1137, %p1138
      %p1140 = scmp.ne.s32.totalorder %s1132, %s1135
      %p1141 = scmp.eq.s32.totalorder %s114, 0
      %p1142 = por %p1140, %p1141
      %p1143 = scmp.ne.s32.totalorder %s1132, %s1135
      %p1144 = scmp.eq.s32.totalorder %s119, 1
      %p1145 = por %p1143, %p1144
      %p1146 = scmp.ne.s32.totalorder %s1135, %s1136
      %p1147 = scmp.eq.s32.totalorder %s119, 0
      %p1148 = por %p1146, %p1147
      %p1149 = scmp.ne.s32.totalorder %s1135, %s1136
      %p1150 = scmp.eq.s32.totalorder %s120, 1
      %p1151 = por %p1149, %p1150
      %p1153 = scmp.ne.s32.totalorder %s1136, %s1152
      %p1154 = scmp.eq.s32.totalorder %s120, 0
      %p1155 = por %p1153, %p1154
      %s1156 = sld [smem:[#allocation3 + %s114]]
      %s1157 = sld [smem:[#allocation3 + %s121]]
      %s1158 = ssub.s32 %s1156, %s1157
      %p1159 = scmp.eq.s32.totalorder %s1158, 0
      %s1161 = sadd.s32 %s1160, 1
      %s1162 = scalar_select %p1159, %s1160, %s1161
      %p1165 = pneg %p1159
      %p1166 = scmp.eq.s32.totalorder %s114, 1
      %p1167 = por %p1165, %p1166
      %p1168 = scmp.ne.s32.totalorder %s1160, %s1163
      %p1169 = scmp.eq.s32.totalorder %s114, 0
      %p1170 = por %p1168, %p1169
      %p1171 = scmp.ne.s32.totalorder %s1160, %s1163
      %p1172 = scmp.eq.s32.totalorder %s119, 1
      %p1173 = por %p1171, %p1172
      %p1174 = scmp.ne.s32.totalorder %s1163, %s1164
      %p1175 = scmp.eq.s32.totalorder %s119, 0
      %p1176 = por %p1174, %p1175
      %p1177 = scmp.ne.s32.totalorder %s1163, %s1164
      %p1178 = scmp.eq.s32.totalorder %s120, 1
      %p1179 = por %p1177, %p1178
      %p1181 = scmp.ne.s32.totalorder %s1164, %s1180
      %p1182 = scmp.eq.s32.totalorder %s120, 0
      %p1183 = por %p1181, %p1182
      %s1184 = ssub.s32 %s114, %s121
      %p1185 = scmp.eq.s32.totalorder %s1184, 0
      %s1187 = sadd.s32 %s1186, 1
      %s1188 = scalar_select %p1185, %s1186, %s1187
      %p1191 = pneg %p1185
      %p1192 = scmp.eq.s32.totalorder %s114, 1
      %p1193 = por %p1191, %p1192
      %p1194 = scmp.ne.s32.totalorder %s1186, %s1189
      %p1195 = scmp.eq.s32.totalorder %s114, 0
      %p1196 = por %p1194, %p1195
      %p1197 = scmp.ne.s32.totalorder %s1186, %s1189
      %p1198 = scmp.eq.s32.totalorder %s119, 1
      %p1199 = por %p1197, %p1198
      %p1200 = scmp.ne.s32.totalorder %s1189, %s1190
      %p1201 = scmp.eq.s32.totalorder %s119, 0
      %p1202 = por %p1200, %p1201
      %p1203 = scmp.ne.s32.totalorder %s1189, %s1190
      %p1204 = scmp.eq.s32.totalorder %s120, 1
      %p1205 = por %p1203, %p1204
      %p1207 = scmp.ne.s32.totalorder %s1190, %s1206
      %p1208 = scmp.eq.s32.totalorder %s120, 0
      %p1209 = por %p1207, %p1208
      %p1210 = scmp.le.s32.totalorder 1, %s114
      %p1211 = scmp.lt.s32.totalorder %s114, 3
      %p1212 = pnand %p1210, %p1211
      %p1213 = pneg %p1212
      // Predicated region
      $region9: #{decoder_forward.1} parent=5 // pred_check
        _
      $region10: #{decoder_forward.1} parent=5 // pred_check_branch
        %1215 = sbr.rel (%p1212) target = $region12
      $region11: #{decoder_forward.1} parent=5 // pred_region
        %s1216 = ssub.s32 %s114, 1
        // Predicated region
        $region13: #{decoder_forward.1} parent=11 // pred_check
          %p1217 = pneg %p343
        $region14: #{decoder_forward.1} parent=11 // pred_check_branch
          %1219 = sbr.rel (%p1217) target = $region16
        $region15: #{decoder_forward.1} parent=11 // pred_region
          _
        $region16: #{decoder_forward.1} parent=11 // pred_fallthru
          _
        // Predicated region
        $region17: #{decoder_forward.1} parent=11 // pred_check
          %p1220 = pneg %p364
        $region18: #{decoder_forward.1} parent=11 // pred_check_branch
          %1222 = sbr.rel (%p1220) target = $region20
        $region19: #{decoder_forward.1} parent=11 // pred_region
          _
        $region20: #{decoder_forward.1} parent=11 // pred_fallthru
          _
        // Predicated region
        $region21: #{decoder_forward.1} parent=11 // pred_check
          %p1223 = pneg %p385
        $region22: #{decoder_forward.1} parent=11 // pred_check_branch
          %1225 = sbr.rel (%p1223) target = $region24
        $region23: #{decoder_forward.1} parent=11 // pred_region
          _
        $region24: #{decoder_forward.1} parent=11 // pred_fallthru
          _
        // Predicated region
        $region25: #{decoder_forward.1} parent=11 // pred_check
          %p1226 = pneg %p406
        $region26: #{decoder_forward.1} parent=11 // pred_check_branch
          %1228 = sbr.rel (%p1226) target = $region28
        $region27: #{decoder_forward.1} parent=11 // pred_region
          _
        $region28: #{decoder_forward.1} parent=11 // pred_fallthru
          _
        // Predicated region
        $region29: #{decoder_forward.1} parent=11 // pred_check
          %p1229 = pneg %p427
        $region30: #{decoder_forward.1} parent=11 // pred_check_branch
          %1231 = sbr.rel (%p1229) target = $region32
        $region31: #{decoder_forward.1} parent=11 // pred_region
          _
        $region32: #{decoder_forward.1} parent=11 // pred_fallthru
          _
        // Predicated region
        $region33: #{decoder_forward.1} parent=11 // pred_check
          %p1232 = pneg %p448
        $region34: #{decoder_forward.1} parent=11 // pred_check_branch
          %1234 = sbr.rel (%p1232) target = $region36
        $region35: #{decoder_forward.1} parent=11 // pred_region
          _
        $region36: #{decoder_forward.1} parent=11 // pred_fallthru
          _
        // Predicated region
        $region37: #{decoder_forward.1} parent=11 // pred_check
          %p1235 = pneg %p469
        $region38: #{decoder_forward.1} parent=11 // pred_check_branch
          %1237 = sbr.rel (%p1235) target = $region40
        $region39: #{decoder_forward.1} parent=11 // pred_region
          _
        $region40: #{decoder_forward.1} parent=11 // pred_fallthru
          _
        // Predicated region
        $region41: #{decoder_forward.1} parent=11 // pred_check
          %p1238 = pneg %p490
        $region42: #{decoder_forward.1} parent=11 // pred_check_branch
          %1240 = sbr.rel (%p1238) target = $region44
        $region43: #{decoder_forward.1} parent=11 // pred_region
          _
        $region44: #{decoder_forward.1} parent=11 // pred_fallthru
          _
        // Predicated region
        $region45: #{decoder_forward.1} parent=11 // pred_check
          %p1241 = pneg %p511
        $region46: #{decoder_forward.1} parent=11 // pred_check_branch
          %1243 = sbr.rel (%p1241) target = $region48
        $region47: #{decoder_forward.1} parent=11 // pred_region
          _
        $region48: #{decoder_forward.1} parent=11 // pred_fallthru
          _
        // Predicated region
        $region49: #{decoder_forward.1} parent=11 // pred_check
          %p1244 = pneg %p532
        $region50: #{decoder_forward.1} parent=11 // pred_check_branch
          %1246 = sbr.rel (%p1244) target = $region52
        $region51: #{decoder_forward.1} parent=11 // pred_region
          _
        $region52: #{decoder_forward.1} parent=11 // pred_fallthru
          _
        // Predicated region
        $region53: #{decoder_forward.1} parent=11 // pred_check
          %p1247 = pneg %p553
        $region54: #{decoder_forward.1} parent=11 // pred_check_branch
          %1249 = sbr.rel (%p1247) target = $region56
        $region55: #{decoder_forward.1} parent=11 // pred_region
          _
        $region56: #{decoder_forward.1} parent=11 // pred_fallthru
          _
        // Predicated region
        $region57: #{decoder_forward.1} parent=11 // pred_check
          %p1250 = pneg %p574
        $region58: #{decoder_forward.1} parent=11 // pred_check_branch
          %1252 = sbr.rel (%p1250) target = $region60
        $region59: #{decoder_forward.1} parent=11 // pred_region
          _
        $region60: #{decoder_forward.1} parent=11 // pred_fallthru
          _
        // Predicated region
        $region61: #{decoder_forward.1} parent=11 // pred_check
          %p1253 = pneg %p595
        $region62: #{decoder_forward.1} parent=11 // pred_check_branch
          %1255 = sbr.rel (%p1253) target = $region64
        $region63: #{decoder_forward.1} parent=11 // pred_region
          _
        $region64: #{decoder_forward.1} parent=11 // pred_fallthru
          _
        // Predicated region
        $region65: #{decoder_forward.1} parent=11 // pred_check
          %p1256 = pneg %p616
        $region66: #{decoder_forward.1} parent=11 // pred_check_branch
          %1258 = sbr.rel (%p1256) target = $region68
        $region67: #{decoder_forward.1} parent=11 // pred_region
          _
        $region68: #{decoder_forward.1} parent=11 // pred_fallthru
          _
        // Predicated region
        $region69: #{decoder_forward.1} parent=11 // pred_check
          %p1259 = pneg %p637
        $region70: #{decoder_forward.1} parent=11 // pred_check_branch
          %1261 = sbr.rel (%p1259) target = $region72
        $region71: #{decoder_forward.1} parent=11 // pred_region
          _
        $region72: #{decoder_forward.1} parent=11 // pred_fallthru
          _
        // Predicated region
        $region73: #{decoder_forward.1} parent=11 // pred_check
          %p1262 = pneg %p658
        $region74: #{decoder_forward.1} parent=11 // pred_check_branch
          %1264 = sbr.rel (%p1262) target = $region76
        $region75: #{decoder_forward.1} parent=11 // pred_region
          _
        $region76: #{decoder_forward.1} parent=11 // pred_fallthru
          _
        // Predicated region
        $region77: #{decoder_forward.1} parent=11 // pred_check
          %p1265 = pneg %p679
        $region78: #{decoder_forward.1} parent=11 // pred_check_branch
          %1267 = sbr.rel (%p1265) target = $region80
        $region79: #{decoder_forward.1} parent=11 // pred_region
          _
        $region80: #{decoder_forward.1} parent=11 // pred_fallthru
          _
        // Predicated region
        $region81: #{decoder_forward.1} parent=11 // pred_check
          %p1268 = pneg %p700
        $region82: #{decoder_forward.1} parent=11 // pred_check_branch
          %1270 = sbr.rel (%p1268) target = $region84
        $region83: #{decoder_forward.1} parent=11 // pred_region
          _
        $region84: #{decoder_forward.1} parent=11 // pred_fallthru
          _
        // Predicated region
        $region85: #{decoder_forward.1} parent=11 // pred_check
          %p1271 = pneg %p721
        $region86: #{decoder_forward.1} parent=11 // pred_check_branch
          %1273 = sbr.rel (%p1271) target = $region88
        $region87: #{decoder_forward.1} parent=11 // pred_region
          _
        $region88: #{decoder_forward.1} parent=11 // pred_fallthru
          _
        // Predicated region
        $region89: #{decoder_forward.1} parent=11 // pred_check
          %p1274 = pneg %p742
        $region90: #{decoder_forward.1} parent=11 // pred_check_branch
          %1276 = sbr.rel (%p1274) target = $region92
        $region91: #{decoder_forward.1} parent=11 // pred_region
          _
        $region92: #{decoder_forward.1} parent=11 // pred_fallthru
          _
        // Predicated region
        $region93: #{decoder_forward.1} parent=11 // pred_check
          %p1277 = pneg %p763
        $region94: #{decoder_forward.1} parent=11 // pred_check_branch
          %1279 = sbr.rel (%p1277) target = $region96
        $region95: #{decoder_forward.1} parent=11 // pred_region
          _
        $region96: #{decoder_forward.1} parent=11 // pred_fallthru
          _
        // Predicated region
        $region97: #{decoder_forward.1} parent=11 // pred_check
          %p1280 = pneg %p784
        $region98: #{decoder_forward.1} parent=11 // pred_check_branch
          %1282 = sbr.rel (%p1280) target = $region100
        $region99: #{decoder_forward.1} parent=11 // pred_region
          _
        $region100: #{decoder_forward.1} parent=11 // pred_fallthru
          _
        // Predicated region
        $region101: #{decoder_forward.1} parent=11 // pred_check
          %p1283 = pneg %p805
        $region102: #{decoder_forward.1} parent=11 // pred_check_branch
          %1285 = sbr.rel (%p1283) target = $region104
        $region103: #{decoder_forward.1} parent=11 // pred_region
          _
        $region104: #{decoder_forward.1} parent=11 // pred_fallthru
          _
        // Predicated region
        $region105: #{decoder_forward.1} parent=11 // pred_check
          %p1286 = pneg %p826
        $region106: #{decoder_forward.1} parent=11 // pred_check_branch
          %1288 = sbr.rel (%p1286) target = $region108
        $region107: #{decoder_forward.1} parent=11 // pred_region
          _
        $region108: #{decoder_forward.1} parent=11 // pred_fallthru
          _
        // Predicated region
        $region109: #{decoder_forward.1} parent=11 // pred_check
          %p1289 = pneg %p847
        $region110: #{decoder_forward.1} parent=11 // pred_check_branch
          %1291 = sbr.rel (%p1289) target = $region112
        $region111: #{decoder_forward.1} parent=11 // pred_region
          _
        $region112: #{decoder_forward.1} parent=11 // pred_fallthru
          _
        // Predicated region
        $region113: #{decoder_forward.1} parent=11 // pred_check
          %p1292 = pneg %p868
        $region114: #{decoder_forward.1} parent=11 // pred_check_branch
          %1294 = sbr.rel (%p1292) target = $region116
        $region115: #{decoder_forward.1} parent=11 // pred_region
          _
        $region116: #{decoder_forward.1} parent=11 // pred_fallthru
          _
        // Predicated region
        $region117: #{decoder_forward.1} parent=11 // pred_check
          %p1295 = pneg %p889
        $region118: #{decoder_forward.1} parent=11 // pred_check_branch
          %1297 = sbr.rel (%p1295) target = $region120
        $region119: #{decoder_forward.1} parent=11 // pred_region
          _
        $region120: #{decoder_forward.1} parent=11 // pred_fallthru
          _
        // Predicated region
        $region121: #{decoder_forward.1} parent=11 // pred_check
          %p1298 = pneg %p910
        $region122: #{decoder_forward.1} parent=11 // pred_check_branch
          %1300 = sbr.rel (%p1298) target = $region124
        $region123: #{decoder_forward.1} parent=11 // pred_region
          _
        $region124: #{decoder_forward.1} parent=11 // pred_fallthru
          _
        // Predicated region
        $region125: #{decoder_forward.1} parent=11 // pred_check
          %p1301 = pneg %p931
        $region126: #{decoder_forward.1} parent=11 // pred_check_branch
          %1303 = sbr.rel (%p1301) target = $region128
        $region127: #{decoder_forward.1} parent=11 // pred_region
          _
        $region128: #{decoder_forward.1} parent=11 // pred_fallthru
          _
        // Predicated region
        $region129: #{decoder_forward.1} parent=11 // pred_check
          %p1304 = pneg %p952
        $region130: #{decoder_forward.1} parent=11 // pred_check_branch
          %1306 = sbr.rel (%p1304) target = $region132
        $region131: #{decoder_forward.1} parent=11 // pred_region
          _
        $region132: #{decoder_forward.1} parent=11 // pred_fallthru
          _
        // Predicated region
        $region133: #{decoder_forward.1} parent=11 // pred_check
          %p1307 = pneg %p973
        $region134: #{decoder_forward.1} parent=11 // pred_check_branch
          %1309 = sbr.rel (%p1307) target = $region136
        $region135: #{decoder_forward.1} parent=11 // pred_region
          _
        $region136: #{decoder_forward.1} parent=11 // pred_fallthru
          _
        // Predicated region
        $region137: #{decoder_forward.1} parent=11 // pred_check
          %p1310 = pneg %p994
        $region138: #{decoder_forward.1} parent=11 // pred_check_branch
          %1312 = sbr.rel (%p1310) target = $region140
        $region139: #{decoder_forward.1} parent=11 // pred_region
          _
        $region140: #{decoder_forward.1} parent=11 // pred_fallthru
          _
        // Predicated region
        $region141: #{decoder_forward.1} parent=11 // pred_check
          %p1313 = pneg %p1015
        $region142: #{decoder_forward.1} parent=11 // pred_check_branch
          %1315 = sbr.rel (%p1313) target = $region144
        $region143: #{decoder_forward.1} parent=11 // pred_region
          _
        $region144: #{decoder_forward.1} parent=11 // pred_fallthru
          _
        // Predicated region
        $region145: #{decoder_forward.1} parent=11 // pred_check
          %p1316 = pneg %p1036
        $region146: #{decoder_forward.1} parent=11 // pred_check_branch
          %1318 = sbr.rel (%p1316) target = $region148
        $region147: #{decoder_forward.1} parent=11 // pred_region
          _
        $region148: #{decoder_forward.1} parent=11 // pred_fallthru
          _
        // Predicated region
        $region149: #{decoder_forward.1} parent=11 // pred_check
          %p1319 = pneg %p1057
        $region150: #{decoder_forward.1} parent=11 // pred_check_branch
          %1321 = sbr.rel (%p1319) target = $region152
        $region151: #{decoder_forward.1} parent=11 // pred_region
          _
        $region152: #{decoder_forward.1} parent=11 // pred_fallthru
          _
        // Predicated region
        $region153: #{decoder_forward.1} parent=11 // pred_check
          %p1322 = pneg %p1078
        $region154: #{decoder_forward.1} parent=11 // pred_check_branch
          %1324 = sbr.rel (%p1322) target = $region156
        $region155: #{decoder_forward.1} parent=11 // pred_region
          _
        $region156: #{decoder_forward.1} parent=11 // pred_fallthru
          _
        // Predicated region
        $region157: #{decoder_forward.1} parent=11 // pred_check
          %p1325 = pneg %p1099
        $region158: #{decoder_forward.1} parent=11 // pred_check_branch
          %1327 = sbr.rel (%p1325) target = $region160
        $region159: #{decoder_forward.1} parent=11 // pred_region
          _
        $region160: #{decoder_forward.1} parent=11 // pred_fallthru
          _
        // Predicated region
        $region161: #{decoder_forward.1} parent=11 // pred_check
          %p1328 = pneg %p1120
        $region162: #{decoder_forward.1} parent=11 // pred_check_branch
          %1330 = sbr.rel (%p1328) target = $region164
        $region163: #{decoder_forward.1} parent=11 // pred_region
          _
        $region164: #{decoder_forward.1} parent=11 // pred_fallthru
          _
      $region12: #{decoder_forward.1} parent=5 // pred_fallthru
        _
      %p1331 = scmp.lt.s32.totalorder %s114, 2
      // Predicated region
      $region165: #{decoder_forward.1} parent=5 // pred_check
        %p1332 = pneg %p1331
      $region166: #{decoder_forward.1} parent=5 // pred_check_branch
        %1334 = sbr.rel (%p1332) target = $region168
      $region167: #{decoder_forward.1} parent=5 // pred_region
        // Predicated region
        $region169: #{decoder_forward.1} parent=167 // pred_check
          %p1335 = pneg %p134
        $region170: #{decoder_forward.1} parent=167 // pred_check_branch
          %1337 = sbr.rel (%p1335) target = $region172
        $region171: #{decoder_forward.1} parent=167 // pred_region
          %p1338 = scmp.lt.s32.totalorder %s114, 1
          %s1339 = scalar_select %p1338, %s114, 1
          %s1340 = smul.addr %s1339, 8
          %s1341 = scalar_lea.vmem %s3, %s1340
        $region172: #{decoder_forward.1} parent=167 // pred_fallthru
          _
        // Predicated region
        $region173: #{decoder_forward.1} parent=167 // pred_check
          %p1342 = pneg %p160
        $region174: #{decoder_forward.1} parent=167 // pred_check_branch
          %1344 = sbr.rel (%p1342) target = $region176
        $region175: #{decoder_forward.1} parent=167 // pred_region
          %p1345 = scmp.lt.s32.totalorder %s114, 1
          %s1346 = scalar_select %p1345, %s114, 1
          %s1347 = smul.addr %s1346, 2
          %s1348 = smul.addr %s1347, 8
          %s1349 = scalar_lea.vmem %s5, %s1348
        $region176: #{decoder_forward.1} parent=167 // pred_fallthru
          _
        // Predicated region
        $region177: #{decoder_forward.1} parent=167 // pred_check
          %p1350 = pneg %p186
        $region178: #{decoder_forward.1} parent=167 // pred_check_branch
          %1352 = sbr.rel (%p1350) target = $region180
        $region179: #{decoder_forward.1} parent=167 // pred_region
          %p1353 = scmp.lt.s32.totalorder %s114, 1
          %s1354 = scalar_select %p1353, %s114, 1
          %s1355 = smul.addr %s1354, 4
          %s1356 = scalar_lea.vmem %s7, %s1355
        $region180: #{decoder_forward.1} parent=167 // pred_fallthru
          _
        // Predicated region
        $region181: #{decoder_forward.1} parent=167 // pred_check
          %p1357 = pneg %p212
        $region182: #{decoder_forward.1} parent=167 // pred_check_branch
          %1359 = sbr.rel (%p1357) target = $region184
        $region183: #{decoder_forward.1} parent=167 // pred_region
          %p1360 = scmp.lt.s32.totalorder %s114, 1
          %s1361 = scalar_select %p1360, %s114, 1
          %s1362 = scalar_lea.vmem %s9, %s1361
        $region184: #{decoder_forward.1} parent=167 // pred_fallthru
          _
        // Predicated region
        $region185: #{decoder_forward.1} parent=167 // pred_check
          %p1363 = pneg %p238
        $region186: #{decoder_forward.1} parent=167 // pred_check_branch
          %1365 = sbr.rel (%p1363) target = $region188
        $region187: #{decoder_forward.1} parent=167 // pred_region
          %p1366 = scmp.lt.s32.totalorder %s114, 1
          %s1367 = scalar_select %p1366, %s114, 1
          %s1368 = smul.addr %s1367, 8
          %s1369 = scalar_lea.vmem %s11, %s1368
        $region188: #{decoder_forward.1} parent=167 // pred_fallthru
          _
        // Predicated region
        $region189: #{decoder_forward.1} parent=167 // pred_check
          %p1370 = pneg %p264
        $region190: #{decoder_forward.1} parent=167 // pred_check_branch
          %1372 = sbr.rel (%p1370) target = $region192
        $region191: #{decoder_forward.1} parent=167 // pred_region
          %p1373 = scmp.lt.s32.totalorder %s114, 1
          %s1374 = scalar_select %p1373, %s114, 1
          %s1375 = scalar_lea.vmem %s13, %s1374
        $region192: #{decoder_forward.1} parent=167 // pred_fallthru
          _
        // Predicated region
        $region193: #{decoder_forward.1} parent=167 // pred_check
          %p1376 = pneg %p290
        $region194: #{decoder_forward.1} parent=167 // pred_check_branch
          %1378 = sbr.rel (%p1376) target = $region196
        $region195: #{decoder_forward.1} parent=167 // pred_region
          %p1379 = scmp.lt.s32.totalorder %s114, 1
          %s1380 = scalar_select %p1379, %s114, 1
          %s1381 = smul.addr %s1380, 8
          %s1382 = scalar_lea.vmem %s15, %s1381
        $region196: #{decoder_forward.1} parent=167 // pred_fallthru
          _
        // Predicated region
        $region197: #{decoder_forward.1} parent=167 // pred_check
          %p1383 = pneg %p316
        $region198: #{decoder_forward.1} parent=167 // pred_check_branch
          %1385 = sbr.rel (%p1383) target = $region200
        $region199: #{decoder_forward.1} parent=167 // pred_region
          %p1386 = scmp.lt.s32.totalorder %s114, 1
          %s1387 = scalar_select %p1386, %s114, 1
          %s1388 = scalar_lea.vmem %s17, %s1387
        $region200: #{decoder_forward.1} parent=167 // pred_fallthru
          _
        // Predicated region
        $region201: #{decoder_forward.1} parent=167 // pred_check
          %p1389 = pneg %p1142
        $region202: #{decoder_forward.1} parent=167 // pred_check_branch
          %1391 = sbr.rel (%p1389) target = $region204
        $region203: #{decoder_forward.1} parent=167 // pred_region
          %s1392 = sld [smem:[#allocation3 + %s114]]
          %p1393 = scmp.lt.s32.totalorder %s1392, 3
          %s1394 = scalar_select %p1393, %s1392, 3
          %s1395 = smul.addr %s1394, 4
          %s1396 = smul.addr %s1395, 8
          %s1397 = scalar_lea.vmem %s95, %s1396
          %s1398 = sld [smem:[#allocation3 + %s114]]
        $region204: #{decoder_forward.1} parent=167 // pred_fallthru
          _
        // Predicated region
        $region205: #{decoder_forward.1} parent=167 // pred_check
          %p1399 = pneg %p1170
        $region206: #{decoder_forward.1} parent=167 // pred_check_branch
          %1401 = sbr.rel (%p1399) target = $region208
        $region207: #{decoder_forward.1} parent=167 // pred_region
          %s1402 = sld [smem:[#allocation3 + %s114]]
          %p1403 = scmp.lt.s32.totalorder %s1402, 3
          %s1404 = scalar_select %p1403, %s1402, 3
          %s1405 = scalar_lea.vmem %s97, %s1404
          %s1406 = sld [smem:[#allocation3 + %s114]]
        $region208: #{decoder_forward.1} parent=167 // pred_fallthru
          _
      $region168: #{decoder_forward.1} parent=5 // pred_fallthru
        _
      %p1407 = scmp.le.s32.totalorder 1, %s114
      %p1408 = scmp.lt.s32.totalorder %s114, 3
      %p1409 = pnand %p1407, %p1408
      %p1410 = pneg %p1409
      // Predicated region
      $region209: #{decoder_forward.1} parent=5 // pred_check
        _
      $region210: #{decoder_forward.1} parent=5 // pred_check_branch
        %1412 = sbr.rel (%p1409) target = $region212
      $region211: #{decoder_forward.1} parent=5 // pred_region
        %s1413 = ssub.s32 %s114, 1
        %p1414 = scmp.lt.s32.totalorder %s119, 1
        %s1415 = scalar_select %p1414, %s119, 1
        %s1416 = smul.addr %s1415, 8
        %s1417 = scalar_lea.vmem %s3, %s1416
        %p1418 = pneg %p140
        %p1419 = pneg %p137
        %p1420 = scmp.lt.s32.totalorder %s119, 1
        %s1421 = scalar_select %p1420, %s119, 1
        %s1422 = smul.addr %s1421, 2
        %s1423 = smul.addr %s1422, 8
        %s1424 = scalar_lea.vmem %s5, %s1423
        %p1425 = pneg %p166
        %p1426 = pneg %p163
        %p1427 = scmp.lt.s32.totalorder %s119, 1
        %s1428 = scalar_select %p1427, %s119, 1
        %s1429 = smul.addr %s1428, 4
        %s1430 = scalar_lea.vmem %s7, %s1429
        %p1431 = pneg %p192
        %p1432 = pneg %p189
        %p1433 = scmp.lt.s32.totalorder %s119, 1
        %s1434 = scalar_select %p1433, %s119, 1
        %s1435 = scalar_lea.vmem %s9, %s1434
        %p1436 = pneg %p218
        %p1437 = pneg %p215
        %p1438 = scmp.lt.s32.totalorder %s119, 1
        %s1439 = scalar_select %p1438, %s119, 1
        %s1440 = smul.addr %s1439, 8
        %s1441 = scalar_lea.vmem %s11, %s1440
        %p1442 = pneg %p244
        %p1443 = pneg %p241
        %p1444 = scmp.lt.s32.totalorder %s119, 1
        %s1445 = scalar_select %p1444, %s119, 1
        %s1446 = scalar_lea.vmem %s13, %s1445
        %p1447 = pneg %p270
        %p1448 = pneg %p267
        %p1449 = scmp.lt.s32.totalorder %s119, 1
        %s1450 = scalar_select %p1449, %s119, 1
        %s1451 = smul.addr %s1450, 8
        %s1452 = scalar_lea.vmem %s15, %s1451
        %p1453 = pneg %p296
        %p1454 = pneg %p293
        %p1455 = scmp.lt.s32.totalorder %s119, 1
        %s1456 = scalar_select %p1455, %s119, 1
        %s1457 = scalar_lea.vmem %s17, %s1456
        %p1458 = pneg %p322
        %p1459 = pneg %p319
        %p1460 = pneg %p343
        %p1461 = pneg %p340
        %p1462 = pneg %p364
        %p1463 = pneg %p361
        %p1464 = pneg %p385
        %p1465 = pneg %p382
        %p1466 = pneg %p406
        %p1467 = pneg %p403
        %p1468 = pneg %p427
        %p1469 = pneg %p424
        %p1470 = pneg %p448
        %p1471 = pneg %p445
        %p1472 = pneg %p469
        %p1473 = pneg %p466
        %p1474 = pneg %p490
        %p1475 = pneg %p487
        %p1476 = pneg %p511
        %p1477 = pneg %p508
        %p1478 = pneg %p532
        %p1479 = pneg %p529
        %p1480 = pneg %p553
        %p1481 = pneg %p550
        %p1482 = pneg %p574
        %p1483 = pneg %p571
        %p1484 = pneg %p595
        %p1485 = pneg %p592
        %p1486 = pneg %p616
        %p1487 = pneg %p613
        %p1488 = pneg %p637
        %p1489 = pneg %p634
        %p1490 = pneg %p658
        %p1491 = pneg %p655
        %p1492 = pneg %p679
        %p1493 = pneg %p676
        %p1494 = pneg %p700
        %p1495 = pneg %p697
        %p1496 = pneg %p721
        %p1497 = pneg %p718
        %p1498 = pneg %p742
        %p1499 = pneg %p739
        %p1500 = pneg %p763
        %p1501 = pneg %p760
        %p1502 = pneg %p784
        %p1503 = pneg %p781
        %p1504 = pneg %p805
        %p1505 = pneg %p802
        %p1506 = pneg %p826
        %p1507 = pneg %p823
        %p1508 = pneg %p847
        %p1509 = pneg %p844
        %p1510 = pneg %p868
        %p1511 = pneg %p865
        %p1512 = pneg %p889
        %p1513 = pneg %p886
        %p1514 = pneg %p910
        %p1515 = pneg %p907
        %p1516 = pneg %p931
        %p1517 = pneg %p928
        %p1518 = pneg %p952
        %p1519 = pneg %p949
        %p1520 = pneg %p973
        %p1521 = pneg %p970
        %p1522 = pneg %p994
        %p1523 = pneg %p991
        %p1524 = pneg %p1015
        %p1525 = pneg %p1012
        %p1526 = pneg %p1036
        %p1527 = pneg %p1033
        %p1528 = pneg %p1057
        %p1529 = pneg %p1054
        %p1530 = pneg %p1078
        %p1531 = pneg %p1075
        %p1532 = pneg %p1099
        %p1533 = pneg %p1096
        %p1534 = pneg %p1120
        %p1535 = pneg %p1117
        %s1536 = sld [smem:[#allocation3 + %s119]]
        %p1537 = scmp.lt.s32.totalorder %s1536, 3
        %s1538 = scalar_select %p1537, %s1536, 3
        %s1539 = smul.addr %s1538, 4
        %s1540 = smul.addr %s1539, 8
        %s1541 = scalar_lea.vmem %s95, %s1540
        %p1542 = pneg %p1148
        %p1543 = pneg %p1145
        %s1544 = sld [smem:[#allocation3 + %s119]]
        %p1545 = scmp.lt.s32.totalorder %s1544, 3
        %s1546 = scalar_select %p1545, %s1544, 3
        %s1547 = scalar_lea.vmem %s97, %s1546
        %p1548 = pneg %p1176
        %p1549 = pneg %p1173
        %p1550 = pneg %p1202
        %p1551 = pneg %p1199
        %s1552 = sand.u32 %s1189, 1
        %s1553 = scalar_lea.sflag [#allocation5], %s1552
        %s1554 = sand.u32 %s1189, 1
        %s1555 = smul.addr %s1554, 8
        %s1556 = scalar_lea.vmem [#allocation4], %s1555
        %p1557 = scmp.lt.s32.totalorder %s119, 1
        %s1558 = scalar_select %p1557, %s119, 1
        %s1559 = smul.addr %s1558, 8
        %s1560 = scalar_lea.vmem %s3, %s1559
        %p1561 = scmp.lt.s32.totalorder %s119, 1
        %s1562 = scalar_select %p1561, %s119, 1
        %s1563 = smul.addr %s1562, 2
        %s1564 = smul.addr %s1563, 8
        %s1565 = scalar_lea.vmem %s5, %s1564
        %p1566 = scmp.lt.s32.totalorder %s119, 1
        %s1567 = scalar_select %p1566, %s119, 1
        %s1568 = smul.addr %s1567, 4
        %s1569 = scalar_lea.vmem %s7, %s1568
        %p1570 = scmp.lt.s32.totalorder %s119, 1
        %s1571 = scalar_select %p1570, %s119, 1
        %s1572 = scalar_lea.vmem %s9, %s1571
        %p1573 = scmp.lt.s32.totalorder %s119, 1
        %s1574 = scalar_select %p1573, %s119, 1
        %s1575 = smul.addr %s1574, 8
        %s1576 = scalar_lea.vmem %s11, %s1575
        %p1577 = scmp.lt.s32.totalorder %s119, 1
        %s1578 = scalar_select %p1577, %s119, 1
        %s1579 = scalar_lea.vmem %s13, %s1578
        %p1580 = scmp.lt.s32.totalorder %s119, 1
        %s1581 = scalar_select %p1580, %s119, 1
        %s1582 = smul.addr %s1581, 8
        %s1583 = scalar_lea.vmem %s15, %s1582
        %p1584 = scmp.lt.s32.totalorder %s119, 1
        %s1585 = scalar_select %p1584, %s119, 1
        %s1586 = scalar_lea.vmem %s17, %s1585
        %s1587 = sld [smem:[#allocation3 + %s119]]
        %p1588 = scmp.lt.s32.totalorder %s1587, 3
        %s1589 = scalar_select %p1588, %s1587, 3
        %s1590 = smul.addr %s1589, 4
        %s1591 = smul.addr %s1590, 8
        %s1592 = scalar_lea.vmem %s95, %s1591
        %s1593 = sld [smem:[#allocation3 + %s119]]
        %s1594 = sld [smem:[#allocation3 + %s119]]
        %p1595 = scmp.lt.s32.totalorder %s1594, 3
        %s1596 = scalar_select %p1595, %s1594, 3
        %s1597 = scalar_lea.vmem %s97, %s1596
        %s1598 = sld [smem:[#allocation3 + %s119]]
        %v1599 = vld [vmem:[%s1560] sm:$0xff]
        %v1600 = vld [vmem:[%s19] sm:$0xff]
        %v1601 = vadd.f32 %v1599, %v1600
        %v1602 = vld [vmem:[%s1565] sm:$0xff]
        %v1603 = vld [vmem:[%s1565 + $0x8] sm:$0x3]
        %v1604 = vld [vmem:[%s1569] sm:$0xf]
        %v1605 = vld [vmem:[%s21] sm:$0xf]
        %v1606 = vld [vmem:[%s1572] sm:$0x1]
        %v1607 = vld [vmem:[%s1583] sm:$0xff]
        %v1608 = vld [vmem:[%s1586] sm:$0x1]
        %v1609 = vld [vmem:[%s1579] sm:$0x1]
        %v1610 = vsub.f32 %v1609, 1.0
        %v1611 = vmul.f32 %v1610, 1e+30
        %v1612 = vld [vmem:[%s1576] sm:$0xff]
        %v1613 = vsub.f32 %v1612, 1.0
        %v1614 = vmul.f32 %v1613, 1e+30
        %v1615 = vld [vmem:[%s23] sm:$0xff]
        %v1616 = vld [vmem:[%s23 + $0x8] sm:$0xff]
        %v1617 = vld [vmem:[%s23 + $0x10] sm:$0xf]
        %v1618 = vld [vmem:[%s25] sm:$0x1]
        %vm1619 = vcmask 162816
        %v1621 = vsel %vm1619, %v1606, 0
        %vm1623 = vcmask 1043456
        %v1625 = vsel %vm1623, %v1617, 0
        %1627 = vmatprep.subr.mxu0 0.0
        %1628 = vmatpush1.msra.mxu0 0.0
        %1629 = vmatprep.subr.mxu0 0.0
        %1630 = vmatpush1.msra.mxu0 0.0
        %1631 = vmatprep.subr.mxu0 0.0
        %1632 = vmatpush1.msra.mxu0 0.0
        %1633 = vmatprep.subr.mxu0 0.0
        %1634 = vmatpush1.msra.mxu0 0.0
        %1635 = vmatprep.subr.mxu0 0.0
        %1636 = vmatpush1.msra.mxu0 0.0
        %1637 = vmatprep.subr.mxu0 0.0
        %1638 = vmatpush1.msra.mxu0 0.0
        %1639 = vmatprep.subr.mxu0 0.0
        %1640 = vmatpush1.msra.mxu0 0.0
        %1641 = vmatprep.subr.mxu0 0.0
        %1642 = vmatpush1.msra.mxu0 0.0
        %1643 = vmatprep.subr.mxu0 0.0
        %1644 = vmatpush1.msra.mxu0 0.0
        %1645 = vmatprep.subr.mxu0 0.0
        %1646 = vmatpush1.msra.mxu0 0.0
        %1647 = vmatprep.subr.mxu0 0.0
        %1648 = vmatpush1.msra.mxu0 0.0
        %1649 = vmatprep.subr.mxu0 0.0
        %1650 = vmatpush1.msra.mxu0 0.0
        %1651 = vmatprep.subr.mxu0 0.0
        %1652 = vmatpush1.msra.mxu0 0.0
        %1653 = vmatprep.subr.mxu0 0.0
        %1654 = vmatpush1.msra.mxu0 %v1625
        %1655 = vmatprep.subr.mxu0 0.0
        %1656 = vmatpush1.msra.mxu0 %v1616
        %1657 = vmatprep.subr.mxu0 0.0
        %1658 = vmatpush1.msra.mxu0 %v1615
        %1659 = vmatprep.subr.mxu0 0.0
        %1660 = vmatpush2.msra.mxu0 0.0
        %1661 = vmatprep.subr.mxu0 0.0
        %1662 = vmatpush2.msra.mxu0 0.0
        %1663 = vmatprep.subr.mxu0 0.0
        %1664 = vmatpush2.msra.mxu0 0.0
        %1665 = vmatprep.subr.mxu0 0.0
        %1666 = vmatpush2.msra.mxu0 0.0
        %1667 = vmatprep.subr.mxu0 0.0
        %1668 = vmatpush2.msra.mxu0 0.0
        %1669 = vmatprep.subr.mxu0 0.0
        %1670 = vmatpush2.msra.mxu0 0.0
        %1671 = vmatprep.subr.mxu0 0.0
        %1672 = vmatpush2.msra.mxu0 0.0
        %1673 = vmatprep.subr.mxu0 0.0
        %1674 = vmatpush2.msra.mxu0 0.0
        %1675 = vmatprep.subr.mxu0 0.0
        %1676 = vmatpush2.msra.mxu0 0.0
        %1677 = vmatprep.subr.mxu0 0.0
        %1678 = vmatpush2.msra.mxu0 0.0
        %1679 = vmatprep.subr.mxu0 0.0
        %1680 = vmatpush2.msra.mxu0 0.0
        %1681 = vmatprep.subr.mxu0 0.0
        %1682 = vmatpush2.msra.mxu0 0.0
        %1683 = vmatprep.subr.mxu0 0.0
        %1684 = vmatpush2.msra.mxu0 0.0
        %1685 = vmatprep.subr.mxu0 0.0
        %1686 = vmatpush2.msra.mxu0 0.0
        %1687 = vmatprep.subr.mxu0 0.0
        %1688 = vmatpush2.msra.mxu0 0.0
        %1689 = vmatprep.subr.mxu0 0.0
        %1690 = vmatpush2.msra.mxu0 0.0
        %1691 = vmatprep.mubr.f32.mxu0 0.0
        %1692 = vmatmul.mubr.f32.gmra.mxu0 %v1621
        %v1693 = vpop.f32.mrf.mxu0
        %v1694 = vadd.f32 %v1618, %v1693
        %v1695 = vpop.f32.mrf.mxu0
        %1696 = vdwg.mxu0
        %v1697 = vlaneseq
        %v1698 = vshrl.u32 %v1697, 7
        %v1699 = vsub.s32 0, %v1698
        %v1700 = vrot.slane %v1694, %v1699
        %v1701 = vadd.f32 %v1601, %v1700
        %v1702 = vld [vmem:[%s41] sm:$0x1]
        %v1703 = vld [vmem:[%s27] sm:$0xff]
        %v1704 = vld [vmem:[%s27 + $0x8] sm:$0xff]
        %v1705 = vld [vmem:[%s27 + $0x10] sm:$0xff]
        %v1706 = vld [vmem:[%s27 + $0x18] sm:$0xff]
        %v1707 = vld [vmem:[%s29] sm:$0x1]
        %v1709 = vlaneseq
        %v1710 = vshrl.u32 %v1709, 7
        %v1711 = vsub.s32 0, %v1710
        %v1712 = vrot.slane %v1707, %v1711
        %vm1714 = vcmask 261120
        %v1716 = vsel %vm1714, %v1701, 0
        %1718 = vmatprep.subr.mxu0 0.0
        %1719 = vmatpush1.msra.mxu0 0.0
        %1720 = vmatprep.subr.mxu0 0.0
        %1721 = vmatpush1.msra.mxu0 0.0
        %1722 = vmatprep.subr.mxu0 0.0
        %1723 = vmatpush1.msra.mxu0 0.0
        %1724 = vmatprep.subr.mxu0 0.0
        %1725 = vmatpush1.msra.mxu0 0.0
        %1726 = vmatprep.subr.mxu0 0.0
        %1727 = vmatpush1.msra.mxu0 0.0
        %1728 = vmatprep.subr.mxu0 0.0
        %1729 = vmatpush1.msra.mxu0 0.0
        %1730 = vmatprep.subr.mxu0 0.0
        %1731 = vmatpush1.msra.mxu0 0.0
        %1732 = vmatprep.subr.mxu0 0.0
        %1733 = vmatpush1.msra.mxu0 0.0
        %1734 = vmatprep.subr.mxu0 0.0
        %1735 = vmatpush1.msra.mxu0 0.0
        %1736 = vmatprep.subr.mxu0 0.0
        %1737 = vmatpush1.msra.mxu0 0.0
        %1738 = vmatprep.subr.mxu0 0.0
        %1739 = vmatpush1.msra.mxu0 0.0
        %1740 = vmatprep.subr.mxu0 0.0
        %1741 = vmatpush1.msra.mxu0 0.0
        %1742 = vmatprep.subr.mxu0 0.0
        %1743 = vmatpush1.msra.mxu0 %v1706
        %1744 = vmatprep.subr.mxu0 0.0
        %1745 = vmatpush1.msra.mxu0 %v1705
        %1746 = vmatprep.subr.mxu0 0.0
        %1747 = vmatpush1.msra.mxu0 %v1704
        %1748 = vmatprep.subr.mxu0 0.0
        %1749 = vmatpush1.msra.mxu0 %v1703
        %1750 = vmatprep.subr.mxu0 0.0
        %1751 = vmatpush2.msra.mxu0 0.0
        %1752 = vmatprep.subr.mxu0 0.0
        %1753 = vmatpush2.msra.mxu0 0.0
        %1754 = vmatprep.subr.mxu0 0.0
        %1755 = vmatpush2.msra.mxu0 0.0
        %1756 = vmatprep.subr.mxu0 0.0
        %1757 = vmatpush2.msra.mxu0 0.0
        %1758 = vmatprep.subr.mxu0 0.0
        %1759 = vmatpush2.msra.mxu0 0.0
        %1760 = vmatprep.subr.mxu0 0.0
        %1761 = vmatpush2.msra.mxu0 0.0
        %1762 = vmatprep.subr.mxu0 0.0
        %1763 = vmatpush2.msra.mxu0 0.0
        %1764 = vmatprep.subr.mxu0 0.0
        %1765 = vmatpush2.msra.mxu0 0.0
        %1766 = vmatprep.subr.mxu0 0.0
        %1767 = vmatpush2.msra.mxu0 0.0
        %1768 = vmatprep.subr.mxu0 0.0
        %1769 = vmatpush2.msra.mxu0 0.0
        %1770 = vmatprep.subr.mxu0 0.0
        %1771 = vmatpush2.msra.mxu0 0.0
        %1772 = vmatprep.subr.mxu0 0.0
        %1773 = vmatpush2.msra.mxu0 0.0
        %1774 = vmatprep.subr.mxu0 0.0
        %1775 = vmatpush2.msra.mxu0 0.0
        %1776 = vmatprep.subr.mxu0 0.0
        %1777 = vmatpush2.msra.mxu0 0.0
        %1778 = vmatprep.subr.mxu0 0.0
        %1779 = vmatpush2.msra.mxu0 0.0
        %1780 = vmatprep.subr.mxu0 0.0
        %1781 = vmatpush2.msra.mxu0 0.0
        %1782 = vmatprep.mubr.f32.mxu0 0.0
        %1783 = vmatmul.mubr.f32.gmra.mxu0 %v1716
        %v1784 = vpop.f32.mrf.mxu0
        %v1785 = vadd.f32 %v1712, %v1784
        %v1786 = vpop.f32.mrf.mxu0
        %1787 = vdwg.mxu0
        %v1788 = vld [vmem:[%s31] sm:$0xff]
        %v1789 = vld [vmem:[%s31 + $0x8] sm:$0xff]
        %v1790 = vld [vmem:[%s31 + $0x10] sm:$0xff]
        %v1791 = vld [vmem:[%s31 + $0x18] sm:$0xff]
        %v1792 = vld [vmem:[%s33] sm:$0x1]
        %v1794 = vlaneseq
        %v1795 = vshrl.u32 %v1794, 7
        %v1796 = vsub.s32 0, %v1795
        %v1797 = vrot.slane %v1792, %v1796
        %1799 = vmatprep.subr.mxu0 0.0
        %1800 = vmatpush1.msra.mxu0 0.0
        %1801 = vmatprep.subr.mxu0 0.0
        %1802 = vmatpush1.msra.mxu0 0.0
        %1803 = vmatprep.subr.mxu0 0.0
        %1804 = vmatpush1.msra.mxu0 0.0
        %1805 = vmatprep.subr.mxu0 0.0
        %1806 = vmatpush1.msra.mxu0 0.0
        %1807 = vmatprep.subr.mxu0 0.0
        %1808 = vmatpush1.msra.mxu0 0.0
        %1809 = vmatprep.subr.mxu0 0.0
        %1810 = vmatpush1.msra.mxu0 0.0
        %1811 = vmatprep.subr.mxu0 0.0
        %1812 = vmatpush1.msra.mxu0 0.0
        %1813 = vmatprep.subr.mxu0 0.0
        %1814 = vmatpush1.msra.mxu0 0.0
        %1815 = vmatprep.subr.mxu0 0.0
        %1816 = vmatpush1.msra.mxu0 0.0
        %1817 = vmatprep.subr.mxu0 0.0
        %1818 = vmatpush1.msra.mxu0 0.0
        %1819 = vmatprep.subr.mxu0 0.0
        %1820 = vmatpush1.msra.mxu0 0.0
        %1821 = vmatprep.subr.mxu0 0.0
        %1822 = vmatpush1.msra.mxu0 0.0
        %1823 = vmatprep.subr.mxu0 0.0
        %1824 = vmatpush1.msra.mxu0 %v1791
        %1825 = vmatprep.subr.mxu0 0.0
        %1826 = vmatpush1.msra.mxu0 %v1790
        %1827 = vmatprep.subr.mxu0 0.0
        %1828 = vmatpush1.msra.mxu0 %v1789
        %1829 = vmatprep.subr.mxu0 0.0
        %1830 = vmatpush1.msra.mxu0 %v1788
        %1831 = vmatprep.subr.mxu0 0.0
        %1832 = vmatpush2.msra.mxu0 0.0
        %1833 = vmatprep.subr.mxu0 0.0
        %1834 = vmatpush2.msra.mxu0 0.0
        %1835 = vmatprep.subr.mxu0 0.0
        %1836 = vmatpush2.msra.mxu0 0.0
        %1837 = vmatprep.subr.mxu0 0.0
        %1838 = vmatpush2.msra.mxu0 0.0
        %1839 = vmatprep.subr.mxu0 0.0
        %1840 = vmatpush2.msra.mxu0 0.0
        %1841 = vmatprep.subr.mxu0 0.0
        %1842 = vmatpush2.msra.mxu0 0.0
        %1843 = vmatprep.subr.mxu0 0.0
        %1844 = vmatpush2.msra.mxu0 0.0
        %1845 = vmatprep.subr.mxu0 0.0
        %1846 = vmatpush2.msra.mxu0 0.0
        %1847 = vmatprep.subr.mxu0 0.0
        %1848 = vmatpush2.msra.mxu0 0.0
        %1849 = vmatprep.subr.mxu0 0.0
        %1850 = vmatpush2.msra.mxu0 0.0
        %1851 = vmatprep.subr.mxu0 0.0
        %1852 = vmatpush2.msra.mxu0 0.0
        %1853 = vmatprep.subr.mxu0 0.0
        %1854 = vmatpush2.msra.mxu0 0.0
        %1855 = vmatprep.subr.mxu0 0.0
        %1856 = vmatpush2.msra.mxu0 0.0
        %1857 = vmatprep.subr.mxu0 0.0
        %1858 = vmatpush2.msra.mxu0 0.0
        %1859 = vmatprep.subr.mxu0 0.0
        %1860 = vmatpush2.msra.mxu0 0.0
        %1861 = vmatprep.subr.mxu0 0.0
        %1862 = vmatpush2.msra.mxu0 0.0
        %1863 = vmatprep.mubr.f32.mxu0 0.0
        %1864 = vmatmul.mubr.f32.gmra.mxu0 %v1716
        %v1865 = vpop.f32.mrf.mxu0
        %v1866 = vadd.f32 %v1797, %v1865
        %v1867 = vpop.f32.mrf.mxu0
        %1868 = vdwg.mxu0
        %v1869 = vld [vmem:[%s35] sm:$0xff]
        %v1870 = vld [vmem:[%s35 + $0x8] sm:$0xff]
        %v1871 = vld [vmem:[%s35 + $0x10] sm:$0xff]
        %v1872 = vld [vmem:[%s35 + $0x18] sm:$0xff]
        %v1873 = vld [vmem:[%s37] sm:$0x1]
        %v1875 = vlaneseq
        %v1876 = vshrl.u32 %v1875, 7
        %v1877 = vsub.s32 0, %v1876
        %v1878 = vrot.slane %v1873, %v1877
        %1880 = vmatprep.subr.mxu0 0.0
        %1881 = vmatpush1.msra.mxu0 0.0
        %1882 = vmatprep.subr.mxu0 0.0
        %1883 = vmatpush1.msra.mxu0 0.0
        %1884 = vmatprep.subr.mxu0 0.0
        %1885 = vmatpush1.msra.mxu0 0.0
        %1886 = vmatprep.subr.mxu0 0.0
        %1887 = vmatpush1.msra.mxu0 0.0
        %1888 = vmatprep.subr.mxu0 0.0
        %1889 = vmatpush1.msra.mxu0 0.0
        %1890 = vmatprep.subr.mxu0 0.0
        %1891 = vmatpush1.msra.mxu0 0.0
        %1892 = vmatprep.subr.mxu0 0.0
        %1893 = vmatpush1.msra.mxu0 0.0
        %1894 = vmatprep.subr.mxu0 0.0
        %1895 = vmatpush1.msra.mxu0 0.0
        %1896 = vmatprep.subr.mxu0 0.0
        %1897 = vmatpush1.msra.mxu0 0.0
        %1898 = vmatprep.subr.mxu0 0.0
        %1899 = vmatpush1.msra.mxu0 0.0
        %1900 = vmatprep.subr.mxu0 0.0
        %1901 = vmatpush1.msra.mxu0 0.0
        %1902 = vmatprep.subr.mxu0 0.0
        %1903 = vmatpush1.msra.mxu0 0.0
        %1904 = vmatprep.subr.mxu0 0.0
        %1905 = vmatpush1.msra.mxu0 %v1872
        %1906 = vmatprep.subr.mxu0 0.0
        %1907 = vmatpush1.msra.mxu0 %v1871
        %1908 = vmatprep.subr.mxu0 0.0
        %1909 = vmatpush1.msra.mxu0 %v1870
        %1910 = vmatprep.subr.mxu0 0.0
        %1911 = vmatpush1.msra.mxu0 %v1869
        %1912 = vmatprep.subr.mxu0 0.0
        %1913 = vmatpush2.msra.mxu0 0.0
        %1914 = vmatprep.subr.mxu0 0.0
        %1915 = vmatpush2.msra.mxu0 0.0
        %1916 = vmatprep.subr.mxu0 0.0
        %1917 = vmatpush2.msra.mxu0 0.0
        %1918 = vmatprep.subr.mxu0 0.0
        %1919 = vmatpush2.msra.mxu0 0.0
        %1920 = vmatprep.subr.mxu0 0.0
        %1921 = vmatpush2.msra.mxu0 0.0
        %1922 = vmatprep.subr.mxu0 0.0
        %1923 = vmatpush2.msra.mxu0 0.0
        %1924 = vmatprep.subr.mxu0 0.0
        %1925 = vmatpush2.msra.mxu0 0.0
        %1926 = vmatprep.subr.mxu0 0.0
        %1927 = vmatpush2.msra.mxu0 0.0
        %1928 = vmatprep.subr.mxu0 0.0
        %1929 = vmatpush2.msra.mxu0 0.0
        %1930 = vmatprep.subr.mxu0 0.0
        %1931 = vmatpush2.msra.mxu0 0.0
        %1932 = vmatprep.subr.mxu0 0.0
        %1933 = vmatpush2.msra.mxu0 0.0
        %1934 = vmatprep.subr.mxu0 0.0
        %1935 = vmatpush2.msra.mxu0 0.0
        %1936 = vmatprep.subr.mxu0 0.0
        %1937 = vmatpush2.msra.mxu0 0.0
        %1938 = vmatprep.subr.mxu0 0.0
        %1939 = vmatpush2.msra.mxu0 0.0
        %1940 = vmatprep.subr.mxu0 0.0
        %1941 = vmatpush2.msra.mxu0 0.0
        %1942 = vmatprep.subr.mxu0 0.0
        %1943 = vmatpush2.msra.mxu0 0.0
        %1944 = vmatprep.mubr.f32.mxu0 0.0
        %1945 = vmatmul.mubr.f32.gmra.mxu0 %v1716
        %v1946 = vpop.f32.mrf.mxu0
        %v1947 = vadd.f32 %v1878, %v1946
        %v1948 = vpop.f32.mrf.mxu0
        %1949 = vdwg.mxu0
        %v1951 = vlaneseq
        %v1952 = vshrl.u32 %v1951, 7
        %v1953 = vsub.s32 0, %v1952
        %v1954 = vrot.slane %v1611, %v1953
        %vm1956 = vcmask 130048
        %v1958 = vsel %vm1956, %v1785, 0
        %v1961 = vsel %vm1956, %v1866, 0
        %1963 = vmatprep.subr.mxu0 0.0
        %1964 = vmatpush1.xpose.msra.mxu0 0.0
        %1965 = vmatprep.subr.mxu0 0.0
        %1966 = vmatpush1.xpose.msra.mxu0 0.0
        %1967 = vmatprep.subr.mxu0 0.0
        %1968 = vmatpush1.xpose.msra.mxu0 0.0
        %1969 = vmatprep.subr.mxu0 0.0
        %1970 = vmatpush1.xpose.msra.mxu0 0.0
        %1971 = vmatprep.subr.mxu0 0.0
        %1972 = vmatpush1.xpose.msra.mxu0 0.0
        %1973 = vmatprep.subr.mxu0 0.0
        %1974 = vmatpush1.xpose.msra.mxu0 0.0
        %1975 = vmatprep.subr.mxu0 0.0
        %1976 = vmatpush1.xpose.msra.mxu0 0.0
        %1977 = vmatprep.subr.mxu0 0.0
        %1978 = vmatpush1.xpose.msra.mxu0 0.0
        %1979 = vmatprep.subr.mxu0 0.0
        %1980 = vmatpush1.xpose.msra.mxu0 0.0
        %1981 = vmatprep.subr.mxu0 0.0
        %1982 = vmatpush1.xpose.msra.mxu0 0.0
        %1983 = vmatprep.subr.mxu0 0.0
        %1984 = vmatpush1.xpose.msra.mxu0 0.0
        %1985 = vmatprep.subr.mxu0 0.0
        %1986 = vmatpush1.xpose.msra.mxu0 0.0
        %1987 = vmatprep.subr.mxu0 0.0
        %1988 = vmatpush1.xpose.msra.mxu0 0.0
        %1989 = vmatprep.subr.mxu0 0.0
        %1990 = vmatpush1.xpose.msra.mxu0 0.0
        %1991 = vmatprep.subr.mxu0 0.0
        %1992 = vmatpush1.xpose.msra.mxu0 0.0
        %1993 = vmatprep.subr.mxu0 0.0
        %1994 = vmatpush1.xpose.msra.mxu0 %v1961
        %1995 = vmatprep.subr.mxu0 0.0
        %1996 = vmatpush2.xpose.msra.mxu0 0.0
        %1997 = vmatprep.subr.mxu0 0.0
        %1998 = vmatpush2.xpose.msra.mxu0 0.0
        %1999 = vmatprep.subr.mxu0 0.0
        %2000 = vmatpush2.xpose.msra.mxu0 0.0
        %2001 = vmatprep.subr.mxu0 0.0
        %2002 = vmatpush2.xpose.msra.mxu0 0.0
        %2003 = vmatprep.subr.mxu0 0.0
        %2004 = vmatpush2.xpose.msra.mxu0 0.0
        %2005 = vmatprep.subr.mxu0 0.0
        %2006 = vmatpush2.xpose.msra.mxu0 0.0
        %2007 = vmatprep.subr.mxu0 0.0
        %2008 = vmatpush2.xpose.msra.mxu0 0.0
        %2009 = vmatprep.subr.mxu0 0.0
        %2010 = vmatpush2.xpose.msra.mxu0 0.0
        %2011 = vmatprep.subr.mxu0 0.0
        %2012 = vmatpush2.xpose.msra.mxu0 0.0
        %2013 = vmatprep.subr.mxu0 0.0
        %2014 = vmatpush2.xpose.msra.mxu0 0.0
        %2015 = vmatprep.subr.mxu0 0.0
        %2016 = vmatpush2.xpose.msra.mxu0 0.0
        %2017 = vmatprep.subr.mxu0 0.0
        %2018 = vmatpush2.xpose.msra.mxu0 0.0
        %2019 = vmatprep.subr.mxu0 0.0
        %2020 = vmatpush2.xpose.msra.mxu0 0.0
        %2021 = vmatprep.subr.mxu0 0.0
        %2022 = vmatpush2.xpose.msra.mxu0 0.0
        %2023 = vmatprep.subr.mxu0 0.0
        %2024 = vmatpush2.xpose.msra.mxu0 0.0
        %2025 = vmatprep.subr.mxu0 0.0
        %2026 = vmatpush2.xpose.msra.mxu0 0.0
        %2027 = vmatprep.mubr.f32.mxu0 0.0
        %2028 = vmatmul.mubr.f32.gmra.mxu0 %v1958
        %v2029 = vpop.f32.mrf.mxu0
        %v2030 = vadd.f32 %v1954, %v2029
        %v2031 = vpop.f32.mrf.mxu0
        %2032 = vdwg.mxu0
        %vm2033 = vcmask 64512
        %v2034 = vsel %vm2033, %v2030, -inf
        %2035 = vmax.xlane.f32.xlu0 %v2034
        %v2036 = vpop.xlane.xlu0 %2035
        %v2037 = vsub.f32 %v2030, %v2036
        %v2038 = vmul.f32 %v2037, 1.442695
        %v2039 = vpow.pop %v2038
        %v2040 = vsel %vm2033, %v2039, 0.0
        %2041 = vadd.xlane.f32.xlu0 %v2040
        %v2042 = vpop.xlane.xlu0 %2041
        %v2043 = vrcp.pop %v2042
        %v2044 = vmul.f32 %v2039, %v2043
        %v2046 = vsel %vm2033, %v2044, 0
        %2048 = vmatprep.subr.mxu0 0.0
        %2049 = vmatpush1.msra.mxu0 0.0
        %2050 = vmatprep.subr.mxu0 0.0
        %2051 = vmatpush1.msra.mxu0 0.0
        %2052 = vmatprep.subr.mxu0 0.0
        %2053 = vmatpush1.msra.mxu0 0.0
        %2054 = vmatprep.subr.mxu0 0.0
        %2055 = vmatpush1.msra.mxu0 0.0
        %2056 = vmatprep.subr.mxu0 0.0
        %2057 = vmatpush1.msra.mxu0 0.0
        %2058 = vmatprep.subr.mxu0 0.0
        %2059 = vmatpush1.msra.mxu0 0.0
        %2060 = vmatprep.subr.mxu0 0.0
        %2061 = vmatpush1.msra.mxu0 0.0
        %2062 = vmatprep.subr.mxu0 0.0
        %2063 = vmatpush1.msra.mxu0 0.0
        %2064 = vmatprep.subr.mxu0 0.0
        %2065 = vmatpush1.msra.mxu0 0.0
        %2066 = vmatprep.subr.mxu0 0.0
        %2067 = vmatpush1.msra.mxu0 0.0
        %2068 = vmatprep.subr.mxu0 0.0
        %2069 = vmatpush1.msra.mxu0 0.0
        %2070 = vmatprep.subr.mxu0 0.0
        %2071 = vmatpush1.msra.mxu0 0.0
        %2072 = vmatprep.subr.mxu0 0.0
        %2073 = vmatpush1.msra.mxu0 0.0
        %2074 = vmatprep.subr.mxu0 0.0
        %2075 = vmatpush1.msra.mxu0 0.0
        %2076 = vmatprep.subr.mxu0 0.0
        %2077 = vmatpush1.msra.mxu0 0.0
        %2078 = vmatprep.subr.mxu0 0.0
        %2079 = vmatpush1.msra.mxu0 %v1947
        %2080 = vmatprep.subr.mxu0 0.0
        %2081 = vmatpush2.msra.mxu0 0.0
        %2082 = vmatprep.subr.mxu0 0.0
        %2083 = vmatpush2.msra.mxu0 0.0
        %2084 = vmatprep.subr.mxu0 0.0
        %2085 = vmatpush2.msra.mxu0 0.0
        %2086 = vmatprep.subr.mxu0 0.0
        %2087 = vmatpush2.msra.mxu0 0.0
        %2088 = vmatprep.subr.mxu0 0.0
        %2089 = vmatpush2.msra.mxu0 0.0
        %2090 = vmatprep.subr.mxu0 0.0
        %2091 = vmatpush2.msra.mxu0 0.0
        %2092 = vmatprep.subr.mxu0 0.0
        %2093 = vmatpush2.msra.mxu0 0.0
        %2094 = vmatprep.subr.mxu0 0.0
        %2095 = vmatpush2.msra.mxu0 0.0
        %2096 = vmatprep.subr.mxu0 0.0
        %2097 = vmatpush2.msra.mxu0 0.0
        %2098 = vmatprep.subr.mxu0 0.0
        %2099 = vmatpush2.msra.mxu0 0.0
        %2100 = vmatprep.subr.mxu0 0.0
        %2101 = vmatpush2.msra.mxu0 0.0
        %2102 = vmatprep.subr.mxu0 0.0
        %2103 = vmatpush2.msra.mxu0 0.0
        %2104 = vmatprep.subr.mxu0 0.0
        %2105 = vmatpush2.msra.mxu0 0.0
        %2106 = vmatprep.subr.mxu0 0.0
        %2107 = vmatpush2.msra.mxu0 0.0
        %2108 = vmatprep.subr.mxu0 0.0
        %2109 = vmatpush2.msra.mxu0 0.0
        %2110 = vmatprep.subr.mxu0 0.0
        %2111 = vmatpush2.msra.mxu0 0.0
        %2112 = vmatprep.mubr.f32.mxu0 0.0
        %2113 = vmatmul.mubr.f32.gmra.mxu0 %v2046
        %v2114 = vpop.f32.mrf.mxu0
        %v2115 = vadd.f32 0.0, %v2114
        %v2116 = vpop.f32.mrf.mxu0
        %2117 = vdwg.mxu0
        %v2118 = vld [vmem:[%s39] sm:$0xff]
        %v2119 = vld [vmem:[%s39 + $0x8] sm:$0xff]
        %s2120 = scalar_lea.vmem %s27, 32
        %v2121 = vld [vmem:[%s2120] sm:$0xff]
        %v2122 = vld [vmem:[%s2120 + $0x8] sm:$0xff]
        %v2123 = vld [vmem:[%s2120 + $0x10] sm:$0xff]
        %v2124 = vld [vmem:[%s2120 + $0x18] sm:$0xff]
        %s2125 = scalar_lea.vmem %s29, 1
        %v2126 = vld [vmem:[%s2125] sm:$0x1]
        %v2128 = vlaneseq
        %v2129 = vshrl.u32 %v2128, 7
        %v2130 = vsub.s32 0, %v2129
        %v2131 = vrot.slane %v2126, %v2130
        %2133 = vmatprep.subr.mxu0 0.0
        %2134 = vmatpush1.msra.mxu0 0.0
        %2135 = vmatprep.subr.mxu0 0.0
        %2136 = vmatpush1.msra.mxu0 0.0
        %2137 = vmatprep.subr.mxu0 0.0
        %2138 = vmatpush1.msra.mxu0 0.0
        %2139 = vmatprep.subr.mxu0 0.0
        %2140 = vmatpush1.msra.mxu0 0.0
        %2141 = vmatprep.subr.mxu0 0.0
        %2142 = vmatpush1.msra.mxu0 0.0
        %2143 = vmatprep.subr.mxu0 0.0
        %2144 = vmatpush1.msra.mxu0 0.0
        %2145 = vmatprep.subr.mxu0 0.0
        %2146 = vmatpush1.msra.mxu0 0.0
        %2147 = vmatprep.subr.mxu0 0.0
        %2148 = vmatpush1.msra.mxu0 0.0
        %2149 = vmatprep.subr.mxu0 0.0
        %2150 = vmatpush1.msra.mxu0 0.0
        %2151 = vmatprep.subr.mxu0 0.0
        %2152 = vmatpush1.msra.mxu0 0.0
        %2153 = vmatprep.subr.mxu0 0.0
        %2154 = vmatpush1.msra.mxu0 0.0
        %2155 = vmatprep.subr.mxu0 0.0
        %2156 = vmatpush1.msra.mxu0 0.0
        %2157 = vmatprep.subr.mxu0 0.0
        %2158 = vmatpush1.msra.mxu0 %v2124
        %2159 = vmatprep.subr.mxu0 0.0
        %2160 = vmatpush1.msra.mxu0 %v2123
        %2161 = vmatprep.subr.mxu0 0.0
        %2162 = vmatpush1.msra.mxu0 %v2122
        %2163 = vmatprep.subr.mxu0 0.0
        %2164 = vmatpush1.msra.mxu0 %v2121
        %2165 = vmatprep.subr.mxu0 0.0
        %2166 = vmatpush2.msra.mxu0 0.0
        %2167 = vmatprep.subr.mxu0 0.0
        %2168 = vmatpush2.msra.mxu0 0.0
        %2169 = vmatprep.subr.mxu0 0.0
        %2170 = vmatpush2.msra.mxu0 0.0
        %2171 = vmatprep.subr.mxu0 0.0
        %2172 = vmatpush2.msra.mxu0 0.0
        %2173 = vmatprep.subr.mxu0 0.0
        %2174 = vmatpush2.msra.mxu0 0.0
        %2175 = vmatprep.subr.mxu0 0.0
        %2176 = vmatpush2.msra.mxu0 0.0
        %2177 = vmatprep.subr.mxu0 0.0
        %2178 = vmatpush2.msra.mxu0 0.0
        %2179 = vmatprep.subr.mxu0 0.0
        %2180 = vmatpush2.msra.mxu0 0.0
        %2181 = vmatprep.subr.mxu0 0.0
        %2182 = vmatpush2.msra.mxu0 0.0
        %2183 = vmatprep.subr.mxu0 0.0
        %2184 = vmatpush2.msra.mxu0 0.0
        %2185 = vmatprep.subr.mxu0 0.0
        %2186 = vmatpush2.msra.mxu0 0.0
        %2187 = vmatprep.subr.mxu0 0.0
        %2188 = vmatpush2.msra.mxu0 0.0
        %2189 = vmatprep.subr.mxu0 0.0
        %2190 = vmatpush2.msra.mxu0 0.0
        %2191 = vmatprep.subr.mxu0 0.0
        %2192 = vmatpush2.msra.mxu0 0.0
        %2193 = vmatprep.subr.mxu0 0.0
        %2194 = vmatpush2.msra.mxu0 0.0
        %2195 = vmatprep.subr.mxu0 0.0
        %2196 = vmatpush2.msra.mxu0 0.0
        %2197 = vmatprep.mubr.f32.mxu0 0.0
        %2198 = vmatmul.mubr.f32.gmra.mxu0 %v1716
        %v2199 = vpop.f32.mrf.mxu0
        %v2200 = vadd.f32 %v2131, %v2199
        %v2201 = vpop.f32.mrf.mxu0
        %2202 = vdwg.mxu0
        %s2203 = scalar_lea.vmem %s31, 32
        %v2204 = vld [vmem:[%s2203] sm:$0xff]
        %v2205 = vld [vmem:[%s2203 + $0x8] sm:$0xff]
        %v2206 = vld [vmem:[%s2203 + $0x10] sm:$0xff]
        %v2207 = vld [vmem:[%s2203 + $0x18] sm:$0xff]
        %s2208 = scalar_lea.vmem %s33, 1
        %v2209 = vld [vmem:[%s2208] sm:$0x1]
        %v2211 = vlaneseq
        %v2212 = vshrl.u32 %v2211, 7
        %v2213 = vsub.s32 0, %v2212
        %v2214 = vrot.slane %v2209, %v2213
        %2216 = vmatprep.subr.mxu0 0.0
        %2217 = vmatpush1.msra.mxu0 0.0
        %2218 = vmatprep.subr.mxu0 0.0
        %2219 = vmatpush1.msra.mxu0 0.0
        %2220 = vmatprep.subr.mxu0 0.0
        %2221 = vmatpush1.msra.mxu0 0.0
        %2222 = vmatprep.subr.mxu0 0.0
        %2223 = vmatpush1.msra.mxu0 0.0
        %2224 = vmatprep.subr.mxu0 0.0
        %2225 = vmatpush1.msra.mxu0 0.0
        %2226 = vmatprep.subr.mxu0 0.0
        %2227 = vmatpush1.msra.mxu0 0.0
        %2228 = vmatprep.subr.mxu0 0.0
        %2229 = vmatpush1.msra.mxu0 0.0
        %2230 = vmatprep.subr.mxu0 0.0
        %2231 = vmatpush1.msra.mxu0 0.0
        %2232 = vmatprep.subr.mxu0 0.0
        %2233 = vmatpush1.msra.mxu0 0.0
        %2234 = vmatprep.subr.mxu0 0.0
        %2235 = vmatpush1.msra.mxu0 0.0
        %2236 = vmatprep.subr.mxu0 0.0
        %2237 = vmatpush1.msra.mxu0 0.0
        %2238 = vmatprep.subr.mxu0 0.0
        %2239 = vmatpush1.msra.mxu0 0.0
        %2240 = vmatprep.subr.mxu0 0.0
        %2241 = vmatpush1.msra.mxu0 %v2207
        %2242 = vmatprep.subr.mxu0 0.0
        %2243 = vmatpush1.msra.mxu0 %v2206
        %2244 = vmatprep.subr.mxu0 0.0
        %2245 = vmatpush1.msra.mxu0 %v2205
        %2246 = vmatprep.subr.mxu0 0.0
        %2247 = vmatpush1.msra.mxu0 %v2204
        %2248 = vmatprep.subr.mxu0 0.0
        %2249 = vmatpush2.msra.mxu0 0.0
        %2250 = vmatprep.subr.mxu0 0.0
        %2251 = vmatpush2.msra.mxu0 0.0
        %2252 = vmatprep.subr.mxu0 0.0
        %2253 = vmatpush2.msra.mxu0 0.0
        %2254 = vmatprep.subr.mxu0 0.0
        %2255 = vmatpush2.msra.mxu0 0.0
        %2256 = vmatprep.subr.mxu0 0.0
        %2257 = vmatpush2.msra.mxu0 0.0
        %2258 = vmatprep.subr.mxu0 0.0
        %2259 = vmatpush2.msra.mxu0 0.0
        %2260 = vmatprep.subr.mxu0 0.0
        %2261 = vmatpush2.msra.mxu0 0.0
        %2262 = vmatprep.subr.mxu0 0.0
        %2263 = vmatpush2.msra.mxu0 0.0
        %2264 = vmatprep.subr.mxu0 0.0
        %2265 = vmatpush2.msra.mxu0 0.0
        %2266 = vmatprep.subr.mxu0 0.0
        %2267 = vmatpush2.msra.mxu0 0.0
        %2268 = vmatprep.subr.mxu0 0.0
        %2269 = vmatpush2.msra.mxu0 0.0
        %2270 = vmatprep.subr.mxu0 0.0
        %2271 = vmatpush2.msra.mxu0 0.0
        %2272 = vmatprep.subr.mxu0 0.0
        %2273 = vmatpush2.msra.mxu0 0.0
        %2274 = vmatprep.subr.mxu0 0.0
        %2275 = vmatpush2.msra.mxu0 0.0
        %2276 = vmatprep.subr.mxu0 0.0
        %2277 = vmatpush2.msra.mxu0 0.0
        %2278 = vmatprep.subr.mxu0 0.0
        %2279 = vmatpush2.msra.mxu0 0.0
        %2280 = vmatprep.mubr.f32.mxu0 0.0
        %2281 = vmatmul.mubr.f32.gmra.mxu0 %v1716
        %v2282 = vpop.f32.mrf.mxu0
        %v2283 = vadd.f32 %v2214, %v2282
        %v2284 = vpop.f32.mrf.mxu0
        %2285 = vdwg.mxu0
        %s2286 = scalar_lea.vmem %s35, 32
        %v2287 = vld [vmem:[%s2286] sm:$0xff]
        %v2288 = vld [vmem:[%s2286 + $0x8] sm:$0xff]
        %v2289 = vld [vmem:[%s2286 + $0x10] sm:$0xff]
        %v2290 = vld [vmem:[%s2286 + $0x18] sm:$0xff]
        %s2291 = scalar_lea.vmem %s37, 1
        %v2292 = vld [vmem:[%s2291] sm:$0x1]
        %v2294 = vlaneseq
        %v2295 = vshrl.u32 %v2294, 7
        %v2296 = vsub.s32 0, %v2295
        %v2297 = vrot.slane %v2292, %v2296
        %2299 = vmatprep.subr.mxu0 0.0
        %2300 = vmatpush1.msra.mxu0 0.0
        %2301 = vmatprep.subr.mxu0 0.0
        %2302 = vmatpush1.msra.mxu0 0.0
        %2303 = vmatprep.subr.mxu0 0.0
        %2304 = vmatpush1.msra.mxu0 0.0
        %2305 = vmatprep.subr.mxu0 0.0
        %2306 = vmatpush1.msra.mxu0 0.0
        %2307 = vmatprep.subr.mxu0 0.0
        %2308 = vmatpush1.msra.mxu0 0.0
        %2309 = vmatprep.subr.mxu0 0.0
        %2310 = vmatpush1.msra.mxu0 0.0
        %2311 = vmatprep.subr.mxu0 0.0
        %2312 = vmatpush1.msra.mxu0 0.0
        %2313 = vmatprep.subr.mxu0 0.0
        %2314 = vmatpush1.msra.mxu0 0.0
        %2315 = vmatprep.subr.mxu0 0.0
        %2316 = vmatpush1.msra.mxu0 0.0
        %2317 = vmatprep.subr.mxu0 0.0
        %2318 = vmatpush1.msra.mxu0 0.0
        %2319 = vmatprep.subr.mxu0 0.0
        %2320 = vmatpush1.msra.mxu0 0.0
        %2321 = vmatprep.subr.mxu0 0.0
        %2322 = vmatpush1.msra.mxu0 0.0
        %2323 = vmatprep.subr.mxu0 0.0
        %2324 = vmatpush1.msra.mxu0 %v2290
        %2325 = vmatprep.subr.mxu0 0.0
        %2326 = vmatpush1.msra.mxu0 %v2289
        %2327 = vmatprep.subr.mxu0 0.0
        %2328 = vmatpush1.msra.mxu0 %v2288
        %2329 = vmatprep.subr.mxu0 0.0
        %2330 = vmatpush1.msra.mxu0 %v2287
        %2331 = vmatprep.subr.mxu0 0.0
        %2332 = vmatpush2.msra.mxu0 0.0
        %2333 = vmatprep.subr.mxu0 0.0
        %2334 = vmatpush2.msra.mxu0 0.0
        %2335 = vmatprep.subr.mxu0 0.0
        %2336 = vmatpush2.msra.mxu0 0.0
        %2337 = vmatprep.subr.mxu0 0.0
        %2338 = vmatpush2.msra.mxu0 0.0
        %2339 = vmatprep.subr.mxu0 0.0
        %2340 = vmatpush2.msra.mxu0 0.0
        %2341 = vmatprep.subr.mxu0 0.0
        %2342 = vmatpush2.msra.mxu0 0.0
        %2343 = vmatprep.subr.mxu0 0.0
        %2344 = vmatpush2.msra.mxu0 0.0
        %2345 = vmatprep.subr.mxu0 0.0
        %2346 = vmatpush2.msra.mxu0 0.0
        %2347 = vmatprep.subr.mxu0 0.0
        %2348 = vmatpush2.msra.mxu0 0.0
        %2349 = vmatprep.subr.mxu0 0.0
        %2350 = vmatpush2.msra.mxu0 0.0
        %2351 = vmatprep.subr.mxu0 0.0
        %2352 = vmatpush2.msra.mxu0 0.0
        %2353 = vmatprep.subr.mxu0 0.0
        %2354 = vmatpush2.msra.mxu0 0.0
        %2355 = vmatprep.subr.mxu0 0.0
        %2356 = vmatpush2.msra.mxu0 0.0
        %2357 = vmatprep.subr.mxu0 0.0
        %2358 = vmatpush2.msra.mxu0 0.0
        %2359 = vmatprep.subr.mxu0 0.0
        %2360 = vmatpush2.msra.mxu0 0.0
        %2361 = vmatprep.subr.mxu0 0.0
        %2362 = vmatpush2.msra.mxu0 0.0
        %2363 = vmatprep.mubr.f32.mxu0 0.0
        %2364 = vmatmul.mubr.f32.gmra.mxu0 %v1716
        %v2365 = vpop.f32.mrf.mxu0
        %v2366 = vadd.f32 %v2297, %v2365
        %v2367 = vpop.f32.mrf.mxu0
        %2368 = vdwg.mxu0
        %v2370 = vsel %vm1956, %v2200, 0
        %v2373 = vsel %vm1956, %v2283, 0
        %2375 = vmatprep.subr.mxu0 0.0
        %2376 = vmatpush1.xpose.msra.mxu0 0.0
        %2377 = vmatprep.subr.mxu0 0.0
        %2378 = vmatpush1.xpose.msra.mxu0 0.0
        %2379 = vmatprep.subr.mxu0 0.0
        %2380 = vmatpush1.xpose.msra.mxu0 0.0
        %2381 = vmatprep.subr.mxu0 0.0
        %2382 = vmatpush1.xpose.msra.mxu0 0.0
        %2383 = vmatprep.subr.mxu0 0.0
        %2384 = vmatpush1.xpose.msra.mxu0 0.0
        %2385 = vmatprep.subr.mxu0 0.0
        %2386 = vmatpush1.xpose.msra.mxu0 0.0
        %2387 = vmatprep.subr.mxu0 0.0
        %2388 = vmatpush1.xpose.msra.mxu0 0.0
        %2389 = vmatprep.subr.mxu0 0.0
        %2390 = vmatpush1.xpose.msra.mxu0 0.0
        %2391 = vmatprep.subr.mxu0 0.0
        %2392 = vmatpush1.xpose.msra.mxu0 0.0
        %2393 = vmatprep.subr.mxu0 0.0
        %2394 = vmatpush1.xpose.msra.mxu0 0.0
        %2395 = vmatprep.subr.mxu0 0.0
        %2396 = vmatpush1.xpose.msra.mxu0 0.0
        %2397 = vmatprep.subr.mxu0 0.0
        %2398 = vmatpush1.xpose.msra.mxu0 0.0
        %2399 = vmatprep.subr.mxu0 0.0
        %2400 = vmatpush1.xpose.msra.mxu0 0.0
        %2401 = vmatprep.subr.mxu0 0.0
        %2402 = vmatpush1.xpose.msra.mxu0 0.0
        %2403 = vmatprep.subr.mxu0 0.0
        %2404 = vmatpush1.xpose.msra.mxu0 0.0
        %2405 = vmatprep.subr.mxu0 0.0
        %2406 = vmatpush1.xpose.msra.mxu0 %v2373
        %2407 = vmatprep.subr.mxu0 0.0
        %2408 = vmatpush2.xpose.msra.mxu0 0.0
        %2409 = vmatprep.subr.mxu0 0.0
        %2410 = vmatpush2.xpose.msra.mxu0 0.0
        %2411 = vmatprep.subr.mxu0 0.0
        %2412 = vmatpush2.xpose.msra.mxu0 0.0
        %2413 = vmatprep.subr.mxu0 0.0
        %2414 = vmatpush2.xpose.msra.mxu0 0.0
        %2415 = vmatprep.subr.mxu0 0.0
        %2416 = vmatpush2.xpose.msra.mxu0 0.0
        %2417 = vmatprep.subr.mxu0 0.0
        %2418 = vmatpush2.xpose.msra.mxu0 0.0
        %2419 = vmatprep.subr.mxu0 0.0
        %2420 = vmatpush2.xpose.msra.mxu0 0.0
        %2421 = vmatprep.subr.mxu0 0.0
        %2422 = vmatpush2.xpose.msra.mxu0 0.0
        %2423 = vmatprep.subr.mxu0 0.0
        %2424 = vmatpush2.xpose.msra.mxu0 0.0
        %2425 = vmatprep.subr.mxu0 0.0
        %2426 = vmatpush2.xpose.msra.mxu0 0.0
        %2427 = vmatprep.subr.mxu0 0.0
        %2428 = vmatpush2.xpose.msra.mxu0 0.0
        %2429 = vmatprep.subr.mxu0 0.0
        %2430 = vmatpush2.xpose.msra.mxu0 0.0
        %2431 = vmatprep.subr.mxu0 0.0
        %2432 = vmatpush2.xpose.msra.mxu0 0.0
        %2433 = vmatprep.subr.mxu0 0.0
        %2434 = vmatpush2.xpose.msra.mxu0 0.0
        %2435 = vmatprep.subr.mxu0 0.0
        %2436 = vmatpush2.xpose.msra.mxu0 0.0
        %2437 = vmatprep.subr.mxu0 0.0
        %2438 = vmatpush2.xpose.msra.mxu0 0.0
        %2439 = vmatprep.mubr.f32.mxu0 0.0
        %2440 = vmatmul.mubr.f32.gmra.mxu0 %v2370
        %v2441 = vpop.f32.mrf.mxu0
        %v2442 = vadd.f32 %v1954, %v2441
        %v2443 = vpop.f32.mrf.mxu0
        %2444 = vdwg.mxu0
        %v2445 = vsel %vm2033, %v2442, -inf
        %2446 = vmax.xlane.f32.xlu0 %v2445
        %v2447 = vpop.xlane.xlu0 %2446
        %v2448 = vsub.f32 %v2442, %v2447
        %v2449 = vmul.f32 %v2448, 1.442695
        %v2450 = vpow.pop %v2449
        %v2451 = vsel %vm2033, %v2450, 0.0
        %2452 = vadd.xlane.f32.xlu0 %v2451
        %v2453 = vpop.xlane.xlu0 %2452
        %v2454 = vrcp.pop %v2453
        %v2455 = vmul.f32 %v2450, %v2454
        %v2457 = vsel %vm2033, %v2455, 0
        %2459 = vmatprep.subr.mxu0 0.0
        %2460 = vmatpush1.msra.mxu0 0.0
        %2461 = vmatprep.subr.mxu0 0.0
        %2462 = vmatpush1.msra.mxu0 0.0
        %2463 = vmatprep.subr.mxu0 0.0
        %2464 = vmatpush1.msra.mxu0 0.0
        %2465 = vmatprep.subr.mxu0 0.0
        %2466 = vmatpush1.msra.mxu0 0.0
        %2467 = vmatprep.subr.mxu0 0.0
        %2468 = vmatpush1.msra.mxu0 0.0
        %2469 = vmatprep.subr.mxu0 0.0
        %2470 = vmatpush1.msra.mxu0 0.0
        %2471 = vmatprep.subr.mxu0 0.0
        %2472 = vmatpush1.msra.mxu0 0.0
        %2473 = vmatprep.subr.mxu0 0.0
        %2474 = vmatpush1.msra.mxu0 0.0
        %2475 = vmatprep.subr.mxu0 0.0
        %2476 = vmatpush1.msra.mxu0 0.0
        %2477 = vmatprep.subr.mxu0 0.0
        %2478 = vmatpush1.msra.mxu0 0.0
        %2479 = vmatprep.subr.mxu0 0.0
        %2480 = vmatpush1.msra.mxu0 0.0
        %2481 = vmatprep.subr.mxu0 0.0
        %2482 = vmatpush1.msra.mxu0 0.0
        %2483 = vmatprep.subr.mxu0 0.0
        %2484 = vmatpush1.msra.mxu0 0.0
        %2485 = vmatprep.subr.mxu0 0.0
        %2486 = vmatpush1.msra.mxu0 0.0
        %2487 = vmatprep.subr.mxu0 0.0
        %2488 = vmatpush1.msra.mxu0 0.0
        %2489 = vmatprep.subr.mxu0 0.0
        %2490 = vmatpush1.msra.mxu0 %v2366
        %2491 = vmatprep.subr.mxu0 0.0
        %2492 = vmatpush2.msra.mxu0 0.0
        %2493 = vmatprep.subr.mxu0 0.0
        %2494 = vmatpush2.msra.mxu0 0.0
        %2495 = vmatprep.subr.mxu0 0.0
        %2496 = vmatpush2.msra.mxu0 0.0
        %2497 = vmatprep.subr.mxu0 0.0
        %2498 = vmatpush2.msra.mxu0 0.0
        %2499 = vmatprep.subr.mxu0 0.0
        %2500 = vmatpush2.msra.mxu0 0.0
        %2501 = vmatprep.subr.mxu0 0.0
        %2502 = vmatpush2.msra.mxu0 0.0
        %2503 = vmatprep.subr.mxu0 0.0
        %2504 = vmatpush2.msra.mxu0 0.0
        %2505 = vmatprep.subr.mxu0 0.0
        %2506 = vmatpush2.msra.mxu0 0.0
        %2507 = vmatprep.subr.mxu0 0.0
        %2508 = vmatpush2.msra.mxu0 0.0
        %2509 = vmatprep.subr.mxu0 0.0
        %2510 = vmatpush2.msra.mxu0 0.0
        %2511 = vmatprep.subr.mxu0 0.0
        %2512 = vmatpush2.msra.mxu0 0.0
        %2513 = vmatprep.subr.mxu0 0.0
        %2514 = vmatpush2.msra.mxu0 0.0
        %2515 = vmatprep.subr.mxu0 0.0
        %2516 = vmatpush2.msra.mxu0 0.0
        %2517 = vmatprep.subr.mxu0 0.0
        %2518 = vmatpush2.msra.mxu0 0.0
        %2519 = vmatprep.subr.mxu0 0.0
        %2520 = vmatpush2.msra.mxu0 0.0
        %2521 = vmatprep.subr.mxu0 0.0
        %2522 = vmatpush2.msra.mxu0 0.0
        %2523 = vmatprep.mubr.f32.mxu0 0.0
        %2524 = vmatmul.mubr.f32.gmra.mxu0 %v2457
        %v2525 = vpop.f32.mrf.mxu0
        %v2526 = vadd.f32 0.0, %v2525
        %v2527 = vpop.f32.mrf.mxu0
        %2528 = vdwg.mxu0
        %s2529 = scalar_lea.vmem %s39, 16
        %v2530 = vld [vmem:[%s2529] sm:$0xff]
        %v2531 = vld [vmem:[%s2529 + $0x8] sm:$0xff]
        %v2533 = vsel %vm1956, %v2526, 0
        %2535 = vmatprep.subr.mxu0 0.0
        %2536 = vmatpush1.msra.mxu0 0.0
        %2537 = vmatprep.subr.mxu0 0.0
        %2538 = vmatpush1.msra.mxu0 0.0
        %2539 = vmatprep.subr.mxu0 0.0
        %2540 = vmatpush1.msra.mxu0 0.0
        %2541 = vmatprep.subr.mxu0 0.0
        %2542 = vmatpush1.msra.mxu0 0.0
        %2543 = vmatprep.subr.mxu0 0.0
        %2544 = vmatpush1.msra.mxu0 0.0
        %2545 = vmatprep.subr.mxu0 0.0
        %2546 = vmatpush1.msra.mxu0 0.0
        %2547 = vmatprep.subr.mxu0 0.0
        %2548 = vmatpush1.msra.mxu0 0.0
        %2549 = vmatprep.subr.mxu0 0.0
        %2550 = vmatpush1.msra.mxu0 0.0
        %2551 = vmatprep.subr.mxu0 0.0
        %2552 = vmatpush1.msra.mxu0 0.0
        %2553 = vmatprep.subr.mxu0 0.0
        %2554 = vmatpush1.msra.mxu0 0.0
        %2555 = vmatprep.subr.mxu0 0.0
        %2556 = vmatpush1.msra.mxu0 0.0
        %2557 = vmatprep.subr.mxu0 0.0
        %2558 = vmatpush1.msra.mxu0 0.0
        %2559 = vmatprep.subr.mxu0 0.0
        %2560 = vmatpush1.msra.mxu0 0.0
        %2561 = vmatprep.subr.mxu0 0.0
        %2562 = vmatpush1.msra.mxu0 0.0
        %2563 = vmatprep.subr.mxu0 0.0
        %2564 = vmatpush1.msra.mxu0 %v2531
        %2565 = vmatprep.subr.mxu0 0.0
        %2566 = vmatpush1.msra.mxu0 %v2530
        %2567 = vmatprep.subr.mxu0 0.0
        %2568 = vmatpush2.msra.mxu0 0.0
        %2569 = vmatprep.subr.mxu0 0.0
        %2570 = vmatpush2.msra.mxu0 0.0
        %2571 = vmatprep.subr.mxu0 0.0
        %2572 = vmatpush2.msra.mxu0 0.0
        %2573 = vmatprep.subr.mxu0 0.0
        %2574 = vmatpush2.msra.mxu0 0.0
        %2575 = vmatprep.subr.mxu0 0.0
        %2576 = vmatpush2.msra.mxu0 0.0
        %2577 = vmatprep.subr.mxu0 0.0
        %2578 = vmatpush2.msra.mxu0 0.0
        %2579 = vmatprep.subr.mxu0 0.0
        %2580 = vmatpush2.msra.mxu0 0.0
        %2581 = vmatprep.subr.mxu0 0.0
        %2582 = vmatpush2.msra.mxu0 0.0
        %2583 = vmatprep.subr.mxu0 0.0
        %2584 = vmatpush2.msra.mxu0 0.0
        %2585 = vmatprep.subr.mxu0 0.0
        %2586 = vmatpush2.msra.mxu0 0.0
        %2587 = vmatprep.subr.mxu0 0.0
        %2588 = vmatpush2.msra.mxu0 0.0
        %2589 = vmatprep.subr.mxu0 0.0
        %2590 = vmatpush2.msra.mxu0 0.0
        %2591 = vmatprep.subr.mxu0 0.0
        %2592 = vmatpush2.msra.mxu0 0.0
        %2593 = vmatprep.subr.mxu0 0.0
        %2594 = vmatpush2.msra.mxu0 0.0
        %2595 = vmatprep.subr.mxu0 0.0
        %2596 = vmatpush2.msra.mxu0 0.0
        %2597 = vmatprep.subr.mxu0 0.0
        %2598 = vmatpush2.msra.mxu0 0.0
        %2599 = vmatprep.mubr.f32.mxu0 0.0
        %2600 = vmatmul.mubr.f32.gmra.mxu0 %v2533
        %v2601 = vpop.f32.mrf.mxu0
        %v2602 = vadd.f32 0.0, %v2601
        %v2603 = vpop.f32.mrf.mxu0
        %2604 = vdwg.mxu0
        %v2606 = vsel %vm1956, %v2115, 0
        %2608 = vmatprep.subr.mxu0 0.0
        %2609 = vmatpush1.msra.mxu0 0.0
        %2610 = vmatprep.subr.mxu0 0.0
        %2611 = vmatpush1.msra.mxu0 0.0
        %2612 = vmatprep.subr.mxu0 0.0
        %2613 = vmatpush1.msra.mxu0 0.0
        %2614 = vmatprep.subr.mxu0 0.0
        %2615 = vmatpush1.msra.mxu0 0.0
        %2616 = vmatprep.subr.mxu0 0.0
        %2617 = vmatpush1.msra.mxu0 0.0
        %2618 = vmatprep.subr.mxu0 0.0
        %2619 = vmatpush1.msra.mxu0 0.0
        %2620 = vmatprep.subr.mxu0 0.0
        %2621 = vmatpush1.msra.mxu0 0.0
        %2622 = vmatprep.subr.mxu0 0.0
        %2623 = vmatpush1.msra.mxu0 0.0
        %2624 = vmatprep.subr.mxu0 0.0
        %2625 = vmatpush1.msra.mxu0 0.0
        %2626 = vmatprep.subr.mxu0 0.0
        %2627 = vmatpush1.msra.mxu0 0.0
        %2628 = vmatprep.subr.mxu0 0.0
        %2629 = vmatpush1.msra.mxu0 0.0
        %2630 = vmatprep.subr.mxu0 0.0
        %2631 = vmatpush1.msra.mxu0 0.0
        %2632 = vmatprep.subr.mxu0 0.0
        %2633 = vmatpush1.msra.mxu0 0.0
        %2634 = vmatprep.subr.mxu0 0.0
        %2635 = vmatpush1.msra.mxu0 0.0
        %2636 = vmatprep.subr.mxu0 0.0
        %2637 = vmatpush1.msra.mxu0 %v2119
        %2638 = vmatprep.subr.mxu0 0.0
        %2639 = vmatpush1.msra.mxu0 %v2118
        %2640 = vmatprep.subr.mxu0 0.0
        %2641 = vmatpush2.msra.mxu0 0.0
        %2642 = vmatprep.subr.mxu0 0.0
        %2643 = vmatpush2.msra.mxu0 0.0
        %2644 = vmatprep.subr.mxu0 0.0
        %2645 = vmatpush2.msra.mxu0 0.0
        %2646 = vmatprep.subr.mxu0 0.0
        %2647 = vmatpush2.msra.mxu0 0.0
        %2648 = vmatprep.subr.mxu0 0.0
        %2649 = vmatpush2.msra.mxu0 0.0
        %2650 = vmatprep.subr.mxu0 0.0
        %2651 = vmatpush2.msra.mxu0 0.0
        %2652 = vmatprep.subr.mxu0 0.0
        %2653 = vmatpush2.msra.mxu0 0.0
        %2654 = vmatprep.subr.mxu0 0.0
        %2655 = vmatpush2.msra.mxu0 0.0
        %2656 = vmatprep.subr.mxu0 0.0
        %2657 = vmatpush2.msra.mxu0 0.0
        %2658 = vmatprep.subr.mxu0 0.0
        %2659 = vmatpush2.msra.mxu0 0.0
        %2660 = vmatprep.subr.mxu0 0.0
        %2661 = vmatpush2.msra.mxu0 0.0
        %2662 = vmatprep.subr.mxu0 0.0
        %2663 = vmatpush2.msra.mxu0 0.0
        %2664 = vmatprep.subr.mxu0 0.0
        %2665 = vmatpush2.msra.mxu0 0.0
        %2666 = vmatprep.subr.mxu0 0.0
        %2667 = vmatpush2.msra.mxu0 0.0
        %2668 = vmatprep.subr.mxu0 0.0
        %2669 = vmatpush2.msra.mxu0 0.0
        %2670 = vmatprep.subr.mxu0 0.0
        %2671 = vmatpush2.msra.mxu0 0.0
        %2672 = vmatprep.mubr.f32.mxu0 0.0
        %2673 = vmatmul.mubr.f32.gmra.mxu0 %v2606
        %v2674 = vpop.f32.mrf.mxu0
        %v2675 = vadd.f32 %v2602, %v2674
        %v2676 = vpop.f32.mrf.mxu0
        %2677 = vdwg.mxu0
        %v2679 = vlaneseq
        %v2680 = vshrl.u32 %v2679, 7
        %v2681 = vsub.s32 0, %v2680
        %v2682 = vrot.slane %v1702, %v2681
        %v2684 = vadd.f32 %v2675, %v2682
        %v2686 = vlaneseq
        %v2687 = vshrl.u32 %v2686, 7
        %v2688 = vsub.s32 0, %v2687
        %v2689 = vrot.slane %v1608, %v2688
        %v2691 = vmul.f32 %v1607, %v2689
        %2693 = vset.pattern.permute.xlu0 0
        %2694 = vperm.xlu0 %2693, %v2691
        %v2695 = vpop.permute.xlu0 %2694
        %v2697 = vmul.f32 %v2684, %v2695
        %v2698 = vld [vmem:[%s75] sm:$0x1]
        %v2699 = vld [vmem:[%s77] sm:$0x1]
        %v2700 = vadd.f32 %v1701, %v2697
        %v2701 = vsel %vm1714, %v2700, 0.0
        %2702 = vadd.xlane.f32.xlu0 %v2701
        %v2703 = vpop.xlane.xlu0 %2702
        %v2704 = vrcp.pop 32.0
        %v2705 = vmul.f32 %v2703, %v2704
        %v2706 = vsub.f32 %v2700, %v2705
        %v2707 = vmul.f32 %v2706, %v2706
        %v2708 = vsel %vm1714, %v2707, 0.0
        %2709 = vadd.xlane.f32.xlu0 %v2708
        %v2710 = vpop.xlane.xlu0 %2709
        %v2711 = vmul.f32 %v2710, %v2704
        %v2712 = vadd.f32 %v2711, 1e-05
        %v2713 = vrsqrt.pop %v2712
        %v2714 = vmul.f32 %v2706, %v2713
        %v2716 = vlaneseq
        %v2717 = vshrl.u32 %v2716, 7
        %v2718 = vsub.s32 0, %v2717
        %v2719 = vrot.slane %v2698, %v2718
        %v2721 = vmul.f32 %v2714, %v2719
        %v2723 = vlaneseq
        %v2724 = vshrl.u32 %v2723, 7
        %v2725 = vsub.s32 0, %v2724
        %v2726 = vrot.slane %v2699, %v2725
        %v2728 = vadd.f32 %v2721, %v2726
        %v2729 = vld [vmem:[%s57] sm:$0x1]
        %v2730 = vld [vmem:[%s43] sm:$0xff]
        %v2731 = vld [vmem:[%s43 + $0x8] sm:$0xff]
        %v2732 = vld [vmem:[%s43 + $0x10] sm:$0xff]
        %v2733 = vld [vmem:[%s43 + $0x18] sm:$0xff]
        %v2734 = vld [vmem:[%s45] sm:$0x1]
        %v2736 = vlaneseq
        %v2737 = vshrl.u32 %v2736, 7
        %v2738 = vsub.s32 0, %v2737
        %v2739 = vrot.slane %v2734, %v2738
        %v2742 = vsel %vm1714, %v2728, 0
        %2744 = vmatprep.subr.mxu0 0.0
        %2745 = vmatpush1.msra.mxu0 0.0
        %2746 = vmatprep.subr.mxu0 0.0
        %2747 = vmatpush1.msra.mxu0 0.0
        %2748 = vmatprep.subr.mxu0 0.0
        %2749 = vmatpush1.msra.mxu0 0.0
        %2750 = vmatprep.subr.mxu0 0.0
        %2751 = vmatpush1.msra.mxu0 0.0
        %2752 = vmatprep.subr.mxu0 0.0
        %2753 = vmatpush1.msra.mxu0 0.0
        %2754 = vmatprep.subr.mxu0 0.0
        %2755 = vmatpush1.msra.mxu0 0.0
        %2756 = vmatprep.subr.mxu0 0.0
        %2757 = vmatpush1.msra.mxu0 0.0
        %2758 = vmatprep.subr.mxu0 0.0
        %2759 = vmatpush1.msra.mxu0 0.0
        %2760 = vmatprep.subr.mxu0 0.0
        %2761 = vmatpush1.msra.mxu0 0.0
        %2762 = vmatprep.subr.mxu0 0.0
        %2763 = vmatpush1.msra.mxu0 0.0
        %2764 = vmatprep.subr.mxu0 0.0
        %2765 = vmatpush1.msra.mxu0 0.0
        %2766 = vmatprep.subr.mxu0 0.0
        %2767 = vmatpush1.msra.mxu0 0.0
        %2768 = vmatprep.subr.mxu0 0.0
        %2769 = vmatpush1.msra.mxu0 %v2733
        %2770 = vmatprep.subr.mxu0 0.0
        %2771 = vmatpush1.msra.mxu0 %v2732
        %2772 = vmatprep.subr.mxu0 0.0
        %2773 = vmatpush1.msra.mxu0 %v2731
        %2774 = vmatprep.subr.mxu0 0.0
        %2775 = vmatpush1.msra.mxu0 %v2730
        %2776 = vmatprep.subr.mxu0 0.0
        %2777 = vmatpush2.msra.mxu0 0.0
        %2778 = vmatprep.subr.mxu0 0.0
        %2779 = vmatpush2.msra.mxu0 0.0
        %2780 = vmatprep.subr.mxu0 0.0
        %2781 = vmatpush2.msra.mxu0 0.0
        %2782 = vmatprep.subr.mxu0 0.0
        %2783 = vmatpush2.msra.mxu0 0.0
        %2784 = vmatprep.subr.mxu0 0.0
        %2785 = vmatpush2.msra.mxu0 0.0
        %2786 = vmatprep.subr.mxu0 0.0
        %2787 = vmatpush2.msra.mxu0 0.0
        %2788 = vmatprep.subr.mxu0 0.0
        %2789 = vmatpush2.msra.mxu0 0.0
        %2790 = vmatprep.subr.mxu0 0.0
        %2791 = vmatpush2.msra.mxu0 0.0
        %2792 = vmatprep.subr.mxu0 0.0
        %2793 = vmatpush2.msra.mxu0 0.0
        %2794 = vmatprep.subr.mxu0 0.0
        %2795 = vmatpush2.msra.mxu0 0.0
        %2796 = vmatprep.subr.mxu0 0.0
        %2797 = vmatpush2.msra.mxu0 0.0
        %2798 = vmatprep.subr.mxu0 0.0
        %2799 = vmatpush2.msra.mxu0 0.0
        %2800 = vmatprep.subr.mxu0 0.0
        %2801 = vmatpush2.msra.mxu0 0.0
        %2802 = vmatprep.subr.mxu0 0.0
        %2803 = vmatpush2.msra.mxu0 0.0
        %2804 = vmatprep.subr.mxu0 0.0
        %2805 = vmatpush2.msra.mxu0 0.0
        %2806 = vmatprep.subr.mxu0 0.0
        %2807 = vmatpush2.msra.mxu0 0.0
        %2808 = vmatprep.mubr.f32.mxu0 0.0
        %2809 = vmatmul.mubr.f32.gmra.mxu0 %v2742
        %v2810 = vpop.f32.mrf.mxu0
        %v2811 = vadd.f32 %v2739, %v2810
        %v2812 = vpop.f32.mrf.mxu0
        %2813 = vdwg.mxu0
        %v2814 = vld [vmem:[%s47] sm:$0xff]
        %v2815 = vld [vmem:[%s47 + $0x8] sm:$0xff]
        %v2816 = vld [vmem:[%s49] sm:$0x1]
        %v2818 = vlaneseq
        %v2819 = vshrl.u32 %v2818, 7
        %v2820 = vsub.s32 0, %v2819
        %v2821 = vrot.slane %v2816, %v2820
        %v2824 = vsel %vm1956, %v1605, 0
        %2826 = vmatprep.subr.mxu0 0.0
        %2827 = vmatpush1.msra.mxu0 0.0
        %2828 = vmatprep.subr.mxu0 0.0
        %2829 = vmatpush1.msra.mxu0 0.0
        %2830 = vmatprep.subr.mxu0 0.0
        %2831 = vmatpush1.msra.mxu0 0.0
        %2832 = vmatprep.subr.mxu0 0.0
        %2833 = vmatpush1.msra.mxu0 0.0
        %2834 = vmatprep.subr.mxu0 0.0
        %2835 = vmatpush1.msra.mxu0 0.0
        %2836 = vmatprep.subr.mxu0 0.0
        %2837 = vmatpush1.msra.mxu0 0.0
        %2838 = vmatprep.subr.mxu0 0.0
        %2839 = vmatpush1.msra.mxu0 0.0
        %2840 = vmatprep.subr.mxu0 0.0
        %2841 = vmatpush1.msra.mxu0 0.0
        %2842 = vmatprep.subr.mxu0 0.0
        %2843 = vmatpush1.msra.mxu0 0.0
        %2844 = vmatprep.subr.mxu0 0.0
        %2845 = vmatpush1.msra.mxu0 0.0
        %2846 = vmatprep.subr.mxu0 0.0
        %2847 = vmatpush1.msra.mxu0 0.0
        %2848 = vmatprep.subr.mxu0 0.0
        %2849 = vmatpush1.msra.mxu0 0.0
        %2850 = vmatprep.subr.mxu0 0.0
        %2851 = vmatpush1.msra.mxu0 0.0
        %2852 = vmatprep.subr.mxu0 0.0
        %2853 = vmatpush1.msra.mxu0 0.0
        %2854 = vmatprep.subr.mxu0 0.0
        %2855 = vmatpush1.msra.mxu0 %v2815
        %2856 = vmatprep.subr.mxu0 0.0
        %2857 = vmatpush1.msra.mxu0 %v2814
        %2858 = vmatprep.subr.mxu0 0.0
        %2859 = vmatpush2.msra.mxu0 0.0
        %2860 = vmatprep.subr.mxu0 0.0
        %2861 = vmatpush2.msra.mxu0 0.0
        %2862 = vmatprep.subr.mxu0 0.0
        %2863 = vmatpush2.msra.mxu0 0.0
        %2864 = vmatprep.subr.mxu0 0.0
        %2865 = vmatpush2.msra.mxu0 0.0
        %2866 = vmatprep.subr.mxu0 0.0
        %2867 = vmatpush2.msra.mxu0 0.0
        %2868 = vmatprep.subr.mxu0 0.0
        %2869 = vmatpush2.msra.mxu0 0.0
        %2870 = vmatprep.subr.mxu0 0.0
        %2871 = vmatpush2.msra.mxu0 0.0
        %2872 = vmatprep.subr.mxu0 0.0
        %2873 = vmatpush2.msra.mxu0 0.0
        %2874 = vmatprep.subr.mxu0 0.0
        %2875 = vmatpush2.msra.mxu0 0.0
        %2876 = vmatprep.subr.mxu0 0.0
        %2877 = vmatpush2.msra.mxu0 0.0
        %2878 = vmatprep.subr.mxu0 0.0
        %2879 = vmatpush2.msra.mxu0 0.0
        %2880 = vmatprep.subr.mxu0 0.0
        %2881 = vmatpush2.msra.mxu0 0.0
        %2882 = vmatprep.subr.mxu0 0.0
        %2883 = vmatpush2.msra.mxu0 0.0
        %2884 = vmatprep.subr.mxu0 0.0
        %2885 = vmatpush2.msra.mxu0 0.0
        %2886 = vmatprep.subr.mxu0 0.0
        %2887 = vmatpush2.msra.mxu0 0.0
        %2888 = vmatprep.subr.mxu0 0.0
        %2889 = vmatpush2.msra.mxu0 0.0
        %2890 = vmatprep.mubr.f32.mxu0 0.0
        %2891 = vmatmul.mubr.f32.gmra.mxu0 %v2824
        %v2892 = vpop.f32.mrf.mxu0
        %v2893 = vadd.f32 %v2821, %v2892
        %v2894 = vpop.f32.mrf.mxu0
        %2895 = vdwg.mxu0
        %v2896 = vld [vmem:[%s51] sm:$0xff]
        %v2897 = vld [vmem:[%s51 + $0x8] sm:$0xff]
        %v2898 = vld [vmem:[%s53] sm:$0x1]
        %v2900 = vlaneseq
        %v2901 = vshrl.u32 %v2900, 7
        %v2902 = vsub.s32 0, %v2901
        %v2903 = vrot.slane %v2898, %v2902
        %v2906 = vsel %vm1956, %v1604, 0
        %2908 = vmatprep.subr.mxu0 0.0
        %2909 = vmatpush1.msra.mxu0 0.0
        %2910 = vmatprep.subr.mxu0 0.0
        %2911 = vmatpush1.msra.mxu0 0.0
        %2912 = vmatprep.subr.mxu0 0.0
        %2913 = vmatpush1.msra.mxu0 0.0
        %2914 = vmatprep.subr.mxu0 0.0
        %2915 = vmatpush1.msra.mxu0 0.0
        %2916 = vmatprep.subr.mxu0 0.0
        %2917 = vmatpush1.msra.mxu0 0.0
        %2918 = vmatprep.subr.mxu0 0.0
        %2919 = vmatpush1.msra.mxu0 0.0
        %2920 = vmatprep.subr.mxu0 0.0
        %2921 = vmatpush1.msra.mxu0 0.0
        %2922 = vmatprep.subr.mxu0 0.0
        %2923 = vmatpush1.msra.mxu0 0.0
        %2924 = vmatprep.subr.mxu0 0.0
        %2925 = vmatpush1.msra.mxu0 0.0
        %2926 = vmatprep.subr.mxu0 0.0
        %2927 = vmatpush1.msra.mxu0 0.0
        %2928 = vmatprep.subr.mxu0 0.0
        %2929 = vmatpush1.msra.mxu0 0.0
        %2930 = vmatprep.subr.mxu0 0.0
        %2931 = vmatpush1.msra.mxu0 0.0
        %2932 = vmatprep.subr.mxu0 0.0
        %2933 = vmatpush1.msra.mxu0 0.0
        %2934 = vmatprep.subr.mxu0 0.0
        %2935 = vmatpush1.msra.mxu0 0.0
        %2936 = vmatprep.subr.mxu0 0.0
        %2937 = vmatpush1.msra.mxu0 %v2897
        %2938 = vmatprep.subr.mxu0 0.0
        %2939 = vmatpush1.msra.mxu0 %v2896
        %2940 = vmatprep.subr.mxu0 0.0
        %2941 = vmatpush2.msra.mxu0 0.0
        %2942 = vmatprep.subr.mxu0 0.0
        %2943 = vmatpush2.msra.mxu0 0.0
        %2944 = vmatprep.subr.mxu0 0.0
        %2945 = vmatpush2.msra.mxu0 0.0
        %2946 = vmatprep.subr.mxu0 0.0
        %2947 = vmatpush2.msra.mxu0 0.0
        %2948 = vmatprep.subr.mxu0 0.0
        %2949 = vmatpush2.msra.mxu0 0.0
        %2950 = vmatprep.subr.mxu0 0.0
        %2951 = vmatpush2.msra.mxu0 0.0
        %2952 = vmatprep.subr.mxu0 0.0
        %2953 = vmatpush2.msra.mxu0 0.0
        %2954 = vmatprep.subr.mxu0 0.0
        %2955 = vmatpush2.msra.mxu0 0.0
        %2956 = vmatprep.subr.mxu0 0.0
        %2957 = vmatpush2.msra.mxu0 0.0
        %2958 = vmatprep.subr.mxu0 0.0
        %2959 = vmatpush2.msra.mxu0 0.0
        %2960 = vmatprep.subr.mxu0 0.0
        %2961 = vmatpush2.msra.mxu0 0.0
        %2962 = vmatprep.subr.mxu0 0.0
        %2963 = vmatpush2.msra.mxu0 0.0
        %2964 = vmatprep.subr.mxu0 0.0
        %2965 = vmatpush2.msra.mxu0 0.0
        %2966 = vmatprep.subr.mxu0 0.0
        %2967 = vmatpush2.msra.mxu0 0.0
        %2968 = vmatprep.subr.mxu0 0.0
        %2969 = vmatpush2.msra.mxu0 0.0
        %2970 = vmatprep.subr.mxu0 0.0
        %2971 = vmatpush2.msra.mxu0 0.0
        %2972 = vmatprep.mubr.f32.mxu0 0.0
        %2973 = vmatmul.mubr.f32.gmra.mxu0 %v2906
        %v2974 = vpop.f32.mrf.mxu0
        %v2975 = vadd.f32 %v2903, %v2974
        %v2976 = vpop.f32.mrf.mxu0
        %2977 = vdwg.mxu0
        %v2979 = vsel %vm1956, %v2811, 0
        %v2982 = vsel %vm1956, %v2893, 0
        %2984 = vmatprep.subr.mxu0 0.0
        %2985 = vmatpush1.xpose.msra.mxu0 0.0
        %2986 = vmatprep.subr.mxu0 0.0
        %2987 = vmatpush1.xpose.msra.mxu0 0.0
        %2988 = vmatprep.subr.mxu0 0.0
        %2989 = vmatpush1.xpose.msra.mxu0 0.0
        %2990 = vmatprep.subr.mxu0 0.0
        %2991 = vmatpush1.xpose.msra.mxu0 0.0
        %2992 = vmatprep.subr.mxu0 0.0
        %2993 = vmatpush1.xpose.msra.mxu0 0.0
        %2994 = vmatprep.subr.mxu0 0.0
        %2995 = vmatpush1.xpose.msra.mxu0 0.0
        %2996 = vmatprep.subr.mxu0 0.0
        %2997 = vmatpush1.xpose.msra.mxu0 0.0
        %2998 = vmatprep.subr.mxu0 0.0
        %2999 = vmatpush1.xpose.msra.mxu0 0.0
        %3000 = vmatprep.subr.mxu0 0.0
        %3001 = vmatpush1.xpose.msra.mxu0 0.0
        %3002 = vmatprep.subr.mxu0 0.0
        %3003 = vmatpush1.xpose.msra.mxu0 0.0
        %3004 = vmatprep.subr.mxu0 0.0
        %3005 = vmatpush1.xpose.msra.mxu0 0.0
        %3006 = vmatprep.subr.mxu0 0.0
        %3007 = vmatpush1.xpose.msra.mxu0 0.0
        %3008 = vmatprep.subr.mxu0 0.0
        %3009 = vmatpush1.xpose.msra.mxu0 0.0
        %3010 = vmatprep.subr.mxu0 0.0
        %3011 = vmatpush1.xpose.msra.mxu0 0.0
        %3012 = vmatprep.subr.mxu0 0.0
        %3013 = vmatpush1.xpose.msra.mxu0 0.0
        %3014 = vmatprep.subr.mxu0 0.0
        %3015 = vmatpush1.xpose.msra.mxu0 %v2982
        %3016 = vmatprep.subr.mxu0 0.0
        %3017 = vmatpush2.xpose.msra.mxu0 0.0
        %3018 = vmatprep.subr.mxu0 0.0
        %3019 = vmatpush2.xpose.msra.mxu0 0.0
        %3020 = vmatprep.subr.mxu0 0.0
        %3021 = vmatpush2.xpose.msra.mxu0 0.0
        %3022 = vmatprep.subr.mxu0 0.0
        %3023 = vmatpush2.xpose.msra.mxu0 0.0
        %3024 = vmatprep.subr.mxu0 0.0
        %3025 = vmatpush2.xpose.msra.mxu0 0.0
        %3026 = vmatprep.subr.mxu0 0.0
        %3027 = vmatpush2.xpose.msra.mxu0 0.0
        %3028 = vmatprep.subr.mxu0 0.0
        %3029 = vmatpush2.xpose.msra.mxu0 0.0
        %3030 = vmatprep.subr.mxu0 0.0
        %3031 = vmatpush2.xpose.msra.mxu0 0.0
        %3032 = vmatprep.subr.mxu0 0.0
        %3033 = vmatpush2.xpose.msra.mxu0 0.0
        %3034 = vmatprep.subr.mxu0 0.0
        %3035 = vmatpush2.xpose.msra.mxu0 0.0
        %3036 = vmatprep.subr.mxu0 0.0
        %3037 = vmatpush2.xpose.msra.mxu0 0.0
        %3038 = vmatprep.subr.mxu0 0.0
        %3039 = vmatpush2.xpose.msra.mxu0 0.0
        %3040 = vmatprep.subr.mxu0 0.0
        %3041 = vmatpush2.xpose.msra.mxu0 0.0
        %3042 = vmatprep.subr.mxu0 0.0
        %3043 = vmatpush2.xpose.msra.mxu0 0.0
        %3044 = vmatprep.subr.mxu0 0.0
        %3045 = vmatpush2.xpose.msra.mxu0 0.0
        %3046 = vmatprep.subr.mxu0 0.0
        %3047 = vmatpush2.xpose.msra.mxu0 0.0
        %3048 = vmatprep.mubr.f32.mxu0 0.0
        %3049 = vmatmul.mubr.f32.gmra.mxu0 %v2979
        %v3050 = vpop.f32.mrf.mxu0
        %v3051 = vadd.f32 0.0, %v3050
        %v3052 = vpop.f32.mrf.mxu0
        %3053 = vdwg.mxu0
        %vm3054 = vcmask 31744
        %v3055 = vsel %vm3054, %v3051, -inf
        %3056 = vmax.xlane.f32.xlu0 %v3055
        %v3057 = vpop.xlane.xlu0 %3056
        %v3058 = vsub.f32 %v3051, %v3057
        %v3059 = vmul.f32 %v3058, 1.442695
        %v3060 = vpow.pop %v3059
        %v3061 = vsel %vm3054, %v3060, 0.0
        %3062 = vadd.xlane.f32.xlu0 %v3061
        %v3063 = vpop.xlane.xlu0 %3062
        %v3064 = vrcp.pop %v3063
        %v3065 = vmul.f32 %v3060, %v3064
        %v3067 = vsel %vm3054, %v3065, 0
        %v3070 = vsel %vm1623, %v2975, 0
        %3072 = vmatprep.subr.mxu0 0.0
        %3073 = vmatpush1.msra.mxu0 0.0
        %3074 = vmatprep.subr.mxu0 0.0
        %3075 = vmatpush1.msra.mxu0 0.0
        %3076 = vmatprep.subr.mxu0 0.0
        %3077 = vmatpush1.msra.mxu0 0.0
        %3078 = vmatprep.subr.mxu0 0.0
        %3079 = vmatpush1.msra.mxu0 0.0
        %3080 = vmatprep.subr.mxu0 0.0
        %3081 = vmatpush1.msra.mxu0 0.0
        %3082 = vmatprep.subr.mxu0 0.0
        %3083 = vmatpush1.msra.mxu0 0.0
        %3084 = vmatprep.subr.mxu0 0.0
        %3085 = vmatpush1.msra.mxu0 0.0
        %3086 = vmatprep.subr.mxu0 0.0
        %3087 = vmatpush1.msra.mxu0 0.0
        %3088 = vmatprep.subr.mxu0 0.0
        %3089 = vmatpush1.msra.mxu0 0.0
        %3090 = vmatprep.subr.mxu0 0.0
        %3091 = vmatpush1.msra.mxu0 0.0
        %3092 = vmatprep.subr.mxu0 0.0
        %3093 = vmatpush1.msra.mxu0 0.0
        %3094 = vmatprep.subr.mxu0 0.0
        %3095 = vmatpush1.msra.mxu0 0.0
        %3096 = vmatprep.subr.mxu0 0.0
        %3097 = vmatpush1.msra.mxu0 0.0
        %3098 = vmatprep.subr.mxu0 0.0
        %3099 = vmatpush1.msra.mxu0 0.0
        %3100 = vmatprep.subr.mxu0 0.0
        %3101 = vmatpush1.msra.mxu0 0.0
        %3102 = vmatprep.subr.mxu0 0.0
        %3103 = vmatpush1.msra.mxu0 %v3070
        %3104 = vmatprep.subr.mxu0 0.0
        %3105 = vmatpush2.msra.mxu0 0.0
        %3106 = vmatprep.subr.mxu0 0.0
        %3107 = vmatpush2.msra.mxu0 0.0
        %3108 = vmatprep.subr.mxu0 0.0
        %3109 = vmatpush2.msra.mxu0 0.0
        %3110 = vmatprep.subr.mxu0 0.0
        %3111 = vmatpush2.msra.mxu0 0.0
        %3112 = vmatprep.subr.mxu0 0.0
        %3113 = vmatpush2.msra.mxu0 0.0
        %3114 = vmatprep.subr.mxu0 0.0
        %3115 = vmatpush2.msra.mxu0 0.0
        %3116 = vmatprep.subr.mxu0 0.0
        %3117 = vmatpush2.msra.mxu0 0.0
        %3118 = vmatprep.subr.mxu0 0.0
        %3119 = vmatpush2.msra.mxu0 0.0
        %3120 = vmatprep.subr.mxu0 0.0
        %3121 = vmatpush2.msra.mxu0 0.0
        %3122 = vmatprep.subr.mxu0 0.0
        %3123 = vmatpush2.msra.mxu0 0.0
        %3124 = vmatprep.subr.mxu0 0.0
        %3125 = vmatpush2.msra.mxu0 0.0
        %3126 = vmatprep.subr.mxu0 0.0
        %3127 = vmatpush2.msra.mxu0 0.0
        %3128 = vmatprep.subr.mxu0 0.0
        %3129 = vmatpush2.msra.mxu0 0.0
        %3130 = vmatprep.subr.mxu0 0.0
        %3131 = vmatpush2.msra.mxu0 0.0
        %3132 = vmatprep.subr.mxu0 0.0
        %3133 = vmatpush2.msra.mxu0 0.0
        %3134 = vmatprep.subr.mxu0 0.0
        %3135 = vmatpush2.msra.mxu0 0.0
        %3136 = vmatprep.mubr.f32.mxu0 0.0
        %3137 = vmatmul.mubr.f32.gmra.mxu0 %v3067
        %v3138 = vpop.f32.mrf.mxu0
        %v3139 = vadd.f32 0.0, %v3138
        %v3140 = vpop.f32.mrf.mxu0
        %3141 = vdwg.mxu0
        %v3142 = vld [vmem:[%s55] sm:$0xff]
        %v3143 = vld [vmem:[%s55 + $0x8] sm:$0xff]
        %s3144 = scalar_lea.vmem %s43, 32
        %v3145 = vld [vmem:[%s3144] sm:$0xff]
        %v3146 = vld [vmem:[%s3144 + $0x8] sm:$0xff]
        %v3147 = vld [vmem:[%s3144 + $0x10] sm:$0xff]
        %v3148 = vld [vmem:[%s3144 + $0x18] sm:$0xff]
        %s3149 = scalar_lea.vmem %s45, 1
        %v3150 = vld [vmem:[%s3149] sm:$0x1]
        %v3152 = vlaneseq
        %v3153 = vshrl.u32 %v3152, 7
        %v3154 = vsub.s32 0, %v3153
        %v3155 = vrot.slane %v3150, %v3154
        %3157 = vmatprep.subr.mxu0 0.0
        %3158 = vmatpush1.msra.mxu0 0.0
        %3159 = vmatprep.subr.mxu0 0.0
        %3160 = vmatpush1.msra.mxu0 0.0
        %3161 = vmatprep.subr.mxu0 0.0
        %3162 = vmatpush1.msra.mxu0 0.0
        %3163 = vmatprep.subr.mxu0 0.0
        %3164 = vmatpush1.msra.mxu0 0.0
        %3165 = vmatprep.subr.mxu0 0.0
        %3166 = vmatpush1.msra.mxu0 0.0
        %3167 = vmatprep.subr.mxu0 0.0
        %3168 = vmatpush1.msra.mxu0 0.0
        %3169 = vmatprep.subr.mxu0 0.0
        %3170 = vmatpush1.msra.mxu0 0.0
        %3171 = vmatprep.subr.mxu0 0.0
        %3172 = vmatpush1.msra.mxu0 0.0
        %3173 = vmatprep.subr.mxu0 0.0
        %3174 = vmatpush1.msra.mxu0 0.0
        %3175 = vmatprep.subr.mxu0 0.0
        %3176 = vmatpush1.msra.mxu0 0.0
        %3177 = vmatprep.subr.mxu0 0.0
        %3178 = vmatpush1.msra.mxu0 0.0
        %3179 = vmatprep.subr.mxu0 0.0
        %3180 = vmatpush1.msra.mxu0 0.0
        %3181 = vmatprep.subr.mxu0 0.0
        %3182 = vmatpush1.msra.mxu0 %v3148
        %3183 = vmatprep.subr.mxu0 0.0
        %3184 = vmatpush1.msra.mxu0 %v3147
        %3185 = vmatprep.subr.mxu0 0.0
        %3186 = vmatpush1.msra.mxu0 %v3146
        %3187 = vmatprep.subr.mxu0 0.0
        %3188 = vmatpush1.msra.mxu0 %v3145
        %3189 = vmatprep.subr.mxu0 0.0
        %3190 = vmatpush2.msra.mxu0 0.0
        %3191 = vmatprep.subr.mxu0 0.0
        %3192 = vmatpush2.msra.mxu0 0.0
        %3193 = vmatprep.subr.mxu0 0.0
        %3194 = vmatpush2.msra.mxu0 0.0
        %3195 = vmatprep.subr.mxu0 0.0
        %3196 = vmatpush2.msra.mxu0 0.0
        %3197 = vmatprep.subr.mxu0 0.0
        %3198 = vmatpush2.msra.mxu0 0.0
        %3199 = vmatprep.subr.mxu0 0.0
        %3200 = vmatpush2.msra.mxu0 0.0
        %3201 = vmatprep.subr.mxu0 0.0
        %3202 = vmatpush2.msra.mxu0 0.0
        %3203 = vmatprep.subr.mxu0 0.0
        %3204 = vmatpush2.msra.mxu0 0.0
        %3205 = vmatprep.subr.mxu0 0.0
        %3206 = vmatpush2.msra.mxu0 0.0
        %3207 = vmatprep.subr.mxu0 0.0
        %3208 = vmatpush2.msra.mxu0 0.0
        %3209 = vmatprep.subr.mxu0 0.0
        %3210 = vmatpush2.msra.mxu0 0.0
        %3211 = vmatprep.subr.mxu0 0.0
        %3212 = vmatpush2.msra.mxu0 0.0
        %3213 = vmatprep.subr.mxu0 0.0
        %3214 = vmatpush2.msra.mxu0 0.0
        %3215 = vmatprep.subr.mxu0 0.0
        %3216 = vmatpush2.msra.mxu0 0.0
        %3217 = vmatprep.subr.mxu0 0.0
        %3218 = vmatpush2.msra.mxu0 0.0
        %3219 = vmatprep.subr.mxu0 0.0
        %3220 = vmatpush2.msra.mxu0 0.0
        %3221 = vmatprep.mubr.f32.mxu0 0.0
        %3222 = vmatmul.mubr.f32.gmra.mxu0 %v2742
        %v3223 = vpop.f32.mrf.mxu0
        %v3224 = vadd.f32 %v3155, %v3223
        %v3225 = vpop.f32.mrf.mxu0
        %3226 = vdwg.mxu0
        %s3227 = scalar_lea.vmem %s47, 16
        %v3228 = vld [vmem:[%s3227] sm:$0xff]
        %v3229 = vld [vmem:[%s3227 + $0x8] sm:$0xff]
        %s3230 = scalar_lea.vmem %s49, 1
        %v3231 = vld [vmem:[%s3230] sm:$0x1]
        %v3233 = vlaneseq
        %v3234 = vshrl.u32 %v3233, 7
        %v3235 = vsub.s32 0, %v3234
        %v3236 = vrot.slane %v3231, %v3235
        %3238 = vmatprep.subr.mxu0 0.0
        %3239 = vmatpush1.msra.mxu0 0.0
        %3240 = vmatprep.subr.mxu0 0.0
        %3241 = vmatpush1.msra.mxu0 0.0
        %3242 = vmatprep.subr.mxu0 0.0
        %3243 = vmatpush1.msra.mxu0 0.0
        %3244 = vmatprep.subr.mxu0 0.0
        %3245 = vmatpush1.msra.mxu0 0.0
        %3246 = vmatprep.subr.mxu0 0.0
        %3247 = vmatpush1.msra.mxu0 0.0
        %3248 = vmatprep.subr.mxu0 0.0
        %3249 = vmatpush1.msra.mxu0 0.0
        %3250 = vmatprep.subr.mxu0 0.0
        %3251 = vmatpush1.msra.mxu0 0.0
        %3252 = vmatprep.subr.mxu0 0.0
        %3253 = vmatpush1.msra.mxu0 0.0
        %3254 = vmatprep.subr.mxu0 0.0
        %3255 = vmatpush1.msra.mxu0 0.0
        %3256 = vmatprep.subr.mxu0 0.0
        %3257 = vmatpush1.msra.mxu0 0.0
        %3258 = vmatprep.subr.mxu0 0.0
        %3259 = vmatpush1.msra.mxu0 0.0
        %3260 = vmatprep.subr.mxu0 0.0
        %3261 = vmatpush1.msra.mxu0 0.0
        %3262 = vmatprep.subr.mxu0 0.0
        %3263 = vmatpush1.msra.mxu0 0.0
        %3264 = vmatprep.subr.mxu0 0.0
        %3265 = vmatpush1.msra.mxu0 0.0
        %3266 = vmatprep.subr.mxu0 0.0
        %3267 = vmatpush1.msra.mxu0 %v3229
        %3268 = vmatprep.subr.mxu0 0.0
        %3269 = vmatpush1.msra.mxu0 %v3228
        %3270 = vmatprep.subr.mxu0 0.0
        %3271 = vmatpush2.msra.mxu0 0.0
        %3272 = vmatprep.subr.mxu0 0.0
        %3273 = vmatpush2.msra.mxu0 0.0
        %3274 = vmatprep.subr.mxu0 0.0
        %3275 = vmatpush2.msra.mxu0 0.0
        %3276 = vmatprep.subr.mxu0 0.0
        %3277 = vmatpush2.msra.mxu0 0.0
        %3278 = vmatprep.subr.mxu0 0.0
        %3279 = vmatpush2.msra.mxu0 0.0
        %3280 = vmatprep.subr.mxu0 0.0
        %3281 = vmatpush2.msra.mxu0 0.0
        %3282 = vmatprep.subr.mxu0 0.0
        %3283 = vmatpush2.msra.mxu0 0.0
        %3284 = vmatprep.subr.mxu0 0.0
        %3285 = vmatpush2.msra.mxu0 0.0
        %3286 = vmatprep.subr.mxu0 0.0
        %3287 = vmatpush2.msra.mxu0 0.0
        %3288 = vmatprep.subr.mxu0 0.0
        %3289 = vmatpush2.msra.mxu0 0.0
        %3290 = vmatprep.subr.mxu0 0.0
        %3291 = vmatpush2.msra.mxu0 0.0
        %3292 = vmatprep.subr.mxu0 0.0
        %3293 = vmatpush2.msra.mxu0 0.0
        %3294 = vmatprep.subr.mxu0 0.0
        %3295 = vmatpush2.msra.mxu0 0.0
        %3296 = vmatprep.subr.mxu0 0.0
        %3297 = vmatpush2.msra.mxu0 0.0
        %3298 = vmatprep.subr.mxu0 0.0
        %3299 = vmatpush2.msra.mxu0 0.0
        %3300 = vmatprep.subr.mxu0 0.0
        %3301 = vmatpush2.msra.mxu0 0.0
        %3302 = vmatprep.mubr.f32.mxu0 0.0
        %3303 = vmatmul.mubr.f32.gmra.mxu0 %v2824
        %v3304 = vpop.f32.mrf.mxu0
        %v3305 = vadd.f32 %v3236, %v3304
        %v3306 = vpop.f32.mrf.mxu0
        %3307 = vdwg.mxu0
        %s3308 = scalar_lea.vmem %s51, 16
        %v3309 = vld [vmem:[%s3308] sm:$0xff]
        %v3310 = vld [vmem:[%s3308 + $0x8] sm:$0xff]
        %s3311 = scalar_lea.vmem %s53, 1
        %v3312 = vld [vmem:[%s3311] sm:$0x1]
        %v3314 = vlaneseq
        %v3315 = vshrl.u32 %v3314, 7
        %v3316 = vsub.s32 0, %v3315
        %v3317 = vrot.slane %v3312, %v3316
        %3319 = vmatprep.subr.mxu0 0.0
        %3320 = vmatpush1.msra.mxu0 0.0
        %3321 = vmatprep.subr.mxu0 0.0
        %3322 = vmatpush1.msra.mxu0 0.0
        %3323 = vmatprep.subr.mxu0 0.0
        %3324 = vmatpush1.msra.mxu0 0.0
        %3325 = vmatprep.subr.mxu0 0.0
        %3326 = vmatpush1.msra.mxu0 0.0
        %3327 = vmatprep.subr.mxu0 0.0
        %3328 = vmatpush1.msra.mxu0 0.0
        %3329 = vmatprep.subr.mxu0 0.0
        %3330 = vmatpush1.msra.mxu0 0.0
        %3331 = vmatprep.subr.mxu0 0.0
        %3332 = vmatpush1.msra.mxu0 0.0
        %3333 = vmatprep.subr.mxu0 0.0
        %3334 = vmatpush1.msra.mxu0 0.0
        %3335 = vmatprep.subr.mxu0 0.0
        %3336 = vmatpush1.msra.mxu0 0.0
        %3337 = vmatprep.subr.mxu0 0.0
        %3338 = vmatpush1.msra.mxu0 0.0
        %3339 = vmatprep.subr.mxu0 0.0
        %3340 = vmatpush1.msra.mxu0 0.0
        %3341 = vmatprep.subr.mxu0 0.0
        %3342 = vmatpush1.msra.mxu0 0.0
        %3343 = vmatprep.subr.mxu0 0.0
        %3344 = vmatpush1.msra.mxu0 0.0
        %3345 = vmatprep.subr.mxu0 0.0
        %3346 = vmatpush1.msra.mxu0 0.0
        %3347 = vmatprep.subr.mxu0 0.0
        %3348 = vmatpush1.msra.mxu0 %v3310
        %3349 = vmatprep.subr.mxu0 0.0
        %3350 = vmatpush1.msra.mxu0 %v3309
        %3351 = vmatprep.subr.mxu0 0.0
        %3352 = vmatpush2.msra.mxu0 0.0
        %3353 = vmatprep.subr.mxu0 0.0
        %3354 = vmatpush2.msra.mxu0 0.0
        %3355 = vmatprep.subr.mxu0 0.0
        %3356 = vmatpush2.msra.mxu0 0.0
        %3357 = vmatprep.subr.mxu0 0.0
        %3358 = vmatpush2.msra.mxu0 0.0
        %3359 = vmatprep.subr.mxu0 0.0
        %3360 = vmatpush2.msra.mxu0 0.0
        %3361 = vmatprep.subr.mxu0 0.0
        %3362 = vmatpush2.msra.mxu0 0.0
        %3363 = vmatprep.subr.mxu0 0.0
        %3364 = vmatpush2.msra.mxu0 0.0
        %3365 = vmatprep.subr.mxu0 0.0
        %3366 = vmatpush2.msra.mxu0 0.0
        %3367 = vmatprep.subr.mxu0 0.0
        %3368 = vmatpush2.msra.mxu0 0.0
        %3369 = vmatprep.subr.mxu0 0.0
        %3370 = vmatpush2.msra.mxu0 0.0
        %3371 = vmatprep.subr.mxu0 0.0
        %3372 = vmatpush2.msra.mxu0 0.0
        %3373 = vmatprep.subr.mxu0 0.0
        %3374 = vmatpush2.msra.mxu0 0.0
        %3375 = vmatprep.subr.mxu0 0.0
        %3376 = vmatpush2.msra.mxu0 0.0
        %3377 = vmatprep.subr.mxu0 0.0
        %3378 = vmatpush2.msra.mxu0 0.0
        %3379 = vmatprep.subr.mxu0 0.0
        %3380 = vmatpush2.msra.mxu0 0.0
        %3381 = vmatprep.subr.mxu0 0.0
        %3382 = vmatpush2.msra.mxu0 0.0
        %3383 = vmatprep.mubr.f32.mxu0 0.0
        %3384 = vmatmul.mubr.f32.gmra.mxu0 %v2906
        %v3385 = vpop.f32.mrf.mxu0
        %v3386 = vadd.f32 %v3317, %v3385
        %v3387 = vpop.f32.mrf.mxu0
        %3388 = vdwg.mxu0
        %v3390 = vsel %vm1956, %v3224, 0
        %v3393 = vsel %vm1956, %v3305, 0
        %3395 = vmatprep.subr.mxu0 0.0
        %3396 = vmatpush1.xpose.msra.mxu0 0.0
        %3397 = vmatprep.subr.mxu0 0.0
        %3398 = vmatpush1.xpose.msra.mxu0 0.0
        %3399 = vmatprep.subr.mxu0 0.0
        %3400 = vmatpush1.xpose.msra.mxu0 0.0
        %3401 = vmatprep.subr.mxu0 0.0
        %3402 = vmatpush1.xpose.msra.mxu0 0.0
        %3403 = vmatprep.subr.mxu0 0.0
        %3404 = vmatpush1.xpose.msra.mxu0 0.0
        %3405 = vmatprep.subr.mxu0 0.0
        %3406 = vmatpush1.xpose.msra.mxu0 0.0
        %3407 = vmatprep.subr.mxu0 0.0
        %3408 = vmatpush1.xpose.msra.mxu0 0.0
        %3409 = vmatprep.subr.mxu0 0.0
        %3410 = vmatpush1.xpose.msra.mxu0 0.0
        %3411 = vmatprep.subr.mxu0 0.0
        %3412 = vmatpush1.xpose.msra.mxu0 0.0
        %3413 = vmatprep.subr.mxu0 0.0
        %3414 = vmatpush1.xpose.msra.mxu0 0.0
        %3415 = vmatprep.subr.mxu0 0.0
        %3416 = vmatpush1.xpose.msra.mxu0 0.0
        %3417 = vmatprep.subr.mxu0 0.0
        %3418 = vmatpush1.xpose.msra.mxu0 0.0
        %3419 = vmatprep.subr.mxu0 0.0
        %3420 = vmatpush1.xpose.msra.mxu0 0.0
        %3421 = vmatprep.subr.mxu0 0.0
        %3422 = vmatpush1.xpose.msra.mxu0 0.0
        %3423 = vmatprep.subr.mxu0 0.0
        %3424 = vmatpush1.xpose.msra.mxu0 0.0
        %3425 = vmatprep.subr.mxu0 0.0
        %3426 = vmatpush1.xpose.msra.mxu0 %v3393
        %3427 = vmatprep.subr.mxu0 0.0
        %3428 = vmatpush2.xpose.msra.mxu0 0.0
        %3429 = vmatprep.subr.mxu0 0.0
        %3430 = vmatpush2.xpose.msra.mxu0 0.0
        %3431 = vmatprep.subr.mxu0 0.0
        %3432 = vmatpush2.xpose.msra.mxu0 0.0
        %3433 = vmatprep.subr.mxu0 0.0
        %3434 = vmatpush2.xpose.msra.mxu0 0.0
        %3435 = vmatprep.subr.mxu0 0.0
        %3436 = vmatpush2.xpose.msra.mxu0 0.0
        %3437 = vmatprep.subr.mxu0 0.0
        %3438 = vmatpush2.xpose.msra.mxu0 0.0
        %3439 = vmatprep.subr.mxu0 0.0
        %3440 = vmatpush2.xpose.msra.mxu0 0.0
        %3441 = vmatprep.subr.mxu0 0.0
        %3442 = vmatpush2.xpose.msra.mxu0 0.0
        %3443 = vmatprep.subr.mxu0 0.0
        %3444 = vmatpush2.xpose.msra.mxu0 0.0
        %3445 = vmatprep.subr.mxu0 0.0
        %3446 = vmatpush2.xpose.msra.mxu0 0.0
        %3447 = vmatprep.subr.mxu0 0.0
        %3448 = vmatpush2.xpose.msra.mxu0 0.0
        %3449 = vmatprep.subr.mxu0 0.0
        %3450 = vmatpush2.xpose.msra.mxu0 0.0
        %3451 = vmatprep.subr.mxu0 0.0
        %3452 = vmatpush2.xpose.msra.mxu0 0.0
        %3453 = vmatprep.subr.mxu0 0.0
        %3454 = vmatpush2.xpose.msra.mxu0 0.0
        %3455 = vmatprep.subr.mxu0 0.0
        %3456 = vmatpush2.xpose.msra.mxu0 0.0
        %3457 = vmatprep.subr.mxu0 0.0
        %3458 = vmatpush2.xpose.msra.mxu0 0.0
        %3459 = vmatprep.mubr.f32.mxu0 0.0
        %3460 = vmatmul.mubr.f32.gmra.mxu0 %v3390
        %v3461 = vpop.f32.mrf.mxu0
        %v3462 = vadd.f32 0.0, %v3461
        %v3463 = vpop.f32.mrf.mxu0
        %3464 = vdwg.mxu0
        %v3465 = vsel %vm3054, %v3462, -inf
        %3466 = vmax.xlane.f32.xlu0 %v3465
        %v3467 = vpop.xlane.xlu0 %3466
        %v3468 = vsub.f32 %v3462, %v3467
        %v3469 = vmul.f32 %v3468, 1.442695
        %v3470 = vpow.pop %v3469
        %v3471 = vsel %vm3054, %v3470, 0.0
        %3472 = vadd.xlane.f32.xlu0 %v3471
        %v3473 = vpop.xlane.xlu0 %3472
        %v3474 = vrcp.pop %v3473
        %v3475 = vmul.f32 %v3470, %v3474
        %v3477 = vsel %vm3054, %v3475, 0
        %v3480 = vsel %vm1623, %v3386, 0
        %3482 = vmatprep.subr.mxu0 0.0
        %3483 = vmatpush1.msra.mxu0 0.0
        %3484 = vmatprep.subr.mxu0 0.0
        %3485 = vmatpush1.msra.mxu0 0.0
        %3486 = vmatprep.subr.mxu0 0.0
        %3487 = vmatpush1.msra.mxu0 0.0
        %3488 = vmatprep.subr.mxu0 0.0
        %3489 = vmatpush1.msra.mxu0 0.0
        %3490 = vmatprep.subr.mxu0 0.0
        %3491 = vmatpush1.msra.mxu0 0.0
        %3492 = vmatprep.subr.mxu0 0.0
        %3493 = vmatpush1.msra.mxu0 0.0
        %3494 = vmatprep.subr.mxu0 0.0
        %3495 = vmatpush1.msra.mxu0 0.0
        %3496 = vmatprep.subr.mxu0 0.0
        %3497 = vmatpush1.msra.mxu0 0.0
        %3498 = vmatprep.subr.mxu0 0.0
        %3499 = vmatpush1.msra.mxu0 0.0
        %3500 = vmatprep.subr.mxu0 0.0
        %3501 = vmatpush1.msra.mxu0 0.0
        %3502 = vmatprep.subr.mxu0 0.0
        %3503 = vmatpush1.msra.mxu0 0.0
        %3504 = vmatprep.subr.mxu0 0.0
        %3505 = vmatpush1.msra.mxu0 0.0
        %3506 = vmatprep.subr.mxu0 0.0
        %3507 = vmatpush1.msra.mxu0 0.0
        %3508 = vmatprep.subr.mxu0 0.0
        %3509 = vmatpush1.msra.mxu0 0.0
        %3510 = vmatprep.subr.mxu0 0.0
        %3511 = vmatpush1.msra.mxu0 0.0
        %3512 = vmatprep.subr.mxu0 0.0
        %3513 = vmatpush1.msra.mxu0 %v3480
        %3514 = vmatprep.subr.mxu0 0.0
        %3515 = vmatpush2.msra.mxu0 0.0
        %3516 = vmatprep.subr.mxu0 0.0
        %3517 = vmatpush2.msra.mxu0 0.0
        %3518 = vmatprep.subr.mxu0 0.0
        %3519 = vmatpush2.msra.mxu0 0.0
        %3520 = vmatprep.subr.mxu0 0.0
        %3521 = vmatpush2.msra.mxu0 0.0
        %3522 = vmatprep.subr.mxu0 0.0
        %3523 = vmatpush2.msra.mxu0 0.0
        %3524 = vmatprep.subr.mxu0 0.0
        %3525 = vmatpush2.msra.mxu0 0.0
        %3526 = vmatprep.subr.mxu0 0.0
        %3527 = vmatpush2.msra.mxu0 0.0
        %3528 = vmatprep.subr.mxu0 0.0
        %3529 = vmatpush2.msra.mxu0 0.0
        %3530 = vmatprep.subr.mxu0 0.0
        %3531 = vmatpush2.msra.mxu0 0.0
        %3532 = vmatprep.subr.mxu0 0.0
        %3533 = vmatpush2.msra.mxu0 0.0
        %3534 = vmatprep.subr.mxu0 0.0
        %3535 = vmatpush2.msra.mxu0 0.0
        %3536 = vmatprep.subr.mxu0 0.0
        %3537 = vmatpush2.msra.mxu0 0.0
        %3538 = vmatprep.subr.mxu0 0.0
        %3539 = vmatpush2.msra.mxu0 0.0
        %3540 = vmatprep.subr.mxu0 0.0
        %3541 = vmatpush2.msra.mxu0 0.0
        %3542 = vmatprep.subr.mxu0 0.0
        %3543 = vmatpush2.msra.mxu0 0.0
        %3544 = vmatprep.subr.mxu0 0.0
        %3545 = vmatpush2.msra.mxu0 0.0
        %3546 = vmatprep.mubr.f32.mxu0 0.0
        %3547 = vmatmul.mubr.f32.gmra.mxu0 %v3477
        %v3548 = vpop.f32.mrf.mxu0
        %v3549 = vadd.f32 0.0, %v3548
        %v3550 = vpop.f32.mrf.mxu0
        %3551 = vdwg.mxu0
        %s3552 = scalar_lea.vmem %s55, 16
        %v3553 = vld [vmem:[%s3552] sm:$0xff]
        %v3554 = vld [vmem:[%s3552 + $0x8] sm:$0xff]
        %v3556 = vsel %vm1956, %v3549, 0
        %3558 = vmatprep.subr.mxu0 0.0
        %3559 = vmatpush1.msra.mxu0 0.0
        %3560 = vmatprep.subr.mxu0 0.0
        %3561 = vmatpush1.msra.mxu0 0.0
        %3562 = vmatprep.subr.mxu0 0.0
        %3563 = vmatpush1.msra.mxu0 0.0
        %3564 = vmatprep.subr.mxu0 0.0
        %3565 = vmatpush1.msra.mxu0 0.0
        %3566 = vmatprep.subr.mxu0 0.0
        %3567 = vmatpush1.msra.mxu0 0.0
        %3568 = vmatprep.subr.mxu0 0.0
        %3569 = vmatpush1.msra.mxu0 0.0
        %3570 = vmatprep.subr.mxu0 0.0
        %3571 = vmatpush1.msra.mxu0 0.0
        %3572 = vmatprep.subr.mxu0 0.0
        %3573 = vmatpush1.msra.mxu0 0.0
        %3574 = vmatprep.subr.mxu0 0.0
        %3575 = vmatpush1.msra.mxu0 0.0
        %3576 = vmatprep.subr.mxu0 0.0
        %3577 = vmatpush1.msra.mxu0 0.0
        %3578 = vmatprep.subr.mxu0 0.0
        %3579 = vmatpush1.msra.mxu0 0.0
        %3580 = vmatprep.subr.mxu0 0.0
        %3581 = vmatpush1.msra.mxu0 0.0
        %3582 = vmatprep.subr.mxu0 0.0
        %3583 = vmatpush1.msra.mxu0 0.0
        %3584 = vmatprep.subr.mxu0 0.0
        %3585 = vmatpush1.msra.mxu0 0.0
        %3586 = vmatprep.subr.mxu0 0.0
        %3587 = vmatpush1.msra.mxu0 %v3554
        %3588 = vmatprep.subr.mxu0 0.0
        %3589 = vmatpush1.msra.mxu0 %v3553
        %3590 = vmatprep.subr.mxu0 0.0
        %3591 = vmatpush2.msra.mxu0 0.0
        %3592 = vmatprep.subr.mxu0 0.0
        %3593 = vmatpush2.msra.mxu0 0.0
        %3594 = vmatprep.subr.mxu0 0.0
        %3595 = vmatpush2.msra.mxu0 0.0
        %3596 = vmatprep.subr.mxu0 0.0
        %3597 = vmatpush2.msra.mxu0 0.0
        %3598 = vmatprep.subr.mxu0 0.0
        %3599 = vmatpush2.msra.mxu0 0.0
        %3600 = vmatprep.subr.mxu0 0.0
        %3601 = vmatpush2.msra.mxu0 0.0
        %3602 = vmatprep.subr.mxu0 0.0
        %3603 = vmatpush2.msra.mxu0 0.0
        %3604 = vmatprep.subr.mxu0 0.0
        %3605 = vmatpush2.msra.mxu0 0.0
        %3606 = vmatprep.subr.mxu0 0.0
        %3607 = vmatpush2.msra.mxu0 0.0
        %3608 = vmatprep.subr.mxu0 0.0
        %3609 = vmatpush2.msra.mxu0 0.0
        %3610 = vmatprep.subr.mxu0 0.0
        %3611 = vmatpush2.msra.mxu0 0.0
        %3612 = vmatprep.subr.mxu0 0.0
        %3613 = vmatpush2.msra.mxu0 0.0
        %3614 = vmatprep.subr.mxu0 0.0
        %3615 = vmatpush2.msra.mxu0 0.0
        %3616 = vmatprep.subr.mxu0 0.0
        %3617 = vmatpush2.msra.mxu0 0.0
        %3618 = vmatprep.subr.mxu0 0.0
        %3619 = vmatpush2.msra.mxu0 0.0
        %3620 = vmatprep.subr.mxu0 0.0
        %3621 = vmatpush2.msra.mxu0 0.0
        %3622 = vmatprep.mubr.f32.mxu0 0.0
        %3623 = vmatmul.mubr.f32.gmra.mxu0 %v3556
        %v3624 = vpop.f32.mrf.mxu0
        %v3625 = vadd.f32 0.0, %v3624
        %v3626 = vpop.f32.mrf.mxu0
        %3627 = vdwg.mxu0
        %v3629 = vsel %vm1956, %v3139, 0
        %3631 = vmatprep.subr.mxu0 0.0
        %3632 = vmatpush1.msra.mxu0 0.0
        %3633 = vmatprep.subr.mxu0 0.0
        %3634 = vmatpush1.msra.mxu0 0.0
        %3635 = vmatprep.subr.mxu0 0.0
        %3636 = vmatpush1.msra.mxu0 0.0
        %3637 = vmatprep.subr.mxu0 0.0
        %3638 = vmatpush1.msra.mxu0 0.0
        %3639 = vmatprep.subr.mxu0 0.0
        %3640 = vmatpush1.msra.mxu0 0.0
        %3641 = vmatprep.subr.mxu0 0.0
        %3642 = vmatpush1.msra.mxu0 0.0
        %3643 = vmatprep.subr.mxu0 0.0
        %3644 = vmatpush1.msra.mxu0 0.0
        %3645 = vmatprep.subr.mxu0 0.0
        %3646 = vmatpush1.msra.mxu0 0.0
        %3647 = vmatprep.subr.mxu0 0.0
        %3648 = vmatpush1.msra.mxu0 0.0
        %3649 = vmatprep.subr.mxu0 0.0
        %3650 = vmatpush1.msra.mxu0 0.0
        %3651 = vmatprep.subr.mxu0 0.0
        %3652 = vmatpush1.msra.mxu0 0.0
        %3653 = vmatprep.subr.mxu0 0.0
        %3654 = vmatpush1.msra.mxu0 0.0
        %3655 = vmatprep.subr.mxu0 0.0
        %3656 = vmatpush1.msra.mxu0 0.0
        %3657 = vmatprep.subr.mxu0 0.0
        %3658 = vmatpush1.msra.mxu0 0.0
        %3659 = vmatprep.subr.mxu0 0.0
        %3660 = vmatpush1.msra.mxu0 %v3143
        %3661 = vmatprep.subr.mxu0 0.0
        %3662 = vmatpush1.msra.mxu0 %v3142
        %3663 = vmatprep.subr.mxu0 0.0
        %3664 = vmatpush2.msra.mxu0 0.0
        %3665 = vmatprep.subr.mxu0 0.0
        %3666 = vmatpush2.msra.mxu0 0.0
        %3667 = vmatprep.subr.mxu0 0.0
        %3668 = vmatpush2.msra.mxu0 0.0
        %3669 = vmatprep.subr.mxu0 0.0
        %3670 = vmatpush2.msra.mxu0 0.0
        %3671 = vmatprep.subr.mxu0 0.0
        %3672 = vmatpush2.msra.mxu0 0.0
        %3673 = vmatprep.subr.mxu0 0.0
        %3674 = vmatpush2.msra.mxu0 0.0
        %3675 = vmatprep.subr.mxu0 0.0
        %3676 = vmatpush2.msra.mxu0 0.0
        %3677 = vmatprep.subr.mxu0 0.0
        %3678 = vmatpush2.msra.mxu0 0.0
        %3679 = vmatprep.subr.mxu0 0.0
        %3680 = vmatpush2.msra.mxu0 0.0
        %3681 = vmatprep.subr.mxu0 0.0
        %3682 = vmatpush2.msra.mxu0 0.0
        %3683 = vmatprep.subr.mxu0 0.0
        %3684 = vmatpush2.msra.mxu0 0.0
        %3685 = vmatprep.subr.mxu0 0.0
        %3686 = vmatpush2.msra.mxu0 0.0
        %3687 = vmatprep.subr.mxu0 0.0
        %3688 = vmatpush2.msra.mxu0 0.0
        %3689 = vmatprep.subr.mxu0 0.0
        %3690 = vmatpush2.msra.mxu0 0.0
        %3691 = vmatprep.subr.mxu0 0.0
        %3692 = vmatpush2.msra.mxu0 0.0
        %3693 = vmatprep.subr.mxu0 0.0
        %3694 = vmatpush2.msra.mxu0 0.0
        %3695 = vmatprep.mubr.f32.mxu0 0.0
        %3696 = vmatmul.mubr.f32.gmra.mxu0 %v3629
        %v3697 = vpop.f32.mrf.mxu0
        %v3698 = vadd.f32 %v3625, %v3697
        %v3699 = vpop.f32.mrf.mxu0
        %3700 = vdwg.mxu0
        %v3702 = vlaneseq
        %v3703 = vshrl.u32 %v3702, 7
        %v3704 = vsub.s32 0, %v3703
        %v3705 = vrot.slane %v2729, %v3704
        %v3707 = vadd.f32 %v3698, %v3705
        %v3708 = vld [vmem:[%s73] sm:$0x1]
        %v3709 = vld [vmem:[%s59] sm:$0xff]
        %v3710 = vld [vmem:[%s59 + $0x8] sm:$0xff]
        %v3711 = vld [vmem:[%s59 + $0x10] sm:$0xff]
        %v3712 = vld [vmem:[%s59 + $0x18] sm:$0xff]
        %v3713 = vld [vmem:[%s61] sm:$0x1]
        %v3715 = vlaneseq
        %v3716 = vshrl.u32 %v3715, 7
        %v3717 = vsub.s32 0, %v3716
        %v3718 = vrot.slane %v3713, %v3717
        %3720 = vmatprep.subr.mxu0 0.0
        %3721 = vmatpush1.msra.mxu0 0.0
        %3722 = vmatprep.subr.mxu0 0.0
        %3723 = vmatpush1.msra.mxu0 0.0
        %3724 = vmatprep.subr.mxu0 0.0
        %3725 = vmatpush1.msra.mxu0 0.0
        %3726 = vmatprep.subr.mxu0 0.0
        %3727 = vmatpush1.msra.mxu0 0.0
        %3728 = vmatprep.subr.mxu0 0.0
        %3729 = vmatpush1.msra.mxu0 0.0
        %3730 = vmatprep.subr.mxu0 0.0
        %3731 = vmatpush1.msra.mxu0 0.0
        %3732 = vmatprep.subr.mxu0 0.0
        %3733 = vmatpush1.msra.mxu0 0.0
        %3734 = vmatprep.subr.mxu0 0.0
        %3735 = vmatpush1.msra.mxu0 0.0
        %3736 = vmatprep.subr.mxu0 0.0
        %3737 = vmatpush1.msra.mxu0 0.0
        %3738 = vmatprep.subr.mxu0 0.0
        %3739 = vmatpush1.msra.mxu0 0.0
        %3740 = vmatprep.subr.mxu0 0.0
        %3741 = vmatpush1.msra.mxu0 0.0
        %3742 = vmatprep.subr.mxu0 0.0
        %3743 = vmatpush1.msra.mxu0 0.0
        %3744 = vmatprep.subr.mxu0 0.0
        %3745 = vmatpush1.msra.mxu0 %v3712
        %3746 = vmatprep.subr.mxu0 0.0
        %3747 = vmatpush1.msra.mxu0 %v3711
        %3748 = vmatprep.subr.mxu0 0.0
        %3749 = vmatpush1.msra.mxu0 %v3710
        %3750 = vmatprep.subr.mxu0 0.0
        %3751 = vmatpush1.msra.mxu0 %v3709
        %3752 = vmatprep.subr.mxu0 0.0
        %3753 = vmatpush2.msra.mxu0 0.0
        %3754 = vmatprep.subr.mxu0 0.0
        %3755 = vmatpush2.msra.mxu0 0.0
        %3756 = vmatprep.subr.mxu0 0.0
        %3757 = vmatpush2.msra.mxu0 0.0
        %3758 = vmatprep.subr.mxu0 0.0
        %3759 = vmatpush2.msra.mxu0 0.0
        %3760 = vmatprep.subr.mxu0 0.0
        %3761 = vmatpush2.msra.mxu0 0.0
        %3762 = vmatprep.subr.mxu0 0.0
        %3763 = vmatpush2.msra.mxu0 0.0
        %3764 = vmatprep.subr.mxu0 0.0
        %3765 = vmatpush2.msra.mxu0 0.0
        %3766 = vmatprep.subr.mxu0 0.0
        %3767 = vmatpush2.msra.mxu0 0.0
        %3768 = vmatprep.subr.mxu0 0.0
        %3769 = vmatpush2.msra.mxu0 0.0
        %3770 = vmatprep.subr.mxu0 0.0
        %3771 = vmatpush2.msra.mxu0 0.0
        %3772 = vmatprep.subr.mxu0 0.0
        %3773 = vmatpush2.msra.mxu0 0.0
        %3774 = vmatprep.subr.mxu0 0.0
        %3775 = vmatpush2.msra.mxu0 0.0
        %3776 = vmatprep.subr.mxu0 0.0
        %3777 = vmatpush2.msra.mxu0 0.0
        %3778 = vmatprep.subr.mxu0 0.0
        %3779 = vmatpush2.msra.mxu0 0.0
        %3780 = vmatprep.subr.mxu0 0.0
        %3781 = vmatpush2.msra.mxu0 0.0
        %3782 = vmatprep.subr.mxu0 0.0
        %3783 = vmatpush2.msra.mxu0 0.0
        %3784 = vmatprep.mubr.f32.mxu0 0.0
        %3785 = vmatmul.mubr.f32.gmra.mxu0 %v2742
        %v3786 = vpop.f32.mrf.mxu0
        %v3787 = vadd.f32 %v3718, %v3786
        %v3788 = vpop.f32.mrf.mxu0
        %3789 = vdwg.mxu0
        %v3790 = vld [vmem:[%s63] sm:$0xff]
        %v3791 = vld [vmem:[%s63 + $0x8] sm:$0xff]
        %v3792 = vld [vmem:[%s63 + $0x10] sm:$0xff]
        %v3793 = vld [vmem:[%s65] sm:$0x1]
        %v3795 = vlaneseq
        %v3796 = vshrl.u32 %v3795, 7
        %v3797 = vsub.s32 0, %v3796
        %v3798 = vrot.slane %v3793, %v3797
        %vm3800 = vcmask 195584
        %v3802 = vsel %vm3800, %v1602, 0
        %v3805 = vsel %vm3800, %v1603, 0
        %3807 = vmatprep.subr.mxu0 0.0
        %3808 = vmatpush1.msra.mxu0 0.0
        %3809 = vmatprep.subr.mxu0 0.0
        %3810 = vmatpush1.msra.mxu0 0.0
        %3811 = vmatprep.subr.mxu0 0.0
        %3812 = vmatpush1.msra.mxu0 0.0
        %3813 = vmatprep.subr.mxu0 0.0
        %3814 = vmatpush1.msra.mxu0 0.0
        %3815 = vmatprep.subr.mxu0 0.0
        %3816 = vmatpush1.msra.mxu0 0.0
        %3817 = vmatprep.subr.mxu0 0.0
        %3818 = vmatpush1.msra.mxu0 0.0
        %3819 = vmatprep.subr.mxu0 0.0
        %3820 = vmatpush1.msra.mxu0 0.0
        %3821 = vmatprep.subr.mxu0 0.0
        %3822 = vmatpush1.msra.mxu0 0.0
        %3823 = vmatprep.subr.mxu0 0.0
        %3824 = vmatpush1.msra.mxu0 0.0
        %3825 = vmatprep.subr.mxu0 0.0
        %3826 = vmatpush1.msra.mxu0 0.0
        %3827 = vmatprep.subr.mxu0 0.0
        %3828 = vmatpush1.msra.mxu0 0.0
        %3829 = vmatprep.subr.mxu0 0.0
        %3830 = vmatpush1.msra.mxu0 0.0
        %3831 = vmatprep.subr.mxu0 0.0
        %3832 = vmatpush1.msra.mxu0 0.0
        %3833 = vmatprep.subr.mxu0 0.0
        %3834 = vmatpush1.msra.mxu0 %v3792
        %3835 = vmatprep.subr.mxu0 0.0
        %3836 = vmatpush1.msra.mxu0 %v3791
        %3837 = vmatprep.subr.mxu0 0.0
        %3838 = vmatpush1.msra.mxu0 %v3790
        %3839 = vmatprep.subr.mxu0 0.0
        %3840 = vmatpush2.msra.mxu0 0.0
        %3841 = vmatprep.subr.mxu0 0.0
        %3842 = vmatpush2.msra.mxu0 0.0
        %3843 = vmatprep.subr.mxu0 0.0
        %3844 = vmatpush2.msra.mxu0 0.0
        %3845 = vmatprep.subr.mxu0 0.0
        %3846 = vmatpush2.msra.mxu0 0.0
        %3847 = vmatprep.subr.mxu0 0.0
        %3848 = vmatpush2.msra.mxu0 0.0
        %3849 = vmatprep.subr.mxu0 0.0
        %3850 = vmatpush2.msra.mxu0 0.0
        %3851 = vmatprep.subr.mxu0 0.0
        %3852 = vmatpush2.msra.mxu0 0.0
        %3853 = vmatprep.subr.mxu0 0.0
        %3854 = vmatpush2.msra.mxu0 0.0
        %3855 = vmatprep.subr.mxu0 0.0
        %3856 = vmatpush2.msra.mxu0 0.0
        %3857 = vmatprep.subr.mxu0 0.0
        %3858 = vmatpush2.msra.mxu0 0.0
        %3859 = vmatprep.subr.mxu0 0.0
        %3860 = vmatpush2.msra.mxu0 0.0
        %3861 = vmatprep.subr.mxu0 0.0
        %3862 = vmatpush2.msra.mxu0 0.0
        %3863 = vmatprep.subr.mxu0 0.0
        %3864 = vmatpush2.msra.mxu0 0.0
        %3865 = vmatprep.subr.mxu0 0.0
        %3866 = vmatpush2.msra.mxu0 0.0
        %3867 = vmatprep.subr.mxu0 0.0
        %3868 = vmatpush2.msra.mxu0 0.0
        %3869 = vmatprep.subr.mxu0 0.0
        %3870 = vmatpush2.msra.mxu0 0.0
        %3871 = vmatprep.mubr.f32.mxu0 0.0
        %3872 = vmatmul.mubr.f32.gmra.mxu0 %v3802
        %v3873 = vpop.f32.mrf.mxu0
        %v3874 = vadd.f32 %v3798, %v3873
        %v3875 = vpop.f32.mrf.mxu0
        %3876 = vmatprep.mubr.f32.mxu0 0.0
        %3877 = vmatmul.mubr.f32.gmra.mxu0 %v3805
        %v3878 = vpop.f32.mrf.mxu0
        %v3879 = vadd.f32 %v3798, %v3878
        %v3880 = vpop.f32.mrf.mxu0
        %3881 = vdwg.mxu0
        %v3882 = vld [vmem:[%s67] sm:$0xff]
        %v3883 = vld [vmem:[%s67 + $0x8] sm:$0xff]
        %v3884 = vld [vmem:[%s67 + $0x10] sm:$0xff]
        %v3885 = vld [vmem:[%s69] sm:$0x1]
        %v3887 = vlaneseq
        %v3888 = vshrl.u32 %v3887, 7
        %v3889 = vsub.s32 0, %v3888
        %v3890 = vrot.slane %v3885, %v3889
        %3892 = vmatprep.subr.mxu0 0.0
        %3893 = vmatpush1.msra.mxu0 0.0
        %3894 = vmatprep.subr.mxu0 0.0
        %3895 = vmatpush1.msra.mxu0 0.0
        %3896 = vmatprep.subr.mxu0 0.0
        %3897 = vmatpush1.msra.mxu0 0.0
        %3898 = vmatprep.subr.mxu0 0.0
        %3899 = vmatpush1.msra.mxu0 0.0
        %3900 = vmatprep.subr.mxu0 0.0
        %3901 = vmatpush1.msra.mxu0 0.0
        %3902 = vmatprep.subr.mxu0 0.0
        %3903 = vmatpush1.msra.mxu0 0.0
        %3904 = vmatprep.subr.mxu0 0.0
        %3905 = vmatpush1.msra.mxu0 0.0
        %3906 = vmatprep.subr.mxu0 0.0
        %3907 = vmatpush1.msra.mxu0 0.0
        %3908 = vmatprep.subr.mxu0 0.0
        %3909 = vmatpush1.msra.mxu0 0.0
        %3910 = vmatprep.subr.mxu0 0.0
        %3911 = vmatpush1.msra.mxu0 0.0
        %3912 = vmatprep.subr.mxu0 0.0
        %3913 = vmatpush1.msra.mxu0 0.0
        %3914 = vmatprep.subr.mxu0 0.0
        %3915 = vmatpush1.msra.mxu0 0.0
        %3916 = vmatprep.subr.mxu0 0.0
        %3917 = vmatpush1.msra.mxu0 0.0
        %3918 = vmatprep.subr.mxu0 0.0
        %3919 = vmatpush1.msra.mxu0 %v3884
        %3920 = vmatprep.subr.mxu0 0.0
        %3921 = vmatpush1.msra.mxu0 %v3883
        %3922 = vmatprep.subr.mxu0 0.0
        %3923 = vmatpush1.msra.mxu0 %v3882
        %3924 = vmatprep.subr.mxu0 0.0
        %3925 = vmatpush2.msra.mxu0 0.0
        %3926 = vmatprep.subr.mxu0 0.0
        %3927 = vmatpush2.msra.mxu0 0.0
        %3928 = vmatprep.subr.mxu0 0.0
        %3929 = vmatpush2.msra.mxu0 0.0
        %3930 = vmatprep.subr.mxu0 0.0
        %3931 = vmatpush2.msra.mxu0 0.0
        %3932 = vmatprep.subr.mxu0 0.0
        %3933 = vmatpush2.msra.mxu0 0.0
        %3934 = vmatprep.subr.mxu0 0.0
        %3935 = vmatpush2.msra.mxu0 0.0
        %3936 = vmatprep.subr.mxu0 0.0
        %3937 = vmatpush2.msra.mxu0 0.0
        %3938 = vmatprep.subr.mxu0 0.0
        %3939 = vmatpush2.msra.mxu0 0.0
        %3940 = vmatprep.subr.mxu0 0.0
        %3941 = vmatpush2.msra.mxu0 0.0
        %3942 = vmatprep.subr.mxu0 0.0
        %3943 = vmatpush2.msra.mxu0 0.0
        %3944 = vmatprep.subr.mxu0 0.0
        %3945 = vmatpush2.msra.mxu0 0.0
        %3946 = vmatprep.subr.mxu0 0.0
        %3947 = vmatpush2.msra.mxu0 0.0
        %3948 = vmatprep.subr.mxu0 0.0
        %3949 = vmatpush2.msra.mxu0 0.0
        %3950 = vmatprep.subr.mxu0 0.0
        %3951 = vmatpush2.msra.mxu0 0.0
        %3952 = vmatprep.subr.mxu0 0.0
        %3953 = vmatpush2.msra.mxu0 0.0
        %3954 = vmatprep.subr.mxu0 0.0
        %3955 = vmatpush2.msra.mxu0 0.0
        %3956 = vmatprep.mubr.f32.mxu0 0.0
        %3957 = vmatmul.mubr.f32.gmra.mxu0 %v3802
        %v3958 = vpop.f32.mrf.mxu0
        %v3959 = vadd.f32 %v3890, %v3958
        %v3960 = vpop.f32.mrf.mxu0
        %3961 = vmatprep.mubr.f32.mxu0 0.0
        %3962 = vmatmul.mubr.f32.gmra.mxu0 %v3805
        %v3963 = vpop.f32.mrf.mxu0
        %v3964 = vadd.f32 %v3890, %v3963
        %v3965 = vpop.f32.mrf.mxu0
        %3966 = vdwg.mxu0
        %v3968 = vsel %vm1956, %v3787, 0
        %v3971 = vsel %vm1956, %v3874, 0
        %v3974 = vsel %vm1956, %v3879, 0
        %3976 = vmatprep.subr.mxu0 0.0
        %3977 = vmatpush1.xpose.msra.mxu0 0.0
        %3978 = vmatprep.subr.mxu0 0.0
        %3979 = vmatpush1.xpose.msra.mxu0 0.0
        %3980 = vmatprep.subr.mxu0 0.0
        %3981 = vmatpush1.xpose.msra.mxu0 0.0
        %3982 = vmatprep.subr.mxu0 0.0
        %3983 = vmatpush1.xpose.msra.mxu0 0.0
        %3984 = vmatprep.subr.mxu0 0.0
        %3985 = vmatpush1.xpose.msra.mxu0 0.0
        %3986 = vmatprep.subr.mxu0 0.0
        %3987 = vmatpush1.xpose.msra.mxu0 0.0
        %3988 = vmatprep.subr.mxu0 0.0
        %3989 = vmatpush1.xpose.msra.mxu0 0.0
        %3990 = vmatprep.subr.mxu0 0.0
        %3991 = vmatpush1.xpose.msra.mxu0 0.0
        %3992 = vmatprep.subr.mxu0 0.0
        %3993 = vmatpush1.xpose.msra.mxu0 0.0
        %3994 = vmatprep.subr.mxu0 0.0
        %3995 = vmatpush1.xpose.msra.mxu0 0.0
        %3996 = vmatprep.subr.mxu0 0.0
        %3997 = vmatpush1.xpose.msra.mxu0 0.0
        %3998 = vmatprep.subr.mxu0 0.0
        %3999 = vmatpush1.xpose.msra.mxu0 0.0
        %4000 = vmatprep.subr.mxu0 0.0
        %4001 = vmatpush1.xpose.msra.mxu0 0.0
        %4002 = vmatprep.subr.mxu0 0.0
        %4003 = vmatpush1.xpose.msra.mxu0 0.0
        %4004 = vmatprep.subr.mxu0 0.0
        %4005 = vmatpush1.xpose.msra.mxu0 %v3974
        %4006 = vmatprep.subr.mxu0 0.0
        %4007 = vmatpush1.xpose.msra.mxu0 %v3971
        %4008 = vmatprep.subr.mxu0 0.0
        %4009 = vmatpush2.xpose.msra.mxu0 0.0
        %4010 = vmatprep.subr.mxu0 0.0
        %4011 = vmatpush2.xpose.msra.mxu0 0.0
        %4012 = vmatprep.subr.mxu0 0.0
        %4013 = vmatpush2.xpose.msra.mxu0 0.0
        %4014 = vmatprep.subr.mxu0 0.0
        %4015 = vmatpush2.xpose.msra.mxu0 0.0
        %4016 = vmatprep.subr.mxu0 0.0
        %4017 = vmatpush2.xpose.msra.mxu0 0.0
        %4018 = vmatprep.subr.mxu0 0.0
        %4019 = vmatpush2.xpose.msra.mxu0 0.0
        %4020 = vmatprep.subr.mxu0 0.0
        %4021 = vmatpush2.xpose.msra.mxu0 0.0
        %4022 = vmatprep.subr.mxu0 0.0
        %4023 = vmatpush2.xpose.msra.mxu0 0.0
        %4024 = vmatprep.subr.mxu0 0.0
        %4025 = vmatpush2.xpose.msra.mxu0 0.0
        %4026 = vmatprep.subr.mxu0 0.0
        %4027 = vmatpush2.xpose.msra.mxu0 0.0
        %4028 = vmatprep.subr.mxu0 0.0
        %4029 = vmatpush2.xpose.msra.mxu0 0.0
        %4030 = vmatprep.subr.mxu0 0.0
        %4031 = vmatpush2.xpose.msra.mxu0 0.0
        %4032 = vmatprep.subr.mxu0 0.0
        %4033 = vmatpush2.xpose.msra.mxu0 0.0
        %4034 = vmatprep.subr.mxu0 0.0
        %4035 = vmatpush2.xpose.msra.mxu0 0.0
        %4036 = vmatprep.subr.mxu0 0.0
        %4037 = vmatpush2.xpose.msra.mxu0 0.0
        %4038 = vmatprep.subr.mxu0 0.0
        %4039 = vmatpush2.xpose.msra.mxu0 0.0
        %4040 = vmatprep.mubr.f32.mxu0 0.0
        %4041 = vmatmul.mubr.f32.gmra.mxu0 %v3968
        %v4042 = vpop.f32.mrf.mxu0
        %v4043 = vadd.f32 %v1614, %v4042
        %v4044 = vpop.f32.mrf.mxu0
        %4045 = vdwg.mxu0
        %vm4046 = vcmask 80896
        %v4047 = vsel %vm4046, %v4043, -inf
        %4048 = vmax.xlane.f32.xlu0 %v4047
        %v4049 = vpop.xlane.xlu0 %4048
        %v4050 = vsub.f32 %v4043, %v4049
        %v4051 = vmul.f32 %v4050, 1.442695
        %v4052 = vpow.pop %v4051
        %v4053 = vsel %vm4046, %v4052, 0.0
        %4054 = vadd.xlane.f32.xlu0 %v4053
        %v4055 = vpop.xlane.xlu0 %4054
        %v4056 = vrcp.pop %v4055
        %v4057 = vmul.f32 %v4052, %v4056
        %v4059 = vsel %vm4046, %v4057, 0
        %vm4061 = vcmask 1041408
        %v4063 = vsel %vm4061, %v3964, 0
        %4065 = vmatprep.subr.mxu0 0.0
        %4066 = vmatpush1.msra.mxu0 0.0
        %4067 = vmatprep.subr.mxu0 0.0
        %4068 = vmatpush1.msra.mxu0 0.0
        %4069 = vmatprep.subr.mxu0 0.0
        %4070 = vmatpush1.msra.mxu0 0.0
        %4071 = vmatprep.subr.mxu0 0.0
        %4072 = vmatpush1.msra.mxu0 0.0
        %4073 = vmatprep.subr.mxu0 0.0
        %4074 = vmatpush1.msra.mxu0 0.0
        %4075 = vmatprep.subr.mxu0 0.0
        %4076 = vmatpush1.msra.mxu0 0.0
        %4077 = vmatprep.subr.mxu0 0.0
        %4078 = vmatpush1.msra.mxu0 0.0
        %4079 = vmatprep.subr.mxu0 0.0
        %4080 = vmatpush1.msra.mxu0 0.0
        %4081 = vmatprep.subr.mxu0 0.0
        %4082 = vmatpush1.msra.mxu0 0.0
        %4083 = vmatprep.subr.mxu0 0.0
        %4084 = vmatpush1.msra.mxu0 0.0
        %4085 = vmatprep.subr.mxu0 0.0
        %4086 = vmatpush1.msra.mxu0 0.0
        %4087 = vmatprep.subr.mxu0 0.0
        %4088 = vmatpush1.msra.mxu0 0.0
        %4089 = vmatprep.subr.mxu0 0.0
        %4090 = vmatpush1.msra.mxu0 0.0
        %4091 = vmatprep.subr.mxu0 0.0
        %4092 = vmatpush1.msra.mxu0 0.0
        %4093 = vmatprep.subr.mxu0 0.0
        %4094 = vmatpush1.msra.mxu0 %v4063
        %4095 = vmatprep.subr.mxu0 0.0
        %4096 = vmatpush1.msra.mxu0 %v3959
        %4097 = vmatprep.subr.mxu0 0.0
        %4098 = vmatpush2.msra.mxu0 0.0
        %4099 = vmatprep.subr.mxu0 0.0
        %4100 = vmatpush2.msra.mxu0 0.0
        %4101 = vmatprep.subr.mxu0 0.0
        %4102 = vmatpush2.msra.mxu0 0.0
        %4103 = vmatprep.subr.mxu0 0.0
        %4104 = vmatpush2.msra.mxu0 0.0
        %4105 = vmatprep.subr.mxu0 0.0
        %4106 = vmatpush2.msra.mxu0 0.0
        %4107 = vmatprep.subr.mxu0 0.0
        %4108 = vmatpush2.msra.mxu0 0.0
        %4109 = vmatprep.subr.mxu0 0.0
        %4110 = vmatpush2.msra.mxu0 0.0
        %4111 = vmatprep.subr.mxu0 0.0
        %4112 = vmatpush2.msra.mxu0 0.0
        %4113 = vmatprep.subr.mxu0 0.0
        %4114 = vmatpush2.msra.mxu0 0.0
        %4115 = vmatprep.subr.mxu0 0.0
        %4116 = vmatpush2.msra.mxu0 0.0
        %4117 = vmatprep.subr.mxu0 0.0
        %4118 = vmatpush2.msra.mxu0 0.0
        %4119 = vmatprep.subr.mxu0 0.0
        %4120 = vmatpush2.msra.mxu0 0.0
        %4121 = vmatprep.subr.mxu0 0.0
        %4122 = vmatpush2.msra.mxu0 0.0
        %4123 = vmatprep.subr.mxu0 0.0
        %4124 = vmatpush2.msra.mxu0 0.0
        %4125 = vmatprep.subr.mxu0 0.0
        %4126 = vmatpush2.msra.mxu0 0.0
        %4127 = vmatprep.subr.mxu0 0.0
        %4128 = vmatpush2.msra.mxu0 0.0
        %4129 = vmatprep.mubr.f32.mxu0 0.0
        %4130 = vmatmul.mubr.f32.gmra.mxu0 %v4059
        %v4131 = vpop.f32.mrf.mxu0
        %v4132 = vadd.f32 0.0, %v4131
        %v4133 = vpop.f32.mrf.mxu0
        %4134 = vdwg.mxu0
        %v4135 = vld [vmem:[%s71] sm:$0xff]
        %v4136 = vld [vmem:[%s71 + $0x8] sm:$0xff]
        %s4137 = scalar_lea.vmem %s59, 32
        %v4138 = vld [vmem:[%s4137] sm:$0xff]
        %v4139 = vld [vmem:[%s4137 + $0x8] sm:$0xff]
        %v4140 = vld [vmem:[%s4137 + $0x10] sm:$0xff]
        %v4141 = vld [vmem:[%s4137 + $0x18] sm:$0xff]
        %s4142 = scalar_lea.vmem %s61, 1
        %v4143 = vld [vmem:[%s4142] sm:$0x1]
        %v4145 = vlaneseq
        %v4146 = vshrl.u32 %v4145, 7
        %v4147 = vsub.s32 0, %v4146
        %v4148 = vrot.slane %v4143, %v4147
        %4150 = vmatprep.subr.mxu0 0.0
        %4151 = vmatpush1.msra.mxu0 0.0
        %4152 = vmatprep.subr.mxu0 0.0
        %4153 = vmatpush1.msra.mxu0 0.0
        %4154 = vmatprep.subr.mxu0 0.0
        %4155 = vmatpush1.msra.mxu0 0.0
        %4156 = vmatprep.subr.mxu0 0.0
        %4157 = vmatpush1.msra.mxu0 0.0
        %4158 = vmatprep.subr.mxu0 0.0
        %4159 = vmatpush1.msra.mxu0 0.0
        %4160 = vmatprep.subr.mxu0 0.0
        %4161 = vmatpush1.msra.mxu0 0.0
        %4162 = vmatprep.subr.mxu0 0.0
        %4163 = vmatpush1.msra.mxu0 0.0
        %4164 = vmatprep.subr.mxu0 0.0
        %4165 = vmatpush1.msra.mxu0 0.0
        %4166 = vmatprep.subr.mxu0 0.0
        %4167 = vmatpush1.msra.mxu0 0.0
        %4168 = vmatprep.subr.mxu0 0.0
        %4169 = vmatpush1.msra.mxu0 0.0
        %4170 = vmatprep.subr.mxu0 0.0
        %4171 = vmatpush1.msra.mxu0 0.0
        %4172 = vmatprep.subr.mxu0 0.0
        %4173 = vmatpush1.msra.mxu0 0.0
        %4174 = vmatprep.subr.mxu0 0.0
        %4175 = vmatpush1.msra.mxu0 %v4141
        %4176 = vmatprep.subr.mxu0 0.0
        %4177 = vmatpush1.msra.mxu0 %v4140
        %4178 = vmatprep.subr.mxu0 0.0
        %4179 = vmatpush1.msra.mxu0 %v4139
        %4180 = vmatprep.subr.mxu0 0.0
        %4181 = vmatpush1.msra.mxu0 %v4138
        %4182 = vmatprep.subr.mxu0 0.0
        %4183 = vmatpush2.msra.mxu0 0.0
        %4184 = vmatprep.subr.mxu0 0.0
        %4185 = vmatpush2.msra.mxu0 0.0
        %4186 = vmatprep.subr.mxu0 0.0
        %4187 = vmatpush2.msra.mxu0 0.0
        %4188 = vmatprep.subr.mxu0 0.0
        %4189 = vmatpush2.msra.mxu0 0.0
        %4190 = vmatprep.subr.mxu0 0.0
        %4191 = vmatpush2.msra.mxu0 0.0
        %4192 = vmatprep.subr.mxu0 0.0
        %4193 = vmatpush2.msra.mxu0 0.0
        %4194 = vmatprep.subr.mxu0 0.0
        %4195 = vmatpush2.msra.mxu0 0.0
        %4196 = vmatprep.subr.mxu0 0.0
        %4197 = vmatpush2.msra.mxu0 0.0
        %4198 = vmatprep.subr.mxu0 0.0
        %4199 = vmatpush2.msra.mxu0 0.0
        %4200 = vmatprep.subr.mxu0 0.0
        %4201 = vmatpush2.msra.mxu0 0.0
        %4202 = vmatprep.subr.mxu0 0.0
        %4203 = vmatpush2.msra.mxu0 0.0
        %4204 = vmatprep.subr.mxu0 0.0
        %4205 = vmatpush2.msra.mxu0 0.0
        %4206 = vmatprep.subr.mxu0 0.0
        %4207 = vmatpush2.msra.mxu0 0.0
        %4208 = vmatprep.subr.mxu0 0.0
        %4209 = vmatpush2.msra.mxu0 0.0
        %4210 = vmatprep.subr.mxu0 0.0
        %4211 = vmatpush2.msra.mxu0 0.0
        %4212 = vmatprep.subr.mxu0 0.0
        %4213 = vmatpush2.msra.mxu0 0.0
        %4214 = vmatprep.mubr.f32.mxu0 0.0
        %4215 = vmatmul.mubr.f32.gmra.mxu0 %v2742
        %v4216 = vpop.f32.mrf.mxu0
        %v4217 = vadd.f32 %v4148, %v4216
        %v4218 = vpop.f32.mrf.mxu0
        %4219 = vdwg.mxu0
        %s4220 = scalar_lea.vmem %s63, 24
        %v4221 = vld [vmem:[%s4220] sm:$0xff]
        %v4222 = vld [vmem:[%s4220 + $0x8] sm:$0xff]
        %v4223 = vld [vmem:[%s4220 + $0x10] sm:$0xff]
        %s4224 = scalar_lea.vmem %s65, 1
        %v4225 = vld [vmem:[%s4224] sm:$0x1]
        %v4227 = vlaneseq
        %v4228 = vshrl.u32 %v4227, 7
        %v4229 = vsub.s32 0, %v4228
        %v4230 = vrot.slane %v4225, %v4229
        %4232 = vmatprep.subr.mxu0 0.0
        %4233 = vmatpush1.msra.mxu0 0.0
        %4234 = vmatprep.subr.mxu0 0.0
        %4235 = vmatpush1.msra.mxu0 0.0
        %4236 = vmatprep.subr.mxu0 0.0
        %4237 = vmatpush1.msra.mxu0 0.0
        %4238 = vmatprep.subr.mxu0 0.0
        %4239 = vmatpush1.msra.mxu0 0.0
        %4240 = vmatprep.subr.mxu0 0.0
        %4241 = vmatpush1.msra.mxu0 0.0
        %4242 = vmatprep.subr.mxu0 0.0
        %4243 = vmatpush1.msra.mxu0 0.0
        %4244 = vmatprep.subr.mxu0 0.0
        %4245 = vmatpush1.msra.mxu0 0.0
        %4246 = vmatprep.subr.mxu0 0.0
        %4247 = vmatpush1.msra.mxu0 0.0
        %4248 = vmatprep.subr.mxu0 0.0
        %4249 = vmatpush1.msra.mxu0 0.0
        %4250 = vmatprep.subr.mxu0 0.0
        %4251 = vmatpush1.msra.mxu0 0.0
        %4252 = vmatprep.subr.mxu0 0.0
        %4253 = vmatpush1.msra.mxu0 0.0
        %4254 = vmatprep.subr.mxu0 0.0
        %4255 = vmatpush1.msra.mxu0 0.0
        %4256 = vmatprep.subr.mxu0 0.0
        %4257 = vmatpush1.msra.mxu0 0.0
        %4258 = vmatprep.subr.mxu0 0.0
        %4259 = vmatpush1.msra.mxu0 %v4223
        %4260 = vmatprep.subr.mxu0 0.0
        %4261 = vmatpush1.msra.mxu0 %v4222
        %4262 = vmatprep.subr.mxu0 0.0
        %4263 = vmatpush1.msra.mxu0 %v4221
        %4264 = vmatprep.subr.mxu0 0.0
        %4265 = vmatpush2.msra.mxu0 0.0
        %4266 = vmatprep.subr.mxu0 0.0
        %4267 = vmatpush2.msra.mxu0 0.0
        %4268 = vmatprep.subr.mxu0 0.0
        %4269 = vmatpush2.msra.mxu0 0.0
        %4270 = vmatprep.subr.mxu0 0.0
        %4271 = vmatpush2.msra.mxu0 0.0
        %4272 = vmatprep.subr.mxu0 0.0
        %4273 = vmatpush2.msra.mxu0 0.0
        %4274 = vmatprep.subr.mxu0 0.0
        %4275 = vmatpush2.msra.mxu0 0.0
        %4276 = vmatprep.subr.mxu0 0.0
        %4277 = vmatpush2.msra.mxu0 0.0
        %4278 = vmatprep.subr.mxu0 0.0
        %4279 = vmatpush2.msra.mxu0 0.0
        %4280 = vmatprep.subr.mxu0 0.0
        %4281 = vmatpush2.msra.mxu0 0.0
        %4282 = vmatprep.subr.mxu0 0.0
        %4283 = vmatpush2.msra.mxu0 0.0
        %4284 = vmatprep.subr.mxu0 0.0
        %4285 = vmatpush2.msra.mxu0 0.0
        %4286 = vmatprep.subr.mxu0 0.0
        %4287 = vmatpush2.msra.mxu0 0.0
        %4288 = vmatprep.subr.mxu0 0.0
        %4289 = vmatpush2.msra.mxu0 0.0
        %4290 = vmatprep.subr.mxu0 0.0
        %4291 = vmatpush2.msra.mxu0 0.0
        %4292 = vmatprep.subr.mxu0 0.0
        %4293 = vmatpush2.msra.mxu0 0.0
        %4294 = vmatprep.subr.mxu0 0.0
        %4295 = vmatpush2.msra.mxu0 0.0
        %4296 = vmatprep.mubr.f32.mxu0 0.0
        %4297 = vmatmul.mubr.f32.gmra.mxu0 %v3802
        %v4298 = vpop.f32.mrf.mxu0
        %v4299 = vadd.f32 %v4230, %v4298
        %v4300 = vpop.f32.mrf.mxu0
        %4301 = vmatprep.mubr.f32.mxu0 0.0
        %4302 = vmatmul.mubr.f32.gmra.mxu0 %v3805
        %v4303 = vpop.f32.mrf.mxu0
        %v4304 = vadd.f32 %v4230, %v4303
        %v4305 = vpop.f32.mrf.mxu0
        %4306 = vdwg.mxu0
        %s4307 = scalar_lea.vmem %s67, 24
        %v4308 = vld [vmem:[%s4307] sm:$0xff]
        %v4309 = vld [vmem:[%s4307 + $0x8] sm:$0xff]
        %v4310 = vld [vmem:[%s4307 + $0x10] sm:$0xff]
        %s4311 = scalar_lea.vmem %s69, 1
        %v4312 = vld [vmem:[%s4311] sm:$0x1]
        %v4314 = vlaneseq
        %v4315 = vshrl.u32 %v4314, 7
        %v4316 = vsub.s32 0, %v4315
        %v4317 = vrot.slane %v4312, %v4316
        %4319 = vmatprep.subr.mxu0 0.0
        %4320 = vmatpush1.msra.mxu0 0.0
        %4321 = vmatprep.subr.mxu0 0.0
        %4322 = vmatpush1.msra.mxu0 0.0
        %4323 = vmatprep.subr.mxu0 0.0
        %4324 = vmatpush1.msra.mxu0 0.0
        %4325 = vmatprep.subr.mxu0 0.0
        %4326 = vmatpush1.msra.mxu0 0.0
        %4327 = vmatprep.subr.mxu0 0.0
        %4328 = vmatpush1.msra.mxu0 0.0
        %4329 = vmatprep.subr.mxu0 0.0
        %4330 = vmatpush1.msra.mxu0 0.0
        %4331 = vmatprep.subr.mxu0 0.0
        %4332 = vmatpush1.msra.mxu0 0.0
        %4333 = vmatprep.subr.mxu0 0.0
        %4334 = vmatpush1.msra.mxu0 0.0
        %4335 = vmatprep.subr.mxu0 0.0
        %4336 = vmatpush1.msra.mxu0 0.0
        %4337 = vmatprep.subr.mxu0 0.0
        %4338 = vmatpush1.msra.mxu0 0.0
        %4339 = vmatprep.subr.mxu0 0.0
        %4340 = vmatpush1.msra.mxu0 0.0
        %4341 = vmatprep.subr.mxu0 0.0
        %4342 = vmatpush1.msra.mxu0 0.0
        %4343 = vmatprep.subr.mxu0 0.0
        %4344 = vmatpush1.msra.mxu0 0.0
        %4345 = vmatprep.subr.mxu0 0.0
        %4346 = vmatpush1.msra.mxu0 %v4310
        %4347 = vmatprep.subr.mxu0 0.0
        %4348 = vmatpush1.msra.mxu0 %v4309
        %4349 = vmatprep.subr.mxu0 0.0
        %4350 = vmatpush1.msra.mxu0 %v4308
        %4351 = vmatprep.subr.mxu0 0.0
        %4352 = vmatpush2.msra.mxu0 0.0
        %4353 = vmatprep.subr.mxu0 0.0
        %4354 = vmatpush2.msra.mxu0 0.0
        %4355 = vmatprep.subr.mxu0 0.0
        %4356 = vmatpush2.msra.mxu0 0.0
        %4357 = vmatprep.subr.mxu0 0.0
        %4358 = vmatpush2.msra.mxu0 0.0
        %4359 = vmatprep.subr.mxu0 0.0
        %4360 = vmatpush2.msra.mxu0 0.0
        %4361 = vmatprep.subr.mxu0 0.0
        %4362 = vmatpush2.msra.mxu0 0.0
        %4363 = vmatprep.subr.mxu0 0.0
        %4364 = vmatpush2.msra.mxu0 0.0
        %4365 = vmatprep.subr.mxu0 0.0
        %4366 = vmatpush2.msra.mxu0 0.0
        %4367 = vmatprep.subr.mxu0 0.0
        %4368 = vmatpush2.msra.mxu0 0.0
        %4369 = vmatprep.subr.mxu0 0.0
        %4370 = vmatpush2.msra.mxu0 0.0
        %4371 = vmatprep.subr.mxu0 0.0
        %4372 = vmatpush2.msra.mxu0 0.0
        %4373 = vmatprep.subr.mxu0 0.0
        %4374 = vmatpush2.msra.mxu0 0.0
        %4375 = vmatprep.subr.mxu0 0.0
        %4376 = vmatpush2.msra.mxu0 0.0
        %4377 = vmatprep.subr.mxu0 0.0
        %4378 = vmatpush2.msra.mxu0 0.0
        %4379 = vmatprep.subr.mxu0 0.0
        %4380 = vmatpush2.msra.mxu0 0.0
        %4381 = vmatprep.subr.mxu0 0.0
        %4382 = vmatpush2.msra.mxu0 0.0
        %4383 = vmatprep.mubr.f32.mxu0 0.0
        %4384 = vmatmul.mubr.f32.gmra.mxu0 %v3802
        %v4385 = vpop.f32.mrf.mxu0
        %v4386 = vadd.f32 %v4317, %v4385
        %v4387 = vpop.f32.mrf.mxu0
        %4388 = vmatprep.mubr.f32.mxu0 0.0
        %4389 = vmatmul.mubr.f32.gmra.mxu0 %v3805
        %v4390 = vpop.f32.mrf.mxu0
        %v4391 = vadd.f32 %v4317, %v4390
        %v4392 = vpop.f32.mrf.mxu0
        %4393 = vdwg.mxu0
        %v4395 = vsel %vm1956, %v4217, 0
        %v4398 = vsel %vm1956, %v4299, 0
        %v4401 = vsel %vm1956, %v4304, 0
        %4403 = vmatprep.subr.mxu0 0.0
        %4404 = vmatpush1.xpose.msra.mxu0 0.0
        %4405 = vmatprep.subr.mxu0 0.0
        %4406 = vmatpush1.xpose.msra.mxu0 0.0
        %4407 = vmatprep.subr.mxu0 0.0
        %4408 = vmatpush1.xpose.msra.mxu0 0.0
        %4409 = vmatprep.subr.mxu0 0.0
        %4410 = vmatpush1.xpose.msra.mxu0 0.0
        %4411 = vmatprep.subr.mxu0 0.0
        %4412 = vmatpush1.xpose.msra.mxu0 0.0
        %4413 = vmatprep.subr.mxu0 0.0
        %4414 = vmatpush1.xpose.msra.mxu0 0.0
        %4415 = vmatprep.subr.mxu0 0.0
        %4416 = vmatpush1.xpose.msra.mxu0 0.0
        %4417 = vmatprep.subr.mxu0 0.0
        %4418 = vmatpush1.xpose.msra.mxu0 0.0
        %4419 = vmatprep.subr.mxu0 0.0
        %4420 = vmatpush1.xpose.msra.mxu0 0.0
        %4421 = vmatprep.subr.mxu0 0.0
        %4422 = vmatpush1.xpose.msra.mxu0 0.0
        %4423 = vmatprep.subr.mxu0 0.0
        %4424 = vmatpush1.xpose.msra.mxu0 0.0
        %4425 = vmatprep.subr.mxu0 0.0
        %4426 = vmatpush1.xpose.msra.mxu0 0.0
        %4427 = vmatprep.subr.mxu0 0.0
        %4428 = vmatpush1.xpose.msra.mxu0 0.0
        %4429 = vmatprep.subr.mxu0 0.0
        %4430 = vmatpush1.xpose.msra.mxu0 0.0
        %4431 = vmatprep.subr.mxu0 0.0
        %4432 = vmatpush1.xpose.msra.mxu0 %v4401
        %4433 = vmatprep.subr.mxu0 0.0
        %4434 = vmatpush1.xpose.msra.mxu0 %v4398
        %4435 = vmatprep.subr.mxu0 0.0
        %4436 = vmatpush2.xpose.msra.mxu0 0.0
        %4437 = vmatprep.subr.mxu0 0.0
        %4438 = vmatpush2.xpose.msra.mxu0 0.0
        %4439 = vmatprep.subr.mxu0 0.0
        %4440 = vmatpush2.xpose.msra.mxu0 0.0
        %4441 = vmatprep.subr.mxu0 0.0
        %4442 = vmatpush2.xpose.msra.mxu0 0.0
        %4443 = vmatprep.subr.mxu0 0.0
        %4444 = vmatpush2.xpose.msra.mxu0 0.0
        %4445 = vmatprep.subr.mxu0 0.0
        %4446 = vmatpush2.xpose.msra.mxu0 0.0
        %4447 = vmatprep.subr.mxu0 0.0
        %4448 = vmatpush2.xpose.msra.mxu0 0.0
        %4449 = vmatprep.subr.mxu0 0.0
        %4450 = vmatpush2.xpose.msra.mxu0 0.0
        %4451 = vmatprep.subr.mxu0 0.0
        %4452 = vmatpush2.xpose.msra.mxu0 0.0
        %4453 = vmatprep.subr.mxu0 0.0
        %4454 = vmatpush2.xpose.msra.mxu0 0.0
        %4455 = vmatprep.subr.mxu0 0.0
        %4456 = vmatpush2.xpose.msra.mxu0 0.0
        %4457 = vmatprep.subr.mxu0 0.0
        %4458 = vmatpush2.xpose.msra.mxu0 0.0
        %4459 = vmatprep.subr.mxu0 0.0
        %4460 = vmatpush2.xpose.msra.mxu0 0.0
        %4461 = vmatprep.subr.mxu0 0.0
        %4462 = vmatpush2.xpose.msra.mxu0 0.0
        %4463 = vmatprep.subr.mxu0 0.0
        %4464 = vmatpush2.xpose.msra.mxu0 0.0
        %4465 = vmatprep.subr.mxu0 0.0
        %4466 = vmatpush2.xpose.msra.mxu0 0.0
        %4467 = vmatprep.mubr.f32.mxu0 0.0
        %4468 = vmatmul.mubr.f32.gmra.mxu0 %v4395
        %v4469 = vpop.f32.mrf.mxu0
        %v4470 = vadd.f32 %v1614, %v4469
        %v4471 = vpop.f32.mrf.mxu0
        %4472 = vdwg.mxu0
        %v4473 = vsel %vm4046, %v4470, -inf
        %4474 = vmax.xlane.f32.xlu0 %v4473
        %v4475 = vpop.xlane.xlu0 %4474
        %v4476 = vsub.f32 %v4470, %v4475
        %v4477 = vmul.f32 %v4476, 1.442695
        %v4478 = vpow.pop %v4477
        %v4479 = vsel %vm4046, %v4478, 0.0
        %4480 = vadd.xlane.f32.xlu0 %v4479
        %v4481 = vpop.xlane.xlu0 %4480
        %v4482 = vrcp.pop %v4481
        %v4483 = vmul.f32 %v4478, %v4482
        %v4485 = vsel %vm4046, %v4483, 0
        %v4488 = vsel %vm4061, %v4391, 0
        %4490 = vmatprep.subr.mxu0 0.0
        %4491 = vmatpush1.msra.mxu0 0.0
        %4492 = vmatprep.subr.mxu0 0.0
        %4493 = vmatpush1.msra.mxu0 0.0
        %4494 = vmatprep.subr.mxu0 0.0
        %4495 = vmatpush1.msra.mxu0 0.0
        %4496 = vmatprep.subr.mxu0 0.0
        %4497 = vmatpush1.msra.mxu0 0.0
        %4498 = vmatprep.subr.mxu0 0.0
        %4499 = vmatpush1.msra.mxu0 0.0
        %4500 = vmatprep.subr.mxu0 0.0
        %4501 = vmatpush1.msra.mxu0 0.0
        %4502 = vmatprep.subr.mxu0 0.0
        %4503 = vmatpush1.msra.mxu0 0.0
        %4504 = vmatprep.subr.mxu0 0.0
        %4505 = vmatpush1.msra.mxu0 0.0
        %4506 = vmatprep.subr.mxu0 0.0
        %4507 = vmatpush1.msra.mxu0 0.0
        %4508 = vmatprep.subr.mxu0 0.0
        %4509 = vmatpush1.msra.mxu0 0.0
        %4510 = vmatprep.subr.mxu0 0.0
        %4511 = vmatpush1.msra.mxu0 0.0
        %4512 = vmatprep.subr.mxu0 0.0
        %4513 = vmatpush1.msra.mxu0 0.0
        %4514 = vmatprep.subr.mxu0 0.0
        %4515 = vmatpush1.msra.mxu0 0.0
        %4516 = vmatprep.subr.mxu0 0.0
        %4517 = vmatpush1.msra.mxu0 0.0
        %4518 = vmatprep.subr.mxu0 0.0
        %4519 = vmatpush1.msra.mxu0 %v4488
        %4520 = vmatprep.subr.mxu0 0.0
        %4521 = vmatpush1.msra.mxu0 %v4386
        %4522 = vmatprep.subr.mxu0 0.0
        %4523 = vmatpush2.msra.mxu0 0.0
        %4524 = vmatprep.subr.mxu0 0.0
        %4525 = vmatpush2.msra.mxu0 0.0
        %4526 = vmatprep.subr.mxu0 0.0
        %4527 = vmatpush2.msra.mxu0 0.0
        %4528 = vmatprep.subr.mxu0 0.0
        %4529 = vmatpush2.msra.mxu0 0.0
        %4530 = vmatprep.subr.mxu0 0.0
        %4531 = vmatpush2.msra.mxu0 0.0
        %4532 = vmatprep.subr.mxu0 0.0
        %4533 = vmatpush2.msra.mxu0 0.0
        %4534 = vmatprep.subr.mxu0 0.0
        %4535 = vmatpush2.msra.mxu0 0.0
        %4536 = vmatprep.subr.mxu0 0.0
        %4537 = vmatpush2.msra.mxu0 0.0
        %4538 = vmatprep.subr.mxu0 0.0
        %4539 = vmatpush2.msra.mxu0 0.0
        %4540 = vmatprep.subr.mxu0 0.0
        %4541 = vmatpush2.msra.mxu0 0.0
        %4542 = vmatprep.subr.mxu0 0.0
        %4543 = vmatpush2.msra.mxu0 0.0
        %4544 = vmatprep.subr.mxu0 0.0
        %4545 = vmatpush2.msra.mxu0 0.0
        %4546 = vmatprep.subr.mxu0 0.0
        %4547 = vmatpush2.msra.mxu0 0.0
        %4548 = vmatprep.subr.mxu0 0.0
        %4549 = vmatpush2.msra.mxu0 0.0
        %4550 = vmatprep.subr.mxu0 0.0
        %4551 = vmatpush2.msra.mxu0 0.0
        %4552 = vmatprep.subr.mxu0 0.0
        %4553 = vmatpush2.msra.mxu0 0.0
        %4554 = vmatprep.mubr.f32.mxu0 0.0
        %4555 = vmatmul.mubr.f32.gmra.mxu0 %v4485
        %v4556 = vpop.f32.mrf.mxu0
        %v4557 = vadd.f32 0.0, %v4556
        %v4558 = vpop.f32.mrf.mxu0
        %4559 = vdwg.mxu0
        %s4560 = scalar_lea.vmem %s71, 16
        %v4561 = vld [vmem:[%s4560] sm:$0xff]
        %v4562 = vld [vmem:[%s4560 + $0x8] sm:$0xff]
        %v4564 = vsel %vm1956, %v4557, 0
        %4566 = vmatprep.subr.mxu0 0.0
        %4567 = vmatpush1.msra.mxu0 0.0
        %4568 = vmatprep.subr.mxu0 0.0
        %4569 = vmatpush1.msra.mxu0 0.0
        %4570 = vmatprep.subr.mxu0 0.0
        %4571 = vmatpush1.msra.mxu0 0.0
        %4572 = vmatprep.subr.mxu0 0.0
        %4573 = vmatpush1.msra.mxu0 0.0
        %4574 = vmatprep.subr.mxu0 0.0
        %4575 = vmatpush1.msra.mxu0 0.0
        %4576 = vmatprep.subr.mxu0 0.0
        %4577 = vmatpush1.msra.mxu0 0.0
        %4578 = vmatprep.subr.mxu0 0.0
        %4579 = vmatpush1.msra.mxu0 0.0
        %4580 = vmatprep.subr.mxu0 0.0
        %4581 = vmatpush1.msra.mxu0 0.0
        %4582 = vmatprep.subr.mxu0 0.0
        %4583 = vmatpush1.msra.mxu0 0.0
        %4584 = vmatprep.subr.mxu0 0.0
        %4585 = vmatpush1.msra.mxu0 0.0
        %4586 = vmatprep.subr.mxu0 0.0
        %4587 = vmatpush1.msra.mxu0 0.0
        %4588 = vmatprep.subr.mxu0 0.0
        %4589 = vmatpush1.msra.mxu0 0.0
        %4590 = vmatprep.subr.mxu0 0.0
        %4591 = vmatpush1.msra.mxu0 0.0
        %4592 = vmatprep.subr.mxu0 0.0
        %4593 = vmatpush1.msra.mxu0 0.0
        %4594 = vmatprep.subr.mxu0 0.0
        %4595 = vmatpush1.msra.mxu0 %v4562
        %4596 = vmatprep.subr.mxu0 0.0
        %4597 = vmatpush1.msra.mxu0 %v4561
        %4598 = vmatprep.subr.mxu0 0.0
        %4599 = vmatpush2.msra.mxu0 0.0
        %4600 = vmatprep.subr.mxu0 0.0
        %4601 = vmatpush2.msra.mxu0 0.0
        %4602 = vmatprep.subr.mxu0 0.0
        %4603 = vmatpush2.msra.mxu0 0.0
        %4604 = vmatprep.subr.mxu0 0.0
        %4605 = vmatpush2.msra.mxu0 0.0
        %4606 = vmatprep.subr.mxu0 0.0
        %4607 = vmatpush2.msra.mxu0 0.0
        %4608 = vmatprep.subr.mxu0 0.0
        %4609 = vmatpush2.msra.mxu0 0.0
        %4610 = vmatprep.subr.mxu0 0.0
        %4611 = vmatpush2.msra.mxu0 0.0
        %4612 = vmatprep.subr.mxu0 0.0
        %4613 = vmatpush2.msra.mxu0 0.0
        %4614 = vmatprep.subr.mxu0 0.0
        %4615 = vmatpush2.msra.mxu0 0.0
        %4616 = vmatprep.subr.mxu0 0.0
        %4617 = vmatpush2.msra.mxu0 0.0
        %4618 = vmatprep.subr.mxu0 0.0
        %4619 = vmatpush2.msra.mxu0 0.0
        %4620 = vmatprep.subr.mxu0 0.0
        %4621 = vmatpush2.msra.mxu0 0.0
        %4622 = vmatprep.subr.mxu0 0.0
        %4623 = vmatpush2.msra.mxu0 0.0
        %4624 = vmatprep.subr.mxu0 0.0
        %4625 = vmatpush2.msra.mxu0 0.0
        %4626 = vmatprep.subr.mxu0 0.0
        %4627 = vmatpush2.msra.mxu0 0.0
        %4628 = vmatprep.subr.mxu0 0.0
        %4629 = vmatpush2.msra.mxu0 0.0
        %4630 = vmatprep.mubr.f32.mxu0 0.0
        %4631 = vmatmul.mubr.f32.gmra.mxu0 %v4564
        %v4632 = vpop.f32.mrf.mxu0
        %v4633 = vadd.f32 0.0, %v4632
        %v4634 = vpop.f32.mrf.mxu0
        %4635 = vdwg.mxu0
        %v4637 = vsel %vm1956, %v4132, 0
        %4639 = vmatprep.subr.mxu0 0.0
        %4640 = vmatpush1.msra.mxu0 0.0
        %4641 = vmatprep.subr.mxu0 0.0
        %4642 = vmatpush1.msra.mxu0 0.0
        %4643 = vmatprep.subr.mxu0 0.0
        %4644 = vmatpush1.msra.mxu0 0.0
        %4645 = vmatprep.subr.mxu0 0.0
        %4646 = vmatpush1.msra.mxu0 0.0
        %4647 = vmatprep.subr.mxu0 0.0
        %4648 = vmatpush1.msra.mxu0 0.0
        %4649 = vmatprep.subr.mxu0 0.0
        %4650 = vmatpush1.msra.mxu0 0.0
        %4651 = vmatprep.subr.mxu0 0.0
        %4652 = vmatpush1.msra.mxu0 0.0
        %4653 = vmatprep.subr.mxu0 0.0
        %4654 = vmatpush1.msra.mxu0 0.0
        %4655 = vmatprep.subr.mxu0 0.0
        %4656 = vmatpush1.msra.mxu0 0.0
        %4657 = vmatprep.subr.mxu0 0.0
        %4658 = vmatpush1.msra.mxu0 0.0
        %4659 = vmatprep.subr.mxu0 0.0
        %4660 = vmatpush1.msra.mxu0 0.0
        %4661 = vmatprep.subr.mxu0 0.0
        %4662 = vmatpush1.msra.mxu0 0.0
        %4663 = vmatprep.subr.mxu0 0.0
        %4664 = vmatpush1.msra.mxu0 0.0
        %4665 = vmatprep.subr.mxu0 0.0
        %4666 = vmatpush1.msra.mxu0 0.0
        %4667 = vmatprep.subr.mxu0 0.0
        %4668 = vmatpush1.msra.mxu0 %v4136
        %4669 = vmatprep.subr.mxu0 0.0
        %4670 = vmatpush1.msra.mxu0 %v4135
        %4671 = vmatprep.subr.mxu0 0.0
        %4672 = vmatpush2.msra.mxu0 0.0
        %4673 = vmatprep.subr.mxu0 0.0
        %4674 = vmatpush2.msra.mxu0 0.0
        %4675 = vmatprep.subr.mxu0 0.0
        %4676 = vmatpush2.msra.mxu0 0.0
        %4677 = vmatprep.subr.mxu0 0.0
        %4678 = vmatpush2.msra.mxu0 0.0
        %4679 = vmatprep.subr.mxu0 0.0
        %4680 = vmatpush2.msra.mxu0 0.0
        %4681 = vmatprep.subr.mxu0 0.0
        %4682 = vmatpush2.msra.mxu0 0.0
        %4683 = vmatprep.subr.mxu0 0.0
        %4684 = vmatpush2.msra.mxu0 0.0
        %4685 = vmatprep.subr.mxu0 0.0
        %4686 = vmatpush2.msra.mxu0 0.0
        %4687 = vmatprep.subr.mxu0 0.0
        %4688 = vmatpush2.msra.mxu0 0.0
        %4689 = vmatprep.subr.mxu0 0.0
        %4690 = vmatpush2.msra.mxu0 0.0
        %4691 = vmatprep.subr.mxu0 0.0
        %4692 = vmatpush2.msra.mxu0 0.0
        %4693 = vmatprep.subr.mxu0 0.0
        %4694 = vmatpush2.msra.mxu0 0.0
        %4695 = vmatprep.subr.mxu0 0.0
        %4696 = vmatpush2.msra.mxu0 0.0
        %4697 = vmatprep.subr.mxu0 0.0
        %4698 = vmatpush2.msra.mxu0 0.0
        %4699 = vmatprep.subr.mxu0 0.0
        %4700 = vmatpush2.msra.mxu0 0.0
        %4701 = vmatprep.subr.mxu0 0.0
        %4702 = vmatpush2.msra.mxu0 0.0
        %4703 = vmatprep.mubr.f32.mxu0 0.0
        %4704 = vmatmul.mubr.f32.gmra.mxu0 %v4637
        %v4705 = vpop.f32.mrf.mxu0
        %v4706 = vadd.f32 %v4633, %v4705
        %v4707 = vpop.f32.mrf.mxu0
        %4708 = vdwg.mxu0
        %v4710 = vlaneseq
        %v4711 = vshrl.u32 %v4710, 7
        %v4712 = vsub.s32 0, %v4711
        %v4713 = vrot.slane %v3708, %v4712
        %v4715 = vadd.f32 %v4706, %v4713
        %4717 = vset.pattern.permute.xlu0 0
        %4718 = vperm.xlu0 %4717, %v1607
        %v4719 = vpop.permute.xlu0 %4718
        %v4721 = vmul.f32 %v4715, %v4719
        %v4722 = vadd.f32 %v3707, %v4721
        %v4723 = vlaneseq
        %v4724 = vand.u32 %v4723, 127
        %vm4725 = vcmp.eq.s32.totalorder %v4724, 0
        %v4726 = vsel %vm4725, 1, 0
        %v4727 = vcvt.s32.f32 %v4726
        %v4728 = vmul.f32 %v4722, %v4727
        %v4729 = vsel %vm1714, %v4728, 0.0
        %4730 = vadd.xlane.f32.xlu0 %v4729
        %v4731 = vpop.xlane.xlu0 %4730
        %v4732 = vld [vmem:[%s79] sm:$0x1]
        %v4733 = vld [vmem:[%s81] sm:$0x1]
        %v4734 = vadd.f32 %v2728, %v4731
        %v4735 = vsel %vm1714, %v4734, 0.0
        %4736 = vadd.xlane.f32.xlu0 %v4735
        %v4737 = vpop.xlane.xlu0 %4736
        %v4738 = vmul.f32 %v4737, %v2704
        %v4739 = vsub.f32 %v4734, %v4738
        %v4740 = vmul.f32 %v4739, %v4739
        %v4741 = vsel %vm1714, %v4740, 0.0
        %4742 = vadd.xlane.f32.xlu0 %v4741
        %v4743 = vpop.xlane.xlu0 %4742
        %v4744 = vmul.f32 %v4743, %v2704
        %v4745 = vadd.f32 %v4744, 1e-05
        %v4746 = vrsqrt.pop %v4745
        %v4747 = vmul.f32 %v4739, %v4746
        %v4749 = vlaneseq
        %v4750 = vshrl.u32 %v4749, 7
        %v4751 = vsub.s32 0, %v4750
        %v4752 = vrot.slane %v4732, %v4751
        %v4754 = vmul.f32 %v4747, %v4752
        %v4756 = vlaneseq
        %v4757 = vshrl.u32 %v4756, 7
        %v4758 = vsub.s32 0, %v4757
        %v4759 = vrot.slane %v4733, %v4758
        %v4761 = vadd.f32 %v4754, %v4759
        %v4762 = vld [vmem:[%s87] sm:$0xff]
        %v4763 = vld [vmem:[%s87 + $0x8] sm:$0xff]
        %v4764 = vld [vmem:[%s87 + $0x10] sm:$0xff]
        %v4765 = vld [vmem:[%s87 + $0x18] sm:$0xff]
        %v4766 = vld [vmem:[%s89] sm:$0x1]
        %v4768 = vlaneseq
        %v4769 = vshrl.u32 %v4768, 7
        %v4770 = vsub.s32 0, %v4769
        %v4771 = vrot.slane %v4766, %v4770
        %v4774 = vsel %vm1714, %v4761, 0
        %4776 = vmatprep.subr.mxu0 0.0
        %4777 = vmatpush1.msra.mxu0 0.0
        %4778 = vmatprep.subr.mxu0 0.0
        %4779 = vmatpush1.msra.mxu0 0.0
        %4780 = vmatprep.subr.mxu0 0.0
        %4781 = vmatpush1.msra.mxu0 0.0
        %4782 = vmatprep.subr.mxu0 0.0
        %4783 = vmatpush1.msra.mxu0 0.0
        %4784 = vmatprep.subr.mxu0 0.0
        %4785 = vmatpush1.msra.mxu0 0.0
        %4786 = vmatprep.subr.mxu0 0.0
        %4787 = vmatpush1.msra.mxu0 0.0
        %4788 = vmatprep.subr.mxu0 0.0
        %4789 = vmatpush1.msra.mxu0 0.0
        %4790 = vmatprep.subr.mxu0 0.0
        %4791 = vmatpush1.msra.mxu0 0.0
        %4792 = vmatprep.subr.mxu0 0.0
        %4793 = vmatpush1.msra.mxu0 0.0
        %4794 = vmatprep.subr.mxu0 0.0
        %4795 = vmatpush1.msra.mxu0 0.0
        %4796 = vmatprep.subr.mxu0 0.0
        %4797 = vmatpush1.msra.mxu0 0.0
        %4798 = vmatprep.subr.mxu0 0.0
        %4799 = vmatpush1.msra.mxu0 0.0
        %4800 = vmatprep.subr.mxu0 0.0
        %4801 = vmatpush1.msra.mxu0 %v4765
        %4802 = vmatprep.subr.mxu0 0.0
        %4803 = vmatpush1.msra.mxu0 %v4764
        %4804 = vmatprep.subr.mxu0 0.0
        %4805 = vmatpush1.msra.mxu0 %v4763
        %4806 = vmatprep.subr.mxu0 0.0
        %4807 = vmatpush1.msra.mxu0 %v4762
        %4808 = vmatprep.subr.mxu0 0.0
        %4809 = vmatpush2.msra.mxu0 0.0
        %4810 = vmatprep.subr.mxu0 0.0
        %4811 = vmatpush2.msra.mxu0 0.0
        %4812 = vmatprep.subr.mxu0 0.0
        %4813 = vmatpush2.msra.mxu0 0.0
        %4814 = vmatprep.subr.mxu0 0.0
        %4815 = vmatpush2.msra.mxu0 0.0
        %4816 = vmatprep.subr.mxu0 0.0
        %4817 = vmatpush2.msra.mxu0 0.0
        %4818 = vmatprep.subr.mxu0 0.0
        %4819 = vmatpush2.msra.mxu0 0.0
        %4820 = vmatprep.subr.mxu0 0.0
        %4821 = vmatpush2.msra.mxu0 0.0
        %4822 = vmatprep.subr.mxu0 0.0
        %4823 = vmatpush2.msra.mxu0 0.0
        %4824 = vmatprep.subr.mxu0 0.0
        %4825 = vmatpush2.msra.mxu0 0.0
        %4826 = vmatprep.subr.mxu0 0.0
        %4827 = vmatpush2.msra.mxu0 0.0
        %4828 = vmatprep.subr.mxu0 0.0
        %4829 = vmatpush2.msra.mxu0 0.0
        %4830 = vmatprep.subr.mxu0 0.0
        %4831 = vmatpush2.msra.mxu0 0.0
        %4832 = vmatprep.subr.mxu0 0.0
        %4833 = vmatpush2.msra.mxu0 0.0
        %4834 = vmatprep.subr.mxu0 0.0
        %4835 = vmatpush2.msra.mxu0 0.0
        %4836 = vmatprep.subr.mxu0 0.0
        %4837 = vmatpush2.msra.mxu0 0.0
        %4838 = vmatprep.subr.mxu0 0.0
        %4839 = vmatpush2.msra.mxu0 0.0
        %4840 = vmatprep.mubr.f32.mxu0 0.0
        %4841 = vmatmul.mubr.f32.gmra.mxu0 %v4774
        %v4842 = vpop.f32.mrf.mxu0
        %v4843 = vadd.f32 %v4771, %v4842
        %v4844 = vpop.f32.mrf.mxu0
        %4845 = vdwg.mxu0
        %v4846 = vmax.f32 %v4843, 0.0
        %v4847 = vld [vmem:[%s91] sm:$0xff]
        %v4848 = vld [vmem:[%s91 + $0x8] sm:$0xff]
        %v4849 = vld [vmem:[%s91 + $0x10] sm:$0xff]
        %v4850 = vld [vmem:[%s91 + $0x18] sm:$0xff]
        %v4851 = vld [vmem:[%s91 + $0x20] sm:$0xff]
        %v4852 = vld [vmem:[%s91 + $0x28] sm:$0xff]
        %v4853 = vld [vmem:[%s93] sm:$0x1]
        %v4855 = vlaneseq
        %v4856 = vshrl.u32 %v4855, 7
        %v4857 = vsub.s32 0, %v4856
        %v4858 = vrot.slane %v4853, %v4857
        %vm4860 = vcmask 392192
        %v4862 = vsel %vm4860, %v4846, 0
        %4864 = vmatprep.subr.mxu0 0.0
        %4865 = vmatpush1.msra.mxu0 0.0
        %4866 = vmatprep.subr.mxu0 0.0
        %4867 = vmatpush1.msra.mxu0 0.0
        %4868 = vmatprep.subr.mxu0 0.0
        %4869 = vmatpush1.msra.mxu0 0.0
        %4870 = vmatprep.subr.mxu0 0.0
        %4871 = vmatpush1.msra.mxu0 0.0
        %4872 = vmatprep.subr.mxu0 0.0
        %4873 = vmatpush1.msra.mxu0 0.0
        %4874 = vmatprep.subr.mxu0 0.0
        %4875 = vmatpush1.msra.mxu0 0.0
        %4876 = vmatprep.subr.mxu0 0.0
        %4877 = vmatpush1.msra.mxu0 0.0
        %4878 = vmatprep.subr.mxu0 0.0
        %4879 = vmatpush1.msra.mxu0 0.0
        %4880 = vmatprep.subr.mxu0 0.0
        %4881 = vmatpush1.msra.mxu0 0.0
        %4882 = vmatprep.subr.mxu0 0.0
        %4883 = vmatpush1.msra.mxu0 0.0
        %4884 = vmatprep.subr.mxu0 0.0
        %4885 = vmatpush1.msra.mxu0 %v4852
        %4886 = vmatprep.subr.mxu0 0.0
        %4887 = vmatpush1.msra.mxu0 %v4851
        %4888 = vmatprep.subr.mxu0 0.0
        %4889 = vmatpush1.msra.mxu0 %v4850
        %4890 = vmatprep.subr.mxu0 0.0
        %4891 = vmatpush1.msra.mxu0 %v4849
        %4892 = vmatprep.subr.mxu0 0.0
        %4893 = vmatpush1.msra.mxu0 %v4848
        %4894 = vmatprep.subr.mxu0 0.0
        %4895 = vmatpush1.msra.mxu0 %v4847
        %4896 = vmatprep.subr.mxu0 0.0
        %4897 = vmatpush2.msra.mxu0 0.0
        %4898 = vmatprep.subr.mxu0 0.0
        %4899 = vmatpush2.msra.mxu0 0.0
        %4900 = vmatprep.subr.mxu0 0.0
        %4901 = vmatpush2.msra.mxu0 0.0
        %4902 = vmatprep.subr.mxu0 0.0
        %4903 = vmatpush2.msra.mxu0 0.0
        %4904 = vmatprep.subr.mxu0 0.0
        %4905 = vmatpush2.msra.mxu0 0.0
        %4906 = vmatprep.subr.mxu0 0.0
        %4907 = vmatpush2.msra.mxu0 0.0
        %4908 = vmatprep.subr.mxu0 0.0
        %4909 = vmatpush2.msra.mxu0 0.0
        %4910 = vmatprep.subr.mxu0 0.0
        %4911 = vmatpush2.msra.mxu0 0.0
        %4912 = vmatprep.subr.mxu0 0.0
        %4913 = vmatpush2.msra.mxu0 0.0
        %4914 = vmatprep.subr.mxu0 0.0
        %4915 = vmatpush2.msra.mxu0 0.0
        %4916 = vmatprep.subr.mxu0 0.0
        %4917 = vmatpush2.msra.mxu0 0.0
        %4918 = vmatprep.subr.mxu0 0.0
        %4919 = vmatpush2.msra.mxu0 0.0
        %4920 = vmatprep.subr.mxu0 0.0
        %4921 = vmatpush2.msra.mxu0 0.0
        %4922 = vmatprep.subr.mxu0 0.0
        %4923 = vmatpush2.msra.mxu0 0.0
        %4924 = vmatprep.subr.mxu0 0.0
        %4925 = vmatpush2.msra.mxu0 0.0
        %4926 = vmatprep.subr.mxu0 0.0
        %4927 = vmatpush2.msra.mxu0 0.0
        %4928 = vmatprep.mubr.f32.mxu0 0.0
        %4929 = vmatmul.mubr.f32.gmra.mxu0 %v4862
        %v4930 = vpop.f32.mrf.mxu0
        %v4931 = vadd.f32 %v4858, %v4930
        %v4932 = vpop.f32.mrf.mxu0
        %4933 = vdwg.mxu0
        %v4934 = vld [vmem:[%s83] sm:$0x1]
        %v4935 = vld [vmem:[%s85] sm:$0x1]
        %v4936 = vadd.f32 %v4761, %v4931
        %v4937 = vsel %vm1714, %v4936, 0.0
        %4938 = vadd.xlane.f32.xlu0 %v4937
        %v4939 = vpop.xlane.xlu0 %4938
        %v4940 = vmul.f32 %v4939, %v2704
        %v4941 = vsub.f32 %v4936, %v4940
        %v4942 = vmul.f32 %v4941, %v4941
        %v4943 = vsel %vm1714, %v4942, 0.0
        %4944 = vadd.xlane.f32.xlu0 %v4943
        %v4945 = vpop.xlane.xlu0 %4944
        %v4946 = vmul.f32 %v4945, %v2704
        %v4947 = vadd.f32 %v4946, 1e-05
        %v4948 = vrsqrt.pop %v4947
        %v4949 = vmul.f32 %v4941, %v4948
        %v4951 = vlaneseq
        %v4952 = vshrl.u32 %v4951, 7
        %v4953 = vsub.s32 0, %v4952
        %v4954 = vrot.slane %v4934, %v4953
        %v4956 = vmul.f32 %v4949, %v4954
        %v4958 = vlaneseq
        %v4959 = vshrl.u32 %v4958, 7
        %v4960 = vsub.s32 0, %v4959
        %v4961 = vrot.slane %v4935, %v4960
        %v4963 = vadd.f32 %v4956, %v4961
        %s4964 = scalar_lea.vmem %s23, 24
        %v4965 = vld [vmem:[%s4964] sm:$0xff]
        %v4966 = vld [vmem:[%s4964 + $0x8] sm:$0xff]
        %v4967 = vld [vmem:[%s4964 + $0x10] sm:$0xf]
        %s4968 = scalar_lea.vmem %s25, 1
        %v4969 = vld [vmem:[%s4968] sm:$0x1]
        %v4971 = vsel %vm1623, %v4967, 0
        %4973 = vmatprep.subr.mxu0 0.0
        %4974 = vmatpush1.msra.mxu0 0.0
        %4975 = vmatprep.subr.mxu0 0.0
        %4976 = vmatpush1.msra.mxu0 0.0
        %4977 = vmatprep.subr.mxu0 0.0
        %4978 = vmatpush1.msra.mxu0 0.0
        %4979 = vmatprep.subr.mxu0 0.0
        %4980 = vmatpush1.msra.mxu0 0.0
        %4981 = vmatprep.subr.mxu0 0.0
        %4982 = vmatpush1.msra.mxu0 0.0
        %4983 = vmatprep.subr.mxu0 0.0
        %4984 = vmatpush1.msra.mxu0 0.0
        %4985 = vmatprep.subr.mxu0 0.0
        %4986 = vmatpush1.msra.mxu0 0.0
        %4987 = vmatprep.subr.mxu0 0.0
        %4988 = vmatpush1.msra.mxu0 0.0
        %4989 = vmatprep.subr.mxu0 0.0
        %4990 = vmatpush1.msra.mxu0 0.0
        %4991 = vmatprep.subr.mxu0 0.0
        %4992 = vmatpush1.msra.mxu0 0.0
        %4993 = vmatprep.subr.mxu0 0.0
        %4994 = vmatpush1.msra.mxu0 0.0
        %4995 = vmatprep.subr.mxu0 0.0
        %4996 = vmatpush1.msra.mxu0 0.0
        %4997 = vmatprep.subr.mxu0 0.0
        %4998 = vmatpush1.msra.mxu0 0.0
        %4999 = vmatprep.subr.mxu0 0.0
        %5000 = vmatpush1.msra.mxu0 %v4971
        %5001 = vmatprep.subr.mxu0 0.0
        %5002 = vmatpush1.msra.mxu0 %v4966
        %5003 = vmatprep.subr.mxu0 0.0
        %5004 = vmatpush1.msra.mxu0 %v4965
        %5005 = vmatprep.subr.mxu0 0.0
        %5006 = vmatpush2.msra.mxu0 0.0
        %5007 = vmatprep.subr.mxu0 0.0
        %5008 = vmatpush2.msra.mxu0 0.0
        %5009 = vmatprep.subr.mxu0 0.0
        %5010 = vmatpush2.msra.mxu0 0.0
        %5011 = vmatprep.subr.mxu0 0.0
        %5012 = vmatpush2.msra.mxu0 0.0
        %5013 = vmatprep.subr.mxu0 0.0
        %5014 = vmatpush2.msra.mxu0 0.0
        %5015 = vmatprep.subr.mxu0 0.0
        %5016 = vmatpush2.msra.mxu0 0.0
        %5017 = vmatprep.subr.mxu0 0.0
        %5018 = vmatpush2.msra.mxu0 0.0
        %5019 = vmatprep.subr.mxu0 0.0
        %5020 = vmatpush2.msra.mxu0 0.0
        %5021 = vmatprep.subr.mxu0 0.0
        %5022 = vmatpush2.msra.mxu0 0.0
        %5023 = vmatprep.subr.mxu0 0.0
        %5024 = vmatpush2.msra.mxu0 0.0
        %5025 = vmatprep.subr.mxu0 0.0
        %5026 = vmatpush2.msra.mxu0 0.0
        %5027 = vmatprep.subr.mxu0 0.0
        %5028 = vmatpush2.msra.mxu0 0.0
        %5029 = vmatprep.subr.mxu0 0.0
        %5030 = vmatpush2.msra.mxu0 0.0
        %5031 = vmatprep.subr.mxu0 0.0
        %5032 = vmatpush2.msra.mxu0 0.0
        %5033 = vmatprep.subr.mxu0 0.0
        %5034 = vmatpush2.msra.mxu0 0.0
        %5035 = vmatprep.subr.mxu0 0.0
        %5036 = vmatpush2.msra.mxu0 0.0
        %5037 = vmatprep.mubr.f32.mxu0 0.0
        %5038 = vmatmul.mubr.f32.gmra.mxu0 %v1621
        %v5039 = vpop.f32.mrf.mxu0
        %v5040 = vadd.f32 %v4969, %v5039
        %v5041 = vpop.f32.mrf.mxu0
        %5042 = vdwg.mxu0
        %v5043 = vlaneseq
        %v5044 = vshrl.u32 %v5043, 7
        %v5045 = vsub.s32 0, %v5044
        %v5046 = vrot.slane %v5040, %v5045
        %v5047 = vadd.f32 %v4963, %v5046
        %s5048 = scalar_lea.vmem %s41, 1
        %v5049 = vld [vmem:[%s5048] sm:$0x1]
        %s5050 = scalar_lea.vmem %s27, 64
        %v5051 = vld [vmem:[%s5050] sm:$0xff]
        %v5052 = vld [vmem:[%s5050 + $0x8] sm:$0xff]
        %v5053 = vld [vmem:[%s5050 + $0x10] sm:$0xff]
        %v5054 = vld [vmem:[%s5050 + $0x18] sm:$0xff]
        %s5055 = scalar_lea.vmem %s29, 2
        %v5056 = vld [vmem:[%s5055] sm:$0x1]
        %v5058 = vlaneseq
        %v5059 = vshrl.u32 %v5058, 7
        %v5060 = vsub.s32 0, %v5059
        %v5061 = vrot.slane %v5056, %v5060
        %v5064 = vsel %vm1714, %v5047, 0
        %5066 = vmatprep.subr.mxu0 0.0
        %5067 = vmatpush1.msra.mxu0 0.0
        %5068 = vmatprep.subr.mxu0 0.0
        %5069 = vmatpush1.msra.mxu0 0.0
        %5070 = vmatprep.subr.mxu0 0.0
        %5071 = vmatpush1.msra.mxu0 0.0
        %5072 = vmatprep.subr.mxu0 0.0
        %5073 = vmatpush1.msra.mxu0 0.0
        %5074 = vmatprep.subr.mxu0 0.0
        %5075 = vmatpush1.msra.mxu0 0.0
        %5076 = vmatprep.subr.mxu0 0.0
        %5077 = vmatpush1.msra.mxu0 0.0
        %5078 = vmatprep.subr.mxu0 0.0
        %5079 = vmatpush1.msra.mxu0 0.0
        %5080 = vmatprep.subr.mxu0 0.0
        %5081 = vmatpush1.msra.mxu0 0.0
        %5082 = vmatprep.subr.mxu0 0.0
        %5083 = vmatpush1.msra.mxu0 0.0
        %5084 = vmatprep.subr.mxu0 0.0
        %5085 = vmatpush1.msra.mxu0 0.0
        %5086 = vmatprep.subr.mxu0 0.0
        %5087 = vmatpush1.msra.mxu0 0.0
        %5088 = vmatprep.subr.mxu0 0.0
        %5089 = vmatpush1.msra.mxu0 0.0
        %5090 = vmatprep.subr.mxu0 0.0
        %5091 = vmatpush1.msra.mxu0 %v5054
        %5092 = vmatprep.subr.mxu0 0.0
        %5093 = vmatpush1.msra.mxu0 %v5053
        %5094 = vmatprep.subr.mxu0 0.0
        %5095 = vmatpush1.msra.mxu0 %v5052
        %5096 = vmatprep.subr.mxu0 0.0
        %5097 = vmatpush1.msra.mxu0 %v5051
        %5098 = vmatprep.subr.mxu0 0.0
        %5099 = vmatpush2.msra.mxu0 0.0
        %5100 = vmatprep.subr.mxu0 0.0
        %5101 = vmatpush2.msra.mxu0 0.0
        %5102 = vmatprep.subr.mxu0 0.0
        %5103 = vmatpush2.msra.mxu0 0.0
        %5104 = vmatprep.subr.mxu0 0.0
        %5105 = vmatpush2.msra.mxu0 0.0
        %5106 = vmatprep.subr.mxu0 0.0
        %5107 = vmatpush2.msra.mxu0 0.0
        %5108 = vmatprep.subr.mxu0 0.0
        %5109 = vmatpush2.msra.mxu0 0.0
        %5110 = vmatprep.subr.mxu0 0.0
        %5111 = vmatpush2.msra.mxu0 0.0
        %5112 = vmatprep.subr.mxu0 0.0
        %5113 = vmatpush2.msra.mxu0 0.0
        %5114 = vmatprep.subr.mxu0 0.0
        %5115 = vmatpush2.msra.mxu0 0.0
        %5116 = vmatprep.subr.mxu0 0.0
        %5117 = vmatpush2.msra.mxu0 0.0
        %5118 = vmatprep.subr.mxu0 0.0
        %5119 = vmatpush2.msra.mxu0 0.0
        %5120 = vmatprep.subr.mxu0 0.0
        %5121 = vmatpush2.msra.mxu0 0.0
        %5122 = vmatprep.subr.mxu0 0.0
        %5123 = vmatpush2.msra.mxu0 0.0
        %5124 = vmatprep.subr.mxu0 0.0
        %5125 = vmatpush2.msra.mxu0 0.0
        %5126 = vmatprep.subr.mxu0 0.0
        %5127 = vmatpush2.msra.mxu0 0.0
        %5128 = vmatprep.subr.mxu0 0.0
        %5129 = vmatpush2.msra.mxu0 0.0
        %5130 = vmatprep.mubr.f32.mxu0 0.0
        %5131 = vmatmul.mubr.f32.gmra.mxu0 %v5064
        %v5132 = vpop.f32.mrf.mxu0
        %v5133 = vadd.f32 %v5061, %v5132
        %v5134 = vpop.f32.mrf.mxu0
        %5135 = vdwg.mxu0
        %s5136 = scalar_lea.vmem %s31, 64
        %v5137 = vld [vmem:[%s5136] sm:$0xff]
        %v5138 = vld [vmem:[%s5136 + $0x8] sm:$0xff]
        %v5139 = vld [vmem:[%s5136 + $0x10] sm:$0xff]
        %v5140 = vld [vmem:[%s5136 + $0x18] sm:$0xff]
        %s5141 = scalar_lea.vmem %s33, 2
        %v5142 = vld [vmem:[%s5141] sm:$0x1]
        %v5144 = vlaneseq
        %v5145 = vshrl.u32 %v5144, 7
        %v5146 = vsub.s32 0, %v5145
        %v5147 = vrot.slane %v5142, %v5146
        %5149 = vmatprep.subr.mxu0 0.0
        %5150 = vmatpush1.msra.mxu0 0.0
        %5151 = vmatprep.subr.mxu0 0.0
        %5152 = vmatpush1.msra.mxu0 0.0
        %5153 = vmatprep.subr.mxu0 0.0
        %5154 = vmatpush1.msra.mxu0 0.0
        %5155 = vmatprep.subr.mxu0 0.0
        %5156 = vmatpush1.msra.mxu0 0.0
        %5157 = vmatprep.subr.mxu0 0.0
        %5158 = vmatpush1.msra.mxu0 0.0
        %5159 = vmatprep.subr.mxu0 0.0
        %5160 = vmatpush1.msra.mxu0 0.0
        %5161 = vmatprep.subr.mxu0 0.0
        %5162 = vmatpush1.msra.mxu0 0.0
        %5163 = vmatprep.subr.mxu0 0.0
        %5164 = vmatpush1.msra.mxu0 0.0
        %5165 = vmatprep.subr.mxu0 0.0
        %5166 = vmatpush1.msra.mxu0 0.0
        %5167 = vmatprep.subr.mxu0 0.0
        %5168 = vmatpush1.msra.mxu0 0.0
        %5169 = vmatprep.subr.mxu0 0.0
        %5170 = vmatpush1.msra.mxu0 0.0
        %5171 = vmatprep.subr.mxu0 0.0
        %5172 = vmatpush1.msra.mxu0 0.0
        %5173 = vmatprep.subr.mxu0 0.0
        %5174 = vmatpush1.msra.mxu0 %v5140
        %5175 = vmatprep.subr.mxu0 0.0
        %5176 = vmatpush1.msra.mxu0 %v5139
        %5177 = vmatprep.subr.mxu0 0.0
        %5178 = vmatpush1.msra.mxu0 %v5138
        %5179 = vmatprep.subr.mxu0 0.0
        %5180 = vmatpush1.msra.mxu0 %v5137
        %5181 = vmatprep.subr.mxu0 0.0
        %5182 = vmatpush2.msra.mxu0 0.0
        %5183 = vmatprep.subr.mxu0 0.0
        %5184 = vmatpush2.msra.mxu0 0.0
        %5185 = vmatprep.subr.mxu0 0.0
        %5186 = vmatpush2.msra.mxu0 0.0
        %5187 = vmatprep.subr.mxu0 0.0
        %5188 = vmatpush2.msra.mxu0 0.0
        %5189 = vmatprep.subr.mxu0 0.0
        %5190 = vmatpush2.msra.mxu0 0.0
        %5191 = vmatprep.subr.mxu0 0.0
        %5192 = vmatpush2.msra.mxu0 0.0
        %5193 = vmatprep.subr.mxu0 0.0
        %5194 = vmatpush2.msra.mxu0 0.0
        %5195 = vmatprep.subr.mxu0 0.0
        %5196 = vmatpush2.msra.mxu0 0.0
        %5197 = vmatprep.subr.mxu0 0.0
        %5198 = vmatpush2.msra.mxu0 0.0
        %5199 = vmatprep.subr.mxu0 0.0
        %5200 = vmatpush2.msra.mxu0 0.0
        %5201 = vmatprep.subr.mxu0 0.0
        %5202 = vmatpush2.msra.mxu0 0.0
        %5203 = vmatprep.subr.mxu0 0.0
        %5204 = vmatpush2.msra.mxu0 0.0
        %5205 = vmatprep.subr.mxu0 0.0
        %5206 = vmatpush2.msra.mxu0 0.0
        %5207 = vmatprep.subr.mxu0 0.0
        %5208 = vmatpush2.msra.mxu0 0.0
        %5209 = vmatprep.subr.mxu0 0.0
        %5210 = vmatpush2.msra.mxu0 0.0
        %5211 = vmatprep.subr.mxu0 0.0
        %5212 = vmatpush2.msra.mxu0 0.0
        %5213 = vmatprep.mubr.f32.mxu0 0.0
        %5214 = vmatmul.mubr.f32.gmra.mxu0 %v5064
        %v5215 = vpop.f32.mrf.mxu0
        %v5216 = vadd.f32 %v5147, %v5215
        %v5217 = vpop.f32.mrf.mxu0
        %5218 = vdwg.mxu0
        %s5219 = scalar_lea.vmem %s35, 64
        %v5220 = vld [vmem:[%s5219] sm:$0xff]
        %v5221 = vld [vmem:[%s5219 + $0x8] sm:$0xff]
        %v5222 = vld [vmem:[%s5219 + $0x10] sm:$0xff]
        %v5223 = vld [vmem:[%s5219 + $0x18] sm:$0xff]
        %s5224 = scalar_lea.vmem %s37, 2
        %v5225 = vld [vmem:[%s5224] sm:$0x1]
        %v5227 = vlaneseq
        %v5228 = vshrl.u32 %v5227, 7
        %v5229 = vsub.s32 0, %v5228
        %v5230 = vrot.slane %v5225, %v5229
        %5232 = vmatprep.subr.mxu0 0.0
        %5233 = vmatpush1.msra.mxu0 0.0
        %5234 = vmatprep.subr.mxu0 0.0
        %5235 = vmatpush1.msra.mxu0 0.0
        %5236 = vmatprep.subr.mxu0 0.0
        %5237 = vmatpush1.msra.mxu0 0.0
        %5238 = vmatprep.subr.mxu0 0.0
        %5239 = vmatpush1.msra.mxu0 0.0
        %5240 = vmatprep.subr.mxu0 0.0
        %5241 = vmatpush1.msra.mxu0 0.0
        %5242 = vmatprep.subr.mxu0 0.0
        %5243 = vmatpush1.msra.mxu0 0.0
        %5244 = vmatprep.subr.mxu0 0.0
        %5245 = vmatpush1.msra.mxu0 0.0
        %5246 = vmatprep.subr.mxu0 0.0
        %5247 = vmatpush1.msra.mxu0 0.0
        %5248 = vmatprep.subr.mxu0 0.0
        %5249 = vmatpush1.msra.mxu0 0.0
        %5250 = vmatprep.subr.mxu0 0.0
        %5251 = vmatpush1.msra.mxu0 0.0
        %5252 = vmatprep.subr.mxu0 0.0
        %5253 = vmatpush1.msra.mxu0 0.0
        %5254 = vmatprep.subr.mxu0 0.0
        %5255 = vmatpush1.msra.mxu0 0.0
        %5256 = vmatprep.subr.mxu0 0.0
        %5257 = vmatpush1.msra.mxu0 %v5223
        %5258 = vmatprep.subr.mxu0 0.0
        %5259 = vmatpush1.msra.mxu0 %v5222
        %5260 = vmatprep.subr.mxu0 0.0
        %5261 = vmatpush1.msra.mxu0 %v5221
        %5262 = vmatprep.subr.mxu0 0.0
        %5263 = vmatpush1.msra.mxu0 %v5220
        %5264 = vmatprep.subr.mxu0 0.0
        %5265 = vmatpush2.msra.mxu0 0.0
        %5266 = vmatprep.subr.mxu0 0.0
        %5267 = vmatpush2.msra.mxu0 0.0
        %5268 = vmatprep.subr.mxu0 0.0
        %5269 = vmatpush2.msra.mxu0 0.0
        %5270 = vmatprep.subr.mxu0 0.0
        %5271 = vmatpush2.msra.mxu0 0.0
        %5272 = vmatprep.subr.mxu0 0.0
        %5273 = vmatpush2.msra.mxu0 0.0
        %5274 = vmatprep.subr.mxu0 0.0
        %5275 = vmatpush2.msra.mxu0 0.0
        %5276 = vmatprep.subr.mxu0 0.0
        %5277 = vmatpush2.msra.mxu0 0.0
        %5278 = vmatprep.subr.mxu0 0.0
        %5279 = vmatpush2.msra.mxu0 0.0
        %5280 = vmatprep.subr.mxu0 0.0
        %5281 = vmatpush2.msra.mxu0 0.0
        %5282 = vmatprep.subr.mxu0 0.0
        %5283 = vmatpush2.msra.mxu0 0.0
        %5284 = vmatprep.subr.mxu0 0.0
        %5285 = vmatpush2.msra.mxu0 0.0
        %5286 = vmatprep.subr.mxu0 0.0
        %5287 = vmatpush2.msra.mxu0 0.0
        %5288 = vmatprep.subr.mxu0 0.0
        %5289 = vmatpush2.msra.mxu0 0.0
        %5290 = vmatprep.subr.mxu0 0.0
        %5291 = vmatpush2.msra.mxu0 0.0
        %5292 = vmatprep.subr.mxu0 0.0
        %5293 = vmatpush2.msra.mxu0 0.0
        %5294 = vmatprep.subr.mxu0 0.0
        %5295 = vmatpush2.msra.mxu0 0.0
        %5296 = vmatprep.mubr.f32.mxu0 0.0
        %5297 = vmatmul.mubr.f32.gmra.mxu0 %v5064
        %v5298 = vpop.f32.mrf.mxu0
        %v5299 = vadd.f32 %v5230, %v5298
        %v5300 = vpop.f32.mrf.mxu0
        %5301 = vdwg.mxu0
        %v5303 = vsel %vm1956, %v5133, 0
        %v5306 = vsel %vm1956, %v5216, 0
        %5308 = vmatprep.subr.mxu0 0.0
        %5309 = vmatpush1.xpose.msra.mxu0 0.0
        %5310 = vmatprep.subr.mxu0 0.0
        %5311 = vmatpush1.xpose.msra.mxu0 0.0
        %5312 = vmatprep.subr.mxu0 0.0
        %5313 = vmatpush1.xpose.msra.mxu0 0.0
        %5314 = vmatprep.subr.mxu0 0.0
        %5315 = vmatpush1.xpose.msra.mxu0 0.0
        %5316 = vmatprep.subr.mxu0 0.0
        %5317 = vmatpush1.xpose.msra.mxu0 0.0
        %5318 = vmatprep.subr.mxu0 0.0
        %5319 = vmatpush1.xpose.msra.mxu0 0.0
        %5320 = vmatprep.subr.mxu0 0.0
        %5321 = vmatpush1.xpose.msra.mxu0 0.0
        %5322 = vmatprep.subr.mxu0 0.0
        %5323 = vmatpush1.xpose.msra.mxu0 0.0
        %5324 = vmatprep.subr.mxu0 0.0
        %5325 = vmatpush1.xpose.msra.mxu0 0.0
        %5326 = vmatprep.subr.mxu0 0.0
        %5327 = vmatpush1.xpose.msra.mxu0 0.0
        %5328 = vmatprep.subr.mxu0 0.0
        %5329 = vmatpush1.xpose.msra.mxu0 0.0
        %5330 = vmatprep.subr.mxu0 0.0
        %5331 = vmatpush1.xpose.msra.mxu0 0.0
        %5332 = vmatprep.subr.mxu0 0.0
        %5333 = vmatpush1.xpose.msra.mxu0 0.0
        %5334 = vmatprep.subr.mxu0 0.0
        %5335 = vmatpush1.xpose.msra.mxu0 0.0
        %5336 = vmatprep.subr.mxu0 0.0
        %5337 = vmatpush1.xpose.msra.mxu0 0.0
        %5338 = vmatprep.subr.mxu0 0.0
        %5339 = vmatpush1.xpose.msra.mxu0 %v5306
        %5340 = vmatprep.subr.mxu0 0.0
        %5341 = vmatpush2.xpose.msra.mxu0 0.0
        %5342 = vmatprep.subr.mxu0 0.0
        %5343 = vmatpush2.xpose.msra.mxu0 0.0
        %5344 = vmatprep.subr.mxu0 0.0
        %5345 = vmatpush2.xpose.msra.mxu0 0.0
        %5346 = vmatprep.subr.mxu0 0.0
        %5347 = vmatpush2.xpose.msra.mxu0 0.0
        %5348 = vmatprep.subr.mxu0 0.0
        %5349 = vmatpush2.xpose.msra.mxu0 0.0
        %5350 = vmatprep.subr.mxu0 0.0
        %5351 = vmatpush2.xpose.msra.mxu0 0.0
        %5352 = vmatprep.subr.mxu0 0.0
        %5353 = vmatpush2.xpose.msra.mxu0 0.0
        %5354 = vmatprep.subr.mxu0 0.0
        %5355 = vmatpush2.xpose.msra.mxu0 0.0
        %5356 = vmatprep.subr.mxu0 0.0
        %5357 = vmatpush2.xpose.msra.mxu0 0.0
        %5358 = vmatprep.subr.mxu0 0.0
        %5359 = vmatpush2.xpose.msra.mxu0 0.0
        %5360 = vmatprep.subr.mxu0 0.0
        %5361 = vmatpush2.xpose.msra.mxu0 0.0
        %5362 = vmatprep.subr.mxu0 0.0
        %5363 = vmatpush2.xpose.msra.mxu0 0.0
        %5364 = vmatprep.subr.mxu0 0.0
        %5365 = vmatpush2.xpose.msra.mxu0 0.0
        %5366 = vmatprep.subr.mxu0 0.0
        %5367 = vmatpush2.xpose.msra.mxu0 0.0
        %5368 = vmatprep.subr.mxu0 0.0
        %5369 = vmatpush2.xpose.msra.mxu0 0.0
        %5370 = vmatprep.subr.mxu0 0.0
        %5371 = vmatpush2.xpose.msra.mxu0 0.0
        %5372 = vmatprep.mubr.f32.mxu0 0.0
        %5373 = vmatmul.mubr.f32.gmra.mxu0 %v5303
        %v5374 = vpop.f32.mrf.mxu0
        %v5375 = vadd.f32 %v1954, %v5374
        %v5376 = vpop.f32.mrf.mxu0
        %5377 = vdwg.mxu0
        %v5378 = vsel %vm2033, %v5375, -inf
        %5379 = vmax.xlane.f32.xlu0 %v5378
        %v5380 = vpop.xlane.xlu0 %5379
        %v5381 = vsub.f32 %v5375, %v5380
        %v5382 = vmul.f32 %v5381, 1.442695
        %v5383 = vpow.pop %v5382
        %v5384 = vsel %vm2033, %v5383, 0.0
        %5385 = vadd.xlane.f32.xlu0 %v5384
        %v5386 = vpop.xlane.xlu0 %5385
        %v5387 = vrcp.pop %v5386
        %v5388 = vmul.f32 %v5383, %v5387
        %v5390 = vsel %vm2033, %v5388, 0
        %5392 = vmatprep.subr.mxu0 0.0
        %5393 = vmatpush1.msra.mxu0 0.0
        %5394 = vmatprep.subr.mxu0 0.0
        %5395 = vmatpush1.msra.mxu0 0.0
        %5396 = vmatprep.subr.mxu0 0.0
        %5397 = vmatpush1.msra.mxu0 0.0
        %5398 = vmatprep.subr.mxu0 0.0
        %5399 = vmatpush1.msra.mxu0 0.0
        %5400 = vmatprep.subr.mxu0 0.0
        %5401 = vmatpush1.msra.mxu0 0.0
        %5402 = vmatprep.subr.mxu0 0.0
        %5403 = vmatpush1.msra.mxu0 0.0
        %5404 = vmatprep.subr.mxu0 0.0
        %5405 = vmatpush1.msra.mxu0 0.0
        %5406 = vmatprep.subr.mxu0 0.0
        %5407 = vmatpush1.msra.mxu0 0.0
        %5408 = vmatprep.subr.mxu0 0.0
        %5409 = vmatpush1.msra.mxu0 0.0
        %5410 = vmatprep.subr.mxu0 0.0
        %5411 = vmatpush1.msra.mxu0 0.0
        %5412 = vmatprep.subr.mxu0 0.0
        %5413 = vmatpush1.msra.mxu0 0.0
        %5414 = vmatprep.subr.mxu0 0.0
        %5415 = vmatpush1.msra.mxu0 0.0
        %5416 = vmatprep.subr.mxu0 0.0
        %5417 = vmatpush1.msra.mxu0 0.0
        %5418 = vmatprep.subr.mxu0 0.0
        %5419 = vmatpush1.msra.mxu0 0.0
        %5420 = vmatprep.subr.mxu0 0.0
        %5421 = vmatpush1.msra.mxu0 0.0
        %5422 = vmatprep.subr.mxu0 0.0
        %5423 = vmatpush1.msra.mxu0 %v5299
        %5424 = vmatprep.subr.mxu0 0.0
        %5425 = vmatpush2.msra.mxu0 0.0
        %5426 = vmatprep.subr.mxu0 0.0
        %5427 = vmatpush2.msra.mxu0 0.0
        %5428 = vmatprep.subr.mxu0 0.0
        %5429 = vmatpush2.msra.mxu0 0.0
        %5430 = vmatprep.subr.mxu0 0.0
        %5431 = vmatpush2.msra.mxu0 0.0
        %5432 = vmatprep.subr.mxu0 0.0
        %5433 = vmatpush2.msra.mxu0 0.0
        %5434 = vmatprep.subr.mxu0 0.0
        %5435 = vmatpush2.msra.mxu0 0.0
        %5436 = vmatprep.subr.mxu0 0.0
        %5437 = vmatpush2.msra.mxu0 0.0
        %5438 = vmatprep.subr.mxu0 0.0
        %5439 = vmatpush2.msra.mxu0 0.0
        %5440 = vmatprep.subr.mxu0 0.0
        %5441 = vmatpush2.msra.mxu0 0.0
        %5442 = vmatprep.subr.mxu0 0.0
        %5443 = vmatpush2.msra.mxu0 0.0
        %5444 = vmatprep.subr.mxu0 0.0
        %5445 = vmatpush2.msra.mxu0 0.0
        %5446 = vmatprep.subr.mxu0 0.0
        %5447 = vmatpush2.msra.mxu0 0.0
        %5448 = vmatprep.subr.mxu0 0.0
        %5449 = vmatpush2.msra.mxu0 0.0
        %5450 = vmatprep.subr.mxu0 0.0
        %5451 = vmatpush2.msra.mxu0 0.0
        %5452 = vmatprep.subr.mxu0 0.0
        %5453 = vmatpush2.msra.mxu0 0.0
        %5454 = vmatprep.subr.mxu0 0.0
        %5455 = vmatpush2.msra.mxu0 0.0
        %5456 = vmatprep.mubr.f32.mxu0 0.0
        %5457 = vmatmul.mubr.f32.gmra.mxu0 %v5390
        %v5458 = vpop.f32.mrf.mxu0
        %v5459 = vadd.f32 0.0, %v5458
        %v5460 = vpop.f32.mrf.mxu0
        %5461 = vdwg.mxu0
        %s5462 = scalar_lea.vmem %s39, 32
        %v5463 = vld [vmem:[%s5462] sm:$0xff]
        %v5464 = vld [vmem:[%s5462 + $0x8] sm:$0xff]
        %s5465 = scalar_lea.vmem %s27, 96
        %v5466 = vld [vmem:[%s5465] sm:$0xff]
        %v5467 = vld [vmem:[%s5465 + $0x8] sm:$0xff]
        %v5468 = vld [vmem:[%s5465 + $0x10] sm:$0xff]
        %v5469 = vld [vmem:[%s5465 + $0x18] sm:$0xff]
        %s5470 = scalar_lea.vmem %s29, 3
        %v5471 = vld [vmem:[%s5470] sm:$0x1]
        %v5473 = vlaneseq
        %v5474 = vshrl.u32 %v5473, 7
        %v5475 = vsub.s32 0, %v5474
        %v5476 = vrot.slane %v5471, %v5475
        %5478 = vmatprep.subr.mxu0 0.0
        %5479 = vmatpush1.msra.mxu0 0.0
        %5480 = vmatprep.subr.mxu0 0.0
        %5481 = vmatpush1.msra.mxu0 0.0
        %5482 = vmatprep.subr.mxu0 0.0
        %5483 = vmatpush1.msra.mxu0 0.0
        %5484 = vmatprep.subr.mxu0 0.0
        %5485 = vmatpush1.msra.mxu0 0.0
        %5486 = vmatprep.subr.mxu0 0.0
        %5487 = vmatpush1.msra.mxu0 0.0
        %5488 = vmatprep.subr.mxu0 0.0
        %5489 = vmatpush1.msra.mxu0 0.0
        %5490 = vmatprep.subr.mxu0 0.0
        %5491 = vmatpush1.msra.mxu0 0.0
        %5492 = vmatprep.subr.mxu0 0.0
        %5493 = vmatpush1.msra.mxu0 0.0
        %5494 = vmatprep.subr.mxu0 0.0
        %5495 = vmatpush1.msra.mxu0 0.0
        %5496 = vmatprep.subr.mxu0 0.0
        %5497 = vmatpush1.msra.mxu0 0.0
        %5498 = vmatprep.subr.mxu0 0.0
        %5499 = vmatpush1.msra.mxu0 0.0
        %5500 = vmatprep.subr.mxu0 0.0
        %5501 = vmatpush1.msra.mxu0 0.0
        %5502 = vmatprep.subr.mxu0 0.0
        %5503 = vmatpush1.msra.mxu0 %v5469
        %5504 = vmatprep.subr.mxu0 0.0
        %5505 = vmatpush1.msra.mxu0 %v5468
        %5506 = vmatprep.subr.mxu0 0.0
        %5507 = vmatpush1.msra.mxu0 %v5467
        %5508 = vmatprep.subr.mxu0 0.0
        %5509 = vmatpush1.msra.mxu0 %v5466
        %5510 = vmatprep.subr.mxu0 0.0
        %5511 = vmatpush2.msra.mxu0 0.0
        %5512 = vmatprep.subr.mxu0 0.0
        %5513 = vmatpush2.msra.mxu0 0.0
        %5514 = vmatprep.subr.mxu0 0.0
        %5515 = vmatpush2.msra.mxu0 0.0
        %5516 = vmatprep.subr.mxu0 0.0
        %5517 = vmatpush2.msra.mxu0 0.0
        %5518 = vmatprep.subr.mxu0 0.0
        %5519 = vmatpush2.msra.mxu0 0.0
        %5520 = vmatprep.subr.mxu0 0.0
        %5521 = vmatpush2.msra.mxu0 0.0
        %5522 = vmatprep.subr.mxu0 0.0
        %5523 = vmatpush2.msra.mxu0 0.0
        %5524 = vmatprep.subr.mxu0 0.0
        %5525 = vmatpush2.msra.mxu0 0.0
        %5526 = vmatprep.subr.mxu0 0.0
        %5527 = vmatpush2.msra.mxu0 0.0
        %5528 = vmatprep.subr.mxu0 0.0
        %5529 = vmatpush2.msra.mxu0 0.0
        %5530 = vmatprep.subr.mxu0 0.0
        %5531 = vmatpush2.msra.mxu0 0.0
        %5532 = vmatprep.subr.mxu0 0.0
        %5533 = vmatpush2.msra.mxu0 0.0
        %5534 = vmatprep.subr.mxu0 0.0
        %5535 = vmatpush2.msra.mxu0 0.0
        %5536 = vmatprep.subr.mxu0 0.0
        %5537 = vmatpush2.msra.mxu0 0.0
        %5538 = vmatprep.subr.mxu0 0.0
        %5539 = vmatpush2.msra.mxu0 0.0
        %5540 = vmatprep.subr.mxu0 0.0
        %5541 = vmatpush2.msra.mxu0 0.0
        %5542 = vmatprep.mubr.f32.mxu0 0.0
        %5543 = vmatmul.mubr.f32.gmra.mxu0 %v5064
        %v5544 = vpop.f32.mrf.mxu0
        %v5545 = vadd.f32 %v5476, %v5544
        %v5546 = vpop.f32.mrf.mxu0
        %5547 = vdwg.mxu0
        %s5548 = scalar_lea.vmem %s31, 96
        %v5549 = vld [vmem:[%s5548] sm:$0xff]
        %v5550 = vld [vmem:[%s5548 + $0x8] sm:$0xff]
        %v5551 = vld [vmem:[%s5548 + $0x10] sm:$0xff]
        %v5552 = vld [vmem:[%s5548 + $0x18] sm:$0xff]
        %s5553 = scalar_lea.vmem %s33, 3
        %v5554 = vld [vmem:[%s5553] sm:$0x1]
        %v5556 = vlaneseq
        %v5557 = vshrl.u32 %v5556, 7
        %v5558 = vsub.s32 0, %v5557
        %v5559 = vrot.slane %v5554, %v5558
        %5561 = vmatprep.subr.mxu0 0.0
        %5562 = vmatpush1.msra.mxu0 0.0
        %5563 = vmatprep.subr.mxu0 0.0
        %5564 = vmatpush1.msra.mxu0 0.0
        %5565 = vmatprep.subr.mxu0 0.0
        %5566 = vmatpush1.msra.mxu0 0.0
        %5567 = vmatprep.subr.mxu0 0.0
        %5568 = vmatpush1.msra.mxu0 0.0
        %5569 = vmatprep.subr.mxu0 0.0
        %5570 = vmatpush1.msra.mxu0 0.0
        %5571 = vmatprep.subr.mxu0 0.0
        %5572 = vmatpush1.msra.mxu0 0.0
        %5573 = vmatprep.subr.mxu0 0.0
        %5574 = vmatpush1.msra.mxu0 0.0
        %5575 = vmatprep.subr.mxu0 0.0
        %5576 = vmatpush1.msra.mxu0 0.0
        %5577 = vmatprep.subr.mxu0 0.0
        %5578 = vmatpush1.msra.mxu0 0.0
        %5579 = vmatprep.subr.mxu0 0.0
        %5580 = vmatpush1.msra.mxu0 0.0
        %5581 = vmatprep.subr.mxu0 0.0
        %5582 = vmatpush1.msra.mxu0 0.0
        %5583 = vmatprep.subr.mxu0 0.0
        %5584 = vmatpush1.msra.mxu0 0.0
        %5585 = vmatprep.subr.mxu0 0.0
        %5586 = vmatpush1.msra.mxu0 %v5552
        %5587 = vmatprep.subr.mxu0 0.0
        %5588 = vmatpush1.msra.mxu0 %v5551
        %5589 = vmatprep.subr.mxu0 0.0
        %5590 = vmatpush1.msra.mxu0 %v5550
        %5591 = vmatprep.subr.mxu0 0.0
        %5592 = vmatpush1.msra.mxu0 %v5549
        %5593 = vmatprep.subr.mxu0 0.0
        %5594 = vmatpush2.msra.mxu0 0.0
        %5595 = vmatprep.subr.mxu0 0.0
        %5596 = vmatpush2.msra.mxu0 0.0
        %5597 = vmatprep.subr.mxu0 0.0
        %5598 = vmatpush2.msra.mxu0 0.0
        %5599 = vmatprep.subr.mxu0 0.0
        %5600 = vmatpush2.msra.mxu0 0.0
        %5601 = vmatprep.subr.mxu0 0.0
        %5602 = vmatpush2.msra.mxu0 0.0
        %5603 = vmatprep.subr.mxu0 0.0
        %5604 = vmatpush2.msra.mxu0 0.0
        %5605 = vmatprep.subr.mxu0 0.0
        %5606 = vmatpush2.msra.mxu0 0.0
        %5607 = vmatprep.subr.mxu0 0.0
        %5608 = vmatpush2.msra.mxu0 0.0
        %5609 = vmatprep.subr.mxu0 0.0
        %5610 = vmatpush2.msra.mxu0 0.0
        %5611 = vmatprep.subr.mxu0 0.0
        %5612 = vmatpush2.msra.mxu0 0.0
        %5613 = vmatprep.subr.mxu0 0.0
        %5614 = vmatpush2.msra.mxu0 0.0
        %5615 = vmatprep.subr.mxu0 0.0
        %5616 = vmatpush2.msra.mxu0 0.0
        %5617 = vmatprep.subr.mxu0 0.0
        %5618 = vmatpush2.msra.mxu0 0.0
        %5619 = vmatprep.subr.mxu0 0.0
        %5620 = vmatpush2.msra.mxu0 0.0
        %5621 = vmatprep.subr.mxu0 0.0
        %5622 = vmatpush2.msra.mxu0 0.0
        %5623 = vmatprep.subr.mxu0 0.0
        %5624 = vmatpush2.msra.mxu0 0.0
        %5625 = vmatprep.mubr.f32.mxu0 0.0
        %5626 = vmatmul.mubr.f32.gmra.mxu0 %v5064
        %v5627 = vpop.f32.mrf.mxu0
        %v5628 = vadd.f32 %v5559, %v5627
        %v5629 = vpop.f32.mrf.mxu0
        %5630 = vdwg.mxu0
        %s5631 = scalar_lea.vmem %s35, 96
        %v5632 = vld [vmem:[%s5631] sm:$0xff]
        %v5633 = vld [vmem:[%s5631 + $0x8] sm:$0xff]
        %v5634 = vld [vmem:[%s5631 + $0x10] sm:$0xff]
        %v5635 = vld [vmem:[%s5631 + $0x18] sm:$0xff]
        %s5636 = scalar_lea.vmem %s37, 3
        %v5637 = vld [vmem:[%s5636] sm:$0x1]
        %v5639 = vlaneseq
        %v5640 = vshrl.u32 %v5639, 7
        %v5641 = vsub.s32 0, %v5640
        %v5642 = vrot.slane %v5637, %v5641
        %5644 = vmatprep.subr.mxu0 0.0
        %5645 = vmatpush1.msra.mxu0 0.0
        %5646 = vmatprep.subr.mxu0 0.0
        %5647 = vmatpush1.msra.mxu0 0.0
        %5648 = vmatprep.subr.mxu0 0.0
        %5649 = vmatpush1.msra.mxu0 0.0
        %5650 = vmatprep.subr.mxu0 0.0
        %5651 = vmatpush1.msra.mxu0 0.0
        %5652 = vmatprep.subr.mxu0 0.0
        %5653 = vmatpush1.msra.mxu0 0.0
        %5654 = vmatprep.subr.mxu0 0.0
        %5655 = vmatpush1.msra.mxu0 0.0
        %5656 = vmatprep.subr.mxu0 0.0
        %5657 = vmatpush1.msra.mxu0 0.0
        %5658 = vmatprep.subr.mxu0 0.0
        %5659 = vmatpush1.msra.mxu0 0.0
        %5660 = vmatprep.subr.mxu0 0.0
        %5661 = vmatpush1.msra.mxu0 0.0
        %5662 = vmatprep.subr.mxu0 0.0
        %5663 = vmatpush1.msra.mxu0 0.0
        %5664 = vmatprep.subr.mxu0 0.0
        %5665 = vmatpush1.msra.mxu0 0.0
        %5666 = vmatprep.subr.mxu0 0.0
        %5667 = vmatpush1.msra.mxu0 0.0
        %5668 = vmatprep.subr.mxu0 0.0
        %5669 = vmatpush1.msra.mxu0 %v5635
        %5670 = vmatprep.subr.mxu0 0.0
        %5671 = vmatpush1.msra.mxu0 %v5634
        %5672 = vmatprep.subr.mxu0 0.0
        %5673 = vmatpush1.msra.mxu0 %v5633
        %5674 = vmatprep.subr.mxu0 0.0
        %5675 = vmatpush1.msra.mxu0 %v5632
        %5676 = vmatprep.subr.mxu0 0.0
        %5677 = vmatpush2.msra.mxu0 0.0
        %5678 = vmatprep.subr.mxu0 0.0
        %5679 = vmatpush2.msra.mxu0 0.0
        %5680 = vmatprep.subr.mxu0 0.0
        %5681 = vmatpush2.msra.mxu0 0.0
        %5682 = vmatprep.subr.mxu0 0.0
        %5683 = vmatpush2.msra.mxu0 0.0
        %5684 = vmatprep.subr.mxu0 0.0
        %5685 = vmatpush2.msra.mxu0 0.0
        %5686 = vmatprep.subr.mxu0 0.0
        %5687 = vmatpush2.msra.mxu0 0.0
        %5688 = vmatprep.subr.mxu0 0.0
        %5689 = vmatpush2.msra.mxu0 0.0
        %5690 = vmatprep.subr.mxu0 0.0
        %5691 = vmatpush2.msra.mxu0 0.0
        %5692 = vmatprep.subr.mxu0 0.0
        %5693 = vmatpush2.msra.mxu0 0.0
        %5694 = vmatprep.subr.mxu0 0.0
        %5695 = vmatpush2.msra.mxu0 0.0
        %5696 = vmatprep.subr.mxu0 0.0
        %5697 = vmatpush2.msra.mxu0 0.0
        %5698 = vmatprep.subr.mxu0 0.0
        %5699 = vmatpush2.msra.mxu0 0.0
        %5700 = vmatprep.subr.mxu0 0.0
        %5701 = vmatpush2.msra.mxu0 0.0
        %5702 = vmatprep.subr.mxu0 0.0
        %5703 = vmatpush2.msra.mxu0 0.0
        %5704 = vmatprep.subr.mxu0 0.0
        %5705 = vmatpush2.msra.mxu0 0.0
        %5706 = vmatprep.subr.mxu0 0.0
        %5707 = vmatpush2.msra.mxu0 0.0
        %5708 = vmatprep.mubr.f32.mxu0 0.0
        %5709 = vmatmul.mubr.f32.gmra.mxu0 %v5064
        %v5710 = vpop.f32.mrf.mxu0
        %v5711 = vadd.f32 %v5642, %v5710
        %v5712 = vpop.f32.mrf.mxu0
        %5713 = vdwg.mxu0
        %v5715 = vsel %vm1956, %v5545, 0
        %v5718 = vsel %vm1956, %v5628, 0
        %5720 = vmatprep.subr.mxu0 0.0
        %5721 = vmatpush1.xpose.msra.mxu0 0.0
        %5722 = vmatprep.subr.mxu0 0.0
        %5723 = vmatpush1.xpose.msra.mxu0 0.0
        %5724 = vmatprep.subr.mxu0 0.0
        %5725 = vmatpush1.xpose.msra.mxu0 0.0
        %5726 = vmatprep.subr.mxu0 0.0
        %5727 = vmatpush1.xpose.msra.mxu0 0.0
        %5728 = vmatprep.subr.mxu0 0.0
        %5729 = vmatpush1.xpose.msra.mxu0 0.0
        %5730 = vmatprep.subr.mxu0 0.0
        %5731 = vmatpush1.xpose.msra.mxu0 0.0
        %5732 = vmatprep.subr.mxu0 0.0
        %5733 = vmatpush1.xpose.msra.mxu0 0.0
        %5734 = vmatprep.subr.mxu0 0.0
        %5735 = vmatpush1.xpose.msra.mxu0 0.0
        %5736 = vmatprep.subr.mxu0 0.0
        %5737 = vmatpush1.xpose.msra.mxu0 0.0
        %5738 = vmatprep.subr.mxu0 0.0
        %5739 = vmatpush1.xpose.msra.mxu0 0.0
        %5740 = vmatprep.subr.mxu0 0.0
        %5741 = vmatpush1.xpose.msra.mxu0 0.0
        %5742 = vmatprep.subr.mxu0 0.0
        %5743 = vmatpush1.xpose.msra.mxu0 0.0
        %5744 = vmatprep.subr.mxu0 0.0
        %5745 = vmatpush1.xpose.msra.mxu0 0.0
        %5746 = vmatprep.subr.mxu0 0.0
        %5747 = vmatpush1.xpose.msra.mxu0 0.0
        %5748 = vmatprep.subr.mxu0 0.0
        %5749 = vmatpush1.xpose.msra.mxu0 0.0
        %5750 = vmatprep.subr.mxu0 0.0
        %5751 = vmatpush1.xpose.msra.mxu0 %v5718
        %5752 = vmatprep.subr.mxu0 0.0
        %5753 = vmatpush2.xpose.msra.mxu0 0.0
        %5754 = vmatprep.subr.mxu0 0.0
        %5755 = vmatpush2.xpose.msra.mxu0 0.0
        %5756 = vmatprep.subr.mxu0 0.0
        %5757 = vmatpush2.xpose.msra.mxu0 0.0
        %5758 = vmatprep.subr.mxu0 0.0
        %5759 = vmatpush2.xpose.msra.mxu0 0.0
        %5760 = vmatprep.subr.mxu0 0.0
        %5761 = vmatpush2.xpose.msra.mxu0 0.0
        %5762 = vmatprep.subr.mxu0 0.0
        %5763 = vmatpush2.xpose.msra.mxu0 0.0
        %5764 = vmatprep.subr.mxu0 0.0
        %5765 = vmatpush2.xpose.msra.mxu0 0.0
        %5766 = vmatprep.subr.mxu0 0.0
        %5767 = vmatpush2.xpose.msra.mxu0 0.0
        %5768 = vmatprep.subr.mxu0 0.0
        %5769 = vmatpush2.xpose.msra.mxu0 0.0
        %5770 = vmatprep.subr.mxu0 0.0
        %5771 = vmatpush2.xpose.msra.mxu0 0.0
        %5772 = vmatprep.subr.mxu0 0.0
        %5773 = vmatpush2.xpose.msra.mxu0 0.0
        %5774 = vmatprep.subr.mxu0 0.0
        %5775 = vmatpush2.xpose.msra.mxu0 0.0
        %5776 = vmatprep.subr.mxu0 0.0
        %5777 = vmatpush2.xpose.msra.mxu0 0.0
        %5778 = vmatprep.subr.mxu0 0.0
        %5779 = vmatpush2.xpose.msra.mxu0 0.0
        %5780 = vmatprep.subr.mxu0 0.0
        %5781 = vmatpush2.xpose.msra.mxu0 0.0
        %5782 = vmatprep.subr.mxu0 0.0
        %5783 = vmatpush2.xpose.msra.mxu0 0.0
        %5784 = vmatprep.mubr.f32.mxu0 0.0
        %5785 = vmatmul.mubr.f32.gmra.mxu0 %v5715
        %v5786 = vpop.f32.mrf.mxu0
        %v5787 = vadd.f32 %v1954, %v5786
        %v5788 = vpop.f32.mrf.mxu0
        %5789 = vdwg.mxu0
        %v5790 = vsel %vm2033, %v5787, -inf
        %5791 = vmax.xlane.f32.xlu0 %v5790
        %v5792 = vpop.xlane.xlu0 %5791
        %v5793 = vsub.f32 %v5787, %v5792
        %v5794 = vmul.f32 %v5793, 1.442695
        %v5795 = vpow.pop %v5794
        %v5796 = vsel %vm2033, %v5795, 0.0
        %5797 = vadd.xlane.f32.xlu0 %v5796
        %v5798 = vpop.xlane.xlu0 %5797
        %v5799 = vrcp.pop %v5798
        %v5800 = vmul.f32 %v5795, %v5799
        %v5802 = vsel %vm2033, %v5800, 0
        %5804 = vmatprep.subr.mxu0 0.0
        %5805 = vmatpush1.msra.mxu0 0.0
        %5806 = vmatprep.subr.mxu0 0.0
        %5807 = vmatpush1.msra.mxu0 0.0
        %5808 = vmatprep.subr.mxu0 0.0
        %5809 = vmatpush1.msra.mxu0 0.0
        %5810 = vmatprep.subr.mxu0 0.0
        %5811 = vmatpush1.msra.mxu0 0.0
        %5812 = vmatprep.subr.mxu0 0.0
        %5813 = vmatpush1.msra.mxu0 0.0
        %5814 = vmatprep.subr.mxu0 0.0
        %5815 = vmatpush1.msra.mxu0 0.0
        %5816 = vmatprep.subr.mxu0 0.0
        %5817 = vmatpush1.msra.mxu0 0.0
        %5818 = vmatprep.subr.mxu0 0.0
        %5819 = vmatpush1.msra.mxu0 0.0
        %5820 = vmatprep.subr.mxu0 0.0
        %5821 = vmatpush1.msra.mxu0 0.0
        %5822 = vmatprep.subr.mxu0 0.0
        %5823 = vmatpush1.msra.mxu0 0.0
        %5824 = vmatprep.subr.mxu0 0.0
        %5825 = vmatpush1.msra.mxu0 0.0
        %5826 = vmatprep.subr.mxu0 0.0
        %5827 = vmatpush1.msra.mxu0 0.0
        %5828 = vmatprep.subr.mxu0 0.0
        %5829 = vmatpush1.msra.mxu0 0.0
        %5830 = vmatprep.subr.mxu0 0.0
        %5831 = vmatpush1.msra.mxu0 0.0
        %5832 = vmatprep.subr.mxu0 0.0
        %5833 = vmatpush1.msra.mxu0 0.0
        %5834 = vmatprep.subr.mxu0 0.0
        %5835 = vmatpush1.msra.mxu0 %v5711
        %5836 = vmatprep.subr.mxu0 0.0
        %5837 = vmatpush2.msra.mxu0 0.0
        %5838 = vmatprep.subr.mxu0 0.0
        %5839 = vmatpush2.msra.mxu0 0.0
        %5840 = vmatprep.subr.mxu0 0.0
        %5841 = vmatpush2.msra.mxu0 0.0
        %5842 = vmatprep.subr.mxu0 0.0
        %5843 = vmatpush2.msra.mxu0 0.0
        %5844 = vmatprep.subr.mxu0 0.0
        %5845 = vmatpush2.msra.mxu0 0.0
        %5846 = vmatprep.subr.mxu0 0.0
        %5847 = vmatpush2.msra.mxu0 0.0
        %5848 = vmatprep.subr.mxu0 0.0
        %5849 = vmatpush2.msra.mxu0 0.0
        %5850 = vmatprep.subr.mxu0 0.0
        %5851 = vmatpush2.msra.mxu0 0.0
        %5852 = vmatprep.subr.mxu0 0.0
        %5853 = vmatpush2.msra.mxu0 0.0
        %5854 = vmatprep.subr.mxu0 0.0
        %5855 = vmatpush2.msra.mxu0 0.0
        %5856 = vmatprep.subr.mxu0 0.0
        %5857 = vmatpush2.msra.mxu0 0.0
        %5858 = vmatprep.subr.mxu0 0.0
        %5859 = vmatpush2.msra.mxu0 0.0
        %5860 = vmatprep.subr.mxu0 0.0
        %5861 = vmatpush2.msra.mxu0 0.0
        %5862 = vmatprep.subr.mxu0 0.0
        %5863 = vmatpush2.msra.mxu0 0.0
        %5864 = vmatprep.subr.mxu0 0.0
        %5865 = vmatpush2.msra.mxu0 0.0
        %5866 = vmatprep.subr.mxu0 0.0
        %5867 = vmatpush2.msra.mxu0 0.0
        %5868 = vmatprep.mubr.f32.mxu0 0.0
        %5869 = vmatmul.mubr.f32.gmra.mxu0 %v5802
        %v5870 = vpop.f32.mrf.mxu0
        %v5871 = vadd.f32 0.0, %v5870
        %v5872 = vpop.f32.mrf.mxu0
        %5873 = vdwg.mxu0
        %s5874 = scalar_lea.vmem %s39, 48
        %v5875 = vld [vmem:[%s5874] sm:$0xff]
        %v5876 = vld [vmem:[%s5874 + $0x8] sm:$0xff]
        %v5878 = vsel %vm1956, %v5871, 0
        %5880 = vmatprep.subr.mxu0 0.0
        %5881 = vmatpush1.msra.mxu0 0.0
        %5882 = vmatprep.subr.mxu0 0.0
        %5883 = vmatpush1.msra.mxu0 0.0
        %5884 = vmatprep.subr.mxu0 0.0
        %5885 = vmatpush1.msra.mxu0 0.0
        %5886 = vmatprep.subr.mxu0 0.0
        %5887 = vmatpush1.msra.mxu0 0.0
        %5888 = vmatprep.subr.mxu0 0.0
        %5889 = vmatpush1.msra.mxu0 0.0
        %5890 = vmatprep.subr.mxu0 0.0
        %5891 = vmatpush1.msra.mxu0 0.0
        %5892 = vmatprep.subr.mxu0 0.0
        %5893 = vmatpush1.msra.mxu0 0.0
        %5894 = vmatprep.subr.mxu0 0.0
        %5895 = vmatpush1.msra.mxu0 0.0
        %5896 = vmatprep.subr.mxu0 0.0
        %5897 = vmatpush1.msra.mxu0 0.0
        %5898 = vmatprep.subr.mxu0 0.0
        %5899 = vmatpush1.msra.mxu0 0.0
        %5900 = vmatprep.subr.mxu0 0.0
        %5901 = vmatpush1.msra.mxu0 0.0
        %5902 = vmatprep.subr.mxu0 0.0
        %5903 = vmatpush1.msra.mxu0 0.0
        %5904 = vmatprep.subr.mxu0 0.0
        %5905 = vmatpush1.msra.mxu0 0.0
        %5906 = vmatprep.subr.mxu0 0.0
        %5907 = vmatpush1.msra.mxu0 0.0
        %5908 = vmatprep.subr.mxu0 0.0
        %5909 = vmatpush1.msra.mxu0 %v5876
        %5910 = vmatprep.subr.mxu0 0.0
        %5911 = vmatpush1.msra.mxu0 %v5875
        %5912 = vmatprep.subr.mxu0 0.0
        %5913 = vmatpush2.msra.mxu0 0.0
        %5914 = vmatprep.subr.mxu0 0.0
        %5915 = vmatpush2.msra.mxu0 0.0
        %5916 = vmatprep.subr.mxu0 0.0
        %5917 = vmatpush2.msra.mxu0 0.0
        %5918 = vmatprep.subr.mxu0 0.0
        %5919 = vmatpush2.msra.mxu0 0.0
        %5920 = vmatprep.subr.mxu0 0.0
        %5921 = vmatpush2.msra.mxu0 0.0
        %5922 = vmatprep.subr.mxu0 0.0
        %5923 = vmatpush2.msra.mxu0 0.0
        %5924 = vmatprep.subr.mxu0 0.0
        %5925 = vmatpush2.msra.mxu0 0.0
        %5926 = vmatprep.subr.mxu0 0.0
        %5927 = vmatpush2.msra.mxu0 0.0
        %5928 = vmatprep.subr.mxu0 0.0
        %5929 = vmatpush2.msra.mxu0 0.0
        %5930 = vmatprep.subr.mxu0 0.0
        %5931 = vmatpush2.msra.mxu0 0.0
        %5932 = vmatprep.subr.mxu0 0.0
        %5933 = vmatpush2.msra.mxu0 0.0
        %5934 = vmatprep.subr.mxu0 0.0
        %5935 = vmatpush2.msra.mxu0 0.0
        %5936 = vmatprep.subr.mxu0 0.0
        %5937 = vmatpush2.msra.mxu0 0.0
        %5938 = vmatprep.subr.mxu0 0.0
        %5939 = vmatpush2.msra.mxu0 0.0
        %5940 = vmatprep.subr.mxu0 0.0
        %5941 = vmatpush2.msra.mxu0 0.0
        %5942 = vmatprep.subr.mxu0 0.0
        %5943 = vmatpush2.msra.mxu0 0.0
        %5944 = vmatprep.mubr.f32.mxu0 0.0
        %5945 = vmatmul.mubr.f32.gmra.mxu0 %v5878
        %v5946 = vpop.f32.mrf.mxu0
        %v5947 = vadd.f32 0.0, %v5946
        %v5948 = vpop.f32.mrf.mxu0
        %5949 = vdwg.mxu0
        %v5951 = vsel %vm1956, %v5459, 0
        %5953 = vmatprep.subr.mxu0 0.0
        %5954 = vmatpush1.msra.mxu0 0.0
        %5955 = vmatprep.subr.mxu0 0.0
        %5956 = vmatpush1.msra.mxu0 0.0
        %5957 = vmatprep.subr.mxu0 0.0
        %5958 = vmatpush1.msra.mxu0 0.0
        %5959 = vmatprep.subr.mxu0 0.0
        %5960 = vmatpush1.msra.mxu0 0.0
        %5961 = vmatprep.subr.mxu0 0.0
        %5962 = vmatpush1.msra.mxu0 0.0
        %5963 = vmatprep.subr.mxu0 0.0
        %5964 = vmatpush1.msra.mxu0 0.0
        %5965 = vmatprep.subr.mxu0 0.0
        %5966 = vmatpush1.msra.mxu0 0.0
        %5967 = vmatprep.subr.mxu0 0.0
        %5968 = vmatpush1.msra.mxu0 0.0
        %5969 = vmatprep.subr.mxu0 0.0
        %5970 = vmatpush1.msra.mxu0 0.0
        %5971 = vmatprep.subr.mxu0 0.0
        %5972 = vmatpush1.msra.mxu0 0.0
        %5973 = vmatprep.subr.mxu0 0.0
        %5974 = vmatpush1.msra.mxu0 0.0
        %5975 = vmatprep.subr.mxu0 0.0
        %5976 = vmatpush1.msra.mxu0 0.0
        %5977 = vmatprep.subr.mxu0 0.0
        %5978 = vmatpush1.msra.mxu0 0.0
        %5979 = vmatprep.subr.mxu0 0.0
        %5980 = vmatpush1.msra.mxu0 0.0
        %5981 = vmatprep.subr.mxu0 0.0
        %5982 = vmatpush1.msra.mxu0 %v5464
        %5983 = vmatprep.subr.mxu0 0.0
        %5984 = vmatpush1.msra.mxu0 %v5463
        %5985 = vmatprep.subr.mxu0 0.0
        %5986 = vmatpush2.msra.mxu0 0.0
        %5987 = vmatprep.subr.mxu0 0.0
        %5988 = vmatpush2.msra.mxu0 0.0
        %5989 = vmatprep.subr.mxu0 0.0
        %5990 = vmatpush2.msra.mxu0 0.0
        %5991 = vmatprep.subr.mxu0 0.0
        %5992 = vmatpush2.msra.mxu0 0.0
        %5993 = vmatprep.subr.mxu0 0.0
        %5994 = vmatpush2.msra.mxu0 0.0
        %5995 = vmatprep.subr.mxu0 0.0
        %5996 = vmatpush2.msra.mxu0 0.0
        %5997 = vmatprep.subr.mxu0 0.0
        %5998 = vmatpush2.msra.mxu0 0.0
        %5999 = vmatprep.subr.mxu0 0.0
        %6000 = vmatpush2.msra.mxu0 0.0
        %6001 = vmatprep.subr.mxu0 0.0
        %6002 = vmatpush2.msra.mxu0 0.0
        %6003 = vmatprep.subr.mxu0 0.0
        %6004 = vmatpush2.msra.mxu0 0.0
        %6005 = vmatprep.subr.mxu0 0.0
        %6006 = vmatpush2.msra.mxu0 0.0
        %6007 = vmatprep.subr.mxu0 0.0
        %6008 = vmatpush2.msra.mxu0 0.0
        %6009 = vmatprep.subr.mxu0 0.0
        %6010 = vmatpush2.msra.mxu0 0.0
        %6011 = vmatprep.subr.mxu0 0.0
        %6012 = vmatpush2.msra.mxu0 0.0
        %6013 = vmatprep.subr.mxu0 0.0
        %6014 = vmatpush2.msra.mxu0 0.0
        %6015 = vmatprep.subr.mxu0 0.0
        %6016 = vmatpush2.msra.mxu0 0.0
        %6017 = vmatprep.mubr.f32.mxu0 0.0
        %6018 = vmatmul.mubr.f32.gmra.mxu0 %v5951
        %v6019 = vpop.f32.mrf.mxu0
        %v6020 = vadd.f32 %v5947, %v6019
        %v6021 = vpop.f32.mrf.mxu0
        %6022 = vdwg.mxu0
        %v6024 = vlaneseq
        %v6025 = vshrl.u32 %v6024, 7
        %v6026 = vsub.s32 0, %v6025
        %v6027 = vrot.slane %v5049, %v6026
        %v6029 = vadd.f32 %v6020, %v6027
        %v6030 = vmul.f32 %v6029, %v2695
        %s6031 = scalar_lea.vmem %s75, 1
        %v6032 = vld [vmem:[%s6031] sm:$0x1]
        %s6033 = scalar_lea.vmem %s77, 1
        %v6034 = vld [vmem:[%s6033] sm:$0x1]
        %v6035 = vadd.f32 %v5047, %v6030
        %v6036 = vsel %vm1714, %v6035, 0.0
        %6037 = vadd.xlane.f32.xlu0 %v6036
        %v6038 = vpop.xlane.xlu0 %6037
        %v6039 = vmul.f32 %v6038, %v2704
        %v6040 = vsub.f32 %v6035, %v6039
        %v6041 = vmul.f32 %v6040, %v6040
        %v6042 = vsel %vm1714, %v6041, 0.0
        %6043 = vadd.xlane.f32.xlu0 %v6042
        %v6044 = vpop.xlane.xlu0 %6043
        %v6045 = vmul.f32 %v6044, %v2704
        %v6046 = vadd.f32 %v6045, 1e-05
        %v6047 = vrsqrt.pop %v6046
        %v6048 = vmul.f32 %v6040, %v6047
        %v6050 = vlaneseq
        %v6051 = vshrl.u32 %v6050, 7
        %v6052 = vsub.s32 0, %v6051
        %v6053 = vrot.slane %v6032, %v6052
        %v6055 = vmul.f32 %v6048, %v6053
        %v6057 = vlaneseq
        %v6058 = vshrl.u32 %v6057, 7
        %v6059 = vsub.s32 0, %v6058
        %v6060 = vrot.slane %v6034, %v6059
        %v6062 = vadd.f32 %v6055, %v6060
        %s6063 = scalar_lea.vmem %s57, 1
        %v6064 = vld [vmem:[%s6063] sm:$0x1]
        %s6065 = scalar_lea.vmem %s43, 64
        %v6066 = vld [vmem:[%s6065] sm:$0xff]
        %v6067 = vld [vmem:[%s6065 + $0x8] sm:$0xff]
        %v6068 = vld [vmem:[%s6065 + $0x10] sm:$0xff]
        %v6069 = vld [vmem:[%s6065 + $0x18] sm:$0xff]
        %s6070 = scalar_lea.vmem %s45, 2
        %v6071 = vld [vmem:[%s6070] sm:$0x1]
        %v6073 = vlaneseq
        %v6074 = vshrl.u32 %v6073, 7
        %v6075 = vsub.s32 0, %v6074
        %v6076 = vrot.slane %v6071, %v6075
        %v6079 = vsel %vm1714, %v6062, 0
        %6081 = vmatprep.subr.mxu0 0.0
        %6082 = vmatpush1.msra.mxu0 0.0
        %6083 = vmatprep.subr.mxu0 0.0
        %6084 = vmatpush1.msra.mxu0 0.0
        %6085 = vmatprep.subr.mxu0 0.0
        %6086 = vmatpush1.msra.mxu0 0.0
        %6087 = vmatprep.subr.mxu0 0.0
        %6088 = vmatpush1.msra.mxu0 0.0
        %6089 = vmatprep.subr.mxu0 0.0
        %6090 = vmatpush1.msra.mxu0 0.0
        %6091 = vmatprep.subr.mxu0 0.0
        %6092 = vmatpush1.msra.mxu0 0.0
        %6093 = vmatprep.subr.mxu0 0.0
        %6094 = vmatpush1.msra.mxu0 0.0
        %6095 = vmatprep.subr.mxu0 0.0
        %6096 = vmatpush1.msra.mxu0 0.0
        %6097 = vmatprep.subr.mxu0 0.0
        %6098 = vmatpush1.msra.mxu0 0.0
        %6099 = vmatprep.subr.mxu0 0.0
        %6100 = vmatpush1.msra.mxu0 0.0
        %6101 = vmatprep.subr.mxu0 0.0
        %6102 = vmatpush1.msra.mxu0 0.0
        %6103 = vmatprep.subr.mxu0 0.0
        %6104 = vmatpush1.msra.mxu0 0.0
        %6105 = vmatprep.subr.mxu0 0.0
        %6106 = vmatpush1.msra.mxu0 %v6069
        %6107 = vmatprep.subr.mxu0 0.0
        %6108 = vmatpush1.msra.mxu0 %v6068
        %6109 = vmatprep.subr.mxu0 0.0
        %6110 = vmatpush1.msra.mxu0 %v6067
        %6111 = vmatprep.subr.mxu0 0.0
        %6112 = vmatpush1.msra.mxu0 %v6066
        %6113 = vmatprep.subr.mxu0 0.0
        %6114 = vmatpush2.msra.mxu0 0.0
        %6115 = vmatprep.subr.mxu0 0.0
        %6116 = vmatpush2.msra.mxu0 0.0
        %6117 = vmatprep.subr.mxu0 0.0
        %6118 = vmatpush2.msra.mxu0 0.0
        %6119 = vmatprep.subr.mxu0 0.0
        %6120 = vmatpush2.msra.mxu0 0.0
        %6121 = vmatprep.subr.mxu0 0.0
        %6122 = vmatpush2.msra.mxu0 0.0
        %6123 = vmatprep.subr.mxu0 0.0
        %6124 = vmatpush2.msra.mxu0 0.0
        %6125 = vmatprep.subr.mxu0 0.0
        %6126 = vmatpush2.msra.mxu0 0.0
        %6127 = vmatprep.subr.mxu0 0.0
        %6128 = vmatpush2.msra.mxu0 0.0
        %6129 = vmatprep.subr.mxu0 0.0
        %6130 = vmatpush2.msra.mxu0 0.0
        %6131 = vmatprep.subr.mxu0 0.0
        %6132 = vmatpush2.msra.mxu0 0.0
        %6133 = vmatprep.subr.mxu0 0.0
        %6134 = vmatpush2.msra.mxu0 0.0
        %6135 = vmatprep.subr.mxu0 0.0
        %6136 = vmatpush2.msra.mxu0 0.0
        %6137 = vmatprep.subr.mxu0 0.0
        %6138 = vmatpush2.msra.mxu0 0.0
        %6139 = vmatprep.subr.mxu0 0.0
        %6140 = vmatpush2.msra.mxu0 0.0
        %6141 = vmatprep.subr.mxu0 0.0
        %6142 = vmatpush2.msra.mxu0 0.0
        %6143 = vmatprep.subr.mxu0 0.0
        %6144 = vmatpush2.msra.mxu0 0.0
        %6145 = vmatprep.mubr.f32.mxu0 0.0
        %6146 = vmatmul.mubr.f32.gmra.mxu0 %v6079
        %v6147 = vpop.f32.mrf.mxu0
        %v6148 = vadd.f32 %v6076, %v6147
        %v6149 = vpop.f32.mrf.mxu0
        %6150 = vdwg.mxu0
        %s6151 = scalar_lea.vmem %s47, 32
        %v6152 = vld [vmem:[%s6151] sm:$0xff]
        %v6153 = vld [vmem:[%s6151 + $0x8] sm:$0xff]
        %s6154 = scalar_lea.vmem %s49, 2
        %v6155 = vld [vmem:[%s6154] sm:$0x1]
        %v6157 = vlaneseq
        %v6158 = vshrl.u32 %v6157, 7
        %v6159 = vsub.s32 0, %v6158
        %v6160 = vrot.slane %v6155, %v6159
        %6162 = vmatprep.subr.mxu0 0.0
        %6163 = vmatpush1.msra.mxu0 0.0
        %6164 = vmatprep.subr.mxu0 0.0
        %6165 = vmatpush1.msra.mxu0 0.0
        %6166 = vmatprep.subr.mxu0 0.0
        %6167 = vmatpush1.msra.mxu0 0.0
        %6168 = vmatprep.subr.mxu0 0.0
        %6169 = vmatpush1.msra.mxu0 0.0
        %6170 = vmatprep.subr.mxu0 0.0
        %6171 = vmatpush1.msra.mxu0 0.0
        %6172 = vmatprep.subr.mxu0 0.0
        %6173 = vmatpush1.msra.mxu0 0.0
        %6174 = vmatprep.subr.mxu0 0.0
        %6175 = vmatpush1.msra.mxu0 0.0
        %6176 = vmatprep.subr.mxu0 0.0
        %6177 = vmatpush1.msra.mxu0 0.0
        %6178 = vmatprep.subr.mxu0 0.0
        %6179 = vmatpush1.msra.mxu0 0.0
        %6180 = vmatprep.subr.mxu0 0.0
        %6181 = vmatpush1.msra.mxu0 0.0
        %6182 = vmatprep.subr.mxu0 0.0
        %6183 = vmatpush1.msra.mxu0 0.0
        %6184 = vmatprep.subr.mxu0 0.0
        %6185 = vmatpush1.msra.mxu0 0.0
        %6186 = vmatprep.subr.mxu0 0.0
        %6187 = vmatpush1.msra.mxu0 0.0
        %6188 = vmatprep.subr.mxu0 0.0
        %6189 = vmatpush1.msra.mxu0 0.0
        %6190 = vmatprep.subr.mxu0 0.0
        %6191 = vmatpush1.msra.mxu0 %v6153
        %6192 = vmatprep.subr.mxu0 0.0
        %6193 = vmatpush1.msra.mxu0 %v6152
        %6194 = vmatprep.subr.mxu0 0.0
        %6195 = vmatpush2.msra.mxu0 0.0
        %6196 = vmatprep.subr.mxu0 0.0
        %6197 = vmatpush2.msra.mxu0 0.0
        %6198 = vmatprep.subr.mxu0 0.0
        %6199 = vmatpush2.msra.mxu0 0.0
        %6200 = vmatprep.subr.mxu0 0.0
        %6201 = vmatpush2.msra.mxu0 0.0
        %6202 = vmatprep.subr.mxu0 0.0
        %6203 = vmatpush2.msra.mxu0 0.0
        %6204 = vmatprep.subr.mxu0 0.0
        %6205 = vmatpush2.msra.mxu0 0.0
        %6206 = vmatprep.subr.mxu0 0.0
        %6207 = vmatpush2.msra.mxu0 0.0
        %6208 = vmatprep.subr.mxu0 0.0
        %6209 = vmatpush2.msra.mxu0 0.0
        %6210 = vmatprep.subr.mxu0 0.0
        %6211 = vmatpush2.msra.mxu0 0.0
        %6212 = vmatprep.subr.mxu0 0.0
        %6213 = vmatpush2.msra.mxu0 0.0
        %6214 = vmatprep.subr.mxu0 0.0
        %6215 = vmatpush2.msra.mxu0 0.0
        %6216 = vmatprep.subr.mxu0 0.0
        %6217 = vmatpush2.msra.mxu0 0.0
        %6218 = vmatprep.subr.mxu0 0.0
        %6219 = vmatpush2.msra.mxu0 0.0
        %6220 = vmatprep.subr.mxu0 0.0
        %6221 = vmatpush2.msra.mxu0 0.0
        %6222 = vmatprep.subr.mxu0 0.0
        %6223 = vmatpush2.msra.mxu0 0.0
        %6224 = vmatprep.subr.mxu0 0.0
        %6225 = vmatpush2.msra.mxu0 0.0
        %6226 = vmatprep.mubr.f32.mxu0 0.0
        %6227 = vmatmul.mubr.f32.gmra.mxu0 %v2824
        %v6228 = vpop.f32.mrf.mxu0
        %v6229 = vadd.f32 %v6160, %v6228
        %v6230 = vpop.f32.mrf.mxu0
        %6231 = vdwg.mxu0
        %s6232 = scalar_lea.vmem %s51, 32
        %v6233 = vld [vmem:[%s6232] sm:$0xff]
        %v6234 = vld [vmem:[%s6232 + $0x8] sm:$0xff]
        %s6235 = scalar_lea.vmem %s53, 2
        %v6236 = vld [vmem:[%s6235] sm:$0x1]
        %v6238 = vlaneseq
        %v6239 = vshrl.u32 %v6238, 7
        %v6240 = vsub.s32 0, %v6239
        %v6241 = vrot.slane %v6236, %v6240
        %6243 = vmatprep.subr.mxu0 0.0
        %6244 = vmatpush1.msra.mxu0 0.0
        %6245 = vmatprep.subr.mxu0 0.0
        %6246 = vmatpush1.msra.mxu0 0.0
        %6247 = vmatprep.subr.mxu0 0.0
        %6248 = vmatpush1.msra.mxu0 0.0
        %6249 = vmatprep.subr.mxu0 0.0
        %6250 = vmatpush1.msra.mxu0 0.0
        %6251 = vmatprep.subr.mxu0 0.0
        %6252 = vmatpush1.msra.mxu0 0.0
        %6253 = vmatprep.subr.mxu0 0.0
        %6254 = vmatpush1.msra.mxu0 0.0
        %6255 = vmatprep.subr.mxu0 0.0
        %6256 = vmatpush1.msra.mxu0 0.0
        %6257 = vmatprep.subr.mxu0 0.0
        %6258 = vmatpush1.msra.mxu0 0.0
        %6259 = vmatprep.subr.mxu0 0.0
        %6260 = vmatpush1.msra.mxu0 0.0
        %6261 = vmatprep.subr.mxu0 0.0
        %6262 = vmatpush1.msra.mxu0 0.0
        %6263 = vmatprep.subr.mxu0 0.0
        %6264 = vmatpush1.msra.mxu0 0.0
        %6265 = vmatprep.subr.mxu0 0.0
        %6266 = vmatpush1.msra.mxu0 0.0
        %6267 = vmatprep.subr.mxu0 0.0
        %6268 = vmatpush1.msra.mxu0 0.0
        %6269 = vmatprep.subr.mxu0 0.0
        %6270 = vmatpush1.msra.mxu0 0.0
        %6271 = vmatprep.subr.mxu0 0.0
        %6272 = vmatpush1.msra.mxu0 %v6234
        %6273 = vmatprep.subr.mxu0 0.0
        %6274 = vmatpush1.msra.mxu0 %v6233
        %6275 = vmatprep.subr.mxu0 0.0
        %6276 = vmatpush2.msra.mxu0 0.0
        %6277 = vmatprep.subr.mxu0 0.0
        %6278 = vmatpush2.msra.mxu0 0.0
        %6279 = vmatprep.subr.mxu0 0.0
        %6280 = vmatpush2.msra.mxu0 0.0
        %6281 = vmatprep.subr.mxu0 0.0
        %6282 = vmatpush2.msra.mxu0 0.0
        %6283 = vmatprep.subr.mxu0 0.0
        %6284 = vmatpush2.msra.mxu0 0.0
        %6285 = vmatprep.subr.mxu0 0.0
        %6286 = vmatpush2.msra.mxu0 0.0
        %6287 = vmatprep.subr.mxu0 0.0
        %6288 = vmatpush2.msra.mxu0 0.0
        %6289 = vmatprep.subr.mxu0 0.0
        %6290 = vmatpush2.msra.mxu0 0.0
        %6291 = vmatprep.subr.mxu0 0.0
        %6292 = vmatpush2.msra.mxu0 0.0
        %6293 = vmatprep.subr.mxu0 0.0
        %6294 = vmatpush2.msra.mxu0 0.0
        %6295 = vmatprep.subr.mxu0 0.0
        %6296 = vmatpush2.msra.mxu0 0.0
        %6297 = vmatprep.subr.mxu0 0.0
        %6298 = vmatpush2.msra.mxu0 0.0
        %6299 = vmatprep.subr.mxu0 0.0
        %6300 = vmatpush2.msra.mxu0 0.0
        %6301 = vmatprep.subr.mxu0 0.0
        %6302 = vmatpush2.msra.mxu0 0.0
        %6303 = vmatprep.subr.mxu0 0.0
        %6304 = vmatpush2.msra.mxu0 0.0
        %6305 = vmatprep.subr.mxu0 0.0
        %6306 = vmatpush2.msra.mxu0 0.0
        %6307 = vmatprep.mubr.f32.mxu0 0.0
        %6308 = vmatmul.mubr.f32.gmra.mxu0 %v2906
        %v6309 = vpop.f32.mrf.mxu0
        %v6310 = vadd.f32 %v6241, %v6309
        %v6311 = vpop.f32.mrf.mxu0
        %6312 = vdwg.mxu0
        %v6314 = vsel %vm1956, %v6148, 0
        %v6317 = vsel %vm1956, %v6229, 0
        %6319 = vmatprep.subr.mxu0 0.0
        %6320 = vmatpush1.xpose.msra.mxu0 0.0
        %6321 = vmatprep.subr.mxu0 0.0
        %6322 = vmatpush1.xpose.msra.mxu0 0.0
        %6323 = vmatprep.subr.mxu0 0.0
        %6324 = vmatpush1.xpose.msra.mxu0 0.0
        %6325 = vmatprep.subr.mxu0 0.0
        %6326 = vmatpush1.xpose.msra.mxu0 0.0
        %6327 = vmatprep.subr.mxu0 0.0
        %6328 = vmatpush1.xpose.msra.mxu0 0.0
        %6329 = vmatprep.subr.mxu0 0.0
        %6330 = vmatpush1.xpose.msra.mxu0 0.0
        %6331 = vmatprep.subr.mxu0 0.0
        %6332 = vmatpush1.xpose.msra.mxu0 0.0
        %6333 = vmatprep.subr.mxu0 0.0
        %6334 = vmatpush1.xpose.msra.mxu0 0.0
        %6335 = vmatprep.subr.mxu0 0.0
        %6336 = vmatpush1.xpose.msra.mxu0 0.0
        %6337 = vmatprep.subr.mxu0 0.0
        %6338 = vmatpush1.xpose.msra.mxu0 0.0
        %6339 = vmatprep.subr.mxu0 0.0
        %6340 = vmatpush1.xpose.msra.mxu0 0.0
        %6341 = vmatprep.subr.mxu0 0.0
        %6342 = vmatpush1.xpose.msra.mxu0 0.0
        %6343 = vmatprep.subr.mxu0 0.0
        %6344 = vmatpush1.xpose.msra.mxu0 0.0
        %6345 = vmatprep.subr.mxu0 0.0
        %6346 = vmatpush1.xpose.msra.mxu0 0.0
        %6347 = vmatprep.subr.mxu0 0.0
        %6348 = vmatpush1.xpose.msra.mxu0 0.0
        %6349 = vmatprep.subr.mxu0 0.0
        %6350 = vmatpush1.xpose.msra.mxu0 %v6317
        %6351 = vmatprep.subr.mxu0 0.0
        %6352 = vmatpush2.xpose.msra.mxu0 0.0
        %6353 = vmatprep.subr.mxu0 0.0
        %6354 = vmatpush2.xpose.msra.mxu0 0.0
        %6355 = vmatprep.subr.mxu0 0.0
        %6356 = vmatpush2.xpose.msra.mxu0 0.0
        %6357 = vmatprep.subr.mxu0 0.0
        %6358 = vmatpush2.xpose.msra.mxu0 0.0
        %6359 = vmatprep.subr.mxu0 0.0
        %6360 = vmatpush2.xpose.msra.mxu0 0.0
        %6361 = vmatprep.subr.mxu0 0.0
        %6362 = vmatpush2.xpose.msra.mxu0 0.0
        %6363 = vmatprep.subr.mxu0 0.0
        %6364 = vmatpush2.xpose.msra.mxu0 0.0
        %6365 = vmatprep.subr.mxu0 0.0
        %6366 = vmatpush2.xpose.msra.mxu0 0.0
        %6367 = vmatprep.subr.mxu0 0.0
        %6368 = vmatpush2.xpose.msra.mxu0 0.0
        %6369 = vmatprep.subr.mxu0 0.0
        %6370 = vmatpush2.xpose.msra.mxu0 0.0
        %6371 = vmatprep.subr.mxu0 0.0
        %6372 = vmatpush2.xpose.msra.mxu0 0.0
        %6373 = vmatprep.subr.mxu0 0.0
        %6374 = vmatpush2.xpose.msra.mxu0 0.0
        %6375 = vmatprep.subr.mxu0 0.0
        %6376 = vmatpush2.xpose.msra.mxu0 0.0
        %6377 = vmatprep.subr.mxu0 0.0
        %6378 = vmatpush2.xpose.msra.mxu0 0.0
        %6379 = vmatprep.subr.mxu0 0.0
        %6380 = vmatpush2.xpose.msra.mxu0 0.0
        %6381 = vmatprep.subr.mxu0 0.0
        %6382 = vmatpush2.xpose.msra.mxu0 0.0
        %6383 = vmatprep.mubr.f32.mxu0 0.0
        %6384 = vmatmul.mubr.f32.gmra.mxu0 %v6314
        %v6385 = vpop.f32.mrf.mxu0
        %v6386 = vadd.f32 0.0, %v6385
        %v6387 = vpop.f32.mrf.mxu0
        %6388 = vdwg.mxu0
        %v6389 = vsel %vm3054, %v6386, -inf
        %6390 = vmax.xlane.f32.xlu0 %v6389
        %v6391 = vpop.xlane.xlu0 %6390
        %v6392 = vsub.f32 %v6386, %v6391
        %v6393 = vmul.f32 %v6392, 1.442695
        %v6394 = vpow.pop %v6393
        %v6395 = vsel %vm3054, %v6394, 0.0
        %6396 = vadd.xlane.f32.xlu0 %v6395
        %v6397 = vpop.xlane.xlu0 %6396
        %v6398 = vrcp.pop %v6397
        %v6399 = vmul.f32 %v6394, %v6398
        %v6401 = vsel %vm3054, %v6399, 0
        %v6404 = vsel %vm1623, %v6310, 0
        %6406 = vmatprep.subr.mxu0 0.0
        %6407 = vmatpush1.msra.mxu0 0.0
        %6408 = vmatprep.subr.mxu0 0.0
        %6409 = vmatpush1.msra.mxu0 0.0
        %6410 = vmatprep.subr.mxu0 0.0
        %6411 = vmatpush1.msra.mxu0 0.0
        %6412 = vmatprep.subr.mxu0 0.0
        %6413 = vmatpush1.msra.mxu0 0.0
        %6414 = vmatprep.subr.mxu0 0.0
        %6415 = vmatpush1.msra.mxu0 0.0
        %6416 = vmatprep.subr.mxu0 0.0
        %6417 = vmatpush1.msra.mxu0 0.0
        %6418 = vmatprep.subr.mxu0 0.0
        %6419 = vmatpush1.msra.mxu0 0.0
        %6420 = vmatprep.subr.mxu0 0.0
        %6421 = vmatpush1.msra.mxu0 0.0
        %6422 = vmatprep.subr.mxu0 0.0
        %6423 = vmatpush1.msra.mxu0 0.0
        %6424 = vmatprep.subr.mxu0 0.0
        %6425 = vmatpush1.msra.mxu0 0.0
        %6426 = vmatprep.subr.mxu0 0.0
        %6427 = vmatpush1.msra.mxu0 0.0
        %6428 = vmatprep.subr.mxu0 0.0
        %6429 = vmatpush1.msra.mxu0 0.0
        %6430 = vmatprep.subr.mxu0 0.0
        %6431 = vmatpush1.msra.mxu0 0.0
        %6432 = vmatprep.subr.mxu0 0.0
        %6433 = vmatpush1.msra.mxu0 0.0
        %6434 = vmatprep.subr.mxu0 0.0
        %6435 = vmatpush1.msra.mxu0 0.0
        %6436 = vmatprep.subr.mxu0 0.0
        %6437 = vmatpush1.msra.mxu0 %v6404
        %6438 = vmatprep.subr.mxu0 0.0
        %6439 = vmatpush2.msra.mxu0 0.0
        %6440 = vmatprep.subr.mxu0 0.0
        %6441 = vmatpush2.msra.mxu0 0.0
        %6442 = vmatprep.subr.mxu0 0.0
        %6443 = vmatpush2.msra.mxu0 0.0
        %6444 = vmatprep.subr.mxu0 0.0
        %6445 = vmatpush2.msra.mxu0 0.0
        %6446 = vmatprep.subr.mxu0 0.0
        %6447 = vmatpush2.msra.mxu0 0.0
        %6448 = vmatprep.subr.mxu0 0.0
        %6449 = vmatpush2.msra.mxu0 0.0
        %6450 = vmatprep.subr.mxu0 0.0
        %6451 = vmatpush2.msra.mxu0 0.0
        %6452 = vmatprep.subr.mxu0 0.0
        %6453 = vmatpush2.msra.mxu0 0.0
        %6454 = vmatprep.subr.mxu0 0.0
        %6455 = vmatpush2.msra.mxu0 0.0
        %6456 = vmatprep.subr.mxu0 0.0
        %6457 = vmatpush2.msra.mxu0 0.0
        %6458 = vmatprep.subr.mxu0 0.0
        %6459 = vmatpush2.msra.mxu0 0.0
        %6460 = vmatprep.subr.mxu0 0.0
        %6461 = vmatpush2.msra.mxu0 0.0
        %6462 = vmatprep.subr.mxu0 0.0
        %6463 = vmatpush2.msra.mxu0 0.0
        %6464 = vmatprep.subr.mxu0 0.0
        %6465 = vmatpush2.msra.mxu0 0.0
        %6466 = vmatprep.subr.mxu0 0.0
        %6467 = vmatpush2.msra.mxu0 0.0
        %6468 = vmatprep.subr.mxu0 0.0
        %6469 = vmatpush2.msra.mxu0 0.0
        %6470 = vmatprep.mubr.f32.mxu0 0.0
        %6471 = vmatmul.mubr.f32.gmra.mxu0 %v6401
        %v6472 = vpop.f32.mrf.mxu0
        %v6473 = vadd.f32 0.0, %v6472
        %v6474 = vpop.f32.mrf.mxu0
        %6475 = vdwg.mxu0
        %s6476 = scalar_lea.vmem %s55, 32
        %v6477 = vld [vmem:[%s6476] sm:$0xff]
        %v6478 = vld [vmem:[%s6476 + $0x8] sm:$0xff]
        %s6479 = scalar_lea.vmem %s43, 96
        %v6480 = vld [vmem:[%s6479] sm:$0xff]
        %v6481 = vld [vmem:[%s6479 + $0x8] sm:$0xff]
        %v6482 = vld [vmem:[%s6479 + $0x10] sm:$0xff]
        %v6483 = vld [vmem:[%s6479 + $0x18] sm:$0xff]
        %s6484 = scalar_lea.vmem %s45, 3
        %v6485 = vld [vmem:[%s6484] sm:$0x1]
        %v6487 = vlaneseq
        %v6488 = vshrl.u32 %v6487, 7
        %v6489 = vsub.s32 0, %v6488
        %v6490 = vrot.slane %v6485, %v6489
        %6492 = vmatprep.subr.mxu0 0.0
        %6493 = vmatpush1.msra.mxu0 0.0
        %6494 = vmatprep.subr.mxu0 0.0
        %6495 = vmatpush1.msra.mxu0 0.0
        %6496 = vmatprep.subr.mxu0 0.0
        %6497 = vmatpush1.msra.mxu0 0.0
        %6498 = vmatprep.subr.mxu0 0.0
        %6499 = vmatpush1.msra.mxu0 0.0
        %6500 = vmatprep.subr.mxu0 0.0
        %6501 = vmatpush1.msra.mxu0 0.0
        %6502 = vmatprep.subr.mxu0 0.0
        %6503 = vmatpush1.msra.mxu0 0.0
        %6504 = vmatprep.subr.mxu0 0.0
        %6505 = vmatpush1.msra.mxu0 0.0
        %6506 = vmatprep.subr.mxu0 0.0
        %6507 = vmatpush1.msra.mxu0 0.0
        %6508 = vmatprep.subr.mxu0 0.0
        %6509 = vmatpush1.msra.mxu0 0.0
        %6510 = vmatprep.subr.mxu0 0.0
        %6511 = vmatpush1.msra.mxu0 0.0
        %6512 = vmatprep.subr.mxu0 0.0
        %6513 = vmatpush1.msra.mxu0 0.0
        %6514 = vmatprep.subr.mxu0 0.0
        %6515 = vmatpush1.msra.mxu0 0.0
        %6516 = vmatprep.subr.mxu0 0.0
        %6517 = vmatpush1.msra.mxu0 %v6483
        %6518 = vmatprep.subr.mxu0 0.0
        %6519 = vmatpush1.msra.mxu0 %v6482
        %6520 = vmatprep.subr.mxu0 0.0
        %6521 = vmatpush1.msra.mxu0 %v6481
        %6522 = vmatprep.subr.mxu0 0.0
        %6523 = vmatpush1.msra.mxu0 %v6480
        %6524 = vmatprep.subr.mxu0 0.0
        %6525 = vmatpush2.msra.mxu0 0.0
        %6526 = vmatprep.subr.mxu0 0.0
        %6527 = vmatpush2.msra.mxu0 0.0
        %6528 = vmatprep.subr.mxu0 0.0
        %6529 = vmatpush2.msra.mxu0 0.0
        %6530 = vmatprep.subr.mxu0 0.0
        %6531 = vmatpush2.msra.mxu0 0.0
        %6532 = vmatprep.subr.mxu0 0.0
        %6533 = vmatpush2.msra.mxu0 0.0
        %6534 = vmatprep.subr.mxu0 0.0
        %6535 = vmatpush2.msra.mxu0 0.0
        %6536 = vmatprep.subr.mxu0 0.0
        %6537 = vmatpush2.msra.mxu0 0.0
        %6538 = vmatprep.subr.mxu0 0.0
        %6539 = vmatpush2.msra.mxu0 0.0
        %6540 = vmatprep.subr.mxu0 0.0
        %6541 = vmatpush2.msra.mxu0 0.0
        %6542 = vmatprep.subr.mxu0 0.0
        %6543 = vmatpush2.msra.mxu0 0.0
        %6544 = vmatprep.subr.mxu0 0.0
        %6545 = vmatpush2.msra.mxu0 0.0
        %6546 = vmatprep.subr.mxu0 0.0
        %6547 = vmatpush2.msra.mxu0 0.0
        %6548 = vmatprep.subr.mxu0 0.0
        %6549 = vmatpush2.msra.mxu0 0.0
        %6550 = vmatprep.subr.mxu0 0.0
        %6551 = vmatpush2.msra.mxu0 0.0
        %6552 = vmatprep.subr.mxu0 0.0
        %6553 = vmatpush2.msra.mxu0 0.0
        %6554 = vmatprep.subr.mxu0 0.0
        %6555 = vmatpush2.msra.mxu0 0.0
        %6556 = vmatprep.mubr.f32.mxu0 0.0
        %6557 = vmatmul.mubr.f32.gmra.mxu0 %v6079
        %v6558 = vpop.f32.mrf.mxu0
        %v6559 = vadd.f32 %v6490, %v6558
        %v6560 = vpop.f32.mrf.mxu0
        %6561 = vdwg.mxu0
        %s6562 = scalar_lea.vmem %s47, 48
        %v6563 = vld [vmem:[%s6562] sm:$0xff]
        %v6564 = vld [vmem:[%s6562 + $0x8] sm:$0xff]
        %s6565 = scalar_lea.vmem %s49, 3
        %v6566 = vld [vmem:[%s6565] sm:$0x1]
        %v6568 = vlaneseq
        %v6569 = vshrl.u32 %v6568, 7
        %v6570 = vsub.s32 0, %v6569
        %v6571 = vrot.slane %v6566, %v6570
        %6573 = vmatprep.subr.mxu0 0.0
        %6574 = vmatpush1.msra.mxu0 0.0
        %6575 = vmatprep.subr.mxu0 0.0
        %6576 = vmatpush1.msra.mxu0 0.0
        %6577 = vmatprep.subr.mxu0 0.0
        %6578 = vmatpush1.msra.mxu0 0.0
        %6579 = vmatprep.subr.mxu0 0.0
        %6580 = vmatpush1.msra.mxu0 0.0
        %6581 = vmatprep.subr.mxu0 0.0
        %6582 = vmatpush1.msra.mxu0 0.0
        %6583 = vmatprep.subr.mxu0 0.0
        %6584 = vmatpush1.msra.mxu0 0.0
        %6585 = vmatprep.subr.mxu0 0.0
        %6586 = vmatpush1.msra.mxu0 0.0
        %6587 = vmatprep.subr.mxu0 0.0
        %6588 = vmatpush1.msra.mxu0 0.0
        %6589 = vmatprep.subr.mxu0 0.0
        %6590 = vmatpush1.msra.mxu0 0.0
        %6591 = vmatprep.subr.mxu0 0.0
        %6592 = vmatpush1.msra.mxu0 0.0
        %6593 = vmatprep.subr.mxu0 0.0
        %6594 = vmatpush1.msra.mxu0 0.0
        %6595 = vmatprep.subr.mxu0 0.0
        %6596 = vmatpush1.msra.mxu0 0.0
        %6597 = vmatprep.subr.mxu0 0.0
        %6598 = vmatpush1.msra.mxu0 0.0
        %6599 = vmatprep.subr.mxu0 0.0
        %6600 = vmatpush1.msra.mxu0 0.0
        %6601 = vmatprep.subr.mxu0 0.0
        %6602 = vmatpush1.msra.mxu0 %v6564
        %6603 = vmatprep.subr.mxu0 0.0
        %6604 = vmatpush1.msra.mxu0 %v6563
        %6605 = vmatprep.subr.mxu0 0.0
        %6606 = vmatpush2.msra.mxu0 0.0
        %6607 = vmatprep.subr.mxu0 0.0
        %6608 = vmatpush2.msra.mxu0 0.0
        %6609 = vmatprep.subr.mxu0 0.0
        %6610 = vmatpush2.msra.mxu0 0.0
        %6611 = vmatprep.subr.mxu0 0.0
        %6612 = vmatpush2.msra.mxu0 0.0
        %6613 = vmatprep.subr.mxu0 0.0
        %6614 = vmatpush2.msra.mxu0 0.0
        %6615 = vmatprep.subr.mxu0 0.0
        %6616 = vmatpush2.msra.mxu0 0.0
        %6617 = vmatprep.subr.mxu0 0.0
        %6618 = vmatpush2.msra.mxu0 0.0
        %6619 = vmatprep.subr.mxu0 0.0
        %6620 = vmatpush2.msra.mxu0 0.0
        %6621 = vmatprep.subr.mxu0 0.0
        %6622 = vmatpush2.msra.mxu0 0.0
        %6623 = vmatprep.subr.mxu0 0.0
        %6624 = vmatpush2.msra.mxu0 0.0
        %6625 = vmatprep.subr.mxu0 0.0
        %6626 = vmatpush2.msra.mxu0 0.0
        %6627 = vmatprep.subr.mxu0 0.0
        %6628 = vmatpush2.msra.mxu0 0.0
        %6629 = vmatprep.subr.mxu0 0.0
        %6630 = vmatpush2.msra.mxu0 0.0
        %6631 = vmatprep.subr.mxu0 0.0
        %6632 = vmatpush2.msra.mxu0 0.0
        %6633 = vmatprep.subr.mxu0 0.0
        %6634 = vmatpush2.msra.mxu0 0.0
        %6635 = vmatprep.subr.mxu0 0.0
        %6636 = vmatpush2.msra.mxu0 0.0
        %6637 = vmatprep.mubr.f32.mxu0 0.0
        %6638 = vmatmul.mubr.f32.gmra.mxu0 %v2824
        %v6639 = vpop.f32.mrf.mxu0
        %v6640 = vadd.f32 %v6571, %v6639
        %v6641 = vpop.f32.mrf.mxu0
        %6642 = vdwg.mxu0
        %s6643 = scalar_lea.vmem %s51, 48
        %v6644 = vld [vmem:[%s6643] sm:$0xff]
        %v6645 = vld [vmem:[%s6643 + $0x8] sm:$0xff]
        %s6646 = scalar_lea.vmem %s53, 3
        %v6647 = vld [vmem:[%s6646] sm:$0x1]
        %v6649 = vlaneseq
        %v6650 = vshrl.u32 %v6649, 7
        %v6651 = vsub.s32 0, %v6650
        %v6652 = vrot.slane %v6647, %v6651
        %6654 = vmatprep.subr.mxu0 0.0
        %6655 = vmatpush1.msra.mxu0 0.0
        %6656 = vmatprep.subr.mxu0 0.0
        %6657 = vmatpush1.msra.mxu0 0.0
        %6658 = vmatprep.subr.mxu0 0.0
        %6659 = vmatpush1.msra.mxu0 0.0
        %6660 = vmatprep.subr.mxu0 0.0
        %6661 = vmatpush1.msra.mxu0 0.0
        %6662 = vmatprep.subr.mxu0 0.0
        %6663 = vmatpush1.msra.mxu0 0.0
        %6664 = vmatprep.subr.mxu0 0.0
        %6665 = vmatpush1.msra.mxu0 0.0
        %6666 = vmatprep.subr.mxu0 0.0
        %6667 = vmatpush1.msra.mxu0 0.0
        %6668 = vmatprep.subr.mxu0 0.0
        %6669 = vmatpush1.msra.mxu0 0.0
        %6670 = vmatprep.subr.mxu0 0.0
        %6671 = vmatpush1.msra.mxu0 0.0
        %6672 = vmatprep.subr.mxu0 0.0
        %6673 = vmatpush1.msra.mxu0 0.0
        %6674 = vmatprep.subr.mxu0 0.0
        %6675 = vmatpush1.msra.mxu0 0.0
        %6676 = vmatprep.subr.mxu0 0.0
        %6677 = vmatpush1.msra.mxu0 0.0
        %6678 = vmatprep.subr.mxu0 0.0
        %6679 = vmatpush1.msra.mxu0 0.0
        %6680 = vmatprep.subr.mxu0 0.0
        %6681 = vmatpush1.msra.mxu0 0.0
        %6682 = vmatprep.subr.mxu0 0.0
        %6683 = vmatpush1.msra.mxu0 %v6645
        %6684 = vmatprep.subr.mxu0 0.0
        %6685 = vmatpush1.msra.mxu0 %v6644
        %6686 = vmatprep.subr.mxu0 0.0
        %6687 = vmatpush2.msra.mxu0 0.0
        %6688 = vmatprep.subr.mxu0 0.0
        %6689 = vmatpush2.msra.mxu0 0.0
        %6690 = vmatprep.subr.mxu0 0.0
        %6691 = vmatpush2.msra.mxu0 0.0
        %6692 = vmatprep.subr.mxu0 0.0
        %6693 = vmatpush2.msra.mxu0 0.0
        %6694 = vmatprep.subr.mxu0 0.0
        %6695 = vmatpush2.msra.mxu0 0.0
        %6696 = vmatprep.subr.mxu0 0.0
        %6697 = vmatpush2.msra.mxu0 0.0
        %6698 = vmatprep.subr.mxu0 0.0
        %6699 = vmatpush2.msra.mxu0 0.0
        %6700 = vmatprep.subr.mxu0 0.0
        %6701 = vmatpush2.msra.mxu0 0.0
        %6702 = vmatprep.subr.mxu0 0.0
        %6703 = vmatpush2.msra.mxu0 0.0
        %6704 = vmatprep.subr.mxu0 0.0
        %6705 = vmatpush2.msra.mxu0 0.0
        %6706 = vmatprep.subr.mxu0 0.0
        %6707 = vmatpush2.msra.mxu0 0.0
        %6708 = vmatprep.subr.mxu0 0.0
        %6709 = vmatpush2.msra.mxu0 0.0
        %6710 = vmatprep.subr.mxu0 0.0
        %6711 = vmatpush2.msra.mxu0 0.0
        %6712 = vmatprep.subr.mxu0 0.0
        %6713 = vmatpush2.msra.mxu0 0.0
        %6714 = vmatprep.subr.mxu0 0.0
        %6715 = vmatpush2.msra.mxu0 0.0
        %6716 = vmatprep.subr.mxu0 0.0
        %6717 = vmatpush2.msra.mxu0 0.0
        %6718 = vmatprep.mubr.f32.mxu0 0.0
        %6719 = vmatmul.mubr.f32.gmra.mxu0 %v2906
        %v6720 = vpop.f32.mrf.mxu0
        %v6721 = vadd.f32 %v6652, %v6720
        %v6722 = vpop.f32.mrf.mxu0
        %6723 = vdwg.mxu0
        %v6725 = vsel %vm1956, %v6559, 0
        %v6728 = vsel %vm1956, %v6640, 0
        %6730 = vmatprep.subr.mxu0 0.0
        %6731 = vmatpush1.xpose.msra.mxu0 0.0
        %6732 = vmatprep.subr.mxu0 0.0
        %6733 = vmatpush1.xpose.msra.mxu0 0.0
        %6734 = vmatprep.subr.mxu0 0.0
        %6735 = vmatpush1.xpose.msra.mxu0 0.0
        %6736 = vmatprep.subr.mxu0 0.0
        %6737 = vmatpush1.xpose.msra.mxu0 0.0
        %6738 = vmatprep.subr.mxu0 0.0
        %6739 = vmatpush1.xpose.msra.mxu0 0.0
        %6740 = vmatprep.subr.mxu0 0.0
        %6741 = vmatpush1.xpose.msra.mxu0 0.0
        %6742 = vmatprep.subr.mxu0 0.0
        %6743 = vmatpush1.xpose.msra.mxu0 0.0
        %6744 = vmatprep.subr.mxu0 0.0
        %6745 = vmatpush1.xpose.msra.mxu0 0.0
        %6746 = vmatprep.subr.mxu0 0.0
        %6747 = vmatpush1.xpose.msra.mxu0 0.0
        %6748 = vmatprep.subr.mxu0 0.0
        %6749 = vmatpush1.xpose.msra.mxu0 0.0
        %6750 = vmatprep.subr.mxu0 0.0
        %6751 = vmatpush1.xpose.msra.mxu0 0.0
        %6752 = vmatprep.subr.mxu0 0.0
        %6753 = vmatpush1.xpose.msra.mxu0 0.0
        %6754 = vmatprep.subr.mxu0 0.0
        %6755 = vmatpush1.xpose.msra.mxu0 0.0
        %6756 = vmatprep.subr.mxu0 0.0
        %6757 = vmatpush1.xpose.msra.mxu0 0.0
        %6758 = vmatprep.subr.mxu0 0.0
        %6759 = vmatpush1.xpose.msra.mxu0 0.0
        %6760 = vmatprep.subr.mxu0 0.0
        %6761 = vmatpush1.xpose.msra.mxu0 %v6728
        %6762 = vmatprep.subr.mxu0 0.0
        %6763 = vmatpush2.xpose.msra.mxu0 0.0
        %6764 = vmatprep.subr.mxu0 0.0
        %6765 = vmatpush2.xpose.msra.mxu0 0.0
        %6766 = vmatprep.subr.mxu0 0.0
        %6767 = vmatpush2.xpose.msra.mxu0 0.0
        %6768 = vmatprep.subr.mxu0 0.0
        %6769 = vmatpush2.xpose.msra.mxu0 0.0
        %6770 = vmatprep.subr.mxu0 0.0
        %6771 = vmatpush2.xpose.msra.mxu0 0.0
        %6772 = vmatprep.subr.mxu0 0.0
        %6773 = vmatpush2.xpose.msra.mxu0 0.0
        %6774 = vmatprep.subr.mxu0 0.0
        %6775 = vmatpush2.xpose.msra.mxu0 0.0
        %6776 = vmatprep.subr.mxu0 0.0
        %6777 = vmatpush2.xpose.msra.mxu0 0.0
        %6778 = vmatprep.subr.mxu0 0.0
        %6779 = vmatpush2.xpose.msra.mxu0 0.0
        %6780 = vmatprep.subr.mxu0 0.0
        %6781 = vmatpush2.xpose.msra.mxu0 0.0
        %6782 = vmatprep.subr.mxu0 0.0
        %6783 = vmatpush2.xpose.msra.mxu0 0.0
        %6784 = vmatprep.subr.mxu0 0.0
        %6785 = vmatpush2.xpose.msra.mxu0 0.0
        %6786 = vmatprep.subr.mxu0 0.0
        %6787 = vmatpush2.xpose.msra.mxu0 0.0
        %6788 = vmatprep.subr.mxu0 0.0
        %6789 = vmatpush2.xpose.msra.mxu0 0.0
        %6790 = vmatprep.subr.mxu0 0.0
        %6791 = vmatpush2.xpose.msra.mxu0 0.0
        %6792 = vmatprep.subr.mxu0 0.0
        %6793 = vmatpush2.xpose.msra.mxu0 0.0
        %6794 = vmatprep.mubr.f32.mxu0 0.0
        %6795 = vmatmul.mubr.f32.gmra.mxu0 %v6725
        %v6796 = vpop.f32.mrf.mxu0
        %v6797 = vadd.f32 0.0, %v6796
        %v6798 = vpop.f32.mrf.mxu0
        %6799 = vdwg.mxu0
        %v6800 = vsel %vm3054, %v6797, -inf
        %6801 = vmax.xlane.f32.xlu0 %v6800
        %v6802 = vpop.xlane.xlu0 %6801
        %v6803 = vsub.f32 %v6797, %v6802
        %v6804 = vmul.f32 %v6803, 1.442695
        %v6805 = vpow.pop %v6804
        %v6806 = vsel %vm3054, %v6805, 0.0
        %6807 = vadd.xlane.f32.xlu0 %v6806
        %v6808 = vpop.xlane.xlu0 %6807
        %v6809 = vrcp.pop %v6808
        %v6810 = vmul.f32 %v6805, %v6809
        %v6812 = vsel %vm3054, %v6810, 0
        %v6815 = vsel %vm1623, %v6721, 0
        %6817 = vmatprep.subr.mxu0 0.0
        %6818 = vmatpush1.msra.mxu0 0.0
        %6819 = vmatprep.subr.mxu0 0.0
        %6820 = vmatpush1.msra.mxu0 0.0
        %6821 = vmatprep.subr.mxu0 0.0
        %6822 = vmatpush1.msra.mxu0 0.0
        %6823 = vmatprep.subr.mxu0 0.0
        %6824 = vmatpush1.msra.mxu0 0.0
        %6825 = vmatprep.subr.mxu0 0.0
        %6826 = vmatpush1.msra.mxu0 0.0
        %6827 = vmatprep.subr.mxu0 0.0
        %6828 = vmatpush1.msra.mxu0 0.0
        %6829 = vmatprep.subr.mxu0 0.0
        %6830 = vmatpush1.msra.mxu0 0.0
        %6831 = vmatprep.subr.mxu0 0.0
        %6832 = vmatpush1.msra.mxu0 0.0
        %6833 = vmatprep.subr.mxu0 0.0
        %6834 = vmatpush1.msra.mxu0 0.0
        %6835 = vmatprep.subr.mxu0 0.0
        %6836 = vmatpush1.msra.mxu0 0.0
        %6837 = vmatprep.subr.mxu0 0.0
        %6838 = vmatpush1.msra.mxu0 0.0
        %6839 = vmatprep.subr.mxu0 0.0
        %6840 = vmatpush1.msra.mxu0 0.0
        %6841 = vmatprep.subr.mxu0 0.0
        %6842 = vmatpush1.msra.mxu0 0.0
        %6843 = vmatprep.subr.mxu0 0.0
        %6844 = vmatpush1.msra.mxu0 0.0
        %6845 = vmatprep.subr.mxu0 0.0
        %6846 = vmatpush1.msra.mxu0 0.0
        %6847 = vmatprep.subr.mxu0 0.0
        %6848 = vmatpush1.msra.mxu0 %v6815
        %6849 = vmatprep.subr.mxu0 0.0
        %6850 = vmatpush2.msra.mxu0 0.0
        %6851 = vmatprep.subr.mxu0 0.0
        %6852 = vmatpush2.msra.mxu0 0.0
        %6853 = vmatprep.subr.mxu0 0.0
        %6854 = vmatpush2.msra.mxu0 0.0
        %6855 = vmatprep.subr.mxu0 0.0
        %6856 = vmatpush2.msra.mxu0 0.0
        %6857 = vmatprep.subr.mxu0 0.0
        %6858 = vmatpush2.msra.mxu0 0.0
        %6859 = vmatprep.subr.mxu0 0.0
        %6860 = vmatpush2.msra.mxu0 0.0
        %6861 = vmatprep.subr.mxu0 0.0
        %6862 = vmatpush2.msra.mxu0 0.0
        %6863 = vmatprep.subr.mxu0 0.0
        %6864 = vmatpush2.msra.mxu0 0.0
        %6865 = vmatprep.subr.mxu0 0.0
        %6866 = vmatpush2.msra.mxu0 0.0
        %6867 = vmatprep.subr.mxu0 0.0
        %6868 = vmatpush2.msra.mxu0 0.0
        %6869 = vmatprep.subr.mxu0 0.0
        %6870 = vmatpush2.msra.mxu0 0.0
        %6871 = vmatprep.subr.mxu0 0.0
        %6872 = vmatpush2.msra.mxu0 0.0
        %6873 = vmatprep.subr.mxu0 0.0
        %6874 = vmatpush2.msra.mxu0 0.0
        %6875 = vmatprep.subr.mxu0 0.0
        %6876 = vmatpush2.msra.mxu0 0.0
        %6877 = vmatprep.subr.mxu0 0.0
        %6878 = vmatpush2.msra.mxu0 0.0
        %6879 = vmatprep.subr.mxu0 0.0
        %6880 = vmatpush2.msra.mxu0 0.0
        %6881 = vmatprep.mubr.f32.mxu0 0.0
        %6882 = vmatmul.mubr.f32.gmra.mxu0 %v6812
        %v6883 = vpop.f32.mrf.mxu0
        %v6884 = vadd.f32 0.0, %v6883
        %v6885 = vpop.f32.mrf.mxu0
        %6886 = vdwg.mxu0
        %s6887 = scalar_lea.vmem %s55, 48
        %v6888 = vld [vmem:[%s6887] sm:$0xff]
        %v6889 = vld [vmem:[%s6887 + $0x8] sm:$0xff]
        %v6891 = vsel %vm1956, %v6884, 0
        %6893 = vmatprep.subr.mxu0 0.0
        %6894 = vmatpush1.msra.mxu0 0.0
        %6895 = vmatprep.subr.mxu0 0.0
        %6896 = vmatpush1.msra.mxu0 0.0
        %6897 = vmatprep.subr.mxu0 0.0
        %6898 = vmatpush1.msra.mxu0 0.0
        %6899 = vmatprep.subr.mxu0 0.0
        %6900 = vmatpush1.msra.mxu0 0.0
        %6901 = vmatprep.subr.mxu0 0.0
        %6902 = vmatpush1.msra.mxu0 0.0
        %6903 = vmatprep.subr.mxu0 0.0
        %6904 = vmatpush1.msra.mxu0 0.0
        %6905 = vmatprep.subr.mxu0 0.0
        %6906 = vmatpush1.msra.mxu0 0.0
        %6907 = vmatprep.subr.mxu0 0.0
        %6908 = vmatpush1.msra.mxu0 0.0
        %6909 = vmatprep.subr.mxu0 0.0
        %6910 = vmatpush1.msra.mxu0 0.0
        %6911 = vmatprep.subr.mxu0 0.0
        %6912 = vmatpush1.msra.mxu0 0.0
        %6913 = vmatprep.subr.mxu0 0.0
        %6914 = vmatpush1.msra.mxu0 0.0
        %6915 = vmatprep.subr.mxu0 0.0
        %6916 = vmatpush1.msra.mxu0 0.0
        %6917 = vmatprep.subr.mxu0 0.0
        %6918 = vmatpush1.msra.mxu0 0.0
        %6919 = vmatprep.subr.mxu0 0.0
        %6920 = vmatpush1.msra.mxu0 0.0
        %6921 = vmatprep.subr.mxu0 0.0
        %6922 = vmatpush1.msra.mxu0 %v6889
        %6923 = vmatprep.subr.mxu0 0.0
        %6924 = vmatpush1.msra.mxu0 %v6888
        %6925 = vmatprep.subr.mxu0 0.0
        %6926 = vmatpush2.msra.mxu0 0.0
        %6927 = vmatprep.subr.mxu0 0.0
        %6928 = vmatpush2.msra.mxu0 0.0
        %6929 = vmatprep.subr.mxu0 0.0
        %6930 = vmatpush2.msra.mxu0 0.0
        %6931 = vmatprep.subr.mxu0 0.0
        %6932 = vmatpush2.msra.mxu0 0.0
        %6933 = vmatprep.subr.mxu0 0.0
        %6934 = vmatpush2.msra.mxu0 0.0
        %6935 = vmatprep.subr.mxu0 0.0
        %6936 = vmatpush2.msra.mxu0 0.0
        %6937 = vmatprep.subr.mxu0 0.0
        %6938 = vmatpush2.msra.mxu0 0.0
        %6939 = vmatprep.subr.mxu0 0.0
        %6940 = vmatpush2.msra.mxu0 0.0
        %6941 = vmatprep.subr.mxu0 0.0
        %6942 = vmatpush2.msra.mxu0 0.0
        %6943 = vmatprep.subr.mxu0 0.0
        %6944 = vmatpush2.msra.mxu0 0.0
        %6945 = vmatprep.subr.mxu0 0.0
        %6946 = vmatpush2.msra.mxu0 0.0
        %6947 = vmatprep.subr.mxu0 0.0
        %6948 = vmatpush2.msra.mxu0 0.0
        %6949 = vmatprep.subr.mxu0 0.0
        %6950 = vmatpush2.msra.mxu0 0.0
        %6951 = vmatprep.subr.mxu0 0.0
        %6952 = vmatpush2.msra.mxu0 0.0
        %6953 = vmatprep.subr.mxu0 0.0
        %6954 = vmatpush2.msra.mxu0 0.0
        %6955 = vmatprep.subr.mxu0 0.0
        %6956 = vmatpush2.msra.mxu0 0.0
        %6957 = vmatprep.mubr.f32.mxu0 0.0
        %6958 = vmatmul.mubr.f32.gmra.mxu0 %v6891
        %v6959 = vpop.f32.mrf.mxu0
        %v6960 = vadd.f32 0.0, %v6959
        %v6961 = vpop.f32.mrf.mxu0
        %6962 = vdwg.mxu0
        %v6964 = vsel %vm1956, %v6473, 0
        %6966 = vmatprep.subr.mxu0 0.0
        %6967 = vmatpush1.msra.mxu0 0.0
        %6968 = vmatprep.subr.mxu0 0.0
        %6969 = vmatpush1.msra.mxu0 0.0
        %6970 = vmatprep.subr.mxu0 0.0
        %6971 = vmatpush1.msra.mxu0 0.0
        %6972 = vmatprep.subr.mxu0 0.0
        %6973 = vmatpush1.msra.mxu0 0.0
        %6974 = vmatprep.subr.mxu0 0.0
        %6975 = vmatpush1.msra.mxu0 0.0
        %6976 = vmatprep.subr.mxu0 0.0
        %6977 = vmatpush1.msra.mxu0 0.0
        %6978 = vmatprep.subr.mxu0 0.0
        %6979 = vmatpush1.msra.mxu0 0.0
        %6980 = vmatprep.subr.mxu0 0.0
        %6981 = vmatpush1.msra.mxu0 0.0
        %6982 = vmatprep.subr.mxu0 0.0
        %6983 = vmatpush1.msra.mxu0 0.0
        %6984 = vmatprep.subr.mxu0 0.0
        %6985 = vmatpush1.msra.mxu0 0.0
        %6986 = vmatprep.subr.mxu0 0.0
        %6987 = vmatpush1.msra.mxu0 0.0
        %6988 = vmatprep.subr.mxu0 0.0
        %6989 = vmatpush1.msra.mxu0 0.0
        %6990 = vmatprep.subr.mxu0 0.0
        %6991 = vmatpush1.msra.mxu0 0.0
        %6992 = vmatprep.subr.mxu0 0.0
        %6993 = vmatpush1.msra.mxu0 0.0
        %6994 = vmatprep.subr.mxu0 0.0
        %6995 = vmatpush1.msra.mxu0 %v6478
        %6996 = vmatprep.subr.mxu0 0.0
        %6997 = vmatpush1.msra.mxu0 %v6477
        %6998 = vmatprep.subr.mxu0 0.0
        %6999 = vmatpush2.msra.mxu0 0.0
        %7000 = vmatprep.subr.mxu0 0.0
        %7001 = vmatpush2.msra.mxu0 0.0
        %7002 = vmatprep.subr.mxu0 0.0
        %7003 = vmatpush2.msra.mxu0 0.0
        %7004 = vmatprep.subr.mxu0 0.0
        %7005 = vmatpush2.msra.mxu0 0.0
        %7006 = vmatprep.subr.mxu0 0.0
        %7007 = vmatpush2.msra.mxu0 0.0
        %7008 = vmatprep.subr.mxu0 0.0
        %7009 = vmatpush2.msra.mxu0 0.0
        %7010 = vmatprep.subr.mxu0 0.0
        %7011 = vmatpush2.msra.mxu0 0.0
        %7012 = vmatprep.subr.mxu0 0.0
        %7013 = vmatpush2.msra.mxu0 0.0
        %7014 = vmatprep.subr.mxu0 0.0
        %7015 = vmatpush2.msra.mxu0 0.0
        %7016 = vmatprep.subr.mxu0 0.0
        %7017 = vmatpush2.msra.mxu0 0.0
        %7018 = vmatprep.subr.mxu0 0.0
        %7019 = vmatpush2.msra.mxu0 0.0
        %7020 = vmatprep.subr.mxu0 0.0
        %7021 = vmatpush2.msra.mxu0 0.0
        %7022 = vmatprep.subr.mxu0 0.0
        %7023 = vmatpush2.msra.mxu0 0.0
        %7024 = vmatprep.subr.mxu0 0.0
        %7025 = vmatpush2.msra.mxu0 0.0
        %7026 = vmatprep.subr.mxu0 0.0
        %7027 = vmatpush2.msra.mxu0 0.0
        %7028 = vmatprep.subr.mxu0 0.0
        %7029 = vmatpush2.msra.mxu0 0.0
        %7030 = vmatprep.mubr.f32.mxu0 0.0
        %7031 = vmatmul.mubr.f32.gmra.mxu0 %v6964
        %v7032 = vpop.f32.mrf.mxu0
        %v7033 = vadd.f32 %v6960, %v7032
        %v7034 = vpop.f32.mrf.mxu0
        %7035 = vdwg.mxu0
        %v7037 = vlaneseq
        %v7038 = vshrl.u32 %v7037, 7
        %v7039 = vsub.s32 0, %v7038
        %v7040 = vrot.slane %v6064, %v7039
        %v7042 = vadd.f32 %v7033, %v7040
        %s7043 = scalar_lea.vmem %s73, 1
        %v7044 = vld [vmem:[%s7043] sm:$0x1]
        %s7045 = scalar_lea.vmem %s59, 64
        %v7046 = vld [vmem:[%s7045] sm:$0xff]
        %v7047 = vld [vmem:[%s7045 + $0x8] sm:$0xff]
        %v7048 = vld [vmem:[%s7045 + $0x10] sm:$0xff]
        %v7049 = vld [vmem:[%s7045 + $0x18] sm:$0xff]
        %s7050 = scalar_lea.vmem %s61, 2
        %v7051 = vld [vmem:[%s7050] sm:$0x1]
        %v7053 = vlaneseq
        %v7054 = vshrl.u32 %v7053, 7
        %v7055 = vsub.s32 0, %v7054
        %v7056 = vrot.slane %v7051, %v7055
        %7058 = vmatprep.subr.mxu0 0.0
        %7059 = vmatpush1.msra.mxu0 0.0
        %7060 = vmatprep.subr.mxu0 0.0
        %7061 = vmatpush1.msra.mxu0 0.0
        %7062 = vmatprep.subr.mxu0 0.0
        %7063 = vmatpush1.msra.mxu0 0.0
        %7064 = vmatprep.subr.mxu0 0.0
        %7065 = vmatpush1.msra.mxu0 0.0
        %7066 = vmatprep.subr.mxu0 0.0
        %7067 = vmatpush1.msra.mxu0 0.0
        %7068 = vmatprep.subr.mxu0 0.0
        %7069 = vmatpush1.msra.mxu0 0.0
        %7070 = vmatprep.subr.mxu0 0.0
        %7071 = vmatpush1.msra.mxu0 0.0
        %7072 = vmatprep.subr.mxu0 0.0
        %7073 = vmatpush1.msra.mxu0 0.0
        %7074 = vmatprep.subr.mxu0 0.0
        %7075 = vmatpush1.msra.mxu0 0.0
        %7076 = vmatprep.subr.mxu0 0.0
        %7077 = vmatpush1.msra.mxu0 0.0
        %7078 = vmatprep.subr.mxu0 0.0
        %7079 = vmatpush1.msra.mxu0 0.0
        %7080 = vmatprep.subr.mxu0 0.0
        %7081 = vmatpush1.msra.mxu0 0.0
        %7082 = vmatprep.subr.mxu0 0.0
        %7083 = vmatpush1.msra.mxu0 %v7049
        %7084 = vmatprep.subr.mxu0 0.0
        %7085 = vmatpush1.msra.mxu0 %v7048
        %7086 = vmatprep.subr.mxu0 0.0
        %7087 = vmatpush1.msra.mxu0 %v7047
        %7088 = vmatprep.subr.mxu0 0.0
        %7089 = vmatpush1.msra.mxu0 %v7046
        %7090 = vmatprep.subr.mxu0 0.0
        %7091 = vmatpush2.msra.mxu0 0.0
        %7092 = vmatprep.subr.mxu0 0.0
        %7093 = vmatpush2.msra.mxu0 0.0
        %7094 = vmatprep.subr.mxu0 0.0
        %7095 = vmatpush2.msra.mxu0 0.0
        %7096 = vmatprep.subr.mxu0 0.0
        %7097 = vmatpush2.msra.mxu0 0.0
        %7098 = vmatprep.subr.mxu0 0.0
        %7099 = vmatpush2.msra.mxu0 0.0
        %7100 = vmatprep.subr.mxu0 0.0
        %7101 = vmatpush2.msra.mxu0 0.0
        %7102 = vmatprep.subr.mxu0 0.0
        %7103 = vmatpush2.msra.mxu0 0.0
        %7104 = vmatprep.subr.mxu0 0.0
        %7105 = vmatpush2.msra.mxu0 0.0
        %7106 = vmatprep.subr.mxu0 0.0
        %7107 = vmatpush2.msra.mxu0 0.0
        %7108 = vmatprep.subr.mxu0 0.0
        %7109 = vmatpush2.msra.mxu0 0.0
        %7110 = vmatprep.subr.mxu0 0.0
        %7111 = vmatpush2.msra.mxu0 0.0
        %7112 = vmatprep.subr.mxu0 0.0
        %7113 = vmatpush2.msra.mxu0 0.0
        %7114 = vmatprep.subr.mxu0 0.0
        %7115 = vmatpush2.msra.mxu0 0.0
        %7116 = vmatprep.subr.mxu0 0.0
        %7117 = vmatpush2.msra.mxu0 0.0
        %7118 = vmatprep.subr.mxu0 0.0
        %7119 = vmatpush2.msra.mxu0 0.0
        %7120 = vmatprep.subr.mxu0 0.0
        %7121 = vmatpush2.msra.mxu0 0.0
        %7122 = vmatprep.mubr.f32.mxu0 0.0
        %7123 = vmatmul.mubr.f32.gmra.mxu0 %v6079
        %v7124 = vpop.f32.mrf.mxu0
        %v7125 = vadd.f32 %v7056, %v7124
        %v7126 = vpop.f32.mrf.mxu0
        %7127 = vdwg.mxu0
        %s7128 = scalar_lea.vmem %s63, 48
        %v7129 = vld [vmem:[%s7128] sm:$0xff]
        %v7130 = vld [vmem:[%s7128 + $0x8] sm:$0xff]
        %v7131 = vld [vmem:[%s7128 + $0x10] sm:$0xff]
        %s7132 = scalar_lea.vmem %s65, 2
        %v7133 = vld [vmem:[%s7132] sm:$0x1]
        %v7135 = vlaneseq
        %v7136 = vshrl.u32 %v7135, 7
        %v7137 = vsub.s32 0, %v7136
        %v7138 = vrot.slane %v7133, %v7137
        %7140 = vmatprep.subr.mxu0 0.0
        %7141 = vmatpush1.msra.mxu0 0.0
        %7142 = vmatprep.subr.mxu0 0.0
        %7143 = vmatpush1.msra.mxu0 0.0
        %7144 = vmatprep.subr.mxu0 0.0
        %7145 = vmatpush1.msra.mxu0 0.0
        %7146 = vmatprep.subr.mxu0 0.0
        %7147 = vmatpush1.msra.mxu0 0.0
        %7148 = vmatprep.subr.mxu0 0.0
        %7149 = vmatpush1.msra.mxu0 0.0
        %7150 = vmatprep.subr.mxu0 0.0
        %7151 = vmatpush1.msra.mxu0 0.0
        %7152 = vmatprep.subr.mxu0 0.0
        %7153 = vmatpush1.msra.mxu0 0.0
        %7154 = vmatprep.subr.mxu0 0.0
        %7155 = vmatpush1.msra.mxu0 0.0
        %7156 = vmatprep.subr.mxu0 0.0
        %7157 = vmatpush1.msra.mxu0 0.0
        %7158 = vmatprep.subr.mxu0 0.0
        %7159 = vmatpush1.msra.mxu0 0.0
        %7160 = vmatprep.subr.mxu0 0.0
        %7161 = vmatpush1.msra.mxu0 0.0
        %7162 = vmatprep.subr.mxu0 0.0
        %7163 = vmatpush1.msra.mxu0 0.0
        %7164 = vmatprep.subr.mxu0 0.0
        %7165 = vmatpush1.msra.mxu0 0.0
        %7166 = vmatprep.subr.mxu0 0.0
        %7167 = vmatpush1.msra.mxu0 %v7131
        %7168 = vmatprep.subr.mxu0 0.0
        %7169 = vmatpush1.msra.mxu0 %v7130
        %7170 = vmatprep.subr.mxu0 0.0
        %7171 = vmatpush1.msra.mxu0 %v7129
        %7172 = vmatprep.subr.mxu0 0.0
        %7173 = vmatpush2.msra.mxu0 0.0
        %7174 = vmatprep.subr.mxu0 0.0
        %7175 = vmatpush2.msra.mxu0 0.0
        %7176 = vmatprep.subr.mxu0 0.0
        %7177 = vmatpush2.msra.mxu0 0.0
        %7178 = vmatprep.subr.mxu0 0.0
        %7179 = vmatpush2.msra.mxu0 0.0
        %7180 = vmatprep.subr.mxu0 0.0
        %7181 = vmatpush2.msra.mxu0 0.0
        %7182 = vmatprep.subr.mxu0 0.0
        %7183 = vmatpush2.msra.mxu0 0.0
        %7184 = vmatprep.subr.mxu0 0.0
        %7185 = vmatpush2.msra.mxu0 0.0
        %7186 = vmatprep.subr.mxu0 0.0
        %7187 = vmatpush2.msra.mxu0 0.0
        %7188 = vmatprep.subr.mxu0 0.0
        %7189 = vmatpush2.msra.mxu0 0.0
        %7190 = vmatprep.subr.mxu0 0.0
        %7191 = vmatpush2.msra.mxu0 0.0
        %7192 = vmatprep.subr.mxu0 0.0
        %7193 = vmatpush2.msra.mxu0 0.0
        %7194 = vmatprep.subr.mxu0 0.0
        %7195 = vmatpush2.msra.mxu0 0.0
        %7196 = vmatprep.subr.mxu0 0.0
        %7197 = vmatpush2.msra.mxu0 0.0
        %7198 = vmatprep.subr.mxu0 0.0
        %7199 = vmatpush2.msra.mxu0 0.0
        %7200 = vmatprep.subr.mxu0 0.0
        %7201 = vmatpush2.msra.mxu0 0.0
        %7202 = vmatprep.subr.mxu0 0.0
        %7203 = vmatpush2.msra.mxu0 0.0
        %7204 = vmatprep.mubr.f32.mxu0 0.0
        %7205 = vmatmul.mubr.f32.gmra.mxu0 %v3802
        %v7206 = vpop.f32.mrf.mxu0
        %v7207 = vadd.f32 %v7138, %v7206
        %v7208 = vpop.f32.mrf.mxu0
        %7209 = vmatprep.mubr.f32.mxu0 0.0
        %7210 = vmatmul.mubr.f32.gmra.mxu0 %v3805
        %v7211 = vpop.f32.mrf.mxu0
        %v7212 = vadd.f32 %v7138, %v7211
        %v7213 = vpop.f32.mrf.mxu0
        %7214 = vdwg.mxu0
        %s7215 = scalar_lea.vmem %s67, 48
        %v7216 = vld [vmem:[%s7215] sm:$0xff]
        %v7217 = vld [vmem:[%s7215 + $0x8] sm:$0xff]
        %v7218 = vld [vmem:[%s7215 + $0x10] sm:$0xff]
        %s7219 = scalar_lea.vmem %s69, 2
        %v7220 = vld [vmem:[%s7219] sm:$0x1]
        %v7222 = vlaneseq
        %v7223 = vshrl.u32 %v7222, 7
        %v7224 = vsub.s32 0, %v7223
        %v7225 = vrot.slane %v7220, %v7224
        %7227 = vmatprep.subr.mxu0 0.0
        %7228 = vmatpush1.msra.mxu0 0.0
        %7229 = vmatprep.subr.mxu0 0.0
        %7230 = vmatpush1.msra.mxu0 0.0
        %7231 = vmatprep.subr.mxu0 0.0
        %7232 = vmatpush1.msra.mxu0 0.0
        %7233 = vmatprep.subr.mxu0 0.0
        %7234 = vmatpush1.msra.mxu0 0.0
        %7235 = vmatprep.subr.mxu0 0.0
        %7236 = vmatpush1.msra.mxu0 0.0
        %7237 = vmatprep.subr.mxu0 0.0
        %7238 = vmatpush1.msra.mxu0 0.0
        %7239 = vmatprep.subr.mxu0 0.0
        %7240 = vmatpush1.msra.mxu0 0.0
        %7241 = vmatprep.subr.mxu0 0.0
        %7242 = vmatpush1.msra.mxu0 0.0
        %7243 = vmatprep.subr.mxu0 0.0
        %7244 = vmatpush1.msra.mxu0 0.0
        %7245 = vmatprep.subr.mxu0 0.0
        %7246 = vmatpush1.msra.mxu0 0.0
        %7247 = vmatprep.subr.mxu0 0.0
        %7248 = vmatpush1.msra.mxu0 0.0
        %7249 = vmatprep.subr.mxu0 0.0
        %7250 = vmatpush1.msra.mxu0 0.0
        %7251 = vmatprep.subr.mxu0 0.0
        %7252 = vmatpush1.msra.mxu0 0.0
        %7253 = vmatprep.subr.mxu0 0.0
        %7254 = vmatpush1.msra.mxu0 %v7218
        %7255 = vmatprep.subr.mxu0 0.0
        %7256 = vmatpush1.msra.mxu0 %v7217
        %7257 = vmatprep.subr.mxu0 0.0
        %7258 = vmatpush1.msra.mxu0 %v7216
        %7259 = vmatprep.subr.mxu0 0.0
        %7260 = vmatpush2.msra.mxu0 0.0
        %7261 = vmatprep.subr.mxu0 0.0
        %7262 = vmatpush2.msra.mxu0 0.0
        %7263 = vmatprep.subr.mxu0 0.0
        %7264 = vmatpush2.msra.mxu0 0.0
        %7265 = vmatprep.subr.mxu0 0.0
        %7266 = vmatpush2.msra.mxu0 0.0
        %7267 = vmatprep.subr.mxu0 0.0
        %7268 = vmatpush2.msra.mxu0 0.0
        %7269 = vmatprep.subr.mxu0 0.0
        %7270 = vmatpush2.msra.mxu0 0.0
        %7271 = vmatprep.subr.mxu0 0.0
        %7272 = vmatpush2.msra.mxu0 0.0
        %7273 = vmatprep.subr.mxu0 0.0
        %7274 = vmatpush2.msra.mxu0 0.0
        %7275 = vmatprep.subr.mxu0 0.0
        %7276 = vmatpush2.msra.mxu0 0.0
        %7277 = vmatprep.subr.mxu0 0.0
        %7278 = vmatpush2.msra.mxu0 0.0
        %7279 = vmatprep.subr.mxu0 0.0
        %7280 = vmatpush2.msra.mxu0 0.0
        %7281 = vmatprep.subr.mxu0 0.0
        %7282 = vmatpush2.msra.mxu0 0.0
        %7283 = vmatprep.subr.mxu0 0.0
        %7284 = vmatpush2.msra.mxu0 0.0
        %7285 = vmatprep.subr.mxu0 0.0
        %7286 = vmatpush2.msra.mxu0 0.0
        %7287 = vmatprep.subr.mxu0 0.0
        %7288 = vmatpush2.msra.mxu0 0.0
        %7289 = vmatprep.subr.mxu0 0.0
        %7290 = vmatpush2.msra.mxu0 0.0
        %7291 = vmatprep.mubr.f32.mxu0 0.0
        %7292 = vmatmul.mubr.f32.gmra.mxu0 %v3802
        %v7293 = vpop.f32.mrf.mxu0
        %v7294 = vadd.f32 %v7225, %v7293
        %v7295 = vpop.f32.mrf.mxu0
        %7296 = vmatprep.mubr.f32.mxu0 0.0
        %7297 = vmatmul.mubr.f32.gmra.mxu0 %v3805
        %v7298 = vpop.f32.mrf.mxu0
        %v7299 = vadd.f32 %v7225, %v7298
        %v7300 = vpop.f32.mrf.mxu0
        %7301 = vdwg.mxu0
        %v7303 = vsel %vm1956, %v7125, 0
        %v7306 = vsel %vm1956, %v7207, 0
        %v7309 = vsel %vm1956, %v7212, 0
        %7311 = vmatprep.subr.mxu0 0.0
        %7312 = vmatpush1.xpose.msra.mxu0 0.0
        %7313 = vmatprep.subr.mxu0 0.0
        %7314 = vmatpush1.xpose.msra.mxu0 0.0
        %7315 = vmatprep.subr.mxu0 0.0
        %7316 = vmatpush1.xpose.msra.mxu0 0.0
        %7317 = vmatprep.subr.mxu0 0.0
        %7318 = vmatpush1.xpose.msra.mxu0 0.0
        %7319 = vmatprep.subr.mxu0 0.0
        %7320 = vmatpush1.xpose.msra.mxu0 0.0
        %7321 = vmatprep.subr.mxu0 0.0
        %7322 = vmatpush1.xpose.msra.mxu0 0.0
        %7323 = vmatprep.subr.mxu0 0.0
        %7324 = vmatpush1.xpose.msra.mxu0 0.0
        %7325 = vmatprep.subr.mxu0 0.0
        %7326 = vmatpush1.xpose.msra.mxu0 0.0
        %7327 = vmatprep.subr.mxu0 0.0
        %7328 = vmatpush1.xpose.msra.mxu0 0.0
        %7329 = vmatprep.subr.mxu0 0.0
        %7330 = vmatpush1.xpose.msra.mxu0 0.0
        %7331 = vmatprep.subr.mxu0 0.0
        %7332 = vmatpush1.xpose.msra.mxu0 0.0
        %7333 = vmatprep.subr.mxu0 0.0
        %7334 = vmatpush1.xpose.msra.mxu0 0.0
        %7335 = vmatprep.subr.mxu0 0.0
        %7336 = vmatpush1.xpose.msra.mxu0 0.0
        %7337 = vmatprep.subr.mxu0 0.0
        %7338 = vmatpush1.xpose.msra.mxu0 0.0
        %7339 = vmatprep.subr.mxu0 0.0
        %7340 = vmatpush1.xpose.msra.mxu0 %v7309
        %7341 = vmatprep.subr.mxu0 0.0
        %7342 = vmatpush1.xpose.msra.mxu0 %v7306
        %7343 = vmatprep.subr.mxu0 0.0
        %7344 = vmatpush2.xpose.msra.mxu0 0.0
        %7345 = vmatprep.subr.mxu0 0.0
        %7346 = vmatpush2.xpose.msra.mxu0 0.0
        %7347 = vmatprep.subr.mxu0 0.0
        %7348 = vmatpush2.xpose.msra.mxu0 0.0
        %7349 = vmatprep.subr.mxu0 0.0
        %7350 = vmatpush2.xpose.msra.mxu0 0.0
        %7351 = vmatprep.subr.mxu0 0.0
        %7352 = vmatpush2.xpose.msra.mxu0 0.0
        %7353 = vmatprep.subr.mxu0 0.0
        %7354 = vmatpush2.xpose.msra.mxu0 0.0
        %7355 = vmatprep.subr.mxu0 0.0
        %7356 = vmatpush2.xpose.msra.mxu0 0.0
        %7357 = vmatprep.subr.mxu0 0.0
        %7358 = vmatpush2.xpose.msra.mxu0 0.0
        %7359 = vmatprep.subr.mxu0 0.0
        %7360 = vmatpush2.xpose.msra.mxu0 0.0
        %7361 = vmatprep.subr.mxu0 0.0
        %7362 = vmatpush2.xpose.msra.mxu0 0.0
        %7363 = vmatprep.subr.mxu0 0.0
        %7364 = vmatpush2.xpose.msra.mxu0 0.0
        %7365 = vmatprep.subr.mxu0 0.0
        %7366 = vmatpush2.xpose.msra.mxu0 0.0
        %7367 = vmatprep.subr.mxu0 0.0
        %7368 = vmatpush2.xpose.msra.mxu0 0.0
        %7369 = vmatprep.subr.mxu0 0.0
        %7370 = vmatpush2.xpose.msra.mxu0 0.0
        %7371 = vmatprep.subr.mxu0 0.0
        %7372 = vmatpush2.xpose.msra.mxu0 0.0
        %7373 = vmatprep.subr.mxu0 0.0
        %7374 = vmatpush2.xpose.msra.mxu0 0.0
        %7375 = vmatprep.mubr.f32.mxu0 0.0
        %7376 = vmatmul.mubr.f32.gmra.mxu0 %v7303
        %v7377 = vpop.f32.mrf.mxu0
        %v7378 = vadd.f32 %v1614, %v7377
        %v7379 = vpop.f32.mrf.mxu0
        %7380 = vdwg.mxu0
        %v7381 = vsel %vm4046, %v7378, -inf
        %7382 = vmax.xlane.f32.xlu0 %v7381
        %v7383 = vpop.xlane.xlu0 %7382
        %v7384 = vsub.f32 %v7378, %v7383
        %v7385 = vmul.f32 %v7384, 1.442695
        %v7386 = vpow.pop %v7385
        %v7387 = vsel %vm4046, %v7386, 0.0
        %7388 = vadd.xlane.f32.xlu0 %v7387
        %v7389 = vpop.xlane.xlu0 %7388
        %v7390 = vrcp.pop %v7389
        %v7391 = vmul.f32 %v7386, %v7390
        %v7393 = vsel %vm4046, %v7391, 0
        %v7396 = vsel %vm4061, %v7299, 0
        %7398 = vmatprep.subr.mxu0 0.0
        %7399 = vmatpush1.msra.mxu0 0.0
        %7400 = vmatprep.subr.mxu0 0.0
        %7401 = vmatpush1.msra.mxu0 0.0
        %7402 = vmatprep.subr.mxu0 0.0
        %7403 = vmatpush1.msra.mxu0 0.0
        %7404 = vmatprep.subr.mxu0 0.0
        %7405 = vmatpush1.msra.mxu0 0.0
        %7406 = vmatprep.subr.mxu0 0.0
        %7407 = vmatpush1.msra.mxu0 0.0
        %7408 = vmatprep.subr.mxu0 0.0
        %7409 = vmatpush1.msra.mxu0 0.0
        %7410 = vmatprep.subr.mxu0 0.0
        %7411 = vmatpush1.msra.mxu0 0.0
        %7412 = vmatprep.subr.mxu0 0.0
        %7413 = vmatpush1.msra.mxu0 0.0
        %7414 = vmatprep.subr.mxu0 0.0
        %7415 = vmatpush1.msra.mxu0 0.0
        %7416 = vmatprep.subr.mxu0 0.0
        %7417 = vmatpush1.msra.mxu0 0.0
        %7418 = vmatprep.subr.mxu0 0.0
        %7419 = vmatpush1.msra.mxu0 0.0
        %7420 = vmatprep.subr.mxu0 0.0
        %7421 = vmatpush1.msra.mxu0 0.0
        %7422 = vmatprep.subr.mxu0 0.0
        %7423 = vmatpush1.msra.mxu0 0.0
        %7424 = vmatprep.subr.mxu0 0.0
        %7425 = vmatpush1.msra.mxu0 0.0
        %7426 = vmatprep.subr.mxu0 0.0
        %7427 = vmatpush1.msra.mxu0 %v7396
        %7428 = vmatprep.subr.mxu0 0.0
        %7429 = vmatpush1.msra.mxu0 %v7294
        %7430 = vmatprep.subr.mxu0 0.0
        %7431 = vmatpush2.msra.mxu0 0.0
        %7432 = vmatprep.subr.mxu0 0.0
        %7433 = vmatpush2.msra.mxu0 0.0
        %7434 = vmatprep.subr.mxu0 0.0
        %7435 = vmatpush2.msra.mxu0 0.0
        %7436 = vmatprep.subr.mxu0 0.0
        %7437 = vmatpush2.msra.mxu0 0.0
        %7438 = vmatprep.subr.mxu0 0.0
        %7439 = vmatpush2.msra.mxu0 0.0
        %7440 = vmatprep.subr.mxu0 0.0
        %7441 = vmatpush2.msra.mxu0 0.0
        %7442 = vmatprep.subr.mxu0 0.0
        %7443 = vmatpush2.msra.mxu0 0.0
        %7444 = vmatprep.subr.mxu0 0.0
        %7445 = vmatpush2.msra.mxu0 0.0
        %7446 = vmatprep.subr.mxu0 0.0
        %7447 = vmatpush2.msra.mxu0 0.0
        %7448 = vmatprep.subr.mxu0 0.0
        %7449 = vmatpush2.msra.mxu0 0.0
        %7450 = vmatprep.subr.mxu0 0.0
        %7451 = vmatpush2.msra.mxu0 0.0
        %7452 = vmatprep.subr.mxu0 0.0
        %7453 = vmatpush2.msra.mxu0 0.0
        %7454 = vmatprep.subr.mxu0 0.0
        %7455 = vmatpush2.msra.mxu0 0.0
        %7456 = vmatprep.subr.mxu0 0.0
        %7457 = vmatpush2.msra.mxu0 0.0
        %7458 = vmatprep.subr.mxu0 0.0
        %7459 = vmatpush2.msra.mxu0 0.0
        %7460 = vmatprep.subr.mxu0 0.0
        %7461 = vmatpush2.msra.mxu0 0.0
        %7462 = vmatprep.mubr.f32.mxu0 0.0
        %7463 = vmatmul.mubr.f32.gmra.mxu0 %v7393
        %v7464 = vpop.f32.mrf.mxu0
        %v7465 = vadd.f32 0.0, %v7464
        %v7466 = vpop.f32.mrf.mxu0
        %7467 = vdwg.mxu0
        %s7468 = scalar_lea.vmem %s71, 32
        %v7469 = vld [vmem:[%s7468] sm:$0xff]
        %v7470 = vld [vmem:[%s7468 + $0x8] sm:$0xff]
        %s7471 = scalar_lea.vmem %s59, 96
        %v7472 = vld [vmem:[%s7471] sm:$0xff]
        %v7473 = vld [vmem:[%s7471 + $0x8] sm:$0xff]
        %v7474 = vld [vmem:[%s7471 + $0x10] sm:$0xff]
        %v7475 = vld [vmem:[%s7471 + $0x18] sm:$0xff]
        %s7476 = scalar_lea.vmem %s61, 3
        %v7477 = vld [vmem:[%s7476] sm:$0x1]
        %v7479 = vlaneseq
        %v7480 = vshrl.u32 %v7479, 7
        %v7481 = vsub.s32 0, %v7480
        %v7482 = vrot.slane %v7477, %v7481
        %7484 = vmatprep.subr.mxu0 0.0
        %7485 = vmatpush1.msra.mxu0 0.0
        %7486 = vmatprep.subr.mxu0 0.0
        %7487 = vmatpush1.msra.mxu0 0.0
        %7488 = vmatprep.subr.mxu0 0.0
        %7489 = vmatpush1.msra.mxu0 0.0
        %7490 = vmatprep.subr.mxu0 0.0
        %7491 = vmatpush1.msra.mxu0 0.0
        %7492 = vmatprep.subr.mxu0 0.0
        %7493 = vmatpush1.msra.mxu0 0.0
        %7494 = vmatprep.subr.mxu0 0.0
        %7495 = vmatpush1.msra.mxu0 0.0
        %7496 = vmatprep.subr.mxu0 0.0
        %7497 = vmatpush1.msra.mxu0 0.0
        %7498 = vmatprep.subr.mxu0 0.0
        %7499 = vmatpush1.msra.mxu0 0.0
        %7500 = vmatprep.subr.mxu0 0.0
        %7501 = vmatpush1.msra.mxu0 0.0
        %7502 = vmatprep.subr.mxu0 0.0
        %7503 = vmatpush1.msra.mxu0 0.0
        %7504 = vmatprep.subr.mxu0 0.0
        %7505 = vmatpush1.msra.mxu0 0.0
        %7506 = vmatprep.subr.mxu0 0.0
        %7507 = vmatpush1.msra.mxu0 0.0
        %7508 = vmatprep.subr.mxu0 0.0
        %7509 = vmatpush1.msra.mxu0 %v7475
        %7510 = vmatprep.subr.mxu0 0.0
        %7511 = vmatpush1.msra.mxu0 %v7474
        %7512 = vmatprep.subr.mxu0 0.0
        %7513 = vmatpush1.msra.mxu0 %v7473
        %7514 = vmatprep.subr.mxu0 0.0
        %7515 = vmatpush1.msra.mxu0 %v7472
        %7516 = vmatprep.subr.mxu0 0.0
        %7517 = vmatpush2.msra.mxu0 0.0
        %7518 = vmatprep.subr.mxu0 0.0
        %7519 = vmatpush2.msra.mxu0 0.0
        %7520 = vmatprep.subr.mxu0 0.0
        %7521 = vmatpush2.msra.mxu0 0.0
        %7522 = vmatprep.subr.mxu0 0.0
        %7523 = vmatpush2.msra.mxu0 0.0
        %7524 = vmatprep.subr.mxu0 0.0
        %7525 = vmatpush2.msra.mxu0 0.0
        %7526 = vmatprep.subr.mxu0 0.0
        %7527 = vmatpush2.msra.mxu0 0.0
        %7528 = vmatprep.subr.mxu0 0.0
        %7529 = vmatpush2.msra.mxu0 0.0
        %7530 = vmatprep.subr.mxu0 0.0
        %7531 = vmatpush2.msra.mxu0 0.0
        %7532 = vmatprep.subr.mxu0 0.0
        %7533 = vmatpush2.msra.mxu0 0.0
        %7534 = vmatprep.subr.mxu0 0.0
        %7535 = vmatpush2.msra.mxu0 0.0
        %7536 = vmatprep.subr.mxu0 0.0
        %7537 = vmatpush2.msra.mxu0 0.0
        %7538 = vmatprep.subr.mxu0 0.0
        %7539 = vmatpush2.msra.mxu0 0.0
        %7540 = vmatprep.subr.mxu0 0.0
        %7541 = vmatpush2.msra.mxu0 0.0
        %7542 = vmatprep.subr.mxu0 0.0
        %7543 = vmatpush2.msra.mxu0 0.0
        %7544 = vmatprep.subr.mxu0 0.0
        %7545 = vmatpush2.msra.mxu0 0.0
        %7546 = vmatprep.subr.mxu0 0.0
        %7547 = vmatpush2.msra.mxu0 0.0
        %7548 = vmatprep.mubr.f32.mxu0 0.0
        %7549 = vmatmul.mubr.f32.gmra.mxu0 %v6079
        %v7550 = vpop.f32.mrf.mxu0
        %v7551 = vadd.f32 %v7482, %v7550
        %v7552 = vpop.f32.mrf.mxu0
        %7553 = vdwg.mxu0
        %s7554 = scalar_lea.vmem %s63, 72
        %v7555 = vld [vmem:[%s7554] sm:$0xff]
        %v7556 = vld [vmem:[%s7554 + $0x8] sm:$0xff]
        %v7557 = vld [vmem:[%s7554 + $0x10] sm:$0xff]
        %s7558 = scalar_lea.vmem %s65, 3
        %v7559 = vld [vmem:[%s7558] sm:$0x1]
        %v7561 = vlaneseq
        %v7562 = vshrl.u32 %v7561, 7
        %v7563 = vsub.s32 0, %v7562
        %v7564 = vrot.slane %v7559, %v7563
        %7566 = vmatprep.subr.mxu0 0.0
        %7567 = vmatpush1.msra.mxu0 0.0
        %7568 = vmatprep.subr.mxu0 0.0
        %7569 = vmatpush1.msra.mxu0 0.0
        %7570 = vmatprep.subr.mxu0 0.0
        %7571 = vmatpush1.msra.mxu0 0.0
        %7572 = vmatprep.subr.mxu0 0.0
        %7573 = vmatpush1.msra.mxu0 0.0
        %7574 = vmatprep.subr.mxu0 0.0
        %7575 = vmatpush1.msra.mxu0 0.0
        %7576 = vmatprep.subr.mxu0 0.0
        %7577 = vmatpush1.msra.mxu0 0.0
        %7578 = vmatprep.subr.mxu0 0.0
        %7579 = vmatpush1.msra.mxu0 0.0
        %7580 = vmatprep.subr.mxu0 0.0
        %7581 = vmatpush1.msra.mxu0 0.0
        %7582 = vmatprep.subr.mxu0 0.0
        %7583 = vmatpush1.msra.mxu0 0.0
        %7584 = vmatprep.subr.mxu0 0.0
        %7585 = vmatpush1.msra.mxu0 0.0
        %7586 = vmatprep.subr.mxu0 0.0
        %7587 = vmatpush1.msra.mxu0 0.0
        %7588 = vmatprep.subr.mxu0 0.0
        %7589 = vmatpush1.msra.mxu0 0.0
        %7590 = vmatprep.subr.mxu0 0.0
        %7591 = vmatpush1.msra.mxu0 0.0
        %7592 = vmatprep.subr.mxu0 0.0
        %7593 = vmatpush1.msra.mxu0 %v7557
        %7594 = vmatprep.subr.mxu0 0.0
        %7595 = vmatpush1.msra.mxu0 %v7556
        %7596 = vmatprep.subr.mxu0 0.0
        %7597 = vmatpush1.msra.mxu0 %v7555
        %7598 = vmatprep.subr.mxu0 0.0
        %7599 = vmatpush2.msra.mxu0 0.0
        %7600 = vmatprep.subr.mxu0 0.0
        %7601 = vmatpush2.msra.mxu0 0.0
        %7602 = vmatprep.subr.mxu0 0.0
        %7603 = vmatpush2.msra.mxu0 0.0
        %7604 = vmatprep.subr.mxu0 0.0
        %7605 = vmatpush2.msra.mxu0 0.0
        %7606 = vmatprep.subr.mxu0 0.0
        %7607 = vmatpush2.msra.mxu0 0.0
        %7608 = vmatprep.subr.mxu0 0.0
        %7609 = vmatpush2.msra.mxu0 0.0
        %7610 = vmatprep.subr.mxu0 0.0
        %7611 = vmatpush2.msra.mxu0 0.0
        %7612 = vmatprep.subr.mxu0 0.0
        %7613 = vmatpush2.msra.mxu0 0.0
        %7614 = vmatprep.subr.mxu0 0.0
        %7615 = vmatpush2.msra.mxu0 0.0
        %7616 = vmatprep.subr.mxu0 0.0
        %7617 = vmatpush2.msra.mxu0 0.0
        %7618 = vmatprep.subr.mxu0 0.0
        %7619 = vmatpush2.msra.mxu0 0.0
        %7620 = vmatprep.subr.mxu0 0.0
        %7621 = vmatpush2.msra.mxu0 0.0
        %7622 = vmatprep.subr.mxu0 0.0
        %7623 = vmatpush2.msra.mxu0 0.0
        %7624 = vmatprep.subr.mxu0 0.0
        %7625 = vmatpush2.msra.mxu0 0.0
        %7626 = vmatprep.subr.mxu0 0.0
        %7627 = vmatpush2.msra.mxu0 0.0
        %7628 = vmatprep.subr.mxu0 0.0
        %7629 = vmatpush2.msra.mxu0 0.0
        %7630 = vmatprep.mubr.f32.mxu0 0.0
        %7631 = vmatmul.mubr.f32.gmra.mxu0 %v3802
        %v7632 = vpop.f32.mrf.mxu0
        %v7633 = vadd.f32 %v7564, %v7632
        %v7634 = vpop.f32.mrf.mxu0
        %7635 = vmatprep.mubr.f32.mxu0 0.0
        %7636 = vmatmul.mubr.f32.gmra.mxu0 %v3805
        %v7637 = vpop.f32.mrf.mxu0
        %v7638 = vadd.f32 %v7564, %v7637
        %v7639 = vpop.f32.mrf.mxu0
        %7640 = vdwg.mxu0
        %s7641 = scalar_lea.vmem %s67, 72
        %v7642 = vld [vmem:[%s7641] sm:$0xff]
        %v7643 = vld [vmem:[%s7641 + $0x8] sm:$0xff]
        %v7644 = vld [vmem:[%s7641 + $0x10] sm:$0xff]
        %s7645 = scalar_lea.vmem %s69, 3
        %v7646 = vld [vmem:[%s7645] sm:$0x1]
        %v7648 = vlaneseq
        %v7649 = vshrl.u32 %v7648, 7
        %v7650 = vsub.s32 0, %v7649
        %v7651 = vrot.slane %v7646, %v7650
        %7653 = vmatprep.subr.mxu0 0.0
        %7654 = vmatpush1.msra.mxu0 0.0
        %7655 = vmatprep.subr.mxu0 0.0
        %7656 = vmatpush1.msra.mxu0 0.0
        %7657 = vmatprep.subr.mxu0 0.0
        %7658 = vmatpush1.msra.mxu0 0.0
        %7659 = vmatprep.subr.mxu0 0.0
        %7660 = vmatpush1.msra.mxu0 0.0
        %7661 = vmatprep.subr.mxu0 0.0
        %7662 = vmatpush1.msra.mxu0 0.0
        %7663 = vmatprep.subr.mxu0 0.0
        %7664 = vmatpush1.msra.mxu0 0.0
        %7665 = vmatprep.subr.mxu0 0.0
        %7666 = vmatpush1.msra.mxu0 0.0
        %7667 = vmatprep.subr.mxu0 0.0
        %7668 = vmatpush1.msra.mxu0 0.0
        %7669 = vmatprep.subr.mxu0 0.0
        %7670 = vmatpush1.msra.mxu0 0.0
        %7671 = vmatprep.subr.mxu0 0.0
        %7672 = vmatpush1.msra.mxu0 0.0
        %7673 = vmatprep.subr.mxu0 0.0
        %7674 = vmatpush1.msra.mxu0 0.0
        %7675 = vmatprep.subr.mxu0 0.0
        %7676 = vmatpush1.msra.mxu0 0.0
        %7677 = vmatprep.subr.mxu0 0.0
        %7678 = vmatpush1.msra.mxu0 0.0
        %7679 = vmatprep.subr.mxu0 0.0
        %7680 = vmatpush1.msra.mxu0 %v7644
        %7681 = vmatprep.subr.mxu0 0.0
        %7682 = vmatpush1.msra.mxu0 %v7643
        %7683 = vmatprep.subr.mxu0 0.0
        %7684 = vmatpush1.msra.mxu0 %v7642
        %7685 = vmatprep.subr.mxu0 0.0
        %7686 = vmatpush2.msra.mxu0 0.0
        %7687 = vmatprep.subr.mxu0 0.0
        %7688 = vmatpush2.msra.mxu0 0.0
        %7689 = vmatprep.subr.mxu0 0.0
        %7690 = vmatpush2.msra.mxu0 0.0
        %7691 = vmatprep.subr.mxu0 0.0
        %7692 = vmatpush2.msra.mxu0 0.0
        %7693 = vmatprep.subr.mxu0 0.0
        %7694 = vmatpush2.msra.mxu0 0.0
        %7695 = vmatprep.subr.mxu0 0.0
        %7696 = vmatpush2.msra.mxu0 0.0
        %7697 = vmatprep.subr.mxu0 0.0
        %7698 = vmatpush2.msra.mxu0 0.0
        %7699 = vmatprep.subr.mxu0 0.0
        %7700 = vmatpush2.msra.mxu0 0.0
        %7701 = vmatprep.subr.mxu0 0.0
        %7702 = vmatpush2.msra.mxu0 0.0
        %7703 = vmatprep.subr.mxu0 0.0
        %7704 = vmatpush2.msra.mxu0 0.0
        %7705 = vmatprep.subr.mxu0 0.0
        %7706 = vmatpush2.msra.mxu0 0.0
        %7707 = vmatprep.subr.mxu0 0.0
        %7708 = vmatpush2.msra.mxu0 0.0
        %7709 = vmatprep.subr.mxu0 0.0
        %7710 = vmatpush2.msra.mxu0 0.0
        %7711 = vmatprep.subr.mxu0 0.0
        %7712 = vmatpush2.msra.mxu0 0.0
        %7713 = vmatprep.subr.mxu0 0.0
        %7714 = vmatpush2.msra.mxu0 0.0
        %7715 = vmatprep.subr.mxu0 0.0
        %7716 = vmatpush2.msra.mxu0 0.0
        %7717 = vmatprep.mubr.f32.mxu0 0.0
        %7718 = vmatmul.mubr.f32.gmra.mxu0 %v3802
        %v7719 = vpop.f32.mrf.mxu0
        %v7720 = vadd.f32 %v7651, %v7719
        %v7721 = vpop.f32.mrf.mxu0
        %7722 = vmatprep.mubr.f32.mxu0 0.0
        %7723 = vmatmul.mubr.f32.gmra.mxu0 %v3805
        %v7724 = vpop.f32.mrf.mxu0
        %v7725 = vadd.f32 %v7651, %v7724
        %v7726 = vpop.f32.mrf.mxu0
        %7727 = vdwg.mxu0
        %v7729 = vsel %vm1956, %v7551, 0
        %v7732 = vsel %vm1956, %v7633, 0
        %v7735 = vsel %vm1956, %v7638, 0
        %7737 = vmatprep.subr.mxu0 0.0
        %7738 = vmatpush1.xpose.msra.mxu0 0.0
        %7739 = vmatprep.subr.mxu0 0.0
        %7740 = vmatpush1.xpose.msra.mxu0 0.0
        %7741 = vmatprep.subr.mxu0 0.0
        %7742 = vmatpush1.xpose.msra.mxu0 0.0
        %7743 = vmatprep.subr.mxu0 0.0
        %7744 = vmatpush1.xpose.msra.mxu0 0.0
        %7745 = vmatprep.subr.mxu0 0.0
        %7746 = vmatpush1.xpose.msra.mxu0 0.0
        %7747 = vmatprep.subr.mxu0 0.0
        %7748 = vmatpush1.xpose.msra.mxu0 0.0
        %7749 = vmatprep.subr.mxu0 0.0
        %7750 = vmatpush1.xpose.msra.mxu0 0.0
        %7751 = vmatprep.subr.mxu0 0.0
        %7752 = vmatpush1.xpose.msra.mxu0 0.0
        %7753 = vmatprep.subr.mxu0 0.0
        %7754 = vmatpush1.xpose.msra.mxu0 0.0
        %7755 = vmatprep.subr.mxu0 0.0
        %7756 = vmatpush1.xpose.msra.mxu0 0.0
        %7757 = vmatprep.subr.mxu0 0.0
        %7758 = vmatpush1.xpose.msra.mxu0 0.0
        %7759 = vmatprep.subr.mxu0 0.0
        %7760 = vmatpush1.xpose.msra.mxu0 0.0
        %7761 = vmatprep.subr.mxu0 0.0
        %7762 = vmatpush1.xpose.msra.mxu0 0.0
        %7763 = vmatprep.subr.mxu0 0.0
        %7764 = vmatpush1.xpose.msra.mxu0 0.0
        %7765 = vmatprep.subr.mxu0 0.0
        %7766 = vmatpush1.xpose.msra.mxu0 %v7735
        %7767 = vmatprep.subr.mxu0 0.0
        %7768 = vmatpush1.xpose.msra.mxu0 %v7732
        %7769 = vmatprep.subr.mxu0 0.0
        %7770 = vmatpush2.xpose.msra.mxu0 0.0
        %7771 = vmatprep.subr.mxu0 0.0
        %7772 = vmatpush2.xpose.msra.mxu0 0.0
        %7773 = vmatprep.subr.mxu0 0.0
        %7774 = vmatpush2.xpose.msra.mxu0 0.0
        %7775 = vmatprep.subr.mxu0 0.0
        %7776 = vmatpush2.xpose.msra.mxu0 0.0
        %7777 = vmatprep.subr.mxu0 0.0
        %7778 = vmatpush2.xpose.msra.mxu0 0.0
        %7779 = vmatprep.subr.mxu0 0.0
        %7780 = vmatpush2.xpose.msra.mxu0 0.0
        %7781 = vmatprep.subr.mxu0 0.0
        %7782 = vmatpush2.xpose.msra.mxu0 0.0
        %7783 = vmatprep.subr.mxu0 0.0
        %7784 = vmatpush2.xpose.msra.mxu0 0.0
        %7785 = vmatprep.subr.mxu0 0.0
        %7786 = vmatpush2.xpose.msra.mxu0 0.0
        %7787 = vmatprep.subr.mxu0 0.0
        %7788 = vmatpush2.xpose.msra.mxu0 0.0
        %7789 = vmatprep.subr.mxu0 0.0
        %7790 = vmatpush2.xpose.msra.mxu0 0.0
        %7791 = vmatprep.subr.mxu0 0.0
        %7792 = vmatpush2.xpose.msra.mxu0 0.0
        %7793 = vmatprep.subr.mxu0 0.0
        %7794 = vmatpush2.xpose.msra.mxu0 0.0
        %7795 = vmatprep.subr.mxu0 0.0
        %7796 = vmatpush2.xpose.msra.mxu0 0.0
        %7797 = vmatprep.subr.mxu0 0.0
        %7798 = vmatpush2.xpose.msra.mxu0 0.0
        %7799 = vmatprep.subr.mxu0 0.0
        %7800 = vmatpush2.xpose.msra.mxu0 0.0
        %7801 = vmatprep.mubr.f32.mxu0 0.0
        %7802 = vmatmul.mubr.f32.gmra.mxu0 %v7729
        %v7803 = vpop.f32.mrf.mxu0
        %v7804 = vadd.f32 %v1614, %v7803
        %v7805 = vpop.f32.mrf.mxu0
        %7806 = vdwg.mxu0
        %v7807 = vsel %vm4046, %v7804, -inf
        %7808 = vmax.xlane.f32.xlu0 %v7807
        %v7809 = vpop.xlane.xlu0 %7808
        %v7810 = vsub.f32 %v7804, %v7809
        %v7811 = vmul.f32 %v7810, 1.442695
        %v7812 = vpow.pop %v7811
        %v7813 = vsel %vm4046, %v7812, 0.0
        %7814 = vadd.xlane.f32.xlu0 %v7813
        %v7815 = vpop.xlane.xlu0 %7814
        %v7816 = vrcp.pop %v7815
        %v7817 = vmul.f32 %v7812, %v7816
        %v7819 = vsel %vm4046, %v7817, 0
        %v7822 = vsel %vm4061, %v7725, 0
        %7824 = vmatprep.subr.mxu0 0.0
        %7825 = vmatpush1.msra.mxu0 0.0
        %7826 = vmatprep.subr.mxu0 0.0
        %7827 = vmatpush1.msra.mxu0 0.0
        %7828 = vmatprep.subr.mxu0 0.0
        %7829 = vmatpush1.msra.mxu0 0.0
        %7830 = vmatprep.subr.mxu0 0.0
        %7831 = vmatpush1.msra.mxu0 0.0
        %7832 = vmatprep.subr.mxu0 0.0
        %7833 = vmatpush1.msra.mxu0 0.0
        %7834 = vmatprep.subr.mxu0 0.0
        %7835 = vmatpush1.msra.mxu0 0.0
        %7836 = vmatprep.subr.mxu0 0.0
        %7837 = vmatpush1.msra.mxu0 0.0
        %7838 = vmatprep.subr.mxu0 0.0
        %7839 = vmatpush1.msra.mxu0 0.0
        %7840 = vmatprep.subr.mxu0 0.0
        %7841 = vmatpush1.msra.mxu0 0.0
        %7842 = vmatprep.subr.mxu0 0.0
        %7843 = vmatpush1.msra.mxu0 0.0
        %7844 = vmatprep.subr.mxu0 0.0
        %7845 = vmatpush1.msra.mxu0 0.0
        %7846 = vmatprep.subr.mxu0 0.0
        %7847 = vmatpush1.msra.mxu0 0.0
        %7848 = vmatprep.subr.mxu0 0.0
        %7849 = vmatpush1.msra.mxu0 0.0
        %7850 = vmatprep.subr.mxu0 0.0
        %7851 = vmatpush1.msra.mxu0 0.0
        %7852 = vmatprep.subr.mxu0 0.0
        %7853 = vmatpush1.msra.mxu0 %v7822
        %7854 = vmatprep.subr.mxu0 0.0
        %7855 = vmatpush1.msra.mxu0 %v7720
        %7856 = vmatprep.subr.mxu0 0.0
        %7857 = vmatpush2.msra.mxu0 0.0
        %7858 = vmatprep.subr.mxu0 0.0
        %7859 = vmatpush2.msra.mxu0 0.0
        %7860 = vmatprep.subr.mxu0 0.0
        %7861 = vmatpush2.msra.mxu0 0.0
        %7862 = vmatprep.subr.mxu0 0.0
        %7863 = vmatpush2.msra.mxu0 0.0
        %7864 = vmatprep.subr.mxu0 0.0
        %7865 = vmatpush2.msra.mxu0 0.0
        %7866 = vmatprep.subr.mxu0 0.0
        %7867 = vmatpush2.msra.mxu0 0.0
        %7868 = vmatprep.subr.mxu0 0.0
        %7869 = vmatpush2.msra.mxu0 0.0
        %7870 = vmatprep.subr.mxu0 0.0
        %7871 = vmatpush2.msra.mxu0 0.0
        %7872 = vmatprep.subr.mxu0 0.0
        %7873 = vmatpush2.msra.mxu0 0.0
        %7874 = vmatprep.subr.mxu0 0.0
        %7875 = vmatpush2.msra.mxu0 0.0
        %7876 = vmatprep.subr.mxu0 0.0
        %7877 = vmatpush2.msra.mxu0 0.0
        %7878 = vmatprep.subr.mxu0 0.0
        %7879 = vmatpush2.msra.mxu0 0.0
        %7880 = vmatprep.subr.mxu0 0.0
        %7881 = vmatpush2.msra.mxu0 0.0
        %7882 = vmatprep.subr.mxu0 0.0
        %7883 = vmatpush2.msra.mxu0 0.0
        %7884 = vmatprep.subr.mxu0 0.0
        %7885 = vmatpush2.msra.mxu0 0.0
        %7886 = vmatprep.subr.mxu0 0.0
        %7887 = vmatpush2.msra.mxu0 0.0
        %7888 = vmatprep.mubr.f32.mxu0 0.0
        %7889 = vmatmul.mubr.f32.gmra.mxu0 %v7819
        %v7890 = vpop.f32.mrf.mxu0
        %v7891 = vadd.f32 0.0, %v7890
        %v7892 = vpop.f32.mrf.mxu0
        %7893 = vdwg.mxu0
        %s7894 = scalar_lea.vmem %s71, 48
        %v7895 = vld [vmem:[%s7894] sm:$0xff]
        %v7896 = vld [vmem:[%s7894 + $0x8] sm:$0xff]
        %v7898 = vsel %vm1956, %v7891, 0
        %7900 = vmatprep.subr.mxu0 0.0
        %7901 = vmatpush1.msra.mxu0 0.0
        %7902 = vmatprep.subr.mxu0 0.0
        %7903 = vmatpush1.msra.mxu0 0.0
        %7904 = vmatprep.subr.mxu0 0.0
        %7905 = vmatpush1.msra.mxu0 0.0
        %7906 = vmatprep.subr.mxu0 0.0
        %7907 = vmatpush1.msra.mxu0 0.0
        %7908 = vmatprep.subr.mxu0 0.0
        %7909 = vmatpush1.msra.mxu0 0.0
        %7910 = vmatprep.subr.mxu0 0.0
        %7911 = vmatpush1.msra.mxu0 0.0
        %7912 = vmatprep.subr.mxu0 0.0
        %7913 = vmatpush1.msra.mxu0 0.0
        %7914 = vmatprep.subr.mxu0 0.0
        %7915 = vmatpush1.msra.mxu0 0.0
        %7916 = vmatprep.subr.mxu0 0.0
        %7917 = vmatpush1.msra.mxu0 0.0
        %7918 = vmatprep.subr.mxu0 0.0
        %7919 = vmatpush1.msra.mxu0 0.0
        %7920 = vmatprep.subr.mxu0 0.0
        %7921 = vmatpush1.msra.mxu0 0.0
        %7922 = vmatprep.subr.mxu0 0.0
        %7923 = vmatpush1.msra.mxu0 0.0
        %7924 = vmatprep.subr.mxu0 0.0
        %7925 = vmatpush1.msra.mxu0 0.0
        %7926 = vmatprep.subr.mxu0 0.0
        %7927 = vmatpush1.msra.mxu0 0.0
        %7928 = vmatprep.subr.mxu0 0.0
        %7929 = vmatpush1.msra.mxu0 %v7896
        %7930 = vmatprep.subr.mxu0 0.0
        %7931 = vmatpush1.msra.mxu0 %v7895
        %7932 = vmatprep.subr.mxu0 0.0
        %7933 = vmatpush2.msra.mxu0 0.0
        %7934 = vmatprep.subr.mxu0 0.0
        %7935 = vmatpush2.msra.mxu0 0.0
        %7936 = vmatprep.subr.mxu0 0.0
        %7937 = vmatpush2.msra.mxu0 0.0
        %7938 = vmatprep.subr.mxu0 0.0
        %7939 = vmatpush2.msra.mxu0 0.0
        %7940 = vmatprep.subr.mxu0 0.0
        %7941 = vmatpush2.msra.mxu0 0.0
        %7942 = vmatprep.subr.mxu0 0.0
        %7943 = vmatpush2.msra.mxu0 0.0
        %7944 = vmatprep.subr.mxu0 0.0
        %7945 = vmatpush2.msra.mxu0 0.0
        %7946 = vmatprep.subr.mxu0 0.0
        %7947 = vmatpush2.msra.mxu0 0.0
        %7948 = vmatprep.subr.mxu0 0.0
        %7949 = vmatpush2.msra.mxu0 0.0
        %7950 = vmatprep.subr.mxu0 0.0
        %7951 = vmatpush2.msra.mxu0 0.0
        %7952 = vmatprep.subr.mxu0 0.0
        %7953 = vmatpush2.msra.mxu0 0.0
        %7954 = vmatprep.subr.mxu0 0.0
        %7955 = vmatpush2.msra.mxu0 0.0
        %7956 = vmatprep.subr.mxu0 0.0
        %7957 = vmatpush2.msra.mxu0 0.0
        %7958 = vmatprep.subr.mxu0 0.0
        %7959 = vmatpush2.msra.mxu0 0.0
        %7960 = vmatprep.subr.mxu0 0.0
        %7961 = vmatpush2.msra.mxu0 0.0
        %7962 = vmatprep.subr.mxu0 0.0
        %7963 = vmatpush2.msra.mxu0 0.0
        %7964 = vmatprep.mubr.f32.mxu0 0.0
        %7965 = vmatmul.mubr.f32.gmra.mxu0 %v7898
        %v7966 = vpop.f32.mrf.mxu0
        %v7967 = vadd.f32 0.0, %v7966
        %v7968 = vpop.f32.mrf.mxu0
        %7969 = vdwg.mxu0
        %v7971 = vsel %vm1956, %v7465, 0
        %7973 = vmatprep.subr.mxu0 0.0
        %7974 = vmatpush1.msra.mxu0 0.0
        %7975 = vmatprep.subr.mxu0 0.0
        %7976 = vmatpush1.msra.mxu0 0.0
        %7977 = vmatprep.subr.mxu0 0.0
        %7978 = vmatpush1.msra.mxu0 0.0
        %7979 = vmatprep.subr.mxu0 0.0
        %7980 = vmatpush1.msra.mxu0 0.0
        %7981 = vmatprep.subr.mxu0 0.0
        %7982 = vmatpush1.msra.mxu0 0.0
        %7983 = vmatprep.subr.mxu0 0.0
        %7984 = vmatpush1.msra.mxu0 0.0
        %7985 = vmatprep.subr.mxu0 0.0
        %7986 = vmatpush1.msra.mxu0 0.0
        %7987 = vmatprep.subr.mxu0 0.0
        %7988 = vmatpush1.msra.mxu0 0.0
        %7989 = vmatprep.subr.mxu0 0.0
        %7990 = vmatpush1.msra.mxu0 0.0
        %7991 = vmatprep.subr.mxu0 0.0
        %7992 = vmatpush1.msra.mxu0 0.0
        %7993 = vmatprep.subr.mxu0 0.0
        %7994 = vmatpush1.msra.mxu0 0.0
        %7995 = vmatprep.subr.mxu0 0.0
        %7996 = vmatpush1.msra.mxu0 0.0
        %7997 = vmatprep.subr.mxu0 0.0
        %7998 = vmatpush1.msra.mxu0 0.0
        %7999 = vmatprep.subr.mxu0 0.0
        %8000 = vmatpush1.msra.mxu0 0.0
        %8001 = vmatprep.subr.mxu0 0.0
        %8002 = vmatpush1.msra.mxu0 %v7470
        %8003 = vmatprep.subr.mxu0 0.0
        %8004 = vmatpush1.msra.mxu0 %v7469
        %8005 = vmatprep.subr.mxu0 0.0
        %8006 = vmatpush2.msra.mxu0 0.0
        %8007 = vmatprep.subr.mxu0 0.0
        %8008 = vmatpush2.msra.mxu0 0.0
        %8009 = vmatprep.subr.mxu0 0.0
        %8010 = vmatpush2.msra.mxu0 0.0
        %8011 = vmatprep.subr.mxu0 0.0
        %8012 = vmatpush2.msra.mxu0 0.0
        %8013 = vmatprep.subr.mxu0 0.0
        %8014 = vmatpush2.msra.mxu0 0.0
        %8015 = vmatprep.subr.mxu0 0.0
        %8016 = vmatpush2.msra.mxu0 0.0
        %8017 = vmatprep.subr.mxu0 0.0
        %8018 = vmatpush2.msra.mxu0 0.0
        %8019 = vmatprep.subr.mxu0 0.0
        %8020 = vmatpush2.msra.mxu0 0.0
        %8021 = vmatprep.subr.mxu0 0.0
        %8022 = vmatpush2.msra.mxu0 0.0
        %8023 = vmatprep.subr.mxu0 0.0
        %8024 = vmatpush2.msra.mxu0 0.0
        %8025 = vmatprep.subr.mxu0 0.0
        %8026 = vmatpush2.msra.mxu0 0.0
        %8027 = vmatprep.subr.mxu0 0.0
        %8028 = vmatpush2.msra.mxu0 0.0
        %8029 = vmatprep.subr.mxu0 0.0
        %8030 = vmatpush2.msra.mxu0 0.0
        %8031 = vmatprep.subr.mxu0 0.0
        %8032 = vmatpush2.msra.mxu0 0.0
        %8033 = vmatprep.subr.mxu0 0.0
        %8034 = vmatpush2.msra.mxu0 0.0
        %8035 = vmatprep.subr.mxu0 0.0
        %8036 = vmatpush2.msra.mxu0 0.0
        %8037 = vmatprep.mubr.f32.mxu0 0.0
        %8038 = vmatmul.mubr.f32.gmra.mxu0 %v7971
        %v8039 = vpop.f32.mrf.mxu0
        %v8040 = vadd.f32 %v7967, %v8039
        %v8041 = vpop.f32.mrf.mxu0
        %8042 = vdwg.mxu0
        %v8044 = vlaneseq
        %v8045 = vshrl.u32 %v8044, 7
        %v8046 = vsub.s32 0, %v8045
        %v8047 = vrot.slane %v7044, %v8046
        %v8049 = vadd.f32 %v8040, %v8047
        %v8050 = vmul.f32 %v8049, %v4719
        %v8051 = vadd.f32 %v7042, %v8050
        %v8052 = vmul.f32 %v8051, %v4727
        %v8053 = vsel %vm1714, %v8052, 0.0
        %8054 = vadd.xlane.f32.xlu0 %v8053
        %v8055 = vpop.xlane.xlu0 %8054
        %s8056 = scalar_lea.vmem %s79, 1
        %v8057 = vld [vmem:[%s8056] sm:$0x1]
        %s8058 = scalar_lea.vmem %s81, 1
        %v8059 = vld [vmem:[%s8058] sm:$0x1]
        %v8060 = vadd.f32 %v6062, %v8055
        %v8061 = vsel %vm1714, %v8060, 0.0
        %8062 = vadd.xlane.f32.xlu0 %v8061
        %v8063 = vpop.xlane.xlu0 %8062
        %v8064 = vmul.f32 %v8063, %v2704
        %v8065 = vsub.f32 %v8060, %v8064
        %v8066 = vmul.f32 %v8065, %v8065
        %v8067 = vsel %vm1714, %v8066, 0.0
        %8068 = vadd.xlane.f32.xlu0 %v8067
        %v8069 = vpop.xlane.xlu0 %8068
        %v8070 = vmul.f32 %v8069, %v2704
        %v8071 = vadd.f32 %v8070, 1e-05
        %v8072 = vrsqrt.pop %v8071
        %v8073 = vmul.f32 %v8065, %v8072
        %v8075 = vlaneseq
        %v8076 = vshrl.u32 %v8075, 7
        %v8077 = vsub.s32 0, %v8076
        %v8078 = vrot.slane %v8057, %v8077
        %v8080 = vmul.f32 %v8073, %v8078
        %v8082 = vlaneseq
        %v8083 = vshrl.u32 %v8082, 7
        %v8084 = vsub.s32 0, %v8083
        %v8085 = vrot.slane %v8059, %v8084
        %v8087 = vadd.f32 %v8080, %v8085
        %s8088 = scalar_lea.vmem %s87, 32
        %v8089 = vld [vmem:[%s8088] sm:$0xff]
        %v8090 = vld [vmem:[%s8088 + $0x8] sm:$0xff]
        %v8091 = vld [vmem:[%s8088 + $0x10] sm:$0xff]
        %v8092 = vld [vmem:[%s8088 + $0x18] sm:$0xff]
        %s8093 = scalar_lea.vmem %s89, 1
        %v8094 = vld [vmem:[%s8093] sm:$0x1]
        %v8096 = vlaneseq
        %v8097 = vshrl.u32 %v8096, 7
        %v8098 = vsub.s32 0, %v8097
        %v8099 = vrot.slane %v8094, %v8098
        %v8102 = vsel %vm1714, %v8087, 0
        %8104 = vmatprep.subr.mxu0 0.0
        %8105 = vmatpush1.msra.mxu0 0.0
        %8106 = vmatprep.subr.mxu0 0.0
        %8107 = vmatpush1.msra.mxu0 0.0
        %8108 = vmatprep.subr.mxu0 0.0
        %8109 = vmatpush1.msra.mxu0 0.0
        %8110 = vmatprep.subr.mxu0 0.0
        %8111 = vmatpush1.msra.mxu0 0.0
        %8112 = vmatprep.subr.mxu0 0.0
        %8113 = vmatpush1.msra.mxu0 0.0
        %8114 = vmatprep.subr.mxu0 0.0
        %8115 = vmatpush1.msra.mxu0 0.0
        %8116 = vmatprep.subr.mxu0 0.0
        %8117 = vmatpush1.msra.mxu0 0.0
        %8118 = vmatprep.subr.mxu0 0.0
        %8119 = vmatpush1.msra.mxu0 0.0
        %8120 = vmatprep.subr.mxu0 0.0
        %8121 = vmatpush1.msra.mxu0 0.0
        %8122 = vmatprep.subr.mxu0 0.0
        %8123 = vmatpush1.msra.mxu0 0.0
        %8124 = vmatprep.subr.mxu0 0.0
        %8125 = vmatpush1.msra.mxu0 0.0
        %8126 = vmatprep.subr.mxu0 0.0
        %8127 = vmatpush1.msra.mxu0 0.0
        %8128 = vmatprep.subr.mxu0 0.0
        %8129 = vmatpush1.msra.mxu0 %v8092
        %8130 = vmatprep.subr.mxu0 0.0
        %8131 = vmatpush1.msra.mxu0 %v8091
        %8132 = vmatprep.subr.mxu0 0.0
        %8133 = vmatpush1.msra.mxu0 %v8090
        %8134 = vmatprep.subr.mxu0 0.0
        %8135 = vmatpush1.msra.mxu0 %v8089
        %8136 = vmatprep.subr.mxu0 0.0
        %8137 = vmatpush2.msra.mxu0 0.0
        %8138 = vmatprep.subr.mxu0 0.0
        %8139 = vmatpush2.msra.mxu0 0.0
        %8140 = vmatprep.subr.mxu0 0.0
        %8141 = vmatpush2.msra.mxu0 0.0
        %8142 = vmatprep.subr.mxu0 0.0
        %8143 = vmatpush2.msra.mxu0 0.0
        %8144 = vmatprep.subr.mxu0 0.0
        %8145 = vmatpush2.msra.mxu0 0.0
        %8146 = vmatprep.subr.mxu0 0.0
        %8147 = vmatpush2.msra.mxu0 0.0
        %8148 = vmatprep.subr.mxu0 0.0
        %8149 = vmatpush2.msra.mxu0 0.0
        %8150 = vmatprep.subr.mxu0 0.0
        %8151 = vmatpush2.msra.mxu0 0.0
        %8152 = vmatprep.subr.mxu0 0.0
        %8153 = vmatpush2.msra.mxu0 0.0
        %8154 = vmatprep.subr.mxu0 0.0
        %8155 = vmatpush2.msra.mxu0 0.0
        %8156 = vmatprep.subr.mxu0 0.0
        %8157 = vmatpush2.msra.mxu0 0.0
        %8158 = vmatprep.subr.mxu0 0.0
        %8159 = vmatpush2.msra.mxu0 0.0
        %8160 = vmatprep.subr.mxu0 0.0
        %8161 = vmatpush2.msra.mxu0 0.0
        %8162 = vmatprep.subr.mxu0 0.0
        %8163 = vmatpush2.msra.mxu0 0.0
        %8164 = vmatprep.subr.mxu0 0.0
        %8165 = vmatpush2.msra.mxu0 0.0
        %8166 = vmatprep.subr.mxu0 0.0
        %8167 = vmatpush2.msra.mxu0 0.0
        %8168 = vmatprep.mubr.f32.mxu0 0.0
        %8169 = vmatmul.mubr.f32.gmra.mxu0 %v8102
        %v8170 = vpop.f32.mrf.mxu0
        %v8171 = vadd.f32 %v8099, %v8170
        %v8172 = vpop.f32.mrf.mxu0
        %8173 = vdwg.mxu0
        %v8174 = vmax.f32 %v8171, 0.0
        %s8175 = scalar_lea.vmem %s91, 48
        %v8176 = vld [vmem:[%s8175] sm:$0xff]
        %v8177 = vld [vmem:[%s8175 + $0x8] sm:$0xff]
        %v8178 = vld [vmem:[%s8175 + $0x10] sm:$0xff]
        %v8179 = vld [vmem:[%s8175 + $0x18] sm:$0xff]
        %v8180 = vld [vmem:[%s8175 + $0x20] sm:$0xff]
        %v8181 = vld [vmem:[%s8175 + $0x28] sm:$0xff]
        %s8182 = scalar_lea.vmem %s93, 1
        %v8183 = vld [vmem:[%s8182] sm:$0x1]
        %v8185 = vlaneseq
        %v8186 = vshrl.u32 %v8185, 7
        %v8187 = vsub.s32 0, %v8186
        %v8188 = vrot.slane %v8183, %v8187
        %v8191 = vsel %vm4860, %v8174, 0
        %8193 = vmatprep.subr.mxu0 0.0
        %8194 = vmatpush1.msra.mxu0 0.0
        %8195 = vmatprep.subr.mxu0 0.0
        %8196 = vmatpush1.msra.mxu0 0.0
        %8197 = vmatprep.subr.mxu0 0.0
        %8198 = vmatpush1.msra.mxu0 0.0
        %8199 = vmatprep.subr.mxu0 0.0
        %8200 = vmatpush1.msra.mxu0 0.0
        %8201 = vmatprep.subr.mxu0 0.0
        %8202 = vmatpush1.msra.mxu0 0.0
        %8203 = vmatprep.subr.mxu0 0.0
        %8204 = vmatpush1.msra.mxu0 0.0
        %8205 = vmatprep.subr.mxu0 0.0
        %8206 = vmatpush1.msra.mxu0 0.0
        %8207 = vmatprep.subr.mxu0 0.0
        %8208 = vmatpush1.msra.mxu0 0.0
        %8209 = vmatprep.subr.mxu0 0.0
        %8210 = vmatpush1.msra.mxu0 0.0
        %8211 = vmatprep.subr.mxu0 0.0
        %8212 = vmatpush1.msra.mxu0 0.0
        %8213 = vmatprep.subr.mxu0 0.0
        %8214 = vmatpush1.msra.mxu0 %v8181
        %8215 = vmatprep.subr.mxu0 0.0
        %8216 = vmatpush1.msra.mxu0 %v8180
        %8217 = vmatprep.subr.mxu0 0.0
        %8218 = vmatpush1.msra.mxu0 %v8179
        %8219 = vmatprep.subr.mxu0 0.0
        %8220 = vmatpush1.msra.mxu0 %v8178
        %8221 = vmatprep.subr.mxu0 0.0
        %8222 = vmatpush1.msra.mxu0 %v8177
        %8223 = vmatprep.subr.mxu0 0.0
        %8224 = vmatpush1.msra.mxu0 %v8176
        %8225 = vmatprep.subr.mxu0 0.0
        %8226 = vmatpush2.msra.mxu0 0.0
        %8227 = vmatprep.subr.mxu0 0.0
        %8228 = vmatpush2.msra.mxu0 0.0
        %8229 = vmatprep.subr.mxu0 0.0
        %8230 = vmatpush2.msra.mxu0 0.0
        %8231 = vmatprep.subr.mxu0 0.0
        %8232 = vmatpush2.msra.mxu0 0.0
        %8233 = vmatprep.subr.mxu0 0.0
        %8234 = vmatpush2.msra.mxu0 0.0
        %8235 = vmatprep.subr.mxu0 0.0
        %8236 = vmatpush2.msra.mxu0 0.0
        %8237 = vmatprep.subr.mxu0 0.0
        %8238 = vmatpush2.msra.mxu0 0.0
        %8239 = vmatprep.subr.mxu0 0.0
        %8240 = vmatpush2.msra.mxu0 0.0
        %8241 = vmatprep.subr.mxu0 0.0
        %8242 = vmatpush2.msra.mxu0 0.0
        %8243 = vmatprep.subr.mxu0 0.0
        %8244 = vmatpush2.msra.mxu0 0.0
        %8245 = vmatprep.subr.mxu0 0.0
        %8246 = vmatpush2.msra.mxu0 0.0
        %8247 = vmatprep.subr.mxu0 0.0
        %8248 = vmatpush2.msra.mxu0 0.0
        %8249 = vmatprep.subr.mxu0 0.0
        %8250 = vmatpush2.msra.mxu0 0.0
        %8251 = vmatprep.subr.mxu0 0.0
        %8252 = vmatpush2.msra.mxu0 0.0
        %8253 = vmatprep.subr.mxu0 0.0
        %8254 = vmatpush2.msra.mxu0 0.0
        %8255 = vmatprep.subr.mxu0 0.0
        %8256 = vmatpush2.msra.mxu0 0.0
        %8257 = vmatprep.mubr.f32.mxu0 0.0
        %8258 = vmatmul.mubr.f32.gmra.mxu0 %v8191
        %v8259 = vpop.f32.mrf.mxu0
        %v8260 = vadd.f32 %v8188, %v8259
        %v8261 = vpop.f32.mrf.mxu0
        %8262 = vdwg.mxu0
        %s8263 = scalar_lea.vmem %s83, 1
        %v8264 = vld [vmem:[%s8263] sm:$0x1]
        %s8265 = scalar_lea.vmem %s85, 1
        %v8266 = vld [vmem:[%s8265] sm:$0x1]
        %v8267 = vadd.f32 %v8087, %v8260
        %v8268 = vsel %vm1714, %v8267, 0.0
        %8269 = vadd.xlane.f32.xlu0 %v8268
        %v8270 = vpop.xlane.xlu0 %8269
        %v8271 = vmul.f32 %v8270, %v2704
        %v8272 = vsub.f32 %v8267, %v8271
        %v8273 = vmul.f32 %v8272, %v8272
        %v8274 = vsel %vm1714, %v8273, 0.0
        %8275 = vadd.xlane.f32.xlu0 %v8274
        %v8276 = vpop.xlane.xlu0 %8275
        %v8277 = vmul.f32 %v8276, %v2704
        %v8278 = vadd.f32 %v8277, 1e-05
        %v8279 = vrsqrt.pop %v8278
        %v8280 = vmul.f32 %v8272, %v8279
        %v8282 = vlaneseq
        %v8283 = vshrl.u32 %v8282, 7
        %v8284 = vsub.s32 0, %v8283
        %v8285 = vrot.slane %v8264, %v8284
        %v8287 = vmul.f32 %v8280, %v8285
        %v8289 = vlaneseq
        %v8290 = vshrl.u32 %v8289, 7
        %v8291 = vsub.s32 0, %v8290
        %v8292 = vrot.slane %v8266, %v8291
        %v8294 = vadd.f32 %v8287, %v8292
        %v8295 = vld [vmem:[%s1592] sm:$0xff]
        %v8296 = vld [vmem:[%s1592 + $0x8] sm:$0xff]
        %v8297 = vld [vmem:[%s1592 + $0x10] sm:$0xff]
        %v8298 = vld [vmem:[%s1592 + $0x18] sm:$0xff]
        %v8299 = vld [vmem:[%s1597] sm:$0x1]
        %v8301 = vlaneseq
        %v8302 = vshrl.u32 %v8301, 7
        %v8303 = vsub.s32 0, %v8302
        %v8304 = vrot.slane %v8299, %v8303
        %v8307 = vsel %vm1714, %v8294, 0
        %8309 = vmatprep.subr.mxu0 0.0
        %8310 = vmatpush1.msra.mxu0 0.0
        %8311 = vmatprep.subr.mxu0 0.0
        %8312 = vmatpush1.msra.mxu0 0.0
        %8313 = vmatprep.subr.mxu0 0.0
        %8314 = vmatpush1.msra.mxu0 0.0
        %8315 = vmatprep.subr.mxu0 0.0
        %8316 = vmatpush1.msra.mxu0 0.0
        %8317 = vmatprep.subr.mxu0 0.0
        %8318 = vmatpush1.msra.mxu0 0.0
        %8319 = vmatprep.subr.mxu0 0.0
        %8320 = vmatpush1.msra.mxu0 0.0
        %8321 = vmatprep.subr.mxu0 0.0
        %8322 = vmatpush1.msra.mxu0 0.0
        %8323 = vmatprep.subr.mxu0 0.0
        %8324 = vmatpush1.msra.mxu0 0.0
        %8325 = vmatprep.subr.mxu0 0.0
        %8326 = vmatpush1.msra.mxu0 0.0
        %8327 = vmatprep.subr.mxu0 0.0
        %8328 = vmatpush1.msra.mxu0 0.0
        %8329 = vmatprep.subr.mxu0 0.0
        %8330 = vmatpush1.msra.mxu0 0.0
        %8331 = vmatprep.subr.mxu0 0.0
        %8332 = vmatpush1.msra.mxu0 0.0
        %8333 = vmatprep.subr.mxu0 0.0
        %8334 = vmatpush1.msra.mxu0 %v8298
        %8335 = vmatprep.subr.mxu0 0.0
        %8336 = vmatpush1.msra.mxu0 %v8297
        %8337 = vmatprep.subr.mxu0 0.0
        %8338 = vmatpush1.msra.mxu0 %v8296
        %8339 = vmatprep.subr.mxu0 0.0
        %8340 = vmatpush1.msra.mxu0 %v8295
        %8341 = vmatprep.subr.mxu0 0.0
        %8342 = vmatpush2.msra.mxu0 0.0
        %8343 = vmatprep.subr.mxu0 0.0
        %8344 = vmatpush2.msra.mxu0 0.0
        %8345 = vmatprep.subr.mxu0 0.0
        %8346 = vmatpush2.msra.mxu0 0.0
        %8347 = vmatprep.subr.mxu0 0.0
        %8348 = vmatpush2.msra.mxu0 0.0
        %8349 = vmatprep.subr.mxu0 0.0
        %8350 = vmatpush2.msra.mxu0 0.0
        %8351 = vmatprep.subr.mxu0 0.0
        %8352 = vmatpush2.msra.mxu0 0.0
        %8353 = vmatprep.subr.mxu0 0.0
        %8354 = vmatpush2.msra.mxu0 0.0
        %8355 = vmatprep.subr.mxu0 0.0
        %8356 = vmatpush2.msra.mxu0 0.0
        %8357 = vmatprep.subr.mxu0 0.0
        %8358 = vmatpush2.msra.mxu0 0.0
        %8359 = vmatprep.subr.mxu0 0.0
        %8360 = vmatpush2.msra.mxu0 0.0
        %8361 = vmatprep.subr.mxu0 0.0
        %8362 = vmatpush2.msra.mxu0 0.0
        %8363 = vmatprep.subr.mxu0 0.0
        %8364 = vmatpush2.msra.mxu0 0.0
        %8365 = vmatprep.subr.mxu0 0.0
        %8366 = vmatpush2.msra.mxu0 0.0
        %8367 = vmatprep.subr.mxu0 0.0
        %8368 = vmatpush2.msra.mxu0 0.0
        %8369 = vmatprep.subr.mxu0 0.0
        %8370 = vmatpush2.msra.mxu0 0.0
        %8371 = vmatprep.subr.mxu0 0.0
        %8372 = vmatpush2.msra.mxu0 0.0
        %8373 = vmatprep.mubr.f32.mxu0 0.0
        %8374 = vmatmul.mubr.f32.gmra.mxu0 %v8307
        %v8375 = vpop.f32.mrf.mxu0
        %v8376 = vadd.f32 %v8304, %v8375
        %v8377 = vpop.f32.mrf.mxu0
        %8378 = vdwg.mxu0
        %v8379 = vmul.f32 %v8376, %v4719
        %vm8380 = vcmask 97280
        %8381 = vst.msk [vmem:[%s1556] sm:$0xff] %vm8380, %v8379
        %s8382 = sand.u32 %s1189, 1
        %s8383 = scalar_lea.sflag [#allocation5], %s8382
        %s8384 = sand.u32 %s1189, 1
        %s8385 = smul.addr %s8384, 8
        %s8386 = scalar_lea.vmem [#allocation4], %s8385
        // Predicated region
        $region213: #{decoder_forward.1} parent=211 // pred_check
          %p8387 = pneg %p1199
        $region214: #{decoder_forward.1} parent=211 // pred_check_branch
          %8389 = sbr.rel (%p8387) target = $region216
        $region215: #{decoder_forward.1} parent=211 // pred_region
          %s8391 = ssub.s32 128, 128
          %8392 = vsyncadd %s8383, %s8391
          %s8393 = smul.addr %s119, 128
          %s8394 = scalar_lea.hbm %s99, %s8393
          %s8396 = sshll.u32 %s8386, 4
          %s8397 = int_to_ptr.vmem [resolvable:$true] %s8396
          %8399 = dma.vmem_to_hbm [thread:$0]  %s8397, 128, %s8394, %s8383
        $region216: #{decoder_forward.1} parent=211 // pred_fallthru
          _
      $region212: #{decoder_forward.1} parent=5 // pred_fallthru
        _
      %p8400 = scmp.le.s32.totalorder 2, %s114
      // Predicated region
      $region217: #{decoder_forward.1} parent=5 // pred_check
        %p8401 = pneg %p8400
      $region218: #{decoder_forward.1} parent=5 // pred_check_branch
        %8403 = sbr.rel (%p8401) target = $region220
      $region219: #{decoder_forward.1} parent=5 // pred_region
        %s8404 = ssub.s32 %s114, 2
        // Predicated region
        $region221: #{decoder_forward.1} parent=219 // pred_check
          %p8405 = pneg %p1205
        $region222: #{decoder_forward.1} parent=219 // pred_check_branch
          %8407 = sbr.rel (%p8405) target = $region224
        $region223: #{decoder_forward.1} parent=219 // pred_region
          %s8408 = sand.u32 %s1190, 1
          %s8409 = scalar_lea.sflag [#allocation5], %s8408
          %s8410 = sand.u32 %s1190, 1
          %s8411 = smul.addr %s8410, 8
          %s8412 = scalar_lea.vmem [#allocation4], %s8411
          %8413 = dma.done %s8409, 128
        $region224: #{decoder_forward.1} parent=219 // pred_fallthru
          _
      $region220: #{decoder_forward.1} parent=5 // pred_fallthru
        _
    $region6: #{decoder_forward.1} parent=1 // loop_footer
      %s118 = sadd.s32 1, %s114
    $region7: #{decoder_forward.1} parent=1 // loop_footer_branch
      %113 = sbr.rel target = $region3
    $region8: #{decoder_forward.1} parent=1 // loop_exit
      _
    %8414 = vsyncpa [#allocation5], 1
    %s8415 = scalar_lea.sflag [#allocation5], 1
    %8416 = vsyncpa %s8415, 1

</llo_original>
